<compile_context>
chip_gen: v7x
topology: tpu7x:2x2x1
jax: 0.10.0
libtpu: 0.0.40
codegen_flags: <defaults>
</compile_context>

<pallas_src>
import functools

import jax
import jax.numpy as jnp
from jax import lax
from jax.experimental import pallas as pl
from jax.experimental.pallas import tpu as pltpu

EPS = 1e-5
LANE = 128


# ---------------------------------------------------------------------------
# Small helpers (host-side)
# ---------------------------------------------------------------------------
def _round_up(c, m=LANE):
    return ((c + m - 1) // m) * m


def _pad_to(a, shape):
    pads = [(0, t - s) for s, t in zip(a.shape, shape)]
    if all(p == (0, 0) for p in pads):
        return a
    return jnp.pad(a, pads)


def _pick_tile_m(m, target):
    """Largest divisor of m that is <= target and a multiple of 8."""
    target = max(8, min(int(target), m))
    for t in range(target - target % 8, 7, -8):
        if m % t == 0:
            return t
    # TODO(synk): ragged M (no 8-aligned divisor) would need masked partial tiles.
    return m


def _pick_tile_h(h, w, target_rows=1024):
    """Largest divisor of h whose chunk (tile_h * w rows) is <= target_rows."""
    best = 1
    for th in range(1, h + 1):
        if h % th == 0 and th * w <= max(w, target_rows):
            best = th
    return best


def _vmem_budget_bytes():
    """Usable scoped-VMEM budget for this generation (~75% of physical)."""
    try:
        cap = pltpu.get_tpu_info().vmem_capacity_bytes
        if cap:
            return int(cap * 3 // 4)        # ~96 MiB on v5e/v6e, ~48 MiB on v7x
    except Exception:
        pass
    return 96 << 20


def _cparams(n_axes, footprint_bytes, budget):
    """Parallel grid axes + scoped-VMEM limit from the exact tile footprint."""
    limit = int(min(budget, max(int(footprint_bytes) + (2 << 20), 32 << 20)))
    return pltpu.CompilerParams(
        dimension_semantics=("parallel",) * n_axes,
        vmem_limit_bytes=limit)


def _const_spec(shape, index_map):
    """BlockSpec for blocks whose index never changes across the grid:
    single-buffered (no point double-buffering a constant block)."""
    try:
        return pl.BlockSpec(shape, index_map, pipeline_mode=pl.Buffered(1))
    except Exception:  # older jax without pipeline_mode / Buffered
        return pl.BlockSpec(shape, index_map)


def _bn_fold(partial_stats, gamma, beta, count):
    """Reduce per-tile (sum, sumsq) and fold BN into per-channel scale/shift."""
    s = jnp.sum(partial_stats[:, 0, :], axis=0, keepdims=True)    # (1, C)
    ss = jnp.sum(partial_stats[:, 1, :], axis=0, keepdims=True)   # (1, C)
    mean = s / count
    # TODO(synk): single-pass E[x^2]-E[x]^2 loses precision for huge M / large
    #             |mean|; Welford-style centered partials would be more robust.
    var = jnp.maximum(ss / count - mean * mean, 0.0)  # biased (training) var
    scale = gamma * jax.lax.rsqrt(var + EPS)
    shift = beta - mean * scale
    return scale, shift


# ---------------------------------------------------------------------------
# Pallas kernels
# ---------------------------------------------------------------------------
def conv1x1_stats_kernel(x_ref, w_ref, y_ref, st_ref):
    """y = x @ w (MXU, f32 acc) + per-tile per-channel sum / sum-of-squares."""
    y = jnp.dot(x_ref[...], w_ref[...], preferred_element_type=jnp.float32)
    y_ref[...] = y.astype(y_ref.dtype)
    st_ref[0, 0:1, :] = jnp.sum(y, axis=0, keepdims=True)
    st_ref[0, 1:2, :] = jnp.sum(y * y, axis=0, keepdims=True)


def bn_relu_conv1x1_stats_kernel(y_ref, s_ref, b_ref, w_ref, o_ref, st_ref):
    """a = relu(y*scale + shift); o = a @ w; per-tile BN stats of o."""
    a = jnp.maximum(y_ref[...].astype(jnp.float32) * s_ref[...] + b_ref[...], 0.0)
    o = jnp.dot(a.astype(w_ref.dtype), w_ref[...],
                preferred_element_type=jnp.float32)
    o_ref[...] = o.astype(o_ref.dtype)
    st_ref[0, 0:1, :] = jnp.sum(o, axis=0, keepdims=True)
    st_ref[0, 1:2, :] = jnp.sum(o * o, axis=0, keepdims=True)


def bn_relu_conv3x3_stats_kernel(y1_ref, s_ref, b_ref, w_ref, o_ref, st_ref,
                                 apad_ref, *, H, W, tile_h, base, rows):
    """Per image: a = relu(bn1(y1)); 3x3 SAME conv as 9 accumulating matmuls on
    shifted views of a row-zero-padded flat VMEM scratch; BN2 partial stats.

    Scratch layout: apad[base + h*W + w, :] = a[h, w, :], rows [0, base) and
    [base + H*W, rows) stay zero (the vertical halo).  Tap (ky, kx) of the
    conv then reads apad[base + q + (ky-1)*W + (kx-1)] for output q = h*W + w;
    the only error of this flattened addressing is the horizontal wrap-around
    at w == 0 / w == W-1 for the kx == 0 / kx == 2 taps, which is removed by a
    cheap per-row mask before the matmul.
    """
    f32 = jnp.float32
    C = y1_ref.shape[-1]
    Co = o_ref.shape[-1]
    dt = apad_ref.dtype
    HW = H * W
    L = tile_h * W                     # rows per chunk (chunks start at k*W)
    n_chunks = H // tile_h

    # Zero only the halo rows.  Done every step (not under program_id == 0):
    # with megacore grid splitting each core has its own scratch and would
    # otherwise never initialise its halo.  The interior is overwritten below.
    apad_ref[0:base, :] = jnp.zeros((base, C), dt)
    apad_ref[base + HW:rows, :] = jnp.zeros((rows - base - HW, C), dt)

    # BN1 + ReLU once per element, written into the scratch interior
    # (base is 8-aligned -> aligned full-tile store).
    a = jnp.maximum(y1_ref[0].astype(f32) * s_ref[...] + b_ref[...], 0.0)
    apad_ref[base:base + HW, :] = a.astype(dt)

    # Row masks fixing the horizontal wrap-around of the flattened layout for
    # the dx = -1 / dx = +1 taps (identical for every chunk since L % W == 0).
    col = lax.broadcasted_iota(jnp.int32, (L, 1), 0) % W
    mask_l = (col != 0).astype(dt)
    mask_r = (col != W - 1).astype(dt)

    def chunk(c, carry):
        ssum, ssq = carry
        q0 = c * L
        if L % 8 == 0:
            q0 = pl.multiple_of(q0, 8)
        acc = None
        for ky in range(3):
            for kx in range(3):
                off = base + q0 + (ky - 1) * W + (kx - 1)
                v = apad_ref[pl.ds(off, L), :]
                if kx == 0:
                    v = v * mask_l
                elif kx == 2:
                    v = v * mask_r
                d = jnp.dot(v, w_ref[ky * 3 + kx], preferred_element_type=f32)
                acc = d if acc is None else acc + d
        o_ref[0, pl.ds(q0, L), :] = acc.astype(o_ref.dtype)
        return (ssum + jnp.sum(acc, axis=0, keepdims=True),
                ssq + jnp.sum(acc * acc, axis=0, keepdims=True))

    ssum, ssq = lax.fori_loop(
        0, n_chunks, chunk,
        (jnp.zeros((1, Co), f32), jnp.zeros((1, Co), f32)),
        unroll=(n_chunks <= 4))
    st_ref[0, 0:1, :] = ssum
    st_ref[0, 1:2, :] = ssq


def bn_add_relu_kernel(y_ref, id_ref, s_ref, b_ref, o_ref):
    """out = relu(bn3(y) + identity)."""
    o_ref[...] = jnp.maximum(
        y_ref[...].astype(jnp.float32) * s_ref[...] + b_ref[...] + id_ref[...],
        0.0).astype(o_ref.dtype)


# ---------------------------------------------------------------------------
# Bottleneck forward (wrapper / glue)
# ---------------------------------------------------------------------------
def bottleneck_forward(x, params, *, tile_m=None, act_dtype=jnp.bfloat16):
    """x: [N, H, W, Cin] float32 (NHWC).  Returns [N, H, W, Cout=planes*4] f32.

    act_dtype controls the HBM storage of the inter-kernel activations y1/y2/y3
    and of the conv2/conv3 weights (bf16 by default: HBM-bound stages halve
    their traffic; MXU accumulation and BN stats stay f32).  act_dtype=float32
    gives exact parity with the f32 reference.
    """
    N, H, W, Cin = x.shape
    w1, w2, w3 = params["w1"], params["w2"], params["w3"]
    Cmid, Cout = w1.shape[1], w3.shape[1]
    assert Cout == Cin, "downsample=None requires inplanes == planes * expansion"
    M = N * H * W
    f32 = jnp.float32
    act_dtype = jnp.dtype(act_dtype)
    ab = act_dtype.itemsize           # bytes/elem of HBM activations
    wb = ab                           # conv2/conv3 weights stored like acts

    # ---- lane-dense channel padding (multiples of 128) ----
    Cin_p, Cmid_p, Cout_p = _round_up(Cin), _round_up(Cmid), _round_up(Cout)
    x2d = _pad_to(x.reshape(M, Cin), (M, Cin_p))                          # f32
    w1p = _pad_to(w1, (Cin_p, Cmid_p))                                    # f32
    w2r = _pad_to(w2, (3, 3, Cmid_p, Cmid_p)).reshape(
        9, Cmid_p, Cmid_p).astype(act_dtype)
    w3p = _pad_to(w3, (Cmid_p, Cout_p)).astype(act_dtype)
    g1 = _pad_to(params["g1"], (1, Cmid_p)); b1 = _pad_to(params["b1"], (1, Cmid_p))
    g2 = _pad_to(params["g2"], (1, Cmid_p)); b2 = _pad_to(params["b2"], (1, Cmid_p))
    g3 = _pad_to(params["g3"], (1, Cout_p)); b3 = _pad_to(params["b3"], (1, Cout_p))

    # ---- generation-aware M tiling for the 1x1 / elementwise kernels --------
    budget = _vmem_budget_bytes()
    row_bytes = max(
        2 * (Cin_p * 4 + Cmid_p * ab),           # K1 streams (double-buffered)
        2 * (Cmid_p * ab + Cout_p * ab),         # K3 streams
        2 * (Cout_p * ab + 2 * Cout_p * 4))      # K4 streams
    const_bytes = max(2 * Cin_p * Cmid_p * 4,
                      2 * Cmid_p * Cout_p * wb) + (256 << 10)
    cap_rows = max(8, int((budget * 8 // 10 - const_bytes) // row_bytes))
    if tile_m is None:
        tile_m = 2048 if budget >= (80 << 20) else 1024   # v5e/v6e vs v7x
    tm = _pick_tile_m(M, min(tile_m, cap_rows))
    G = M // tm

    # ---- K1: conv1 (1x1) + BN1 partial stats --------------------------------
    fp1 = 2 * tm * (Cin_p * 4 + Cmid_p * ab) + 2 * Cin_p * Cmid_p * 4 + (1 << 20)
    y1, st1 = pl.pallas_call(
        conv1x1_stats_kernel,
        grid=(G,),
        in_specs=[pl.BlockSpec((tm, Cin_p), lambda i: (i, 0)),
                  _const_spec((Cin_p, Cmid_p), lambda i: (0, 0))],
        out_specs=[pl.BlockSpec((tm, Cmid_p), lambda i: (i, 0)),
                   pl.BlockSpec((1, 2, Cmid_p), lambda i: (i, 0, 0))],
        out_shape=(jax.ShapeDtypeStruct((M, Cmid_p), act_dtype),
                   jax.ShapeDtypeStruct((G, 2, Cmid_p), f32)),
        compiler_params=_cparams(1, fp1, budget),
        cost_estimate=pl.CostEstimate(
            flops=2 * M * Cin_p * Cmid_p, transcendentals=0,
            bytes_accessed=4 * M * Cin_p + ab * M * Cmid_p + 4 * Cin_p * Cmid_p),
    )(x2d, w1p)
    s1, h1 = _bn_fold(st1, g1, b1, M)

    # ---- K2: bn1 + relu + conv2 (3x3, SAME) + BN2 partial stats -------------
    # TODO(synk): for very large H*W the per-image block should become a
    #             (N, row-chunk) grid with halo rows fetched per step (v7x
    #             VMEM / megacore parallelism); whole-image blocks are kept
    #             here for simplicity at these sizes.
    HW = H * W
    tile_h = _pick_tile_h(H, W)
    base = _round_up(W + 1, 8)                    # 8-aligned interior start
    rows = _round_up(base + (H + 1) * W + 1, 8)   # covers all shifted reads
    fp2 = (4 * HW * Cmid_p * ab
           + 2 * 9 * Cmid_p * Cmid_p * wb
           + rows * Cmid_p * ab + (1 << 20))
    y1_img = y1.reshape(N, HW, Cmid_p)
    y2, st2 = pl.pallas_call(
        functools.partial(bn_relu_conv3x3_stats_kernel,
                          H=H, W=W, tile_h=tile_h, base=base, rows=rows),
        grid=(N,),
        in_specs=[pl.BlockSpec((1, HW, Cmid_p), lambda n: (n, 0, 0)),
                  _const_spec((1, Cmid_p), lambda n: (0, 0)),
                  _const_spec((1, Cmid_p), lambda n: (0, 0)),
                  _const_spec((9, Cmid_p, Cmid_p), lambda n: (0, 0, 0))],
        out_specs=[pl.BlockSpec((1, HW, Cmid_p), lambda n: (n, 0, 0)),
                   pl.BlockSpec((1, 2, Cmid_p), lambda n: (n, 0, 0))],
        out_shape=(jax.ShapeDtypeStruct((N, HW, Cmid_p), act_dtype),
                   jax.ShapeDtypeStruct((N, 2, Cmid_p), f32)),
        scratch_shapes=[pltpu.VMEM((rows, Cmid_p), act_dtype)],
        compiler_params=_cparams(1, fp2, budget),
        cost_estimate=pl.CostEstimate(
            flops=2 * M * 9 * Cmid_p * Cmid_p, transcendentals=0,
            bytes_accessed=2 * ab * M * Cmid_p + wb * 9 * Cmid_p * Cmid_p),
    )(y1_img, s1, h1, w2r)
    s2, h2 = _bn_fold(st2, g2, b2, M)

    # ---- K3: bn2 + relu + conv3 (1x1) + BN3 partial stats -------------------
    y2f = y2.reshape(M, Cmid_p)
    fp3 = (2 * tm * (Cmid_p * ab + Cout_p * ab)
           + 2 * Cmid_p * Cout_p * wb + (1 << 20))
    y3, st3 = pl.pallas_call(
        bn_relu_conv1x1_stats_kernel,
        grid=(G,),
        in_specs=[pl.BlockSpec((tm, Cmid_p), lambda i: (i, 0)),
                  _const_spec((1, Cmid_p), lambda i: (0, 0)),
                  _const_spec((1, Cmid_p), lambda i: (0, 0)),
                  _const_spec((Cmid_p, Cout_p), lambda i: (0, 0))],
        out_specs=[pl.BlockSpec((tm, Cout_p), lambda i: (i, 0)),
                   pl.BlockSpec((1, 2, Cout_p), lambda i: (i, 0, 0))],
        out_shape=(jax.ShapeDtypeStruct((M, Cout_p), act_dtype),
                   jax.ShapeDtypeStruct((G, 2, Cout_p), f32)),
        compiler_params=_cparams(1, fp3, budget),
        cost_estimate=pl.CostEstimate(
            flops=2 * M * Cmid_p * Cout_p, transcendentals=0,
            bytes_accessed=ab * M * (Cmid_p + Cout_p) + wb * Cmid_p * Cout_p),
    )(y2f, s2, h2, w3p)
    s3, h3 = _bn_fold(st3, g3, b3, M)

    # ---- K4: bn3 + residual add + relu --------------------------------------
    fp4 = 2 * tm * (Cout_p * ab + 2 * Cout_p * 4) + (1 << 20)
    io_alias = {0: 0} if act_dtype == jnp.dtype(f32) else {}
    out = pl.pallas_call(
        bn_add_relu_kernel,
        grid=(G,),
        in_specs=[pl.BlockSpec((tm, Cout_p), lambda i: (i, 0)),
                  pl.BlockSpec((tm, Cout_p), lambda i: (i, 0)),
                  _const_spec((1, Cout_p), lambda i: (0, 0)),
                  _const_spec((1, Cout_p), lambda i: (0, 0))],
        out_specs=pl.BlockSpec((tm, Cout_p), lambda i: (i, 0)),
        out_shape=jax.ShapeDtypeStruct((M, Cout_p), f32),
        input_output_aliases=io_alias,
        compiler_params=_cparams(1, fp4, budget),
        cost_estimate=pl.CostEstimate(
            flops=3 * M * Cout_p, transcendentals=0,
            bytes_accessed=(ab + 8) * M * Cout_p),
    )(y3, x2d, s3, h3)

    return out[:, :Cout].reshape(N, H, W, Cout)


# ---------------------------------------------------------------------------
# Parameter init (deterministic, shapes per Bottleneck.__init__)
# ---------------------------------------------------------------------------
def init_params(key, inplanes, planes, base_width=64, groups=1):
    width = int(planes * (base_width / 64.0)) * groups
    cout = planes * 4  # expansion
    k1, k2, k3 = jax.random.split(key, 3)
    w1 = jax.random.normal(k1, (inplanes, width), jnp.float32) * 0.1      # conv1 (1x1)
    w2 = jax.random.normal(k2, (3, 3, width, width), jnp.float32) * 0.1   # conv2 (3x3, HWIO)
    w3 = jax.random.normal(k3, (width, cout), jnp.float32) * 0.1          # conv3 (1x1)
    ones = lambda c: jnp.ones((1, c), jnp.float32)    # BN gamma default init
    zeros = lambda c: jnp.zeros((1, c), jnp.float32)  # BN beta default init
    return dict(w1=w1, w2=w2, w3=w3,
                g1=ones(width), b1=zeros(width),
                g2=ones(width), b2=zeros(width),
                g3=ones(cout), b3=zeros(cout))


# ---------------------------------------------------------------------------
# Pure-JAX reference (for correctness check only)
# ---------------------------------------------------------------------------
def reference_forward(x, params):
    def bn_train(y, g, b):
        mean = jnp.mean(y, axis=(0, 1, 2), keepdims=True)
        var = jnp.mean((y - mean) ** 2, axis=(0, 1, 2), keepdims=True)
        return (y - mean) * jax.lax.rsqrt(var + EPS) * g.reshape(1, 1, 1, -1) \
            + b.reshape(1, 1, 1, -1)

    y = jnp.einsum("nhwc,cd->nhwd", x, params["w1"])
    y = jax.nn.relu(bn_train(y, params["g1"], params["b1"]))
    y = jax.lax.conv_general_dilated(
        y, params["w2"], window_strides=(1, 1), padding="SAME",
        dimension_numbers=("NHWC", "HWIO", "NHWC"))
    y = jax.nn.relu(bn_train(y, params["g2"], params["b2"]))
    y = jnp.einsum("nhwc,cd->nhwd", y, params["w3"])
    y = bn_train(y, params["g3"], params["b3"])
    return jax.nn.relu(y + x)


# ---------------------------------------------------------------------------
if __name__ == "__main__":
    N, H, W = 2, 16, 16
    planes = 4
    inplanes = planes * 4  # 16, so the residual add is valid with downsample=None

    key = jax.random.PRNGKey(0)
    kx, kp = jax.random.split(key)
    x = jax.random.normal(kx, (N, H, W, inplanes), jnp.float32)  # NHWC input
    params = init_params(kp, inplanes, planes)
    ref = jax.block_until_ready(reference_forward(x, params))

    # Exact-parity path (f32 intermediates); small tile_m exercises the grid.
    fwd_f32 = jax.jit(functools.partial(bottleneck_forward,
                                        tile_m=128, act_dtype=jnp.float32))
    out_f32 = jax.block_until_ready(fwd_f32(x, params))
    assert out_f32.shape == (N, H, W, planes * 4)
    err32 = float(jnp.max(jnp.abs(out_f32 - ref)))
    assert jnp.allclose(out_f32, ref, atol=1e-3, rtol=1e-3), f"f32 max err {err32}"

    # Default path: bf16 activations/weights in HBM (halves the HBM-bound
    # inter-kernel traffic); f32 MXU accumulation and BN stats.  The looser
    # tolerance only reflects bf16 storage rounding across three convs + BNs.
    fwd_bf16 = jax.jit(functools.partial(bottleneck_forward, tile_m=128))
    out_bf16 = jax.block_until_ready(fwd_bf16(x, params))
    err16 = float(jnp.max(jnp.abs(out_bf16 - ref)))
    assert jnp.allclose(out_bf16, ref, atol=1e-1, rtol=1e-1), f"bf16 max err {err16}"

    print("KERNEL_OK")
</pallas_src>

<mosaic_0001>
module attributes {stable_mosaic.version = 11 : i64} {
  func.func @conv1x1_stats_kernel(%arg0: i32, %arg1: memref<128x128xf32, #tpu.memory_space<vmem>>, %arg2: memref<128x128xf32, #tpu.memory_space<vmem>>, %arg3: memref<128x128xf32, #tpu.memory_space<vmem>>, %arg4: memref<1x2x128xf32, #tpu.memory_space<vmem>>) attributes {dimension_semantics = [#tpu.dimension_semantics<parallel>], iteration_bounds = array<i64: 4>, scalar_prefetch = 0 : i64, scratch_operands = 0 : i64, tpu.core_type = #tpu.core_type<tc>, window_params = [{transform_indices = @transform_0, window_bounds = array<i64: 128, 128>}, {pipeline_mode = #tpu.pipeline_mode<synchronous>, transform_indices = @transform_1, window_bounds = array<i64: 128, 128>}, {transform_indices = @transform_2, window_bounds = array<i64: 128, 128>}, {transform_indices = @transform_3, window_bounds = array<i64: 1, 2, 128>}]} {
    %c0 = arith.constant 0 : index
    %c0_0 = arith.constant 0 : index
    %0 = vector.load %arg1[%c0, %c0_0] : memref<128x128xf32, #tpu.memory_space<vmem>>, vector<128x128xf32>
    %c0_1 = arith.constant 0 : index
    %c0_2 = arith.constant 0 : index
    %1 = vector.load %arg2[%c0_1, %c0_2] : memref<128x128xf32, #tpu.memory_space<vmem>>, vector<128x128xf32>
    %cst = arith.constant dense<0.000000e+00> : vector<128x128xf32>
    %2 = tpu.matmul %0, %1, %cst {dimension_numbers = #tpu.dot_dimension_numbers<[1], [0], [0], [1], [0, 0, 1, 1], [], []>} : vector<128x128xf32>, vector<128x128xf32>, vector<128x128xf32> -> vector<128x128xf32>
    %c0_3 = arith.constant 0 : index
    %c0_4 = arith.constant 0 : index
    %3 = vector.load %arg3[%c0_3, %c0_4] : memref<128x128xf32, #tpu.memory_space<vmem>>, vector<128x128xf32>
    tpu.vector_store %arg3[%c0_3, %c0_4], %2 {strides = array<i32>} : memref<128x128xf32, #tpu.memory_space<vmem>>, vector<128x128xf32>,
    %cst_5 = arith.constant dense<0.000000e+00> : vector<128xf32>
    %4 = vector.multi_reduction <add>, %2, %cst_5 [0] : vector<128x128xf32> to vector<128xf32>
    %5 = vector.shape_cast %4 : vector<128xf32> to vector<1x128xf32>
    %c0_6 = arith.constant 0 : index
    %c0_7 = arith.constant 0 : index
    %c0_8 = arith.constant 0 : index
    %6 = vector.load %arg4[%c0_6, %c0_7, %c0_8] : memref<1x2x128xf32, #tpu.memory_space<vmem>>, vector<1x1x128xf32>
    %7 = vector.shape_cast %6 : vector<1x1x128xf32> to vector<1x128xf32>
    %8 = vector.shape_cast %5 : vector<1x128xf32> to vector<1x1x128xf32>
    tpu.vector_store %arg4[%c0_6, %c0_7, %c0_8], %8 {strides = array<i32>} : memref<1x2x128xf32, #tpu.memory_space<vmem>>, vector<1x1x128xf32>,
    %9 = arith.mulf %2, %2 : vector<128x128xf32>
    %cst_9 = arith.constant dense<0.000000e+00> : vector<128xf32>
    %10 = vector.multi_reduction <add>, %9, %cst_9 [0] : vector<128x128xf32> to vector<128xf32>
    %11 = vector.shape_cast %10 : vector<128xf32> to vector<1x128xf32>
    %c0_10 = arith.constant 0 : index
    %c1 = arith.constant 1 : index
    %c0_11 = arith.constant 0 : index
    %12 = vector.load %arg4[%c0_10, %c1, %c0_11] : memref<1x2x128xf32, #tpu.memory_space<vmem>>, vector<1x1x128xf32>
    %13 = vector.shape_cast %12 : vector<1x1x128xf32> to vector<1x128xf32>
    %14 = vector.shape_cast %11 : vector<1x128xf32> to vector<1x1x128xf32>
    tpu.vector_store %arg4[%c0_10, %c1, %c0_11], %14 {strides = array<i32>} : memref<1x2x128xf32, #tpu.memory_space<vmem>>, vector<1x1x128xf32>,
    return
  }
  func.func @transform_0(%arg0: i32) -> (i32, i32) {
    %c0_i32 = arith.constant 0 : i32
    %c0_i32_0 = arith.constant 0 : i32
    return %arg0, %c0_i32 : i32, i32
  }
  func.func @transform_1(%arg0: i32) -> (i32, i32) {
    %c0_i32 = arith.constant 0 : i32
    %c0_i32_0 = arith.constant 0 : i32
    %c0_i32_1 = arith.constant 0 : i32
    return %c0_i32, %c0_i32_0 : i32, i32
  }
  func.func @transform_2(%arg0: i32) -> (i32, i32) {
    %c0_i32 = arith.constant 0 : i32
    %c0_i32_0 = arith.constant 0 : i32
    return %arg0, %c0_i32 : i32, i32
  }
  func.func @transform_3(%arg0: i32) -> (i32, i32, i32) {
    %c0_i32 = arith.constant 0 : i32
    %c0_i32_0 = arith.constant 0 : i32
    %c0_i32_1 = arith.constant 0 : i32
    return %arg0, %c0_i32, %c0_i32_0 : i32, i32, i32
  }
}

module attributes {stable_mosaic.version = 11 : i64} {
  func.func @bn_relu_conv3x3_stats_kernel(%arg0: i32, %arg1: memref<1x256x128xf32, #tpu.memory_space<vmem>>, %arg2: memref<1x128xf32, #tpu.memory_space<vmem>>, %arg3: memref<1x128xf32, #tpu.memory_space<vmem>>, %arg4: memref<9x128x128xf32, #tpu.memory_space<vmem>>, %arg5: memref<1x256x128xf32, #tpu.memory_space<vmem>>, %arg6: memref<1x2x128xf32, #tpu.memory_space<vmem>>, %arg7: memref<304x128xf32, #tpu.memory_space<vmem>>) attributes {dimension_semantics = [#tpu.dimension_semantics<parallel>], iteration_bounds = array<i64: 2>, scalar_prefetch = 0 : i64, scratch_operands = 1 : i64, tpu.core_type = #tpu.core_type<tc>, window_params = [{transform_indices = @transform_0, window_bounds = array<i64: 1, 256, 128>}, {pipeline_mode = #tpu.pipeline_mode<synchronous>, transform_indices = @transform_1, window_bounds = array<i64: 1, 128>}, {pipeline_mode = #tpu.pipeline_mode<synchronous>, transform_indices = @transform_2, window_bounds = array<i64: 1, 128>}, {pipeline_mode = #tpu.pipeline_mode<synchronous>, transform_indices = @transform_3, window_bounds = array<i64: 9, 128, 128>}, {transform_indices = @transform_4, window_bounds = array<i64: 1, 256, 128>}, {transform_indices = @transform_5, window_bounds = array<i64: 1, 2, 128>}]} {
    %cst = arith.constant 0.000000e+00 : f32
    %0 = vector.broadcast %cst : f32 to vector<24x128xf32>
    %c0 = arith.constant 0 : index
    %c0_0 = arith.constant 0 : index
    %1 = vector.load %arg7[%c0, %c0_0] : memref<304x128xf32, #tpu.memory_space<vmem>>, vector<24x128xf32>
    tpu.vector_store %arg7[%c0, %c0_0], %0 {strides = array<i32>} : memref<304x128xf32, #tpu.memory_space<vmem>>, vector<24x128xf32>,
    %cst_1 = arith.constant 0.000000e+00 : f32
    %2 = vector.broadcast %cst_1 : f32 to vector<24x128xf32>
    %c280 = arith.constant 280 : index
    %c0_2 = arith.constant 0 : index
    %3 = vector.load %arg7[%c280, %c0_2] : memref<304x128xf32, #tpu.memory_space<vmem>>, vector<24x128xf32>
    tpu.vector_store %arg7[%c280, %c0_2], %2 {strides = array<i32>} : memref<304x128xf32, #tpu.memory_space<vmem>>, vector<24x128xf32>,
    %c0_3 = arith.constant 0 : index
    %c0_4 = arith.constant 0 : index
    %c0_5 = arith.constant 0 : index
    %4 = vector.load %arg1[%c0_3, %c0_4, %c0_5] : memref<1x256x128xf32, #tpu.memory_space<vmem>>, vector<1x256x128xf32>
    %5 = vector.shape_cast %4 : vector<1x256x128xf32> to vector<256x128xf32>
    %c0_6 = arith.constant 0 : index
    %c0_7 = arith.constant 0 : index
    %6 = vector.load %arg2[%c0_6, %c0_7] : memref<1x128xf32, #tpu.memory_space<vmem>>, vector<1x128xf32>
    %7 = vector.broadcast %6 : vector<1x128xf32> to vector<256x128xf32>
    %8 = arith.mulf %5, %7 : vector<256x128xf32>
    %c0_8 = arith.constant 0 : index
    %c0_9 = arith.constant 0 : index
    %9 = vector.load %arg3[%c0_8, %c0_9] : memref<1x128xf32, #tpu.memory_space<vmem>>, vector<1x128xf32>
    %10 = vector.broadcast %9 : vector<1x128xf32> to vector<256x128xf32>
    %11 = arith.addf %8, %10 : vector<256x128xf32>
    %cst_10 = arith.constant 0.000000e+00 : f32
    %12 = vector.broadcast %cst_10 : f32 to vector<256x128xf32>
    %13 = arith.maximumf %11, %12 : vector<256x128xf32>
    %c24 = arith.constant 24 : index
    %c0_11 = arith.constant 0 : index
    %14 = vector.load %arg7[%c24, %c0_11] : memref<304x128xf32, #tpu.memory_space<vmem>>, vector<256x128xf32>
    tpu.vector_store %arg7[%c24, %c0_11], %13 {strides = array<i32>} : memref<304x128xf32, #tpu.memory_space<vmem>>, vector<256x128xf32>,
    %15 = tpu.iota {dimensions = array<i32: 0>} : vector<256x1xi32>
    %c16_i32 = arith.constant 16 : i32
    %c0_i32 = arith.constant 0 : i32
    %16 = arith.cmpi eq, %c16_i32, %c0_i32 : i32
    %c1_i32 = arith.constant 1 : i32
    %17 = arith.select %16, %c1_i32, %c16_i32 : i32
    %18 = vector.broadcast %17 : i32 to vector<256x1xi32>
    %19 = arith.remsi %15, %18 : vector<256x1xi32>
    %c0_i32_12 = arith.constant 0 : i32
    %20 = vector.broadcast %c0_i32_12 : i32 to vector<256x1xi32>
    %21 = arith.cmpi ne, %19, %20 : vector<256x1xi32>
    %c0_i32_13 = arith.constant 0 : i32
    %22 = vector.broadcast %c0_i32_13 : i32 to vector<256x1xi32>
    %23 = arith.cmpi slt, %19, %22 : vector<256x1xi32>
    %c0_i32_14 = arith.constant 0 : i32
    %24 = arith.cmpi slt, %17, %c0_i32_14 : i32
    %25 = vector.broadcast %24 : i1 to vector<256x1xi1>
    %26 = vector.broadcast %25 : vector<256x1xi1> to vector<256x1xi1>
    %27 = arith.xori %23, %26 : vector<256x1xi1>
    %28 = arith.andi %27, %21 : vector<256x1xi1>
    %29 = vector.broadcast %17 : i32 to vector<256x1xi32>
    %30 = arith.addi %19, %29 : vector<256x1xi32>
    %31 = arith.select %28, %30, %19 : vector<256x1xi1>, vector<256x1xi32>
    %c0_i32_15 = arith.constant 0 : i32
    %32 = vector.broadcast %c0_i32_15 : i32 to vector<256x1xi32>
    %33 = arith.cmpi ne, %31, %32 : vector<256x1xi32>
    %34 = arith.extui %33 : vector<256x1xi1> to vector<256x1xi32>
    %35 = arith.sitofp %34 : vector<256x1xi32> to vector<256x1xf32>
    %c15_i32 = arith.constant 15 : i32
    %36 = vector.broadcast %c15_i32 : i32 to vector<256x1xi32>
    %37 = arith.cmpi ne, %31, %36 : vector<256x1xi32>
    %38 = arith.extui %37 : vector<256x1xi1> to vector<256x1xi32>
    %39 = arith.sitofp %38 : vector<256x1xi32> to vector<256x1xf32>
    %cst_16 = arith.constant 0.000000e+00 : f32
    %40 = vector.broadcast %cst_16 : f32 to vector<1x128xf32>
    %cst_17 = arith.constant 0.000000e+00 : f32
    %41 = vector.broadcast %cst_17 : f32 to vector<1x128xf32>
    %c0_i32_18 = arith.constant 0 : i32
    %c256_i32 = arith.constant 256 : i32
    %42 = arith.muli %c0_i32_18, %c256_i32 : i32
    %43 = tpu.assume_multiple %42, 8 : i32
    %c24_i32 = arith.constant 24 : i32
    %44 = arith.addi %c24_i32, %43 : i32
    %c-16_i32 = arith.constant -16 : i32
    %45 = arith.addi %44, %c-16_i32 : i32
    %c-1_i32 = arith.constant -1 : i32
    %46 = arith.addi %45, %c-1_i32 : i32
    %47 = arith.index_cast %46 : i32 to index
    %c0_19 = arith.constant 0 : index
    %48 = vector.load %arg7[%47, %c0_19] : memref<304x128xf32, #tpu.memory_space<vmem>>, vector<256x128xf32>
    %49 = vector.broadcast %35 : vector<256x1xf32> to vector<256x128xf32>
    %50 = arith.mulf %48, %49 : vector<256x128xf32>
    %c0_20 = arith.constant 0 : index
    %c0_21 = arith.constant 0 : index
    %c0_22 = arith.constant 0 : index
    %51 = vector.load %arg4[%c0_20, %c0_21, %c0_22] : memref<9x128x128xf32, #tpu.memory_space<vmem>>, vector<1x128x128xf32>
    %52 = vector.shape_cast %51 : vector<1x128x128xf32> to vector<128x128xf32>
    %cst_23 = arith.constant dense<0.000000e+00> : vector<256x128xf32>
    %53 = tpu.matmul %50, %52, %cst_23 {dimension_numbers = #tpu.dot_dimension_numbers<[1], [0], [0], [1], [0, 0, 1, 1], [], []>} : vector<256x128xf32>, vector<128x128xf32>, vector<256x128xf32> -> vector<256x128xf32>
    %c24_i32_24 = arith.constant 24 : i32
    %54 = arith.addi %c24_i32_24, %43 : i32
    %c-16_i32_25 = arith.constant -16 : i32
    %55 = arith.addi %54, %c-16_i32_25 : i32
    %c0_i32_26 = arith.constant 0 : i32
    %56 = arith.addi %55, %c0_i32_26 : i32
    %57 = arith.index_cast %56 : i32 to index
    %c0_27 = arith.constant 0 : index
    %58 = vector.load %arg7[%57, %c0_27] : memref<304x128xf32, #tpu.memory_space<vmem>>, vector<256x128xf32>
    %c1 = arith.constant 1 : index
    %c0_28 = arith.constant 0 : index
    %c0_29 = arith.constant 0 : index
    %59 = vector.load %arg4[%c1, %c0_28, %c0_29] : memref<9x128x128xf32, #tpu.memory_space<vmem>>, vector<1x128x128xf32>
    %60 = vector.shape_cast %59 : vector<1x128x128xf32> to vector<128x128xf32>
    %cst_30 = arith.constant dense<0.000000e+00> : vector<256x128xf32>
    %61 = tpu.matmul %58, %60, %cst_30 {dimension_numbers = #tpu.dot_dimension_numbers<[1], [0], [0], [1], [0, 0, 1, 1], [], []>} : vector<256x128xf32>, vector<128x128xf32>, vector<256x128xf32> -> vector<256x128xf32>
    %62 = arith.addf %53, %61 : vector<256x128xf32>
    %c24_i32_31 = arith.constant 24 : i32
    %63 = arith.addi %c24_i32_31, %43 : i32
    %c-16_i32_32 = arith.constant -16 : i32
    %64 = arith.addi %63, %c-16_i32_32 : i32
    %c1_i32_33 = arith.constant 1 : i32
    %65 = arith.addi %64, %c1_i32_33 : i32
    %66 = arith.index_cast %65 : i32 to index
    %c0_34 = arith.constant 0 : index
    %67 = vector.load %arg7[%66, %c0_34] : memref<304x128xf32, #tpu.memory_space<vmem>>, vector<256x128xf32>
    %68 = vector.broadcast %39 : vector<256x1xf32> to vector<256x128xf32>
    %69 = arith.mulf %67, %68 : vector<256x128xf32>
    %c2 = arith.constant 2 : index
    %c0_35 = arith.constant 0 : index
    %c0_36 = arith.constant 0 : index
    %70 = vector.load %arg4[%c2, %c0_35, %c0_36] : memref<9x128x128xf32, #tpu.memory_space<vmem>>, vector<1x128x128xf32>
    %71 = vector.shape_cast %70 : vector<1x128x128xf32> to vector<128x128xf32>
    %cst_37 = arith.constant dense<0.000000e+00> : vector<256x128xf32>
    %72 = tpu.matmul %69, %71, %cst_37 {dimension_numbers = #tpu.dot_dimension_numbers<[1], [0], [0], [1], [0, 0, 1, 1], [], []>} : vector<256x128xf32>, vector<128x128xf32>, vector<256x128xf32> -> vector<256x128xf32>
    %73 = arith.addf %62, %72 : vector<256x128xf32>
    %c24_i32_38 = arith.constant 24 : i32
    %74 = arith.addi %c24_i32_38, %43 : i32
    %c0_i32_39 = arith.constant 0 : i32
    %75 = arith.addi %74, %c0_i32_39 : i32
    %c-1_i32_40 = arith.constant -1 : i32
    %76 = arith.addi %75, %c-1_i32_40 : i32
    %77 = arith.index_cast %76 : i32 to index
    %c0_41 = arith.constant 0 : index
    %78 = vector.load %arg7[%77, %c0_41] : memref<304x128xf32, #tpu.memory_space<vmem>>, vector<256x128xf32>
    %79 = vector.broadcast %35 : vector<256x1xf32> to vector<256x128xf32>
    %80 = arith.mulf %78, %79 : vector<256x128xf32>
    %c3 = arith.constant 3 : index
    %c0_42 = arith.constant 0 : index
    %c0_43 = arith.constant 0 : index
    %81 = vector.load %arg4[%c3, %c0_42, %c0_43] : memref<9x128x128xf32, #tpu.memory_space<vmem>>, vector<1x128x128xf32>
    %82 = vector.shape_cast %81 : vector<1x128x128xf32> to vector<128x128xf32>
    %cst_44 = arith.constant dense<0.000000e+00> : vector<256x128xf32>
    %83 = tpu.matmul %80, %82, %cst_44 {dimension_numbers = #tpu.dot_dimension_numbers<[1], [0], [0], [1], [0, 0, 1, 1], [], []>} : vector<256x128xf32>, vector<128x128xf32>, vector<256x128xf32> -> vector<256x128xf32>
    %84 = arith.addf %73, %83 : vector<256x128xf32>
    %c24_i32_45 = arith.constant 24 : i32
    %85 = arith.addi %c24_i32_45, %43 : i32
    %c0_i32_46 = arith.constant 0 : i32
    %86 = arith.addi %85, %c0_i32_46 : i32
    %c0_i32_47 = arith.constant 0 : i32
    %87 = arith.addi %86, %c0_i32_47 : i32
    %88 = arith.index_cast %87 : i32 to index
    %c0_48 = arith.constant 0 : index
    %89 = vector.load %arg7[%88, %c0_48] : memref<304x128xf32, #tpu.memory_space<vmem>>, vector<256x128xf32>
    %c4 = arith.constant 4 : index
    %c0_49 = arith.constant 0 : index
    %c0_50 = arith.constant 0 : index
    %90 = vector.load %arg4[%c4, %c0_49, %c0_50] : memref<9x128x128xf32, #tpu.memory_space<vmem>>, vector<1x128x128xf32>
    %91 = vector.shape_cast %90 : vector<1x128x128xf32> to vector<128x128xf32>
    %cst_51 = arith.constant dense<0.000000e+00> : vector<256x128xf32>
    %92 = tpu.matmul %89, %91, %cst_51 {dimension_numbers = #tpu.dot_dimension_numbers<[1], [0], [0], [1], [0, 0, 1, 1], [], []>} : vector<256x128xf32>, vector<128x128xf32>, vector<256x128xf32> -> vector<256x128xf32>
    %93 = arith.addf %84, %92 : vector<256x128xf32>
    %c24_i32_52 = arith.constant 24 : i32
    %94 = arith.addi %c24_i32_52, %43 : i32
    %c0_i32_53 = arith.constant 0 : i32
    %95 = arith.addi %94, %c0_i32_53 : i32
    %c1_i32_54 = arith.constant 1 : i32
    %96 = arith.addi %95, %c1_i32_54 : i32
    %97 = arith.index_cast %96 : i32 to index
    %c0_55 = arith.constant 0 : index
    %98 = vector.load %arg7[%97, %c0_55] : memref<304x128xf32, #tpu.memory_space<vmem>>, vector<256x128xf32>
    %99 = vector.broadcast %39 : vector<256x1xf32> to vector<256x128xf32>
    %100 = arith.mulf %98, %99 : vector<256x128xf32>
    %c5 = arith.constant 5 : index
    %c0_56 = arith.constant 0 : index
    %c0_57 = arith.constant 0 : index
    %101 = vector.load %arg4[%c5, %c0_56, %c0_57] : memref<9x128x128xf32, #tpu.memory_space<vmem>>, vector<1x128x128xf32>
    %102 = vector.shape_cast %101 : vector<1x128x128xf32> to vector<128x128xf32>
    %cst_58 = arith.constant dense<0.000000e+00> : vector<256x128xf32>
    %103 = tpu.matmul %100, %102, %cst_58 {dimension_numbers = #tpu.dot_dimension_numbers<[1], [0], [0], [1], [0, 0, 1, 1], [], []>} : vector<256x128xf32>, vector<128x128xf32>, vector<256x128xf32> -> vector<256x128xf32>
    %104 = arith.addf %93, %103 : vector<256x128xf32>
    %c24_i32_59 = arith.constant 24 : i32
    %105 = arith.addi %c24_i32_59, %43 : i32
    %c16_i32_60 = arith.constant 16 : i32
    %106 = arith.addi %105, %c16_i32_60 : i32
    %c-1_i32_61 = arith.constant -1 : i32
    %107 = arith.addi %106, %c-1_i32_61 : i32
    %108 = arith.index_cast %107 : i32 to index
    %c0_62 = arith.constant 0 : index
    %109 = vector.load %arg7[%108, %c0_62] : memref<304x128xf32, #tpu.memory_space<vmem>>, vector<256x128xf32>
    %110 = vector.broadcast %35 : vector<256x1xf32> to vector<256x128xf32>
    %111 = arith.mulf %109, %110 : vector<256x128xf32>
    %c6 = arith.constant 6 : index
    %c0_63 = arith.constant 0 : index
    %c0_64 = arith.constant 0 : index
    %112 = vector.load %arg4[%c6, %c0_63, %c0_64] : memref<9x128x128xf32, #tpu.memory_space<vmem>>, vector<1x128x128xf32>
    %113 = vector.shape_cast %112 : vector<1x128x128xf32> to vector<128x128xf32>
    %cst_65 = arith.constant dense<0.000000e+00> : vector<256x128xf32>
    %114 = tpu.matmul %111, %113, %cst_65 {dimension_numbers = #tpu.dot_dimension_numbers<[1], [0], [0], [1], [0, 0, 1, 1], [], []>} : vector<256x128xf32>, vector<128x128xf32>, vector<256x128xf32> -> vector<256x128xf32>
    %115 = arith.addf %104, %114 : vector<256x128xf32>
    %c24_i32_66 = arith.constant 24 : i32
    %116 = arith.addi %c24_i32_66, %43 : i32
    %c16_i32_67 = arith.constant 16 : i32
    %117 = arith.addi %116, %c16_i32_67 : i32
    %c0_i32_68 = arith.constant 0 : i32
    %118 = arith.addi %117, %c0_i32_68 : i32
    %119 = arith.index_cast %118 : i32 to index
    %c0_69 = arith.constant 0 : index
    %120 = vector.load %arg7[%119, %c0_69] : memref<304x128xf32, #tpu.memory_space<vmem>>, vector<256x128xf32>
    %c7 = arith.constant 7 : index
    %c0_70 = arith.constant 0 : index
    %c0_71 = arith.constant 0 : index
    %121 = vector.load %arg4[%c7, %c0_70, %c0_71] : memref<9x128x128xf32, #tpu.memory_space<vmem>>, vector<1x128x128xf32>
    %122 = vector.shape_cast %121 : vector<1x128x128xf32> to vector<128x128xf32>
    %cst_72 = arith.constant dense<0.000000e+00> : vector<256x128xf32>
    %123 = tpu.matmul %120, %122, %cst_72 {dimension_numbers = #tpu.dot_dimension_numbers<[1], [0], [0], [1], [0, 0, 1, 1], [], []>} : vector<256x128xf32>, vector<128x128xf32>, vector<256x128xf32> -> vector<256x128xf32>
    %124 = arith.addf %115, %123 : vector<256x128xf32>
    %c24_i32_73 = arith.constant 24 : i32
    %125 = arith.addi %c24_i32_73, %43 : i32
    %c16_i32_74 = arith.constant 16 : i32
    %126 = arith.addi %125, %c16_i32_74 : i32
    %c1_i32_75 = arith.constant 1 : i32
    %127 = arith.addi %126, %c1_i32_75 : i32
    %128 = arith.index_cast %127 : i32 to index
    %c0_76 = arith.constant 0 : index
    %129 = vector.load %arg7[%128, %c0_76] : memref<304x128xf32, #tpu.memory_space<vmem>>, vector<256x128xf32>
    %130 = vector.broadcast %39 : vector<256x1xf32> to vector<256x128xf32>
    %131 = arith.mulf %129, %130 : vector<256x128xf32>
    %c8 = arith.constant 8 : index
    %c0_77 = arith.constant 0 : index
    %c0_78 = arith.constant 0 : index
    %132 = vector.load %arg4[%c8, %c0_77, %c0_78] : memref<9x128x128xf32, #tpu.memory_space<vmem>>, vector<1x128x128xf32>
    %133 = vector.shape_cast %132 : vector<1x128x128xf32> to vector<128x128xf32>
    %cst_79 = arith.constant dense<0.000000e+00> : vector<256x128xf32>
    %134 = tpu.matmul %131, %133, %cst_79 {dimension_numbers = #tpu.dot_dimension_numbers<[1], [0], [0], [1], [0, 0, 1, 1], [], []>} : vector<256x128xf32>, vector<128x128xf32>, vector<256x128xf32> -> vector<256x128xf32>
    %135 = arith.addf %124, %134 : vector<256x128xf32>
    %c0_80 = arith.constant 0 : index
    %136 = arith.index_cast %43 : i32 to index
    %c0_81 = arith.constant 0 : index
    %137 = vector.load %arg5[%c0_80, %136, %c0_81] : memref<1x256x128xf32, #tpu.memory_space<vmem>>, vector<1x256x128xf32>
    %138 = vector.shape_cast %137 : vector<1x256x128xf32> to vector<256x128xf32>
    %139 = vector.shape_cast %135 : vector<256x128xf32> to vector<1x256x128xf32>
    tpu.vector_store %arg5[%c0_80, %136, %c0_81], %139 {strides = array<i32>} : memref<1x256x128xf32, #tpu.memory_space<vmem>>, vector<1x256x128xf32>,
    %cst_82 = arith.constant dense<0.000000e+00> : vector<128xf32>
    %140 = vector.multi_reduction <add>, %135, %cst_82 [0] : vector<256x128xf32> to vector<128xf32>
    %141 = vector.shape_cast %140 : vector<128xf32> to vector<1x128xf32>
    %142 = arith.addf %40, %141 : vector<1x128xf32>
    %143 = arith.mulf %135, %135 : vector<256x128xf32>
    %cst_83 = arith.constant dense<0.000000e+00> : vector<128xf32>
    %144 = vector.multi_reduction <add>, %143, %cst_83 [0] : vector<256x128xf32> to vector<128xf32>
    %145 = vector.shape_cast %144 : vector<128xf32> to vector<1x128xf32>
    %146 = arith.addf %41, %145 : vector<1x128xf32>
    %c1_i32_84 = arith.constant 1 : i32
    %c0_85 = arith.constant 0 : index
    %c0_86 = arith.constant 0 : index
    %c0_87 = arith.constant 0 : index
    %147 = vector.load %arg6[%c0_85, %c0_86, %c0_87] : memref<1x2x128xf32, #tpu.memory_space<vmem>>, vector<1x1x128xf32>
    %148 = vector.shape_cast %147 : vector<1x1x128xf32> to vector<1x128xf32>
    %149 = vector.shape_cast %142 : vector<1x128xf32> to vector<1x1x128xf32>
    tpu.vector_store %arg6[%c0_85, %c0_86, %c0_87], %149 {strides = array<i32>} : memref<1x2x128xf32, #tpu.memory_space<vmem>>, vector<1x1x128xf32>,
    %c0_88 = arith.constant 0 : index
    %c1_89 = arith.constant 1 : index
    %c0_90 = arith.constant 0 : index
    %150 = vector.load %arg6[%c0_88, %c1_89, %c0_90] : memref<1x2x128xf32, #tpu.memory_space<vmem>>, vector<1x1x128xf32>
    %151 = vector.shape_cast %150 : vector<1x1x128xf32> to vector<1x128xf32>
    %152 = vector.shape_cast %146 : vector<1x128xf32> to vector<1x1x128xf32>
    tpu.vector_store %arg6[%c0_88, %c1_89, %c0_90], %152 {strides = array<i32>} : memref<1x2x128xf32, #tpu.memory_space<vmem>>, vector<1x1x128xf32>,
    return
  }
  func.func @transform_0(%arg0: i32) -> (i32, i32, i32) {
    %c0_i32 = arith.constant 0 : i32
    %c0_i32_0 = arith.constant 0 : i32
    %c0_i32_1 = arith.constant 0 : i32
    return %arg0, %c0_i32, %c0_i32_0 : i32, i32, i32
  }
  func.func @transform_1(%arg0: i32) -> (i32, i32) {
    %c0_i32 = arith.constant 0 : i32
    %c0_i32_0 = arith.constant 0 : i32
    %c0_i32_1 = arith.constant 0 : i32
    return %c0_i32, %c0_i32_0 : i32, i32
  }
  func.func @transform_2(%arg0: i32) -> (i32, i32) {
    %c0_i32 = arith.constant 0 : i32
    %c0_i32_0 = arith.constant 0 : i32
    %c0_i32_1 = arith.constant 0 : i32
    return %c0_i32, %c0_i32_0 : i32, i32
  }
  func.func @transform_3(%arg0: i32) -> (i32, i32, i32) {
    %c0_i32 = arith.constant 0 : i32
    %c0_i32_0 = arith.constant 0 : i32
    %c0_i32_1 = arith.constant 0 : i32
    %c0_i32_2 = arith.constant 0 : i32
    return %c0_i32, %c0_i32_0, %c0_i32_1 : i32, i32, i32
  }
  func.func @transform_4(%arg0: i32) -> (i32, i32, i32) {
    %c0_i32 = arith.constant 0 : i32
    %c0_i32_0 = arith.constant 0 : i32
    %c0_i32_1 = arith.constant 0 : i32
    return %arg0, %c0_i32, %c0_i32_0 : i32, i32, i32
  }
  func.func @transform_5(%arg0: i32) -> (i32, i32, i32) {
    %c0_i32 = arith.constant 0 : i32
    %c0_i32_0 = arith.constant 0 : i32
    %c0_i32_1 = arith.constant 0 : i32
    return %arg0, %c0_i32, %c0_i32_0 : i32, i32, i32
  }
}

module attributes {stable_mosaic.version = 11 : i64} {
  func.func @bn_add_relu_kernel(%arg0: i32, %arg1: memref<128x128xf32, #tpu.memory_space<vmem>>, %arg2: memref<128x128xf32, #tpu.memory_space<vmem>>, %arg3: memref<1x128xf32, #tpu.memory_space<vmem>>, %arg4: memref<1x128xf32, #tpu.memory_space<vmem>>, %arg5: memref<128x128xf32, #tpu.memory_space<vmem>>) attributes {dimension_semantics = [#tpu.dimension_semantics<parallel>], iteration_bounds = array<i64: 4>, scalar_prefetch = 0 : i64, scratch_operands = 0 : i64, tpu.core_type = #tpu.core_type<tc>, window_params = [{transform_indices = @transform_0, window_bounds = array<i64: 128, 128>}, {transform_indices = @transform_1, window_bounds = array<i64: 128, 128>}, {pipeline_mode = #tpu.pipeline_mode<synchronous>, transform_indices = @transform_2, window_bounds = array<i64: 1, 128>}, {pipeline_mode = #tpu.pipeline_mode<synchronous>, transform_indices = @transform_3, window_bounds = array<i64: 1, 128>}, {transform_indices = @transform_4, window_bounds = array<i64: 128, 128>}]} {
    %c0 = arith.constant 0 : index
    %c0_0 = arith.constant 0 : index
    %0 = vector.load %arg1[%c0, %c0_0] : memref<128x128xf32, #tpu.memory_space<vmem>>, vector<128x128xf32>
    %c0_1 = arith.constant 0 : index
    %c0_2 = arith.constant 0 : index
    %1 = vector.load %arg3[%c0_1, %c0_2] : memref<1x128xf32, #tpu.memory_space<vmem>>, vector<1x128xf32>
    %2 = vector.broadcast %1 : vector<1x128xf32> to vector<128x128xf32>
    %3 = arith.mulf %0, %2 : vector<128x128xf32>
    %c0_3 = arith.constant 0 : index
    %c0_4 = arith.constant 0 : index
    %4 = vector.load %arg4[%c0_3, %c0_4] : memref<1x128xf32, #tpu.memory_space<vmem>>, vector<1x128xf32>
    %5 = vector.broadcast %4 : vector<1x128xf32> to vector<128x128xf32>
    %6 = arith.addf %3, %5 : vector<128x128xf32>
    %c0_5 = arith.constant 0 : index
    %c0_6 = arith.constant 0 : index
    %7 = vector.load %arg2[%c0_5, %c0_6] : memref<128x128xf32, #tpu.memory_space<vmem>>, vector<128x128xf32>
    %8 = arith.addf %6, %7 : vector<128x128xf32>
    %cst = arith.constant 0.000000e+00 : f32
    %9 = vector.broadcast %cst : f32 to vector<128x128xf32>
    %10 = arith.maximumf %8, %9 : vector<128x128xf32>
    %c0_7 = arith.constant 0 : index
    %c0_8 = arith.constant 0 : index
    %11 = vector.load %arg5[%c0_7, %c0_8] : memref<128x128xf32, #tpu.memory_space<vmem>>, vector<128x128xf32>
    tpu.vector_store %arg5[%c0_7, %c0_8], %10 {strides = array<i32>} : memref<128x128xf32, #tpu.memory_space<vmem>>, vector<128x128xf32>,
    return
  }
  func.func @transform_0(%arg0: i32) -> (i32, i32) {
    %c0_i32 = arith.constant 0 : i32
    %c0_i32_0 = arith.constant 0 : i32
    return %arg0, %c0_i32 : i32, i32
  }
  func.func @transform_1(%arg0: i32) -> (i32, i32) {
    %c0_i32 = arith.constant 0 : i32
    %c0_i32_0 = arith.constant 0 : i32
    return %arg0, %c0_i32 : i32, i32
  }
  func.func @transform_2(%arg0: i32) -> (i32, i32) {
    %c0_i32 = arith.constant 0 : i32
    %c0_i32_0 = arith.constant 0 : i32
    %c0_i32_1 = arith.constant 0 : i32
    return %c0_i32, %c0_i32_0 : i32, i32
  }
  func.func @transform_3(%arg0: i32) -> (i32, i32) {
    %c0_i32 = arith.constant 0 : i32
    %c0_i32_0 = arith.constant 0 : i32
    %c0_i32_1 = arith.constant 0 : i32
    return %c0_i32, %c0_i32_0 : i32, i32
  }
  func.func @transform_4(%arg0: i32) -> (i32, i32) {
    %c0_i32 = arith.constant 0 : i32
    %c0_i32_0 = arith.constant 0 : i32
    return %arg0, %c0_i32 : i32, i32
  }
}

module attributes {stable_mosaic.version = 11 : i64} {
  func.func @bn_relu_conv1x1_stats_kernel(%arg0: i32, %arg1: memref<128x128xf32, #tpu.memory_space<vmem>>, %arg2: memref<1x128xf32, #tpu.memory_space<vmem>>, %arg3: memref<1x128xf32, #tpu.memory_space<vmem>>, %arg4: memref<128x128xf32, #tpu.memory_space<vmem>>, %arg5: memref<128x128xf32, #tpu.memory_space<vmem>>, %arg6: memref<1x2x128xf32, #tpu.memory_space<vmem>>) attributes {dimension_semantics = [#tpu.dimension_semantics<parallel>], iteration_bounds = array<i64: 4>, scalar_prefetch = 0 : i64, scratch_operands = 0 : i64, tpu.core_type = #tpu.core_type<tc>, window_params = [{transform_indices = @transform_0, window_bounds = array<i64: 128, 128>}, {pipeline_mode = #tpu.pipeline_mode<synchronous>, transform_indices = @transform_1, window_bounds = array<i64: 1, 128>}, {pipeline_mode = #tpu.pipeline_mode<synchronous>, transform_indices = @transform_2, window_bounds = array<i64: 1, 128>}, {pipeline_mode = #tpu.pipeline_mode<synchronous>, transform_indices = @transform_3, window_bounds = array<i64: 128, 128>}, {transform_indices = @transform_4, window_bounds = array<i64: 128, 128>}, {transform_indices = @transform_5, window_bounds = array<i64: 1, 2, 128>}]} {
    %c0 = arith.constant 0 : index
    %c0_0 = arith.constant 0 : index
    %0 = vector.load %arg1[%c0, %c0_0] : memref<128x128xf32, #tpu.memory_space<vmem>>, vector<128x128xf32>
    %c0_1 = arith.constant 0 : index
    %c0_2 = arith.constant 0 : index
    %1 = vector.load %arg2[%c0_1, %c0_2] : memref<1x128xf32, #tpu.memory_space<vmem>>, vector<1x128xf32>
    %2 = vector.broadcast %1 : vector<1x128xf32> to vector<128x128xf32>
    %3 = arith.mulf %0, %2 : vector<128x128xf32>
    %c0_3 = arith.constant 0 : index
    %c0_4 = arith.constant 0 : index
    %4 = vector.load %arg3[%c0_3, %c0_4] : memref<1x128xf32, #tpu.memory_space<vmem>>, vector<1x128xf32>
    %5 = vector.broadcast %4 : vector<1x128xf32> to vector<128x128xf32>
    %6 = arith.addf %3, %5 : vector<128x128xf32>
    %cst = arith.constant 0.000000e+00 : f32
    %7 = vector.broadcast %cst : f32 to vector<128x128xf32>
    %8 = arith.maximumf %6, %7 : vector<128x128xf32>
    %c0_5 = arith.constant 0 : index
    %c0_6 = arith.constant 0 : index
    %9 = vector.load %arg4[%c0_5, %c0_6] : memref<128x128xf32, #tpu.memory_space<vmem>>, vector<128x128xf32>
    %cst_7 = arith.constant dense<0.000000e+00> : vector<128x128xf32>
    %10 = tpu.matmul %8, %9, %cst_7 {dimension_numbers = #tpu.dot_dimension_numbers<[1], [0], [0], [1], [0, 0, 1, 1], [], []>} : vector<128x128xf32>, vector<128x128xf32>, vector<128x128xf32> -> vector<128x128xf32>
    %c0_8 = arith.constant 0 : index
    %c0_9 = arith.constant 0 : index
    %11 = vector.load %arg5[%c0_8, %c0_9] : memref<128x128xf32, #tpu.memory_space<vmem>>, vector<128x128xf32>
    tpu.vector_store %arg5[%c0_8, %c0_9], %10 {strides = array<i32>} : memref<128x128xf32, #tpu.memory_space<vmem>>, vector<128x128xf32>,
    %cst_10 = arith.constant dense<0.000000e+00> : vector<128xf32>
    %12 = vector.multi_reduction <add>, %10, %cst_10 [0] : vector<128x128xf32> to vector<128xf32>
    %13 = vector.shape_cast %12 : vector<128xf32> to vector<1x128xf32>
    %c0_11 = arith.constant 0 : index
    %c0_12 = arith.constant 0 : index
    %c0_13 = arith.constant 0 : index
    %14 = vector.load %arg6[%c0_11, %c0_12, %c0_13] : memref<1x2x128xf32, #tpu.memory_space<vmem>>, vector<1x1x128xf32>
    %15 = vector.shape_cast %14 : vector<1x1x128xf32> to vector<1x128xf32>
    %16 = vector.shape_cast %13 : vector<1x128xf32> to vector<1x1x128xf32>
    tpu.vector_store %arg6[%c0_11, %c0_12, %c0_13], %16 {strides = array<i32>} : memref<1x2x128xf32, #tpu.memory_space<vmem>>, vector<1x1x128xf32>,
    %17 = arith.mulf %10, %10 : vector<128x128xf32>
    %cst_14 = arith.constant dense<0.000000e+00> : vector<128xf32>
    %18 = vector.multi_reduction <add>, %17, %cst_14 [0] : vector<128x128xf32> to vector<128xf32>
    %19 = vector.shape_cast %18 : vector<128xf32> to vector<1x128xf32>
    %c0_15 = arith.constant 0 : index
    %c1 = arith.constant 1 : index
    %c0_16 = arith.constant 0 : index
    %20 = vector.load %arg6[%c0_15, %c1, %c0_16] : memref<1x2x128xf32, #tpu.memory_space<vmem>>, vector<1x1x128xf32>
    %21 = vector.shape_cast %20 : vector<1x1x128xf32> to vector<1x128xf32>
    %22 = vector.shape_cast %19 : vector<1x128xf32> to vector<1x1x128xf32>
    tpu.vector_store %arg6[%c0_15, %c1, %c0_16], %22 {strides = array<i32>} : memref<1x2x128xf32, #tpu.memory_space<vmem>>, vector<1x1x128xf32>,
    return
  }
  func.func @transform_0(%arg0: i32) -> (i32, i32) {
    %c0_i32 = arith.constant 0 : i32
    %c0_i32_0 = arith.constant 0 : i32
    return %arg0, %c0_i32 : i32, i32
  }
  func.func @transform_1(%arg0: i32) -> (i32, i32) {
    %c0_i32 = arith.constant 0 : i32
    %c0_i32_0 = arith.constant 0 : i32
    %c0_i32_1 = arith.constant 0 : i32
    return %c0_i32, %c0_i32_0 : i32, i32
  }
  func.func @transform_2(%arg0: i32) -> (i32, i32) {
    %c0_i32 = arith.constant 0 : i32
    %c0_i32_0 = arith.constant 0 : i32
    %c0_i32_1 = arith.constant 0 : i32
    return %c0_i32, %c0_i32_0 : i32, i32
  }
  func.func @transform_3(%arg0: i32) -> (i32, i32) {
    %c0_i32 = arith.constant 0 : i32
    %c0_i32_0 = arith.constant 0 : i32
    %c0_i32_1 = arith.constant 0 : i32
    return %c0_i32, %c0_i32_0 : i32, i32
  }
  func.func @transform_4(%arg0: i32) -> (i32, i32) {
    %c0_i32 = arith.constant 0 : i32
    %c0_i32_0 = arith.constant 0 : i32
    return %arg0, %c0_i32 : i32, i32
  }
  func.func @transform_5(%arg0: i32) -> (i32, i32, i32) {
    %c0_i32 = arith.constant 0 : i32
    %c0_i32_0 = arith.constant 0 : i32
    %c0_i32_1 = arith.constant 0 : i32
    return %arg0, %c0_i32, %c0_i32_0 : i32, i32, i32
  }
}

</mosaic_0001>

<llo_original>
// kernel: bottleneck_forward.4
$region0: #{bottleneck_forward.4}
  #allocation0 [shape = 'u32[]', space=smem, size = 0x4, offset = 0x4, fixed_abs, tag = 'smem constant byte address 0x4 - core index']
  #allocation1 [shape = 'u32[144,128]{1,0:T(1,128)}', space=vmem, size = 0x12000, scoped, tag = 'internal scratch']
  %s0 = inlined_call_operand.vmem [shape: f32[512,128], index: 0, kind: input, shape index: {}]
  %s1 = inlined_call_operand.vmem [shape: f32[128,128], index: 1, kind: input, shape index: {}]
  %s2 = inlined_call_operand.vmem [shape: f32[512,128], index: 2, kind: output, shape index: {0}]
  %s3 = inlined_call_operand.vmem [shape: f32[4,2,128], index: 3, kind: output, shape index: {1}]
  %4 = xla_tuple %s2, %s3
  %s5 = sld [smem:[#allocation0]]
  $region49: #{bottleneck_forward.4} parent=0
    _
  %s7 = ssub.s32 1, %s5
  %s8 = scalar_select 0, %s7, %s5
  loop: start=0, step=1, limit=6
  $region2: #{bottleneck_forward.4} parent=0 // loop_pre_header
    _
  $region3: #{bottleneck_forward.4} parent=0 // loop_header
    %s10 = sphi 0, %s14
    %p11 = scmp.ge.s32.totalorder %s10, 6
    %s20 = sphi 0, %s22
    %s23 = sphi 0, %s20
    %s24 = sphi 0, %s23
    %s40 = sphi 0, %s24
    %s44 = sphi 0, %s44
    %s46 = sphi 0, %s44
    %s47 = sphi 0, %s46
    %s61 = sphi 0, %s47
    %s67 = sphi 0, %s69
    %s70 = sphi 0, %s67
    %s71 = sphi 0, %s70
    %s87 = sphi 0, %s71
    %s93 = sphi 0, %s95
    %s96 = sphi 0, %s93
    %s97 = sphi 0, %s96
    %s113 = sphi 0, %s97
  $region4: #{bottleneck_forward.4} parent=0 // loop_header_branch
    %13 = sbr.rel (%p11) target = $region8
  $region5: #{bottleneck_forward.4} parent=0 // loop_body
    %s15 = ssub.s32 %s10, 1
    %s16 = ssub.s32 %s10, 2
    %s17 = sadd.s32 %s10, 1
    %s18 = ssub.s32 %s10, %s17
    %p19 = scmp.eq.s32.totalorder %s18, 0
    %s21 = sadd.s32 %s20, 1
    %s22 = scalar_select %p19, %s20, %s21
    %p25 = pneg %p19
    %p26 = scmp.eq.s32.totalorder %s10, 3
    %p27 = por %p25, %p26
    %p28 = scmp.ne.s32.totalorder %s20, %s23
    %p29 = scmp.eq.s32.totalorder %s10, 0
    %p30 = por %p28, %p29
    %p31 = scmp.ne.s32.totalorder %s20, %s23
    %p32 = scmp.eq.s32.totalorder %s15, 3
    %p33 = por %p31, %p32
    %p34 = scmp.ne.s32.totalorder %s23, %s24
    %p35 = scmp.eq.s32.totalorder %s15, 0
    %p36 = por %p34, %p35
    %p37 = scmp.ne.s32.totalorder %s23, %s24
    %p38 = scmp.eq.s32.totalorder %s16, 3
    %p39 = por %p37, %p38
    %p41 = scmp.ne.s32.totalorder %s24, %s40
    %p42 = scmp.eq.s32.totalorder %s16, 0
    %p43 = por %p41, %p42
    %s45 = sadd.s32 %s44, 1
    %p48 = scmp.eq.s32.totalorder %s10, 3
    %p49 = scmp.ne.s32.totalorder %s44, %s46
    %p50 = scmp.eq.s32.totalorder %s10, 0
    %p51 = por %p49, %p50
    %p52 = scmp.ne.s32.totalorder %s44, %s46
    %p53 = scmp.eq.s32.totalorder %s15, 3
    %p54 = por %p52, %p53
    %p55 = scmp.ne.s32.totalorder %s46, %s47
    %p56 = scmp.eq.s32.totalorder %s15, 0
    %p57 = por %p55, %p56
    %p58 = scmp.ne.s32.totalorder %s46, %s47
    %p59 = scmp.eq.s32.totalorder %s16, 3
    %p60 = por %p58, %p59
    %p62 = scmp.ne.s32.totalorder %s47, %s61
    %p63 = scmp.eq.s32.totalorder %s16, 0
    %p64 = por %p62, %p63
    %s65 = ssub.s32 %s10, %s17
    %p66 = scmp.eq.s32.totalorder %s65, 0
    %s68 = sadd.s32 %s67, 1
    %s69 = scalar_select %p66, %s67, %s68
    %p72 = pneg %p66
    %p73 = scmp.eq.s32.totalorder %s10, 3
    %p74 = por %p72, %p73
    %p75 = scmp.ne.s32.totalorder %s67, %s70
    %p76 = scmp.eq.s32.totalorder %s10, 0
    %p77 = por %p75, %p76
    %p78 = scmp.ne.s32.totalorder %s67, %s70
    %p79 = scmp.eq.s32.totalorder %s15, 3
    %p80 = por %p78, %p79
    %p81 = scmp.ne.s32.totalorder %s70, %s71
    %p82 = scmp.eq.s32.totalorder %s15, 0
    %p83 = por %p81, %p82
    %p84 = scmp.ne.s32.totalorder %s70, %s71
    %p85 = scmp.eq.s32.totalorder %s16, 3
    %p86 = por %p84, %p85
    %p88 = scmp.ne.s32.totalorder %s71, %s87
    %p89 = scmp.eq.s32.totalorder %s16, 0
    %p90 = por %p88, %p89
    %s91 = ssub.s32 %s10, %s17
    %p92 = scmp.eq.s32.totalorder %s91, 0
    %s94 = sadd.s32 %s93, 1
    %s95 = scalar_select %p92, %s93, %s94
    %p98 = pneg %p92
    %p99 = scmp.eq.s32.totalorder %s10, 3
    %p100 = por %p98, %p99
    %p101 = scmp.ne.s32.totalorder %s93, %s96
    %p102 = scmp.eq.s32.totalorder %s10, 0
    %p103 = por %p101, %p102
    %p104 = scmp.ne.s32.totalorder %s93, %s96
    %p105 = scmp.eq.s32.totalorder %s15, 3
    %p106 = por %p104, %p105
    %p107 = scmp.ne.s32.totalorder %s96, %s97
    %p108 = scmp.eq.s32.totalorder %s15, 0
    %p109 = por %p107, %p108
    %p110 = scmp.ne.s32.totalorder %s96, %s97
    %p111 = scmp.eq.s32.totalorder %s16, 3
    %p112 = por %p110, %p111
    %p114 = scmp.ne.s32.totalorder %s97, %s113
    %p115 = scmp.eq.s32.totalorder %s16, 0
    %p116 = por %p114, %p115
    %p117 = scmp.le.s32.totalorder 1, %s10
    %p118 = scmp.lt.s32.totalorder %s10, 5
    %p119 = pnand %p117, %p118
    %p120 = pneg %p119
    // Predicated region
    $region9: #{bottleneck_forward.4} parent=5 // pred_check
      _
    $region10: #{bottleneck_forward.4} parent=5 // pred_check_branch
      %122 = sbr.rel (%p119) target = $region12
    $region11: #{bottleneck_forward.4} parent=5 // pred_region
      %s123 = ssub.s32 %s10, 1
      // Predicated region
      $region13: #{bottleneck_forward.4} parent=11 // pred_check
        %p124 = pneg %p57
      $region14: #{bottleneck_forward.4} parent=11 // pred_check_branch
        %126 = sbr.rel (%p124) target = $region16
      $region15: #{bottleneck_forward.4} parent=11 // pred_region
        _
      $region16: #{bottleneck_forward.4} parent=11 // pred_fallthru
        _
    $region12: #{bottleneck_forward.4} parent=5 // pred_fallthru
      _
    %p127 = scmp.lt.s32.totalorder %s10, 4
    // Predicated region
    $region17: #{bottleneck_forward.4} parent=5 // pred_check
      %p128 = pneg %p127
    $region18: #{bottleneck_forward.4} parent=5 // pred_check_branch
      %130 = sbr.rel (%p128) target = $region20
    $region19: #{bottleneck_forward.4} parent=5 // pred_region
      // Predicated region
      $region21: #{bottleneck_forward.4} parent=19 // pred_check
        %p131 = pneg %p30
      $region22: #{bottleneck_forward.4} parent=19 // pred_check_branch
        %133 = sbr.rel (%p131) target = $region24
      $region23: #{bottleneck_forward.4} parent=19 // pred_region
        %s134 = smul.u32 16, %s10
        %p135 = scmp.lt.s32.totalorder %s134, 63
        %s136 = scalar_select %p135, %s134, 63
        %s137 = smul.addr %s136, 8
        %s138 = scalar_lea.vmem %s0, %s137
        %s139 = smul.u32 16, %s10
      $region24: #{bottleneck_forward.4} parent=19 // pred_fallthru
        _
    $region20: #{bottleneck_forward.4} parent=5 // pred_fallthru
      _
    %p140 = scmp.le.s32.totalorder 1, %s10
    %p141 = scmp.lt.s32.totalorder %s10, 5
    %p142 = pnand %p140, %p141
    %p143 = pneg %p142
    // Predicated region
    $region25: #{bottleneck_forward.4} parent=5 // pred_check
      _
    $region26: #{bottleneck_forward.4} parent=5 // pred_check_branch
      %145 = sbr.rel (%p142) target = $region28
    $region27: #{bottleneck_forward.4} parent=5 // pred_region
      %s146 = ssub.s32 %s10, 1
      %s147 = smul.u32 16, %s15
      %p148 = scmp.lt.s32.totalorder %s147, 63
      %s149 = scalar_select %p148, %s147, 63
      %s150 = smul.addr %s149, 8
      %s151 = scalar_lea.vmem %s0, %s150
      %p152 = pneg %p36
      %p153 = pneg %p33
      %p154 = pneg %p57
      %p155 = pneg %p54
      %p156 = pneg %p83
      %p157 = pneg %p80
      %s158 = smul.u32 16, %s15
      %p159 = scmp.lt.s32.totalorder %s158, 63
      %s160 = scalar_select %p159, %s158, 63
      %s161 = smul.addr %s160, 8
      %s162 = scalar_lea.vmem %s2, %s161
      %p163 = pneg %p109
      %p164 = pneg %p106
      %p165 = scmp.lt.s32.totalorder %s15, 3
      %s166 = scalar_select %p165, %s15, 3
      %s167 = smul.addr %s166, 2
      %s168 = scalar_lea.vmem %s3, %s167
      %s169 = smul.u32 16, %s15
      %p170 = scmp.lt.s32.totalorder %s169, 63
      %s171 = scalar_select %p170, %s169, 63
      %s172 = smul.addr %s171, 8
      %s173 = scalar_lea.vmem %s0, %s172
      %s174 = smul.u32 16, %s15
      %s175 = smul.u32 16, %s15
      %p176 = scmp.lt.s32.totalorder %s175, 63
      %s177 = scalar_select %p176, %s175, 63
      %s178 = smul.addr %s177, 8
      %s179 = scalar_lea.vmem %s2, %s178
      %s180 = smul.u32 16, %s15
      %p181 = scmp.lt.s32.totalorder %s15, 3
      %s182 = scalar_select %p181, %s15, 3
      %s183 = smul.addr %s182, 2
      %s184 = scalar_lea.vmem %s3, %s183
      %v185 = vld [vmem:[%s173] sm:$0xff]
      %v186 = vld [vmem:[%s173 + $0x8] sm:$0xff]
      %v187 = vld [vmem:[%s173 + $0x10] sm:$0xff]
      %v188 = vld [vmem:[%s173 + $0x18] sm:$0xff]
      %v189 = vld [vmem:[%s173 + $0x20] sm:$0xff]
      %v190 = vld [vmem:[%s173 + $0x28] sm:$0xff]
      %v191 = vld [vmem:[%s173 + $0x30] sm:$0xff]
      %v192 = vld [vmem:[%s173 + $0x38] sm:$0xff]
      %v193 = vld [vmem:[%s173 + $0x40] sm:$0xff]
      %v194 = vld [vmem:[%s173 + $0x48] sm:$0xff]
      %v195 = vld [vmem:[%s173 + $0x50] sm:$0xff]
      %v196 = vld [vmem:[%s173 + $0x58] sm:$0xff]
      %v197 = vld [vmem:[%s173 + $0x60] sm:$0xff]
      %v198 = vld [vmem:[%s173 + $0x68] sm:$0xff]
      %v199 = vld [vmem:[%s173 + $0x70] sm:$0xff]
      %v200 = vld [vmem:[%s173 + $0x78] sm:$0xff]
      %v201 = vld [vmem:[%s1] sm:$0xff]
      %v202 = vld [vmem:[%s1 + $0x8] sm:$0xff]
      %v203 = vld [vmem:[%s1 + $0x10] sm:$0xff]
      %v204 = vld [vmem:[%s1 + $0x18] sm:$0xff]
      %v205 = vld [vmem:[%s1 + $0x20] sm:$0xff]
      %v206 = vld [vmem:[%s1 + $0x28] sm:$0xff]
      %v207 = vld [vmem:[%s1 + $0x30] sm:$0xff]
      %v208 = vld [vmem:[%s1 + $0x38] sm:$0xff]
      %v209 = vld [vmem:[%s1 + $0x40] sm:$0xff]
      %v210 = vld [vmem:[%s1 + $0x48] sm:$0xff]
      %v211 = vld [vmem:[%s1 + $0x50] sm:$0xff]
      %v212 = vld [vmem:[%s1 + $0x58] sm:$0xff]
      %v213 = vld [vmem:[%s1 + $0x60] sm:$0xff]
      %v214 = vld [vmem:[%s1 + $0x68] sm:$0xff]
      %v215 = vld [vmem:[%s1 + $0x70] sm:$0xff]
      %v216 = vld [vmem:[%s1 + $0x78] sm:$0xff]
      %217 = vmatprep.subr.mxu0 0.0
      %218 = vmatpush1.msra.mxu0 %v201
      %219 = vmatprep.subr.mxu0 0.0
      %220 = vmatpush1.msra.mxu0 %v202
      %221 = vmatprep.subr.mxu0 0.0
      %222 = vmatpush1.msra.mxu0 %v203
      %223 = vmatprep.subr.mxu0 0.0
      %224 = vmatpush1.msra.mxu0 %v204
      %225 = vmatprep.subr.mxu0 0.0
      %226 = vmatpush1.msra.mxu0 %v205
      %227 = vmatprep.subr.mxu0 0.0
      %228 = vmatpush1.msra.mxu0 %v206
      %229 = vmatprep.subr.mxu0 0.0
      %230 = vmatpush1.msra.mxu0 %v207
      %231 = vmatprep.subr.mxu0 0.0
      %232 = vmatpush1.msra.mxu0 %v208
      %233 = vmatprep.subr.mxu0 0.0
      %234 = vmatpush1.msra.mxu0 %v209
      %235 = vmatprep.subr.mxu0 0.0
      %236 = vmatpush1.msra.mxu0 %v210
      %237 = vmatprep.subr.mxu0 0.0
      %238 = vmatpush1.msra.mxu0 %v211
      %239 = vmatprep.subr.mxu0 0.0
      %240 = vmatpush1.msra.mxu0 %v212
      %241 = vmatprep.subr.mxu0 0.0
      %242 = vmatpush1.msra.mxu0 %v213
      %243 = vmatprep.subr.mxu0 0.0
      %244 = vmatpush1.msra.mxu0 %v214
      %245 = vmatprep.subr.mxu0 0.0
      %246 = vmatpush1.msra.mxu0 %v215
      %247 = vmatprep.subr.mxu0 0.0
      %248 = vmatpush1.msra.mxu0 %v216
      %249 = vmatprep.subr.mxu0 0.0
      %250 = vmatpush1.msra.mxu0 0.0
      %251 = vmatprep.subr.mxu0 0.0
      %252 = vmatpush1.msra.mxu0 0.0
      %253 = vmatprep.subr.mxu0 0.0
      %254 = vmatpush1.msra.mxu0 0.0
      %255 = vmatprep.subr.mxu0 0.0
      %256 = vmatpush1.msra.mxu0 0.0
      %257 = vmatprep.subr.mxu0 0.0
      %258 = vmatpush1.msra.mxu0 0.0
      %259 = vmatprep.subr.mxu0 0.0
      %260 = vmatpush1.msra.mxu0 0.0
      %261 = vmatprep.subr.mxu0 0.0
      %262 = vmatpush1.msra.mxu0 0.0
      %263 = vmatprep.subr.mxu0 0.0
      %264 = vmatpush1.msra.mxu0 0.0
      %265 = vmatprep.subr.mxu0 0.0
      %266 = vmatpush1.msra.mxu0 0.0
      %267 = vmatprep.subr.mxu0 0.0
      %268 = vmatpush1.msra.mxu0 0.0
      %269 = vmatprep.subr.mxu0 0.0
      %270 = vmatpush1.msra.mxu0 0.0
      %271 = vmatprep.subr.mxu0 0.0
      %272 = vmatpush1.msra.mxu0 0.0
      %273 = vmatprep.subr.mxu0 0.0
      %274 = vmatpush1.msra.mxu0 0.0
      %275 = vmatprep.subr.mxu0 0.0
      %276 = vmatpush1.msra.mxu0 0.0
      %277 = vmatprep.subr.mxu0 0.0
      %278 = vmatpush1.msra.mxu0 0.0
      %279 = vmatprep.subr.mxu0 0.0
      %280 = vmatpush1.msra.mxu0 0.0
      %281 = vmatprep.mubr.f32.mxu0 0.0
      %282 = vmatmul.mubr.f32.gmra.mrb[0].mxu0 %v185
      %v283 = vpop.f32.mrb[0].mxu0
      %v284 = vadd.f32 0.0, %v283
      %v285 = vpop.f32.mrb[0].mxu0
      %286 = vmatprep.mubr.f32.mxu0 0.0
      %287 = vmatmul.mubr.f32.gmra.mrb[0].mxu0 %v186
      %v288 = vpop.f32.mrb[0].mxu0
      %v289 = vadd.f32 0.0, %v288
      %v290 = vpop.f32.mrb[0].mxu0
      %291 = vmatprep.mubr.f32.mxu0 0.0
      %292 = vmatmul.mubr.f32.gmra.mrb[0].mxu0 %v187
      %v293 = vpop.f32.mrb[0].mxu0
      %v294 = vadd.f32 0.0, %v293
      %v295 = vpop.f32.mrb[0].mxu0
      %296 = vmatprep.mubr.f32.mxu0 0.0
      %297 = vmatmul.mubr.f32.gmra.mrb[0].mxu0 %v188
      %v298 = vpop.f32.mrb[0].mxu0
      %v299 = vadd.f32 0.0, %v298
      %v300 = vpop.f32.mrb[0].mxu0
      %301 = vmatprep.mubr.f32.mxu0 0.0
      %302 = vmatmul.mubr.f32.gmra.mrb[0].mxu0 %v189
      %v303 = vpop.f32.mrb[0].mxu0
      %v304 = vadd.f32 0.0, %v303
      %v305 = vpop.f32.mrb[0].mxu0
      %306 = vmatprep.mubr.f32.mxu0 0.0
      %307 = vmatmul.mubr.f32.gmra.mrb[0].mxu0 %v190
      %v308 = vpop.f32.mrb[0].mxu0
      %v309 = vadd.f32 0.0, %v308
      %v310 = vpop.f32.mrb[0].mxu0
      %311 = vmatprep.mubr.f32.mxu0 0.0
      %312 = vmatmul.mubr.f32.gmra.mrb[0].mxu0 %v191
      %v313 = vpop.f32.mrb[0].mxu0
      %v314 = vadd.f32 0.0, %v313
      %v315 = vpop.f32.mrb[0].mxu0
      %316 = vmatprep.mubr.f32.mxu0 0.0
      %317 = vmatmul.mubr.f32.gmra.mrb[0].mxu0 %v192
      %v318 = vpop.f32.mrb[0].mxu0
      %v319 = vadd.f32 0.0, %v318
      %v320 = vpop.f32.mrb[0].mxu0
      %321 = vmatprep.mubr.f32.mxu0 0.0
      %322 = vmatmul.mubr.f32.gmra.mrb[0].mxu0 %v193
      %v323 = vpop.f32.mrb[0].mxu0
      %v324 = vadd.f32 0.0, %v323
      %v325 = vpop.f32.mrb[0].mxu0
      %326 = vmatprep.mubr.f32.mxu0 0.0
      %327 = vmatmul.mubr.f32.gmra.mrb[0].mxu0 %v194
      %v328 = vpop.f32.mrb[0].mxu0
      %v329 = vadd.f32 0.0, %v328
      %v330 = vpop.f32.mrb[0].mxu0
      %331 = vmatprep.mubr.f32.mxu0 0.0
      %332 = vmatmul.mubr.f32.gmra.mrb[0].mxu0 %v195
      %v333 = vpop.f32.mrb[0].mxu0
      %v334 = vadd.f32 0.0, %v333
      %v335 = vpop.f32.mrb[0].mxu0
      %336 = vmatprep.mubr.f32.mxu0 0.0
      %337 = vmatmul.mubr.f32.gmra.mrb[0].mxu0 %v196
      %v338 = vpop.f32.mrb[0].mxu0
      %v339 = vadd.f32 0.0, %v338
      %v340 = vpop.f32.mrb[0].mxu0
      %341 = vmatprep.mubr.f32.mxu0 0.0
      %342 = vmatmul.mubr.f32.gmra.mrb[0].mxu0 %v197
      %v343 = vpop.f32.mrb[0].mxu0
      %v344 = vadd.f32 0.0, %v343
      %v345 = vpop.f32.mrb[0].mxu0
      %346 = vmatprep.mubr.f32.mxu0 0.0
      %347 = vmatmul.mubr.f32.gmra.mrb[0].mxu0 %v198
      %v348 = vpop.f32.mrb[0].mxu0
      %v349 = vadd.f32 0.0, %v348
      %v350 = vpop.f32.mrb[0].mxu0
      %351 = vmatprep.mubr.f32.mxu0 0.0
      %352 = vmatmul.mubr.f32.gmra.mrb[0].mxu0 %v199
      %v353 = vpop.f32.mrb[0].mxu0
      %v354 = vadd.f32 0.0, %v353
      %v355 = vpop.f32.mrb[0].mxu0
      %356 = vmatprep.mubr.f32.mxu0 0.0
      %357 = vmatmul.mubr.f32.gmra.mrb[0].mxu0 %v200
      %v358 = vpop.f32.mrb[0].mxu0
      %v359 = vadd.f32 0.0, %v358
      %v360 = vpop.f32.mrb[0].mxu0
      %361 = vdwg.mxu0
      %362 = vst [vmem:[%s179] sm:$0xff] %v284
      %363 = vst [vmem:[%s179 + $0x8] sm:$0xff] %v289
      %364 = vst [vmem:[%s179 + $0x10] sm:$0xff] %v294
      %365 = vst [vmem:[%s179 + $0x18] sm:$0xff] %v299
      %366 = vst [vmem:[%s179 + $0x20] sm:$0xff] %v304
      %367 = vst [vmem:[%s179 + $0x28] sm:$0xff] %v309
      %368 = vst [vmem:[%s179 + $0x30] sm:$0xff] %v314
      %369 = vst [vmem:[%s179 + $0x38] sm:$0xff] %v319
      %370 = vst [vmem:[%s179 + $0x40] sm:$0xff] %v324
      %371 = vst [vmem:[%s179 + $0x48] sm:$0xff] %v329
      %372 = vst [vmem:[%s179 + $0x50] sm:$0xff] %v334
      %373 = vst [vmem:[%s179 + $0x58] sm:$0xff] %v339
      %374 = vst [vmem:[%s179 + $0x60] sm:$0xff] %v344
      %375 = vst [vmem:[%s179 + $0x68] sm:$0xff] %v349
      %376 = vst [vmem:[%s179 + $0x70] sm:$0xff] %v354
      %377 = vst [vmem:[%s179 + $0x78] sm:$0xff] %v359
      %v378 = vadd.f32 %v284, %v289
      %v379 = vadd.f32 %v378, %v294
      %v380 = vadd.f32 %v379, %v299
      %v381 = vadd.f32 %v380, %v304
      %v382 = vadd.f32 %v381, %v309
      %v383 = vadd.f32 %v382, %v314
      %v384 = vadd.f32 %v383, %v319
      %v385 = vadd.f32 %v384, %v324
      %v386 = vadd.f32 %v385, %v329
      %v387 = vadd.f32 %v386, %v334
      %v388 = vadd.f32 %v387, %v339
      %v389 = vadd.f32 %v388, %v344
      %v390 = vadd.f32 %v389, %v349
      %v391 = vadd.f32 %v390, %v354
      %v392 = vadd.f32 %v391, %v359
      %v393 = vrot.slane %v392, 4
      %v394 = vadd.f32 %v392, %v393
      %v395 = vrot.slane %v394, 2
      %v396 = vadd.f32 %v394, %v395
      %v397 = vrot.slane %v396, 1
      %v398 = vadd.f32 %v396, %v397
      %399 = vst [vmem:[%s184] sm:$0x1] %v398
      %v400 = vmul.f32 %v284, %v284
      %v401 = vmul.f32 %v289, %v289
      %v402 = vmul.f32 %v294, %v294
      %v403 = vmul.f32 %v299, %v299
      %v404 = vmul.f32 %v304, %v304
      %v405 = vmul.f32 %v309, %v309
      %v406 = vmul.f32 %v314, %v314
      %v407 = vmul.f32 %v319, %v319
      %v408 = vmul.f32 %v324, %v324
      %v409 = vmul.f32 %v329, %v329
      %v410 = vmul.f32 %v334, %v334
      %v411 = vmul.f32 %v339, %v339
      %v412 = vmul.f32 %v344, %v344
      %v413 = vmul.f32 %v349, %v349
      %v414 = vmul.f32 %v354, %v354
      %v415 = vmul.f32 %v359, %v359
      %v416 = vadd.f32 %v400, %v401
      %v417 = vadd.f32 %v416, %v402
      %v418 = vadd.f32 %v417, %v403
      %v419 = vadd.f32 %v418, %v404
      %v420 = vadd.f32 %v419, %v405
      %v421 = vadd.f32 %v420, %v406
      %v422 = vadd.f32 %v421, %v407
      %v423 = vadd.f32 %v422, %v408
      %v424 = vadd.f32 %v423, %v409
      %v425 = vadd.f32 %v424, %v410
      %v426 = vadd.f32 %v425, %v411
      %v427 = vadd.f32 %v426, %v412
      %v428 = vadd.f32 %v427, %v413
      %v429 = vadd.f32 %v428, %v414
      %v430 = vadd.f32 %v429, %v415
      %v431 = vrot.slane %v430, 4
      %v432 = vadd.f32 %v430, %v431
      %v433 = vrot.slane %v432, 2
      %v434 = vadd.f32 %v432, %v433
      %v435 = vrot.slane %v434, 1
      %v436 = vadd.f32 %v434, %v435
      %437 = vst [vmem:[%s184 + $0x1] sm:$0x1] %v436
      %s438 = smul.u32 16, %s15
      %p439 = scmp.lt.s32.totalorder %s438, 63
      %s440 = scalar_select %p439, %s438, 63
      %s441 = smul.addr %s440, 8
      %s442 = scalar_lea.vmem %s2, %s441
      %p443 = scmp.lt.s32.totalorder %s15, 3
      %s444 = scalar_select %p443, %s15, 3
      %s445 = smul.addr %s444, 2
      %s446 = scalar_lea.vmem %s3, %s445
      // Predicated region
      $region29: #{bottleneck_forward.4} parent=27 // pred_check
        %p447 = pneg %p80
      $region30: #{bottleneck_forward.4} parent=27 // pred_check_branch
        %449 = sbr.rel (%p447) target = $region32
      $region31: #{bottleneck_forward.4} parent=27 // pred_region
        %s450 = smul.u32 16, %s15
      $region32: #{bottleneck_forward.4} parent=27 // pred_fallthru
        _
      // Predicated region
      $region33: #{bottleneck_forward.4} parent=27 // pred_check
        %p451 = pneg %p106
      $region34: #{bottleneck_forward.4} parent=27 // pred_check_branch
        %453 = sbr.rel (%p451) target = $region36
      $region35: #{bottleneck_forward.4} parent=27 // pred_region
        _
      $region36: #{bottleneck_forward.4} parent=27 // pred_fallthru
        _
    $region28: #{bottleneck_forward.4} parent=5 // pred_fallthru
      _
    %p454 = scmp.le.s32.totalorder 2, %s10
    // Predicated region
    $region37: #{bottleneck_forward.4} parent=5 // pred_check
      %p455 = pneg %p454
    $region38: #{bottleneck_forward.4} parent=5 // pred_check_branch
      %457 = sbr.rel (%p455) target = $region40
    $region39: #{bottleneck_forward.4} parent=5 // pred_region
      %s458 = ssub.s32 %s10, 2
      // Predicated region
      $region41: #{bottleneck_forward.4} parent=39 // pred_check
        %p459 = pneg %p86
      $region42: #{bottleneck_forward.4} parent=39 // pred_check_branch
        %461 = sbr.rel (%p459) target = $region44
      $region43: #{bottleneck_forward.4} parent=39 // pred_region
        %s462 = smul.u32 16, %s16
        %p463 = scmp.lt.s32.totalorder %s462, 63
        %s464 = scalar_select %p463, %s462, 63
        %s465 = smul.addr %s464, 8
        %s466 = scalar_lea.vmem %s2, %s465
      $region44: #{bottleneck_forward.4} parent=39 // pred_fallthru
        _
      // Predicated region
      $region45: #{bottleneck_forward.4} parent=39 // pred_check
        %p467 = pneg %p112
      $region46: #{bottleneck_forward.4} parent=39 // pred_check_branch
        %469 = sbr.rel (%p467) target = $region48
      $region47: #{bottleneck_forward.4} parent=39 // pred_region
        %p470 = scmp.lt.s32.totalorder %s16, 3
        %s471 = scalar_select %p470, %s16, 3
        %s472 = smul.addr %s471, 2
        %s473 = scalar_lea.vmem %s3, %s472
      $region48: #{bottleneck_forward.4} parent=39 // pred_fallthru
        _
    $region40: #{bottleneck_forward.4} parent=5 // pred_fallthru
      _
  $region6: #{bottleneck_forward.4} parent=0 // loop_footer
    %s14 = sadd.s32 1, %s10
  $region7: #{bottleneck_forward.4} parent=0 // loop_footer_branch
    %9 = sbr.rel target = $region3
  $region8: #{bottleneck_forward.4} parent=0 // loop_exit
    _

// kernel: bottleneck_forward.7
$region0: #{bottleneck_forward.7}
  #allocation0 [shape = 'u32[]', space=smem, size = 0x4, offset = 0x4, fixed_abs, tag = 'smem constant byte address 0x4 - core index']
  #allocation1 [shape = 'u32[144,128]{1,0:T(1,128)}', space=vmem, size = 0x12000, scoped, tag = 'internal scratch']
  %s0 = inlined_call_operand.vmem [shape: f32[512,128], index: 0, kind: input, shape index: {}, may-alias: {0,4}]
  %s1 = inlined_call_operand.vmem [shape: f32[512,128], index: 1, kind: input, shape index: {}]
  %s2 = inlined_call_operand.vmem [shape: f32[1,128], index: 2, kind: input, shape index: {}]
  %s3 = inlined_call_operand.vmem [shape: f32[1,128], index: 3, kind: input, shape index: {}]
  %s4 = inlined_call_operand.vmem [shape: f32[512,128], index: 4, kind: output, shape index: {}, may-alias: {0,4}]
  %s5 = sld [smem:[#allocation0]]
  $region49: #{bottleneck_forward.7} parent=0
    _
  %s7 = ssub.s32 1, %s5
  %s8 = scalar_select 0, %s7, %s5
  loop: start=0, step=1, limit=6
  $region2: #{bottleneck_forward.7} parent=0 // loop_pre_header
    _
  $region3: #{bottleneck_forward.7} parent=0 // loop_header
    %s10 = sphi 0, %s14
    %p11 = scmp.ge.s32.totalorder %s10, 6
    %s20 = sphi 0, %s22
    %s23 = sphi 0, %s20
    %s24 = sphi 0, %s23
    %s40 = sphi 0, %s24
    %s46 = sphi 0, %s48
    %s49 = sphi 0, %s46
    %s50 = sphi 0, %s49
    %s66 = sphi 0, %s50
    %s70 = sphi 0, %s70
    %s72 = sphi 0, %s70
    %s73 = sphi 0, %s72
    %s87 = sphi 0, %s73
    %s91 = sphi 0, %s91
    %s93 = sphi 0, %s91
    %s94 = sphi 0, %s93
    %s108 = sphi 0, %s94
    %s114 = sphi 0, %s116
    %s117 = sphi 0, %s114
    %s118 = sphi 0, %s117
    %s134 = sphi 0, %s118
  $region4: #{bottleneck_forward.7} parent=0 // loop_header_branch
    %13 = sbr.rel (%p11) target = $region8
  $region5: #{bottleneck_forward.7} parent=0 // loop_body
    %s15 = ssub.s32 %s10, 1
    %s16 = ssub.s32 %s10, 2
    %s17 = sadd.s32 %s10, 1
    %s18 = ssub.s32 %s10, %s17
    %p19 = scmp.eq.s32.totalorder %s18, 0
    %s21 = sadd.s32 %s20, 1
    %s22 = scalar_select %p19, %s20, %s21
    %p25 = pneg %p19
    %p26 = scmp.eq.s32.totalorder %s10, 3
    %p27 = por %p25, %p26
    %p28 = scmp.ne.s32.totalorder %s20, %s23
    %p29 = scmp.eq.s32.totalorder %s10, 0
    %p30 = por %p28, %p29
    %p31 = scmp.ne.s32.totalorder %s20, %s23
    %p32 = scmp.eq.s32.totalorder %s15, 3
    %p33 = por %p31, %p32
    %p34 = scmp.ne.s32.totalorder %s23, %s24
    %p35 = scmp.eq.s32.totalorder %s15, 0
    %p36 = por %p34, %p35
    %p37 = scmp.ne.s32.totalorder %s23, %s24
    %p38 = scmp.eq.s32.totalorder %s16, 3
    %p39 = por %p37, %p38
    %p41 = scmp.ne.s32.totalorder %s24, %s40
    %p42 = scmp.eq.s32.totalorder %s16, 0
    %p43 = por %p41, %p42
    %s44 = ssub.s32 %s10, %s17
    %p45 = scmp.eq.s32.totalorder %s44, 0
    %s47 = sadd.s32 %s46, 1
    %s48 = scalar_select %p45, %s46, %s47
    %p51 = pneg %p45
    %p52 = scmp.eq.s32.totalorder %s10, 3
    %p53 = por %p51, %p52
    %p54 = scmp.ne.s32.totalorder %s46, %s49
    %p55 = scmp.eq.s32.totalorder %s10, 0
    %p56 = por %p54, %p55
    %p57 = scmp.ne.s32.totalorder %s46, %s49
    %p58 = scmp.eq.s32.totalorder %s15, 3
    %p59 = por %p57, %p58
    %p60 = scmp.ne.s32.totalorder %s49, %s50
    %p61 = scmp.eq.s32.totalorder %s15, 0
    %p62 = por %p60, %p61
    %p63 = scmp.ne.s32.totalorder %s49, %s50
    %p64 = scmp.eq.s32.totalorder %s16, 3
    %p65 = por %p63, %p64
    %p67 = scmp.ne.s32.totalorder %s50, %s66
    %p68 = scmp.eq.s32.totalorder %s16, 0
    %p69 = por %p67, %p68
    %s71 = sadd.s32 %s70, 1
    %p74 = scmp.eq.s32.totalorder %s10, 3
    %p75 = scmp.ne.s32.totalorder %s70, %s72
    %p76 = scmp.eq.s32.totalorder %s10, 0
    %p77 = por %p75, %p76
    %p78 = scmp.ne.s32.totalorder %s70, %s72
    %p79 = scmp.eq.s32.totalorder %s15, 3
    %p80 = por %p78, %p79
    %p81 = scmp.ne.s32.totalorder %s72, %s73
    %p82 = scmp.eq.s32.totalorder %s15, 0
    %p83 = por %p81, %p82
    %p84 = scmp.ne.s32.totalorder %s72, %s73
    %p85 = scmp.eq.s32.totalorder %s16, 3
    %p86 = por %p84, %p85
    %p88 = scmp.ne.s32.totalorder %s73, %s87
    %p89 = scmp.eq.s32.totalorder %s16, 0
    %p90 = por %p88, %p89
    %s92 = sadd.s32 %s91, 1
    %p95 = scmp.eq.s32.totalorder %s10, 3
    %p96 = scmp.ne.s32.totalorder %s91, %s93
    %p97 = scmp.eq.s32.totalorder %s10, 0
    %p98 = por %p96, %p97
    %p99 = scmp.ne.s32.totalorder %s91, %s93
    %p100 = scmp.eq.s32.totalorder %s15, 3
    %p101 = por %p99, %p100
    %p102 = scmp.ne.s32.totalorder %s93, %s94
    %p103 = scmp.eq.s32.totalorder %s15, 0
    %p104 = por %p102, %p103
    %p105 = scmp.ne.s32.totalorder %s93, %s94
    %p106 = scmp.eq.s32.totalorder %s16, 3
    %p107 = por %p105, %p106
    %p109 = scmp.ne.s32.totalorder %s94, %s108
    %p110 = scmp.eq.s32.totalorder %s16, 0
    %p111 = por %p109, %p110
    %s112 = ssub.s32 %s10, %s17
    %p113 = scmp.eq.s32.totalorder %s112, 0
    %s115 = sadd.s32 %s114, 1
    %s116 = scalar_select %p113, %s114, %s115
    %p119 = pneg %p113
    %p120 = scmp.eq.s32.totalorder %s10, 3
    %p121 = por %p119, %p120
    %p122 = scmp.ne.s32.totalorder %s114, %s117
    %p123 = scmp.eq.s32.totalorder %s10, 0
    %p124 = por %p122, %p123
    %p125 = scmp.ne.s32.totalorder %s114, %s117
    %p126 = scmp.eq.s32.totalorder %s15, 3
    %p127 = por %p125, %p126
    %p128 = scmp.ne.s32.totalorder %s117, %s118
    %p129 = scmp.eq.s32.totalorder %s15, 0
    %p130 = por %p128, %p129
    %p131 = scmp.ne.s32.totalorder %s117, %s118
    %p132 = scmp.eq.s32.totalorder %s16, 3
    %p133 = por %p131, %p132
    %p135 = scmp.ne.s32.totalorder %s118, %s134
    %p136 = scmp.eq.s32.totalorder %s16, 0
    %p137 = por %p135, %p136
    %p138 = scmp.le.s32.totalorder 1, %s10
    %p139 = scmp.lt.s32.totalorder %s10, 5
    %p140 = pnand %p138, %p139
    %p141 = pneg %p140
    // Predicated region
    $region9: #{bottleneck_forward.7} parent=5 // pred_check
      _
    $region10: #{bottleneck_forward.7} parent=5 // pred_check_branch
      %143 = sbr.rel (%p140) target = $region12
    $region11: #{bottleneck_forward.7} parent=5 // pred_region
      %s144 = ssub.s32 %s10, 1
      // Predicated region
      $region13: #{bottleneck_forward.7} parent=11 // pred_check
        %p145 = pneg %p83
      $region14: #{bottleneck_forward.7} parent=11 // pred_check_branch
        %147 = sbr.rel (%p145) target = $region16
      $region15: #{bottleneck_forward.7} parent=11 // pred_region
        _
      $region16: #{bottleneck_forward.7} parent=11 // pred_fallthru
        _
      // Predicated region
      $region17: #{bottleneck_forward.7} parent=11 // pred_check
        %p148 = pneg %p104
      $region18: #{bottleneck_forward.7} parent=11 // pred_check_branch
        %150 = sbr.rel (%p148) target = $region20
      $region19: #{bottleneck_forward.7} parent=11 // pred_region
        _
      $region20: #{bottleneck_forward.7} parent=11 // pred_fallthru
        _
    $region12: #{bottleneck_forward.7} parent=5 // pred_fallthru
      _
    %p151 = scmp.lt.s32.totalorder %s10, 4
    // Predicated region
    $region21: #{bottleneck_forward.7} parent=5 // pred_check
      %p152 = pneg %p151
    $region22: #{bottleneck_forward.7} parent=5 // pred_check_branch
      %154 = sbr.rel (%p152) target = $region24
    $region23: #{bottleneck_forward.7} parent=5 // pred_region
      // Predicated region
      $region25: #{bottleneck_forward.7} parent=23 // pred_check
        %p155 = pneg %p30
      $region26: #{bottleneck_forward.7} parent=23 // pred_check_branch
        %157 = sbr.rel (%p155) target = $region28
      $region27: #{bottleneck_forward.7} parent=23 // pred_region
        %s158 = smul.u32 16, %s10
        %p159 = scmp.lt.s32.totalorder %s158, 63
        %s160 = scalar_select %p159, %s158, 63
        %s161 = smul.addr %s160, 8
        %s162 = scalar_lea.vmem %s0, %s161
        %s163 = smul.u32 16, %s10
      $region28: #{bottleneck_forward.7} parent=23 // pred_fallthru
        _
      // Predicated region
      $region29: #{bottleneck_forward.7} parent=23 // pred_check
        %p164 = pneg %p56
      $region30: #{bottleneck_forward.7} parent=23 // pred_check_branch
        %166 = sbr.rel (%p164) target = $region32
      $region31: #{bottleneck_forward.7} parent=23 // pred_region
        %s167 = smul.u32 16, %s10
        %p168 = scmp.lt.s32.totalorder %s167, 63
        %s169 = scalar_select %p168, %s167, 63
        %s170 = smul.addr %s169, 8
        %s171 = scalar_lea.vmem %s1, %s170
        %s172 = smul.u32 16, %s10
      $region32: #{bottleneck_forward.7} parent=23 // pred_fallthru
        _
    $region24: #{bottleneck_forward.7} parent=5 // pred_fallthru
      _
    %p173 = scmp.le.s32.totalorder 1, %s10
    %p174 = scmp.lt.s32.totalorder %s10, 5
    %p175 = pnand %p173, %p174
    %p176 = pneg %p175
    // Predicated region
    $region33: #{bottleneck_forward.7} parent=5 // pred_check
      _
    $region34: #{bottleneck_forward.7} parent=5 // pred_check_branch
      %178 = sbr.rel (%p175) target = $region36
    $region35: #{bottleneck_forward.7} parent=5 // pred_region
      %s179 = ssub.s32 %s10, 1
      %s180 = smul.u32 16, %s15
      %p181 = scmp.lt.s32.totalorder %s180, 63
      %s182 = scalar_select %p181, %s180, 63
      %s183 = smul.addr %s182, 8
      %s184 = scalar_lea.vmem %s0, %s183
      %p185 = pneg %p36
      %p186 = pneg %p33
      %s187 = smul.u32 16, %s15
      %p188 = scmp.lt.s32.totalorder %s187, 63
      %s189 = scalar_select %p188, %s187, 63
      %s190 = smul.addr %s189, 8
      %s191 = scalar_lea.vmem %s1, %s190
      %p192 = pneg %p62
      %p193 = pneg %p59
      %p194 = pneg %p83
      %p195 = pneg %p80
      %p196 = pneg %p104
      %p197 = pneg %p101
      %p198 = pneg %p130
      %p199 = pneg %p127
      %s200 = smul.u32 16, %s15
      %p201 = scmp.lt.s32.totalorder %s200, 63
      %s202 = scalar_select %p201, %s200, 63
      %s203 = smul.addr %s202, 8
      %s204 = scalar_lea.vmem %s4, %s203
      %s205 = smul.u32 16, %s15
      %p206 = scmp.lt.s32.totalorder %s205, 63
      %s207 = scalar_select %p206, %s205, 63
      %s208 = smul.addr %s207, 8
      %s209 = scalar_lea.vmem %s0, %s208
      %s210 = smul.u32 16, %s15
      %s211 = smul.u32 16, %s15
      %p212 = scmp.lt.s32.totalorder %s211, 63
      %s213 = scalar_select %p212, %s211, 63
      %s214 = smul.addr %s213, 8
      %s215 = scalar_lea.vmem %s1, %s214
      %s216 = smul.u32 16, %s15
      %s217 = smul.u32 16, %s15
      %p218 = scmp.lt.s32.totalorder %s217, 63
      %s219 = scalar_select %p218, %s217, 63
      %s220 = smul.addr %s219, 8
      %s221 = scalar_lea.vmem %s4, %s220
      %s222 = smul.u32 16, %s15
      %v223 = vld [vmem:[%s209] sm:$0xff]
      %v224 = vld [vmem:[%s209 + $0x8] sm:$0xff]
      %v225 = vld [vmem:[%s209 + $0x10] sm:$0xff]
      %v226 = vld [vmem:[%s209 + $0x18] sm:$0xff]
      %v227 = vld [vmem:[%s209 + $0x20] sm:$0xff]
      %v228 = vld [vmem:[%s209 + $0x28] sm:$0xff]
      %v229 = vld [vmem:[%s209 + $0x30] sm:$0xff]
      %v230 = vld [vmem:[%s209 + $0x38] sm:$0xff]
      %v231 = vld [vmem:[%s209 + $0x40] sm:$0xff]
      %v232 = vld [vmem:[%s209 + $0x48] sm:$0xff]
      %v233 = vld [vmem:[%s209 + $0x50] sm:$0xff]
      %v234 = vld [vmem:[%s209 + $0x58] sm:$0xff]
      %v235 = vld [vmem:[%s209 + $0x60] sm:$0xff]
      %v236 = vld [vmem:[%s209 + $0x68] sm:$0xff]
      %v237 = vld [vmem:[%s209 + $0x70] sm:$0xff]
      %v238 = vld [vmem:[%s209 + $0x78] sm:$0xff]
      %v239 = vld [vmem:[%s2] sm:$0x1]
      %v241 = vlaneseq
      %v242 = vshrl.u32 %v241, 7
      %v243 = vsub.s32 0, %v242
      %v244 = vrot.slane %v239, %v243
      %v246 = vmul.f32 %v223, %v244
      %v247 = vmul.f32 %v224, %v244
      %v248 = vmul.f32 %v225, %v244
      %v249 = vmul.f32 %v226, %v244
      %v250 = vmul.f32 %v227, %v244
      %v251 = vmul.f32 %v228, %v244
      %v252 = vmul.f32 %v229, %v244
      %v253 = vmul.f32 %v230, %v244
      %v254 = vmul.f32 %v231, %v244
      %v255 = vmul.f32 %v232, %v244
      %v256 = vmul.f32 %v233, %v244
      %v257 = vmul.f32 %v234, %v244
      %v258 = vmul.f32 %v235, %v244
      %v259 = vmul.f32 %v236, %v244
      %v260 = vmul.f32 %v237, %v244
      %v261 = vmul.f32 %v238, %v244
      %v262 = vld [vmem:[%s3] sm:$0x1]
      %v264 = vlaneseq
      %v265 = vshrl.u32 %v264, 7
      %v266 = vsub.s32 0, %v265
      %v267 = vrot.slane %v262, %v266
      %v269 = vadd.f32 %v246, %v267
      %v270 = vadd.f32 %v247, %v267
      %v271 = vadd.f32 %v248, %v267
      %v272 = vadd.f32 %v249, %v267
      %v273 = vadd.f32 %v250, %v267
      %v274 = vadd.f32 %v251, %v267
      %v275 = vadd.f32 %v252, %v267
      %v276 = vadd.f32 %v253, %v267
      %v277 = vadd.f32 %v254, %v267
      %v278 = vadd.f32 %v255, %v267
      %v279 = vadd.f32 %v256, %v267
      %v280 = vadd.f32 %v257, %v267
      %v281 = vadd.f32 %v258, %v267
      %v282 = vadd.f32 %v259, %v267
      %v283 = vadd.f32 %v260, %v267
      %v284 = vadd.f32 %v261, %v267
      %v285 = vld [vmem:[%s215] sm:$0xff]
      %v286 = vld [vmem:[%s215 + $0x8] sm:$0xff]
      %v287 = vld [vmem:[%s215 + $0x10] sm:$0xff]
      %v288 = vld [vmem:[%s215 + $0x18] sm:$0xff]
      %v289 = vld [vmem:[%s215 + $0x20] sm:$0xff]
      %v290 = vld [vmem:[%s215 + $0x28] sm:$0xff]
      %v291 = vld [vmem:[%s215 + $0x30] sm:$0xff]
      %v292 = vld [vmem:[%s215 + $0x38] sm:$0xff]
      %v293 = vld [vmem:[%s215 + $0x40] sm:$0xff]
      %v294 = vld [vmem:[%s215 + $0x48] sm:$0xff]
      %v295 = vld [vmem:[%s215 + $0x50] sm:$0xff]
      %v296 = vld [vmem:[%s215 + $0x58] sm:$0xff]
      %v297 = vld [vmem:[%s215 + $0x60] sm:$0xff]
      %v298 = vld [vmem:[%s215 + $0x68] sm:$0xff]
      %v299 = vld [vmem:[%s215 + $0x70] sm:$0xff]
      %v300 = vld [vmem:[%s215 + $0x78] sm:$0xff]
      %v301 = vadd.f32 %v269, %v285
      %v302 = vadd.f32 %v270, %v286
      %v303 = vadd.f32 %v271, %v287
      %v304 = vadd.f32 %v272, %v288
      %v305 = vadd.f32 %v273, %v289
      %v306 = vadd.f32 %v274, %v290
      %v307 = vadd.f32 %v275, %v291
      %v308 = vadd.f32 %v276, %v292
      %v309 = vadd.f32 %v277, %v293
      %v310 = vadd.f32 %v278, %v294
      %v311 = vadd.f32 %v279, %v295
      %v312 = vadd.f32 %v280, %v296
      %v313 = vadd.f32 %v281, %v297
      %v314 = vadd.f32 %v282, %v298
      %v315 = vadd.f32 %v283, %v299
      %v316 = vadd.f32 %v284, %v300
      %v317 = vmax.f32 %v301, 0.0
      %v318 = vmax.f32 %v302, 0.0
      %v319 = vmax.f32 %v303, 0.0
      %v320 = vmax.f32 %v304, 0.0
      %v321 = vmax.f32 %v305, 0.0
      %v322 = vmax.f32 %v306, 0.0
      %v323 = vmax.f32 %v307, 0.0
      %v324 = vmax.f32 %v308, 0.0
      %v325 = vmax.f32 %v309, 0.0
      %v326 = vmax.f32 %v310, 0.0
      %v327 = vmax.f32 %v311, 0.0
      %v328 = vmax.f32 %v312, 0.0
      %v329 = vmax.f32 %v313, 0.0
      %v330 = vmax.f32 %v314, 0.0
      %v331 = vmax.f32 %v315, 0.0
      %v332 = vmax.f32 %v316, 0.0
      %333 = vst [vmem:[%s221] sm:$0xff] %v317
      %334 = vst [vmem:[%s221 + $0x8] sm:$0xff] %v318
      %335 = vst [vmem:[%s221 + $0x10] sm:$0xff] %v319
      %336 = vst [vmem:[%s221 + $0x18] sm:$0xff] %v320
      %337 = vst [vmem:[%s221 + $0x20] sm:$0xff] %v321
      %338 = vst [vmem:[%s221 + $0x28] sm:$0xff] %v322
      %339 = vst [vmem:[%s221 + $0x30] sm:$0xff] %v323
      %340 = vst [vmem:[%s221 + $0x38] sm:$0xff] %v324
      %341 = vst [vmem:[%s221 + $0x40] sm:$0xff] %v325
      %342 = vst [vmem:[%s221 + $0x48] sm:$0xff] %v326
      %343 = vst [vmem:[%s221 + $0x50] sm:$0xff] %v327
      %344 = vst [vmem:[%s221 + $0x58] sm:$0xff] %v328
      %345 = vst [vmem:[%s221 + $0x60] sm:$0xff] %v329
      %346 = vst [vmem:[%s221 + $0x68] sm:$0xff] %v330
      %347 = vst [vmem:[%s221 + $0x70] sm:$0xff] %v331
      %348 = vst [vmem:[%s221 + $0x78] sm:$0xff] %v332
      %s349 = smul.u32 16, %s15
      %p350 = scmp.lt.s32.totalorder %s349, 63
      %s351 = scalar_select %p350, %s349, 63
      %s352 = smul.addr %s351, 8
      %s353 = scalar_lea.vmem %s4, %s352
      // Predicated region
      $region37: #{bottleneck_forward.7} parent=35 // pred_check
        %p354 = pneg %p127
      $region38: #{bottleneck_forward.7} parent=35 // pred_check_branch
        %356 = sbr.rel (%p354) target = $region40
      $region39: #{bottleneck_forward.7} parent=35 // pred_region
        %s357 = smul.u32 16, %s15
      $region40: #{bottleneck_forward.7} parent=35 // pred_fallthru
        _
    $region36: #{bottleneck_forward.7} parent=5 // pred_fallthru
      _
    %p358 = scmp.le.s32.totalorder 2, %s10
    // Predicated region
    $region41: #{bottleneck_forward.7} parent=5 // pred_check
      %p359 = pneg %p358
    $region42: #{bottleneck_forward.7} parent=5 // pred_check_branch
      %361 = sbr.rel (%p359) target = $region44
    $region43: #{bottleneck_forward.7} parent=5 // pred_region
      %s362 = ssub.s32 %s10, 2
      // Predicated region
      $region45: #{bottleneck_forward.7} parent=43 // pred_check
        %p363 = pneg %p133
      $region46: #{bottleneck_forward.7} parent=43 // pred_check_branch
        %365 = sbr.rel (%p363) target = $region48
      $region47: #{bottleneck_forward.7} parent=43 // pred_region
        %s366 = smul.u32 16, %s16
        %p367 = scmp.lt.s32.totalorder %s366, 63
        %s368 = scalar_select %p367, %s366, 63
        %s369 = smul.addr %s368, 8
        %s370 = scalar_lea.vmem %s4, %s369
      $region48: #{bottleneck_forward.7} parent=43 // pred_fallthru
        _
    $region44: #{bottleneck_forward.7} parent=5 // pred_fallthru
      _
  $region6: #{bottleneck_forward.7} parent=0 // loop_footer
    %s14 = sadd.s32 1, %s10
  $region7: #{bottleneck_forward.7} parent=0 // loop_footer_branch
    %9 = sbr.rel target = $region3
  $region8: #{bottleneck_forward.7} parent=0 // loop_exit
    _

// kernel: bottleneck_forward.6
$region0: #{bottleneck_forward.6}
  #allocation0 [shape = 'u32[]', space=smem, size = 0x4, offset = 0x4, fixed_abs, tag = 'smem constant byte address 0x4 - core index']
  #allocation1 [shape = 'u32[144,128]{1,0:T(1,128)}', space=vmem, size = 0x12000, scoped, tag = 'internal scratch']
  %s0 = inlined_call_operand.vmem [shape: f32[512,128], index: 0, kind: input, shape index: {}]
  %s1 = inlined_call_operand.vmem [shape: f32[1,128], index: 1, kind: input, shape index: {}]
  %s2 = inlined_call_operand.vmem [shape: f32[1,128], index: 2, kind: input, shape index: {}]
  %s3 = inlined_call_operand.vmem [shape: f32[128,128], index: 3, kind: input, shape index: {}]
  %s4 = inlined_call_operand.vmem [shape: f32[512,128], index: 4, kind: output, shape index: {0}]
  %s5 = inlined_call_operand.vmem [shape: f32[4,2,128], index: 5, kind: output, shape index: {1}]
  %6 = xla_tuple %s4, %s5
  %s7 = sld [smem:[#allocation0]]
  $region57: #{bottleneck_forward.6} parent=0
    _
  %s9 = ssub.s32 1, %s7
  %s10 = scalar_select 0, %s9, %s7
  loop: start=0, step=1, limit=6
  $region2: #{bottleneck_forward.6} parent=0 // loop_pre_header
    _
  $region3: #{bottleneck_forward.6} parent=0 // loop_header
    %s12 = sphi 0, %s16
    %p13 = scmp.ge.s32.totalorder %s12, 6
    %s22 = sphi 0, %s24
    %s25 = sphi 0, %s22
    %s26 = sphi 0, %s25
    %s42 = sphi 0, %s26
    %s46 = sphi 0, %s46
    %s48 = sphi 0, %s46
    %s49 = sphi 0, %s48
    %s63 = sphi 0, %s49
    %s67 = sphi 0, %s67
    %s69 = sphi 0, %s67
    %s70 = sphi 0, %s69
    %s84 = sphi 0, %s70
    %s88 = sphi 0, %s88
    %s90 = sphi 0, %s88
    %s91 = sphi 0, %s90
    %s105 = sphi 0, %s91
    %s111 = sphi 0, %s113
    %s114 = sphi 0, %s111
    %s115 = sphi 0, %s114
    %s131 = sphi 0, %s115
    %s137 = sphi 0, %s139
    %s140 = sphi 0, %s137
    %s141 = sphi 0, %s140
    %s157 = sphi 0, %s141
  $region4: #{bottleneck_forward.6} parent=0 // loop_header_branch
    %15 = sbr.rel (%p13) target = $region8
  $region5: #{bottleneck_forward.6} parent=0 // loop_body
    %s17 = ssub.s32 %s12, 1
    %s18 = ssub.s32 %s12, 2
    %s19 = sadd.s32 %s12, 1
    %s20 = ssub.s32 %s12, %s19
    %p21 = scmp.eq.s32.totalorder %s20, 0
    %s23 = sadd.s32 %s22, 1
    %s24 = scalar_select %p21, %s22, %s23
    %p27 = pneg %p21
    %p28 = scmp.eq.s32.totalorder %s12, 3
    %p29 = por %p27, %p28
    %p30 = scmp.ne.s32.totalorder %s22, %s25
    %p31 = scmp.eq.s32.totalorder %s12, 0
    %p32 = por %p30, %p31
    %p33 = scmp.ne.s32.totalorder %s22, %s25
    %p34 = scmp.eq.s32.totalorder %s17, 3
    %p35 = por %p33, %p34
    %p36 = scmp.ne.s32.totalorder %s25, %s26
    %p37 = scmp.eq.s32.totalorder %s17, 0
    %p38 = por %p36, %p37
    %p39 = scmp.ne.s32.totalorder %s25, %s26
    %p40 = scmp.eq.s32.totalorder %s18, 3
    %p41 = por %p39, %p40
    %p43 = scmp.ne.s32.totalorder %s26, %s42
    %p44 = scmp.eq.s32.totalorder %s18, 0
    %p45 = por %p43, %p44
    %s47 = sadd.s32 %s46, 1
    %p50 = scmp.eq.s32.totalorder %s12, 3
    %p51 = scmp.ne.s32.totalorder %s46, %s48
    %p52 = scmp.eq.s32.totalorder %s12, 0
    %p53 = por %p51, %p52
    %p54 = scmp.ne.s32.totalorder %s46, %s48
    %p55 = scmp.eq.s32.totalorder %s17, 3
    %p56 = por %p54, %p55
    %p57 = scmp.ne.s32.totalorder %s48, %s49
    %p58 = scmp.eq.s32.totalorder %s17, 0
    %p59 = por %p57, %p58
    %p60 = scmp.ne.s32.totalorder %s48, %s49
    %p61 = scmp.eq.s32.totalorder %s18, 3
    %p62 = por %p60, %p61
    %p64 = scmp.ne.s32.totalorder %s49, %s63
    %p65 = scmp.eq.s32.totalorder %s18, 0
    %p66 = por %p64, %p65
    %s68 = sadd.s32 %s67, 1
    %p71 = scmp.eq.s32.totalorder %s12, 3
    %p72 = scmp.ne.s32.totalorder %s67, %s69
    %p73 = scmp.eq.s32.totalorder %s12, 0
    %p74 = por %p72, %p73
    %p75 = scmp.ne.s32.totalorder %s67, %s69
    %p76 = scmp.eq.s32.totalorder %s17, 3
    %p77 = por %p75, %p76
    %p78 = scmp.ne.s32.totalorder %s69, %s70
    %p79 = scmp.eq.s32.totalorder %s17, 0
    %p80 = por %p78, %p79
    %p81 = scmp.ne.s32.totalorder %s69, %s70
    %p82 = scmp.eq.s32.totalorder %s18, 3
    %p83 = por %p81, %p82
    %p85 = scmp.ne.s32.totalorder %s70, %s84
    %p86 = scmp.eq.s32.totalorder %s18, 0
    %p87 = por %p85, %p86
    %s89 = sadd.s32 %s88, 1
    %p92 = scmp.eq.s32.totalorder %s12, 3
    %p93 = scmp.ne.s32.totalorder %s88, %s90
    %p94 = scmp.eq.s32.totalorder %s12, 0
    %p95 = por %p93, %p94
    %p96 = scmp.ne.s32.totalorder %s88, %s90
    %p97 = scmp.eq.s32.totalorder %s17, 3
    %p98 = por %p96, %p97
    %p99 = scmp.ne.s32.totalorder %s90, %s91
    %p100 = scmp.eq.s32.totalorder %s17, 0
    %p101 = por %p99, %p100
    %p102 = scmp.ne.s32.totalorder %s90, %s91
    %p103 = scmp.eq.s32.totalorder %s18, 3
    %p104 = por %p102, %p103
    %p106 = scmp.ne.s32.totalorder %s91, %s105
    %p107 = scmp.eq.s32.totalorder %s18, 0
    %p108 = por %p106, %p107
    %s109 = ssub.s32 %s12, %s19
    %p110 = scmp.eq.s32.totalorder %s109, 0
    %s112 = sadd.s32 %s111, 1
    %s113 = scalar_select %p110, %s111, %s112
    %p116 = pneg %p110
    %p117 = scmp.eq.s32.totalorder %s12, 3
    %p118 = por %p116, %p117
    %p119 = scmp.ne.s32.totalorder %s111, %s114
    %p120 = scmp.eq.s32.totalorder %s12, 0
    %p121 = por %p119, %p120
    %p122 = scmp.ne.s32.totalorder %s111, %s114
    %p123 = scmp.eq.s32.totalorder %s17, 3
    %p124 = por %p122, %p123
    %p125 = scmp.ne.s32.totalorder %s114, %s115
    %p126 = scmp.eq.s32.totalorder %s17, 0
    %p127 = por %p125, %p126
    %p128 = scmp.ne.s32.totalorder %s114, %s115
    %p129 = scmp.eq.s32.totalorder %s18, 3
    %p130 = por %p128, %p129
    %p132 = scmp.ne.s32.totalorder %s115, %s131
    %p133 = scmp.eq.s32.totalorder %s18, 0
    %p134 = por %p132, %p133
    %s135 = ssub.s32 %s12, %s19
    %p136 = scmp.eq.s32.totalorder %s135, 0
    %s138 = sadd.s32 %s137, 1
    %s139 = scalar_select %p136, %s137, %s138
    %p142 = pneg %p136
    %p143 = scmp.eq.s32.totalorder %s12, 3
    %p144 = por %p142, %p143
    %p145 = scmp.ne.s32.totalorder %s137, %s140
    %p146 = scmp.eq.s32.totalorder %s12, 0
    %p147 = por %p145, %p146
    %p148 = scmp.ne.s32.totalorder %s137, %s140
    %p149 = scmp.eq.s32.totalorder %s17, 3
    %p150 = por %p148, %p149
    %p151 = scmp.ne.s32.totalorder %s140, %s141
    %p152 = scmp.eq.s32.totalorder %s17, 0
    %p153 = por %p151, %p152
    %p154 = scmp.ne.s32.totalorder %s140, %s141
    %p155 = scmp.eq.s32.totalorder %s18, 3
    %p156 = por %p154, %p155
    %p158 = scmp.ne.s32.totalorder %s141, %s157
    %p159 = scmp.eq.s32.totalorder %s18, 0
    %p160 = por %p158, %p159
    %p161 = scmp.le.s32.totalorder 1, %s12
    %p162 = scmp.lt.s32.totalorder %s12, 5
    %p163 = pnand %p161, %p162
    %p164 = pneg %p163
    // Predicated region
    $region9: #{bottleneck_forward.6} parent=5 // pred_check
      _
    $region10: #{bottleneck_forward.6} parent=5 // pred_check_branch
      %166 = sbr.rel (%p163) target = $region12
    $region11: #{bottleneck_forward.6} parent=5 // pred_region
      %s167 = ssub.s32 %s12, 1
      // Predicated region
      $region13: #{bottleneck_forward.6} parent=11 // pred_check
        %p168 = pneg %p59
      $region14: #{bottleneck_forward.6} parent=11 // pred_check_branch
        %170 = sbr.rel (%p168) target = $region16
      $region15: #{bottleneck_forward.6} parent=11 // pred_region
        _
      $region16: #{bottleneck_forward.6} parent=11 // pred_fallthru
        _
      // Predicated region
      $region17: #{bottleneck_forward.6} parent=11 // pred_check
        %p171 = pneg %p80
      $region18: #{bottleneck_forward.6} parent=11 // pred_check_branch
        %173 = sbr.rel (%p171) target = $region20
      $region19: #{bottleneck_forward.6} parent=11 // pred_region
        _
      $region20: #{bottleneck_forward.6} parent=11 // pred_fallthru
        _
      // Predicated region
      $region21: #{bottleneck_forward.6} parent=11 // pred_check
        %p174 = pneg %p101
      $region22: #{bottleneck_forward.6} parent=11 // pred_check_branch
        %176 = sbr.rel (%p174) target = $region24
      $region23: #{bottleneck_forward.6} parent=11 // pred_region
        _
      $region24: #{bottleneck_forward.6} parent=11 // pred_fallthru
        _
    $region12: #{bottleneck_forward.6} parent=5 // pred_fallthru
      _
    %p177 = scmp.lt.s32.totalorder %s12, 4
    // Predicated region
    $region25: #{bottleneck_forward.6} parent=5 // pred_check
      %p178 = pneg %p177
    $region26: #{bottleneck_forward.6} parent=5 // pred_check_branch
      %180 = sbr.rel (%p178) target = $region28
    $region27: #{bottleneck_forward.6} parent=5 // pred_region
      // Predicated region
      $region29: #{bottleneck_forward.6} parent=27 // pred_check
        %p181 = pneg %p32
      $region30: #{bottleneck_forward.6} parent=27 // pred_check_branch
        %183 = sbr.rel (%p181) target = $region32
      $region31: #{bottleneck_forward.6} parent=27 // pred_region
        %s184 = smul.u32 16, %s12
        %p185 = scmp.lt.s32.totalorder %s184, 63
        %s186 = scalar_select %p185, %s184, 63
        %s187 = smul.addr %s186, 8
        %s188 = scalar_lea.vmem %s0, %s187
        %s189 = smul.u32 16, %s12
      $region32: #{bottleneck_forward.6} parent=27 // pred_fallthru
        _
    $region28: #{bottleneck_forward.6} parent=5 // pred_fallthru
      _
    %p190 = scmp.le.s32.totalorder 1, %s12
    %p191 = scmp.lt.s32.totalorder %s12, 5
    %p192 = pnand %p190, %p191
    %p193 = pneg %p192
    // Predicated region
    $region33: #{bottleneck_forward.6} parent=5 // pred_check
      _
    $region34: #{bottleneck_forward.6} parent=5 // pred_check_branch
      %195 = sbr.rel (%p192) target = $region36
    $region35: #{bottleneck_forward.6} parent=5 // pred_region
      %s196 = ssub.s32 %s12, 1
      %s197 = smul.u32 16, %s17
      %p198 = scmp.lt.s32.totalorder %s197, 63
      %s199 = scalar_select %p198, %s197, 63
      %s200 = smul.addr %s199, 8
      %s201 = scalar_lea.vmem %s0, %s200
      %p202 = pneg %p38
      %p203 = pneg %p35
      %p204 = pneg %p59
      %p205 = pneg %p56
      %p206 = pneg %p80
      %p207 = pneg %p77
      %p208 = pneg %p101
      %p209 = pneg %p98
      %p210 = pneg %p127
      %p211 = pneg %p124
      %s212 = smul.u32 16, %s17
      %p213 = scmp.lt.s32.totalorder %s212, 63
      %s214 = scalar_select %p213, %s212, 63
      %s215 = smul.addr %s214, 8
      %s216 = scalar_lea.vmem %s4, %s215
      %p217 = pneg %p153
      %p218 = pneg %p150
      %p219 = scmp.lt.s32.totalorder %s17, 3
      %s220 = scalar_select %p219, %s17, 3
      %s221 = smul.addr %s220, 2
      %s222 = scalar_lea.vmem %s5, %s221
      %s223 = smul.u32 16, %s17
      %p224 = scmp.lt.s32.totalorder %s223, 63
      %s225 = scalar_select %p224, %s223, 63
      %s226 = smul.addr %s225, 8
      %s227 = scalar_lea.vmem %s0, %s226
      %s228 = smul.u32 16, %s17
      %s229 = smul.u32 16, %s17
      %p230 = scmp.lt.s32.totalorder %s229, 63
      %s231 = scalar_select %p230, %s229, 63
      %s232 = smul.addr %s231, 8
      %s233 = scalar_lea.vmem %s4, %s232
      %s234 = smul.u32 16, %s17
      %p235 = scmp.lt.s32.totalorder %s17, 3
      %s236 = scalar_select %p235, %s17, 3
      %s237 = smul.addr %s236, 2
      %s238 = scalar_lea.vmem %s5, %s237
      %v239 = vld [vmem:[%s227] sm:$0xff]
      %v240 = vld [vmem:[%s227 + $0x8] sm:$0xff]
      %v241 = vld [vmem:[%s227 + $0x10] sm:$0xff]
      %v242 = vld [vmem:[%s227 + $0x18] sm:$0xff]
      %v243 = vld [vmem:[%s227 + $0x20] sm:$0xff]
      %v244 = vld [vmem:[%s227 + $0x28] sm:$0xff]
      %v245 = vld [vmem:[%s227 + $0x30] sm:$0xff]
      %v246 = vld [vmem:[%s227 + $0x38] sm:$0xff]
      %v247 = vld [vmem:[%s227 + $0x40] sm:$0xff]
      %v248 = vld [vmem:[%s227 + $0x48] sm:$0xff]
      %v249 = vld [vmem:[%s227 + $0x50] sm:$0xff]
      %v250 = vld [vmem:[%s227 + $0x58] sm:$0xff]
      %v251 = vld [vmem:[%s227 + $0x60] sm:$0xff]
      %v252 = vld [vmem:[%s227 + $0x68] sm:$0xff]
      %v253 = vld [vmem:[%s227 + $0x70] sm:$0xff]
      %v254 = vld [vmem:[%s227 + $0x78] sm:$0xff]
      %v255 = vld [vmem:[%s1] sm:$0x1]
      %v257 = vlaneseq
      %v258 = vshrl.u32 %v257, 7
      %v259 = vsub.s32 0, %v258
      %v260 = vrot.slane %v255, %v259
      %v262 = vmul.f32 %v239, %v260
      %v263 = vmul.f32 %v240, %v260
      %v264 = vmul.f32 %v241, %v260
      %v265 = vmul.f32 %v242, %v260
      %v266 = vmul.f32 %v243, %v260
      %v267 = vmul.f32 %v244, %v260
      %v268 = vmul.f32 %v245, %v260
      %v269 = vmul.f32 %v246, %v260
      %v270 = vmul.f32 %v247, %v260
      %v271 = vmul.f32 %v248, %v260
      %v272 = vmul.f32 %v249, %v260
      %v273 = vmul.f32 %v250, %v260
      %v274 = vmul.f32 %v251, %v260
      %v275 = vmul.f32 %v252, %v260
      %v276 = vmul.f32 %v253, %v260
      %v277 = vmul.f32 %v254, %v260
      %v278 = vld [vmem:[%s2] sm:$0x1]
      %v280 = vlaneseq
      %v281 = vshrl.u32 %v280, 7
      %v282 = vsub.s32 0, %v281
      %v283 = vrot.slane %v278, %v282
      %v285 = vadd.f32 %v262, %v283
      %v286 = vadd.f32 %v263, %v283
      %v287 = vadd.f32 %v264, %v283
      %v288 = vadd.f32 %v265, %v283
      %v289 = vadd.f32 %v266, %v283
      %v290 = vadd.f32 %v267, %v283
      %v291 = vadd.f32 %v268, %v283
      %v292 = vadd.f32 %v269, %v283
      %v293 = vadd.f32 %v270, %v283
      %v294 = vadd.f32 %v271, %v283
      %v295 = vadd.f32 %v272, %v283
      %v296 = vadd.f32 %v273, %v283
      %v297 = vadd.f32 %v274, %v283
      %v298 = vadd.f32 %v275, %v283
      %v299 = vadd.f32 %v276, %v283
      %v300 = vadd.f32 %v277, %v283
      %v301 = vmax.f32 %v285, 0.0
      %v302 = vmax.f32 %v286, 0.0
      %v303 = vmax.f32 %v287, 0.0
      %v304 = vmax.f32 %v288, 0.0
      %v305 = vmax.f32 %v289, 0.0
      %v306 = vmax.f32 %v290, 0.0
      %v307 = vmax.f32 %v291, 0.0
      %v308 = vmax.f32 %v292, 0.0
      %v309 = vmax.f32 %v293, 0.0
      %v310 = vmax.f32 %v294, 0.0
      %v311 = vmax.f32 %v295, 0.0
      %v312 = vmax.f32 %v296, 0.0
      %v313 = vmax.f32 %v297, 0.0
      %v314 = vmax.f32 %v298, 0.0
      %v315 = vmax.f32 %v299, 0.0
      %v316 = vmax.f32 %v300, 0.0
      %v317 = vld [vmem:[%s3] sm:$0xff]
      %v318 = vld [vmem:[%s3 + $0x8] sm:$0xff]
      %v319 = vld [vmem:[%s3 + $0x10] sm:$0xff]
      %v320 = vld [vmem:[%s3 + $0x18] sm:$0xff]
      %v321 = vld [vmem:[%s3 + $0x20] sm:$0xff]
      %v322 = vld [vmem:[%s3 + $0x28] sm:$0xff]
      %v323 = vld [vmem:[%s3 + $0x30] sm:$0xff]
      %v324 = vld [vmem:[%s3 + $0x38] sm:$0xff]
      %v325 = vld [vmem:[%s3 + $0x40] sm:$0xff]
      %v326 = vld [vmem:[%s3 + $0x48] sm:$0xff]
      %v327 = vld [vmem:[%s3 + $0x50] sm:$0xff]
      %v328 = vld [vmem:[%s3 + $0x58] sm:$0xff]
      %v329 = vld [vmem:[%s3 + $0x60] sm:$0xff]
      %v330 = vld [vmem:[%s3 + $0x68] sm:$0xff]
      %v331 = vld [vmem:[%s3 + $0x70] sm:$0xff]
      %v332 = vld [vmem:[%s3 + $0x78] sm:$0xff]
      %333 = vmatprep.subr.mxu0 0.0
      %334 = vmatpush1.msra.mxu0 %v317
      %335 = vmatprep.subr.mxu0 0.0
      %336 = vmatpush1.msra.mxu0 %v318
      %337 = vmatprep.subr.mxu0 0.0
      %338 = vmatpush1.msra.mxu0 %v319
      %339 = vmatprep.subr.mxu0 0.0
      %340 = vmatpush1.msra.mxu0 %v320
      %341 = vmatprep.subr.mxu0 0.0
      %342 = vmatpush1.msra.mxu0 %v321
      %343 = vmatprep.subr.mxu0 0.0
      %344 = vmatpush1.msra.mxu0 %v322
      %345 = vmatprep.subr.mxu0 0.0
      %346 = vmatpush1.msra.mxu0 %v323
      %347 = vmatprep.subr.mxu0 0.0
      %348 = vmatpush1.msra.mxu0 %v324
      %349 = vmatprep.subr.mxu0 0.0
      %350 = vmatpush1.msra.mxu0 %v325
      %351 = vmatprep.subr.mxu0 0.0
      %352 = vmatpush1.msra.mxu0 %v326
      %353 = vmatprep.subr.mxu0 0.0
      %354 = vmatpush1.msra.mxu0 %v327
      %355 = vmatprep.subr.mxu0 0.0
      %356 = vmatpush1.msra.mxu0 %v328
      %357 = vmatprep.subr.mxu0 0.0
      %358 = vmatpush1.msra.mxu0 %v329
      %359 = vmatprep.subr.mxu0 0.0
      %360 = vmatpush1.msra.mxu0 %v330
      %361 = vmatprep.subr.mxu0 0.0
      %362 = vmatpush1.msra.mxu0 %v331
      %363 = vmatprep.subr.mxu0 0.0
      %364 = vmatpush1.msra.mxu0 %v332
      %365 = vmatprep.subr.mxu0 0.0
      %366 = vmatpush1.msra.mxu0 0.0
      %367 = vmatprep.subr.mxu0 0.0
      %368 = vmatpush1.msra.mxu0 0.0
      %369 = vmatprep.subr.mxu0 0.0
      %370 = vmatpush1.msra.mxu0 0.0
      %371 = vmatprep.subr.mxu0 0.0
      %372 = vmatpush1.msra.mxu0 0.0
      %373 = vmatprep.subr.mxu0 0.0
      %374 = vmatpush1.msra.mxu0 0.0
      %375 = vmatprep.subr.mxu0 0.0
      %376 = vmatpush1.msra.mxu0 0.0
      %377 = vmatprep.subr.mxu0 0.0
      %378 = vmatpush1.msra.mxu0 0.0
      %379 = vmatprep.subr.mxu0 0.0
      %380 = vmatpush1.msra.mxu0 0.0
      %381 = vmatprep.subr.mxu0 0.0
      %382 = vmatpush1.msra.mxu0 0.0
      %383 = vmatprep.subr.mxu0 0.0
      %384 = vmatpush1.msra.mxu0 0.0
      %385 = vmatprep.subr.mxu0 0.0
      %386 = vmatpush1.msra.mxu0 0.0
      %387 = vmatprep.subr.mxu0 0.0
      %388 = vmatpush1.msra.mxu0 0.0
      %389 = vmatprep.subr.mxu0 0.0
      %390 = vmatpush1.msra.mxu0 0.0
      %391 = vmatprep.subr.mxu0 0.0
      %392 = vmatpush1.msra.mxu0 0.0
      %393 = vmatprep.subr.mxu0 0.0
      %394 = vmatpush1.msra.mxu0 0.0
      %395 = vmatprep.subr.mxu0 0.0
      %396 = vmatpush1.msra.mxu0 0.0
      %397 = vmatprep.mubr.f32.mxu0 0.0
      %398 = vmatmul.mubr.f32.gmra.mrb[0].mxu0 %v301
      %v399 = vpop.f32.mrb[0].mxu0
      %v400 = vadd.f32 0.0, %v399
      %v401 = vpop.f32.mrb[0].mxu0
      %402 = vmatprep.mubr.f32.mxu0 0.0
      %403 = vmatmul.mubr.f32.gmra.mrb[0].mxu0 %v302
      %v404 = vpop.f32.mrb[0].mxu0
      %v405 = vadd.f32 0.0, %v404
      %v406 = vpop.f32.mrb[0].mxu0
      %407 = vmatprep.mubr.f32.mxu0 0.0
      %408 = vmatmul.mubr.f32.gmra.mrb[0].mxu0 %v303
      %v409 = vpop.f32.mrb[0].mxu0
      %v410 = vadd.f32 0.0, %v409
      %v411 = vpop.f32.mrb[0].mxu0
      %412 = vmatprep.mubr.f32.mxu0 0.0
      %413 = vmatmul.mubr.f32.gmra.mrb[0].mxu0 %v304
      %v414 = vpop.f32.mrb[0].mxu0
      %v415 = vadd.f32 0.0, %v414
      %v416 = vpop.f32.mrb[0].mxu0
      %417 = vmatprep.mubr.f32.mxu0 0.0
      %418 = vmatmul.mubr.f32.gmra.mrb[0].mxu0 %v305
      %v419 = vpop.f32.mrb[0].mxu0
      %v420 = vadd.f32 0.0, %v419
      %v421 = vpop.f32.mrb[0].mxu0
      %422 = vmatprep.mubr.f32.mxu0 0.0
      %423 = vmatmul.mubr.f32.gmra.mrb[0].mxu0 %v306
      %v424 = vpop.f32.mrb[0].mxu0
      %v425 = vadd.f32 0.0, %v424
      %v426 = vpop.f32.mrb[0].mxu0
      %427 = vmatprep.mubr.f32.mxu0 0.0
      %428 = vmatmul.mubr.f32.gmra.mrb[0].mxu0 %v307
      %v429 = vpop.f32.mrb[0].mxu0
      %v430 = vadd.f32 0.0, %v429
      %v431 = vpop.f32.mrb[0].mxu0
      %432 = vmatprep.mubr.f32.mxu0 0.0
      %433 = vmatmul.mubr.f32.gmra.mrb[0].mxu0 %v308
      %v434 = vpop.f32.mrb[0].mxu0
      %v435 = vadd.f32 0.0, %v434
      %v436 = vpop.f32.mrb[0].mxu0
      %437 = vmatprep.mubr.f32.mxu0 0.0
      %438 = vmatmul.mubr.f32.gmra.mrb[0].mxu0 %v309
      %v439 = vpop.f32.mrb[0].mxu0
      %v440 = vadd.f32 0.0, %v439
      %v441 = vpop.f32.mrb[0].mxu0
      %442 = vmatprep.mubr.f32.mxu0 0.0
      %443 = vmatmul.mubr.f32.gmra.mrb[0].mxu0 %v310
      %v444 = vpop.f32.mrb[0].mxu0
      %v445 = vadd.f32 0.0, %v444
      %v446 = vpop.f32.mrb[0].mxu0
      %447 = vmatprep.mubr.f32.mxu0 0.0
      %448 = vmatmul.mubr.f32.gmra.mrb[0].mxu0 %v311
      %v449 = vpop.f32.mrb[0].mxu0
      %v450 = vadd.f32 0.0, %v449
      %v451 = vpop.f32.mrb[0].mxu0
      %452 = vmatprep.mubr.f32.mxu0 0.0
      %453 = vmatmul.mubr.f32.gmra.mrb[0].mxu0 %v312
      %v454 = vpop.f32.mrb[0].mxu0
      %v455 = vadd.f32 0.0, %v454
      %v456 = vpop.f32.mrb[0].mxu0
      %457 = vmatprep.mubr.f32.mxu0 0.0
      %458 = vmatmul.mubr.f32.gmra.mrb[0].mxu0 %v313
      %v459 = vpop.f32.mrb[0].mxu0
      %v460 = vadd.f32 0.0, %v459
      %v461 = vpop.f32.mrb[0].mxu0
      %462 = vmatprep.mubr.f32.mxu0 0.0
      %463 = vmatmul.mubr.f32.gmra.mrb[0].mxu0 %v314
      %v464 = vpop.f32.mrb[0].mxu0
      %v465 = vadd.f32 0.0, %v464
      %v466 = vpop.f32.mrb[0].mxu0
      %467 = vmatprep.mubr.f32.mxu0 0.0
      %468 = vmatmul.mubr.f32.gmra.mrb[0].mxu0 %v315
      %v469 = vpop.f32.mrb[0].mxu0
      %v470 = vadd.f32 0.0, %v469
      %v471 = vpop.f32.mrb[0].mxu0
      %472 = vmatprep.mubr.f32.mxu0 0.0
      %473 = vmatmul.mubr.f32.gmra.mrb[0].mxu0 %v316
      %v474 = vpop.f32.mrb[0].mxu0
      %v475 = vadd.f32 0.0, %v474
      %v476 = vpop.f32.mrb[0].mxu0
      %477 = vdwg.mxu0
      %478 = vst [vmem:[%s233] sm:$0xff] %v400
      %479 = vst [vmem:[%s233 + $0x8] sm:$0xff] %v405
      %480 = vst [vmem:[%s233 + $0x10] sm:$0xff] %v410
      %481 = vst [vmem:[%s233 + $0x18] sm:$0xff] %v415
      %482 = vst [vmem:[%s233 + $0x20] sm:$0xff] %v420
      %483 = vst [vmem:[%s233 + $0x28] sm:$0xff] %v425
      %484 = vst [vmem:[%s233 + $0x30] sm:$0xff] %v430
      %485 = vst [vmem:[%s233 + $0x38] sm:$0xff] %v435
      %486 = vst [vmem:[%s233 + $0x40] sm:$0xff] %v440
      %487 = vst [vmem:[%s233 + $0x48] sm:$0xff] %v445
      %488 = vst [vmem:[%s233 + $0x50] sm:$0xff] %v450
      %489 = vst [vmem:[%s233 + $0x58] sm:$0xff] %v455
      %490 = vst [vmem:[%s233 + $0x60] sm:$0xff] %v460
      %491 = vst [vmem:[%s233 + $0x68] sm:$0xff] %v465
      %492 = vst [vmem:[%s233 + $0x70] sm:$0xff] %v470
      %493 = vst [vmem:[%s233 + $0x78] sm:$0xff] %v475
      %v494 = vadd.f32 %v400, %v405
      %v495 = vadd.f32 %v494, %v410
      %v496 = vadd.f32 %v495, %v415
      %v497 = vadd.f32 %v496, %v420
      %v498 = vadd.f32 %v497, %v425
      %v499 = vadd.f32 %v498, %v430
      %v500 = vadd.f32 %v499, %v435
      %v501 = vadd.f32 %v500, %v440
      %v502 = vadd.f32 %v501, %v445
      %v503 = vadd.f32 %v502, %v450
      %v504 = vadd.f32 %v503, %v455
      %v505 = vadd.f32 %v504, %v460
      %v506 = vadd.f32 %v505, %v465
      %v507 = vadd.f32 %v506, %v470
      %v508 = vadd.f32 %v507, %v475
      %v509 = vrot.slane %v508, 4
      %v510 = vadd.f32 %v508, %v509
      %v511 = vrot.slane %v510, 2
      %v512 = vadd.f32 %v510, %v511
      %v513 = vrot.slane %v512, 1
      %v514 = vadd.f32 %v512, %v513
      %515 = vst [vmem:[%s238] sm:$0x1] %v514
      %v516 = vmul.f32 %v400, %v400
      %v517 = vmul.f32 %v405, %v405
      %v518 = vmul.f32 %v410, %v410
      %v519 = vmul.f32 %v415, %v415
      %v520 = vmul.f32 %v420, %v420
      %v521 = vmul.f32 %v425, %v425
      %v522 = vmul.f32 %v430, %v430
      %v523 = vmul.f32 %v435, %v435
      %v524 = vmul.f32 %v440, %v440
      %v525 = vmul.f32 %v445, %v445
      %v526 = vmul.f32 %v450, %v450
      %v527 = vmul.f32 %v455, %v455
      %v528 = vmul.f32 %v460, %v460
      %v529 = vmul.f32 %v465, %v465
      %v530 = vmul.f32 %v470, %v470
      %v531 = vmul.f32 %v475, %v475
      %v532 = vadd.f32 %v516, %v517
      %v533 = vadd.f32 %v532, %v518
      %v534 = vadd.f32 %v533, %v519
      %v535 = vadd.f32 %v534, %v520
      %v536 = vadd.f32 %v535, %v521
      %v537 = vadd.f32 %v536, %v522
      %v538 = vadd.f32 %v537, %v523
      %v539 = vadd.f32 %v538, %v524
      %v540 = vadd.f32 %v539, %v525
      %v541 = vadd.f32 %v540, %v526
      %v542 = vadd.f32 %v541, %v527
      %v543 = vadd.f32 %v542, %v528
      %v544 = vadd.f32 %v543, %v529
      %v545 = vadd.f32 %v544, %v530
      %v546 = vadd.f32 %v545, %v531
      %v547 = vrot.slane %v546, 4
      %v548 = vadd.f32 %v546, %v547
      %v549 = vrot.slane %v548, 2
      %v550 = vadd.f32 %v548, %v549
      %v551 = vrot.slane %v550, 1
      %v552 = vadd.f32 %v550, %v551
      %553 = vst [vmem:[%s238 + $0x1] sm:$0x1] %v552
      %s554 = smul.u32 16, %s17
      %p555 = scmp.lt.s32.totalorder %s554, 63
      %s556 = scalar_select %p555, %s554, 63
      %s557 = smul.addr %s556, 8
      %s558 = scalar_lea.vmem %s4, %s557
      %p559 = scmp.lt.s32.totalorder %s17, 3
      %s560 = scalar_select %p559, %s17, 3
      %s561 = smul.addr %s560, 2
      %s562 = scalar_lea.vmem %s5, %s561
      // Predicated region
      $region37: #{bottleneck_forward.6} parent=35 // pred_check
        %p563 = pneg %p124
      $region38: #{bottleneck_forward.6} parent=35 // pred_check_branch
        %565 = sbr.rel (%p563) target = $region40
      $region39: #{bottleneck_forward.6} parent=35 // pred_region
        %s566 = smul.u32 16, %s17
      $region40: #{bottleneck_forward.6} parent=35 // pred_fallthru
        _
      // Predicated region
      $region41: #{bottleneck_forward.6} parent=35 // pred_check
        %p567 = pneg %p150
      $region42: #{bottleneck_forward.6} parent=35 // pred_check_branch
        %569 = sbr.rel (%p567) target = $region44
      $region43: #{bottleneck_forward.6} parent=35 // pred_region
        _
      $region44: #{bottleneck_forward.6} parent=35 // pred_fallthru
        _
    $region36: #{bottleneck_forward.6} parent=5 // pred_fallthru
      _
    %p570 = scmp.le.s32.totalorder 2, %s12
    // Predicated region
    $region45: #{bottleneck_forward.6} parent=5 // pred_check
      %p571 = pneg %p570
    $region46: #{bottleneck_forward.6} parent=5 // pred_check_branch
      %573 = sbr.rel (%p571) target = $region48
    $region47: #{bottleneck_forward.6} parent=5 // pred_region
      %s574 = ssub.s32 %s12, 2
      // Predicated region
      $region49: #{bottleneck_forward.6} parent=47 // pred_check
        %p575 = pneg %p130
      $region50: #{bottleneck_forward.6} parent=47 // pred_check_branch
        %577 = sbr.rel (%p575) target = $region52
      $region51: #{bottleneck_forward.6} parent=47 // pred_region
        %s578 = smul.u32 16, %s18
        %p579 = scmp.lt.s32.totalorder %s578, 63
        %s580 = scalar_select %p579, %s578, 63
        %s581 = smul.addr %s580, 8
        %s582 = scalar_lea.vmem %s4, %s581
      $region52: #{bottleneck_forward.6} parent=47 // pred_fallthru
        _
      // Predicated region
      $region53: #{bottleneck_forward.6} parent=47 // pred_check
        %p583 = pneg %p156
      $region54: #{bottleneck_forward.6} parent=47 // pred_check_branch
        %585 = sbr.rel (%p583) target = $region56
      $region55: #{bottleneck_forward.6} parent=47 // pred_region
        %p586 = scmp.lt.s32.totalorder %s18, 3
        %s587 = scalar_select %p586, %s18, 3
        %s588 = smul.addr %s587, 2
        %s589 = scalar_lea.vmem %s5, %s588
      $region56: #{bottleneck_forward.6} parent=47 // pred_fallthru
        _
    $region48: #{bottleneck_forward.6} parent=5 // pred_fallthru
      _
  $region6: #{bottleneck_forward.6} parent=0 // loop_footer
    %s16 = sadd.s32 1, %s12
  $region7: #{bottleneck_forward.6} parent=0 // loop_footer_branch
    %11 = sbr.rel target = $region3
  $region8: #{bottleneck_forward.6} parent=0 // loop_exit
    _

// kernel: bottleneck_forward.5
$region0: #{bottleneck_forward.5}
  #allocation0 [shape = 'u32[]', space=smem, size = 0x4, offset = 0x4, fixed_abs, tag = 'smem constant byte address 0x4 - core index']
  #allocation1 [shape = 'u32[144,128]{1,0:T(1,128)}', space=vmem, size = 0x12000, scoped, tag = 'internal scratch']
  #allocation2 [shape = 'f32[304,128]{1,0:T(8,128)}', space=vmem, size = 0x26000, scoped, tag = 'scratch operand']
  %s0 = inlined_call_operand.vmem [shape: f32[2,256,128], index: 0, kind: input, shape index: {}]
  %s1 = inlined_call_operand.vmem [shape: f32[1,128], index: 1, kind: input, shape index: {}]
  %s2 = inlined_call_operand.vmem [shape: f32[1,128], index: 2, kind: input, shape index: {}]
  %s3 = inlined_call_operand.vmem [shape: f32[9,128,128], index: 3, kind: input, shape index: {}]
  %s4 = inlined_call_operand.vmem [shape: f32[2,256,128], index: 4, kind: output, shape index: {0}]
  %s5 = inlined_call_operand.vmem [shape: f32[2,2,128], index: 5, kind: output, shape index: {1}]
  %6 = xla_tuple %s4, %s5
  %s7 = sld [smem:[#allocation0]]
  $region57: #{bottleneck_forward.5} parent=0
    _
  %s9 = ssub.s32 1, %s7
  %s10 = scalar_select 0, %s9, %s7
  loop: start=0, step=1, limit=4
  $region2: #{bottleneck_forward.5} parent=0 // loop_pre_header
    _
  $region3: #{bottleneck_forward.5} parent=0 // loop_header
    %s12 = sphi 0, %s16
    %p13 = scmp.ge.s32.totalorder %s12, 4
    %s22 = sphi 0, %s24
    %s25 = sphi 0, %s22
    %s26 = sphi 0, %s25
    %s42 = sphi 0, %s26
    %s46 = sphi 0, %s46
    %s48 = sphi 0, %s46
    %s49 = sphi 0, %s48
    %s63 = sphi 0, %s49
    %s67 = sphi 0, %s67
    %s69 = sphi 0, %s67
    %s70 = sphi 0, %s69
    %s84 = sphi 0, %s70
    %s88 = sphi 0, %s88
    %s90 = sphi 0, %s88
    %s91 = sphi 0, %s90
    %s105 = sphi 0, %s91
    %s111 = sphi 0, %s113
    %s114 = sphi 0, %s111
    %s115 = sphi 0, %s114
    %s131 = sphi 0, %s115
    %s137 = sphi 0, %s139
    %s140 = sphi 0, %s137
    %s141 = sphi 0, %s140
    %s157 = sphi 0, %s141
  $region4: #{bottleneck_forward.5} parent=0 // loop_header_branch
    %15 = sbr.rel (%p13) target = $region8
  $region5: #{bottleneck_forward.5} parent=0 // loop_body
    %s17 = ssub.s32 %s12, 1
    %s18 = ssub.s32 %s12, 2
    %s19 = sadd.s32 %s12, 1
    %s20 = ssub.s32 %s12, %s19
    %p21 = scmp.eq.s32.totalorder %s20, 0
    %s23 = sadd.s32 %s22, 1
    %s24 = scalar_select %p21, %s22, %s23
    %p27 = pneg %p21
    %p28 = scmp.eq.s32.totalorder %s12, 1
    %p29 = por %p27, %p28
    %p30 = scmp.ne.s32.totalorder %s22, %s25
    %p31 = scmp.eq.s32.totalorder %s12, 0
    %p32 = por %p30, %p31
    %p33 = scmp.ne.s32.totalorder %s22, %s25
    %p34 = scmp.eq.s32.totalorder %s17, 1
    %p35 = por %p33, %p34
    %p36 = scmp.ne.s32.totalorder %s25, %s26
    %p37 = scmp.eq.s32.totalorder %s17, 0
    %p38 = por %p36, %p37
    %p39 = scmp.ne.s32.totalorder %s25, %s26
    %p40 = scmp.eq.s32.totalorder %s18, 1
    %p41 = por %p39, %p40
    %p43 = scmp.ne.s32.totalorder %s26, %s42
    %p44 = scmp.eq.s32.totalorder %s18, 0
    %p45 = por %p43, %p44
    %s47 = sadd.s32 %s46, 1
    %p50 = scmp.eq.s32.totalorder %s12, 1
    %p51 = scmp.ne.s32.totalorder %s46, %s48
    %p52 = scmp.eq.s32.totalorder %s12, 0
    %p53 = por %p51, %p52
    %p54 = scmp.ne.s32.totalorder %s46, %s48
    %p55 = scmp.eq.s32.totalorder %s17, 1
    %p56 = por %p54, %p55
    %p57 = scmp.ne.s32.totalorder %s48, %s49
    %p58 = scmp.eq.s32.totalorder %s17, 0
    %p59 = por %p57, %p58
    %p60 = scmp.ne.s32.totalorder %s48, %s49
    %p61 = scmp.eq.s32.totalorder %s18, 1
    %p62 = por %p60, %p61
    %p64 = scmp.ne.s32.totalorder %s49, %s63
    %p65 = scmp.eq.s32.totalorder %s18, 0
    %p66 = por %p64, %p65
    %s68 = sadd.s32 %s67, 1
    %p71 = scmp.eq.s32.totalorder %s12, 1
    %p72 = scmp.ne.s32.totalorder %s67, %s69
    %p73 = scmp.eq.s32.totalorder %s12, 0
    %p74 = por %p72, %p73
    %p75 = scmp.ne.s32.totalorder %s67, %s69
    %p76 = scmp.eq.s32.totalorder %s17, 1
    %p77 = por %p75, %p76
    %p78 = scmp.ne.s32.totalorder %s69, %s70
    %p79 = scmp.eq.s32.totalorder %s17, 0
    %p80 = por %p78, %p79
    %p81 = scmp.ne.s32.totalorder %s69, %s70
    %p82 = scmp.eq.s32.totalorder %s18, 1
    %p83 = por %p81, %p82
    %p85 = scmp.ne.s32.totalorder %s70, %s84
    %p86 = scmp.eq.s32.totalorder %s18, 0
    %p87 = por %p85, %p86
    %s89 = sadd.s32 %s88, 1
    %p92 = scmp.eq.s32.totalorder %s12, 1
    %p93 = scmp.ne.s32.totalorder %s88, %s90
    %p94 = scmp.eq.s32.totalorder %s12, 0
    %p95 = por %p93, %p94
    %p96 = scmp.ne.s32.totalorder %s88, %s90
    %p97 = scmp.eq.s32.totalorder %s17, 1
    %p98 = por %p96, %p97
    %p99 = scmp.ne.s32.totalorder %s90, %s91
    %p100 = scmp.eq.s32.totalorder %s17, 0
    %p101 = por %p99, %p100
    %p102 = scmp.ne.s32.totalorder %s90, %s91
    %p103 = scmp.eq.s32.totalorder %s18, 1
    %p104 = por %p102, %p103
    %p106 = scmp.ne.s32.totalorder %s91, %s105
    %p107 = scmp.eq.s32.totalorder %s18, 0
    %p108 = por %p106, %p107
    %s109 = ssub.s32 %s12, %s19
    %p110 = scmp.eq.s32.totalorder %s109, 0
    %s112 = sadd.s32 %s111, 1
    %s113 = scalar_select %p110, %s111, %s112
    %p116 = pneg %p110
    %p117 = scmp.eq.s32.totalorder %s12, 1
    %p118 = por %p116, %p117
    %p119 = scmp.ne.s32.totalorder %s111, %s114
    %p120 = scmp.eq.s32.totalorder %s12, 0
    %p121 = por %p119, %p120
    %p122 = scmp.ne.s32.totalorder %s111, %s114
    %p123 = scmp.eq.s32.totalorder %s17, 1
    %p124 = por %p122, %p123
    %p125 = scmp.ne.s32.totalorder %s114, %s115
    %p126 = scmp.eq.s32.totalorder %s17, 0
    %p127 = por %p125, %p126
    %p128 = scmp.ne.s32.totalorder %s114, %s115
    %p129 = scmp.eq.s32.totalorder %s18, 1
    %p130 = por %p128, %p129
    %p132 = scmp.ne.s32.totalorder %s115, %s131
    %p133 = scmp.eq.s32.totalorder %s18, 0
    %p134 = por %p132, %p133
    %s135 = ssub.s32 %s12, %s19
    %p136 = scmp.eq.s32.totalorder %s135, 0
    %s138 = sadd.s32 %s137, 1
    %s139 = scalar_select %p136, %s137, %s138
    %p142 = pneg %p136
    %p143 = scmp.eq.s32.totalorder %s12, 1
    %p144 = por %p142, %p143
    %p145 = scmp.ne.s32.totalorder %s137, %s140
    %p146 = scmp.eq.s32.totalorder %s12, 0
    %p147 = por %p145, %p146
    %p148 = scmp.ne.s32.totalorder %s137, %s140
    %p149 = scmp.eq.s32.totalorder %s17, 1
    %p150 = por %p148, %p149
    %p151 = scmp.ne.s32.totalorder %s140, %s141
    %p152 = scmp.eq.s32.totalorder %s17, 0
    %p153 = por %p151, %p152
    %p154 = scmp.ne.s32.totalorder %s140, %s141
    %p155 = scmp.eq.s32.totalorder %s18, 1
    %p156 = por %p154, %p155
    %p158 = scmp.ne.s32.totalorder %s141, %s157
    %p159 = scmp.eq.s32.totalorder %s18, 0
    %p160 = por %p158, %p159
    %p161 = scmp.le.s32.totalorder 1, %s12
    %p162 = scmp.lt.s32.totalorder %s12, 3
    %p163 = pnand %p161, %p162
    %p164 = pneg %p163
    // Predicated region
    $region9: #{bottleneck_forward.5} parent=5 // pred_check
      _
    $region10: #{bottleneck_forward.5} parent=5 // pred_check_branch
      %166 = sbr.rel (%p163) target = $region12
    $region11: #{bottleneck_forward.5} parent=5 // pred_region
      %s167 = ssub.s32 %s12, 1
      // Predicated region
      $region13: #{bottleneck_forward.5} parent=11 // pred_check
        %p168 = pneg %p59
      $region14: #{bottleneck_forward.5} parent=11 // pred_check_branch
        %170 = sbr.rel (%p168) target = $region16
      $region15: #{bottleneck_forward.5} parent=11 // pred_region
        _
      $region16: #{bottleneck_forward.5} parent=11 // pred_fallthru
        _
      // Predicated region
      $region17: #{bottleneck_forward.5} parent=11 // pred_check
        %p171 = pneg %p80
      $region18: #{bottleneck_forward.5} parent=11 // pred_check_branch
        %173 = sbr.rel (%p171) target = $region20
      $region19: #{bottleneck_forward.5} parent=11 // pred_region
        _
      $region20: #{bottleneck_forward.5} parent=11 // pred_fallthru
        _
      // Predicated region
      $region21: #{bottleneck_forward.5} parent=11 // pred_check
        %p174 = pneg %p101
      $region22: #{bottleneck_forward.5} parent=11 // pred_check_branch
        %176 = sbr.rel (%p174) target = $region24
      $region23: #{bottleneck_forward.5} parent=11 // pred_region
        _
      $region24: #{bottleneck_forward.5} parent=11 // pred_fallthru
        _
    $region12: #{bottleneck_forward.5} parent=5 // pred_fallthru
      _
    %p177 = scmp.lt.s32.totalorder %s12, 2
    // Predicated region
    $region25: #{bottleneck_forward.5} parent=5 // pred_check
      %p178 = pneg %p177
    $region26: #{bottleneck_forward.5} parent=5 // pred_check_branch
      %180 = sbr.rel (%p178) target = $region28
    $region27: #{bottleneck_forward.5} parent=5 // pred_region
      // Predicated region
      $region29: #{bottleneck_forward.5} parent=27 // pred_check
        %p181 = pneg %p32
      $region30: #{bottleneck_forward.5} parent=27 // pred_check_branch
        %183 = sbr.rel (%p181) target = $region32
      $region31: #{bottleneck_forward.5} parent=27 // pred_region
        %p184 = scmp.lt.s32.totalorder %s12, 1
        %s185 = scalar_select %p184, %s12, 1
        %s186 = smul.addr %s185, 32
        %s187 = smul.addr %s186, 8
        %s188 = scalar_lea.vmem %s0, %s187
      $region32: #{bottleneck_forward.5} parent=27 // pred_fallthru
        _
    $region28: #{bottleneck_forward.5} parent=5 // pred_fallthru
      _
    %p189 = scmp.le.s32.totalorder 1, %s12
    %p190 = scmp.lt.s32.totalorder %s12, 3
    %p191 = pnand %p189, %p190
    %p192 = pneg %p191
    // Predicated region
    $region33: #{bottleneck_forward.5} parent=5 // pred_check
      _
    $region34: #{bottleneck_forward.5} parent=5 // pred_check_branch
      %194 = sbr.rel (%p191) target = $region36
    $region35: #{bottleneck_forward.5} parent=5 // pred_region
      %s195 = ssub.s32 %s12, 1
      %p196 = scmp.lt.s32.totalorder %s17, 1
      %s197 = scalar_select %p196, %s17, 1
      %s198 = smul.addr %s197, 32
      %s199 = smul.addr %s198, 8
      %s200 = scalar_lea.vmem %s0, %s199
      %p201 = pneg %p38
      %p202 = pneg %p35
      %p203 = pneg %p59
      %p204 = pneg %p56
      %p205 = pneg %p80
      %p206 = pneg %p77
      %p207 = pneg %p101
      %p208 = pneg %p98
      %p209 = pneg %p127
      %p210 = pneg %p124
      %p211 = scmp.lt.s32.totalorder %s17, 1
      %s212 = scalar_select %p211, %s17, 1
      %s213 = smul.addr %s212, 32
      %s214 = smul.addr %s213, 8
      %s215 = scalar_lea.vmem %s4, %s214
      %p216 = pneg %p153
      %p217 = pneg %p150
      %p218 = scmp.lt.s32.totalorder %s17, 1
      %s219 = scalar_select %p218, %s17, 1
      %s220 = smul.addr %s219, 2
      %s221 = scalar_lea.vmem %s5, %s220
      %p222 = scmp.lt.s32.totalorder %s17, 1
      %s223 = scalar_select %p222, %s17, 1
      %s224 = smul.addr %s223, 32
      %s225 = smul.addr %s224, 8
      %s226 = scalar_lea.vmem %s0, %s225
      %p227 = scmp.lt.s32.totalorder %s17, 1
      %s228 = scalar_select %p227, %s17, 1
      %s229 = smul.addr %s228, 32
      %s230 = smul.addr %s229, 8
      %s231 = scalar_lea.vmem %s4, %s230
      %p232 = scmp.lt.s32.totalorder %s17, 1
      %s233 = scalar_select %p232, %s17, 1
      %s234 = smul.addr %s233, 2
      %s235 = scalar_lea.vmem %s5, %s234
      %236 = vst [vmem:[#allocation2] sm:$0xff] 0.0
      %237 = vst [vmem:[#allocation2 + $0x8] sm:$0xff] 0.0
      %238 = vst [vmem:[#allocation2 + $0x10] sm:$0xff] 0.0
      %239 = vst [vmem:[#allocation2 + $0x118] sm:$0xff] 0.0
      %240 = vst [vmem:[#allocation2 + $0x120] sm:$0xff] 0.0
      %241 = vst [vmem:[#allocation2 + $0x128] sm:$0xff] 0.0
      %v242 = vld [vmem:[%s226] sm:$0xff]
      %v243 = vld [vmem:[%s226 + $0x8] sm:$0xff]
      %v244 = vld [vmem:[%s226 + $0x10] sm:$0xff]
      %v245 = vld [vmem:[%s226 + $0x18] sm:$0xff]
      %v246 = vld [vmem:[%s226 + $0x20] sm:$0xff]
      %v247 = vld [vmem:[%s226 + $0x28] sm:$0xff]
      %v248 = vld [vmem:[%s226 + $0x30] sm:$0xff]
      %v249 = vld [vmem:[%s226 + $0x38] sm:$0xff]
      %v250 = vld [vmem:[%s226 + $0x40] sm:$0xff]
      %v251 = vld [vmem:[%s226 + $0x48] sm:$0xff]
      %v252 = vld [vmem:[%s226 + $0x50] sm:$0xff]
      %v253 = vld [vmem:[%s226 + $0x58] sm:$0xff]
      %v254 = vld [vmem:[%s226 + $0x60] sm:$0xff]
      %v255 = vld [vmem:[%s226 + $0x68] sm:$0xff]
      %v256 = vld [vmem:[%s226 + $0x70] sm:$0xff]
      %v257 = vld [vmem:[%s226 + $0x78] sm:$0xff]
      %v258 = vld [vmem:[%s226 + $0x80] sm:$0xff]
      %v259 = vld [vmem:[%s226 + $0x88] sm:$0xff]
      %v260 = vld [vmem:[%s226 + $0x90] sm:$0xff]
      %v261 = vld [vmem:[%s226 + $0x98] sm:$0xff]
      %v262 = vld [vmem:[%s226 + $0xa0] sm:$0xff]
      %v263 = vld [vmem:[%s226 + $0xa8] sm:$0xff]
      %v264 = vld [vmem:[%s226 + $0xb0] sm:$0xff]
      %v265 = vld [vmem:[%s226 + $0xb8] sm:$0xff]
      %v266 = vld [vmem:[%s226 + $0xc0] sm:$0xff]
      %v267 = vld [vmem:[%s226 + $0xc8] sm:$0xff]
      %v268 = vld [vmem:[%s226 + $0xd0] sm:$0xff]
      %v269 = vld [vmem:[%s226 + $0xd8] sm:$0xff]
      %v270 = vld [vmem:[%s226 + $0xe0] sm:$0xff]
      %v271 = vld [vmem:[%s226 + $0xe8] sm:$0xff]
      %v272 = vld [vmem:[%s226 + $0xf0] sm:$0xff]
      %v273 = vld [vmem:[%s226 + $0xf8] sm:$0xff]
      %v274 = vld [vmem:[%s1] sm:$0x1]
      %v276 = vlaneseq
      %v277 = vshrl.u32 %v276, 7
      %v278 = vsub.s32 0, %v277
      %v279 = vrot.slane %v274, %v278
      %v281 = vmul.f32 %v242, %v279
      %v282 = vmul.f32 %v243, %v279
      %v283 = vmul.f32 %v244, %v279
      %v284 = vmul.f32 %v245, %v279
      %v285 = vmul.f32 %v246, %v279
      %v286 = vmul.f32 %v247, %v279
      %v287 = vmul.f32 %v248, %v279
      %v288 = vmul.f32 %v249, %v279
      %v289 = vmul.f32 %v250, %v279
      %v290 = vmul.f32 %v251, %v279
      %v291 = vmul.f32 %v252, %v279
      %v292 = vmul.f32 %v253, %v279
      %v293 = vmul.f32 %v254, %v279
      %v294 = vmul.f32 %v255, %v279
      %v295 = vmul.f32 %v256, %v279
      %v296 = vmul.f32 %v257, %v279
      %v297 = vmul.f32 %v258, %v279
      %v298 = vmul.f32 %v259, %v279
      %v299 = vmul.f32 %v260, %v279
      %v300 = vmul.f32 %v261, %v279
      %v301 = vmul.f32 %v262, %v279
      %v302 = vmul.f32 %v263, %v279
      %v303 = vmul.f32 %v264, %v279
      %v304 = vmul.f32 %v265, %v279
      %v305 = vmul.f32 %v266, %v279
      %v306 = vmul.f32 %v267, %v279
      %v307 = vmul.f32 %v268, %v279
      %v308 = vmul.f32 %v269, %v279
      %v309 = vmul.f32 %v270, %v279
      %v310 = vmul.f32 %v271, %v279
      %v311 = vmul.f32 %v272, %v279
      %v312 = vmul.f32 %v273, %v279
      %v313 = vld [vmem:[%s2] sm:$0x1]
      %v315 = vlaneseq
      %v316 = vshrl.u32 %v315, 7
      %v317 = vsub.s32 0, %v316
      %v318 = vrot.slane %v313, %v317
      %v320 = vadd.f32 %v281, %v318
      %v321 = vadd.f32 %v282, %v318
      %v322 = vadd.f32 %v283, %v318
      %v323 = vadd.f32 %v284, %v318
      %v324 = vadd.f32 %v285, %v318
      %v325 = vadd.f32 %v286, %v318
      %v326 = vadd.f32 %v287, %v318
      %v327 = vadd.f32 %v288, %v318
      %v328 = vadd.f32 %v289, %v318
      %v329 = vadd.f32 %v290, %v318
      %v330 = vadd.f32 %v291, %v318
      %v331 = vadd.f32 %v292, %v318
      %v332 = vadd.f32 %v293, %v318
      %v333 = vadd.f32 %v294, %v318
      %v334 = vadd.f32 %v295, %v318
      %v335 = vadd.f32 %v296, %v318
      %v336 = vadd.f32 %v297, %v318
      %v337 = vadd.f32 %v298, %v318
      %v338 = vadd.f32 %v299, %v318
      %v339 = vadd.f32 %v300, %v318
      %v340 = vadd.f32 %v301, %v318
      %v341 = vadd.f32 %v302, %v318
      %v342 = vadd.f32 %v303, %v318
      %v343 = vadd.f32 %v304, %v318
      %v344 = vadd.f32 %v305, %v318
      %v345 = vadd.f32 %v306, %v318
      %v346 = vadd.f32 %v307, %v318
      %v347 = vadd.f32 %v308, %v318
      %v348 = vadd.f32 %v309, %v318
      %v349 = vadd.f32 %v310, %v318
      %v350 = vadd.f32 %v311, %v318
      %v351 = vadd.f32 %v312, %v318
      %v352 = vmax.f32 %v320, 0.0
      %v353 = vmax.f32 %v321, 0.0
      %v354 = vmax.f32 %v322, 0.0
      %v355 = vmax.f32 %v323, 0.0
      %v356 = vmax.f32 %v324, 0.0
      %v357 = vmax.f32 %v325, 0.0
      %v358 = vmax.f32 %v326, 0.0
      %v359 = vmax.f32 %v327, 0.0
      %v360 = vmax.f32 %v328, 0.0
      %v361 = vmax.f32 %v329, 0.0
      %v362 = vmax.f32 %v330, 0.0
      %v363 = vmax.f32 %v331, 0.0
      %v364 = vmax.f32 %v332, 0.0
      %v365 = vmax.f32 %v333, 0.0
      %v366 = vmax.f32 %v334, 0.0
      %v367 = vmax.f32 %v335, 0.0
      %v368 = vmax.f32 %v336, 0.0
      %v369 = vmax.f32 %v337, 0.0
      %v370 = vmax.f32 %v338, 0.0
      %v371 = vmax.f32 %v339, 0.0
      %v372 = vmax.f32 %v340, 0.0
      %v373 = vmax.f32 %v341, 0.0
      %v374 = vmax.f32 %v342, 0.0
      %v375 = vmax.f32 %v343, 0.0
      %v376 = vmax.f32 %v344, 0.0
      %v377 = vmax.f32 %v345, 0.0
      %v378 = vmax.f32 %v346, 0.0
      %v379 = vmax.f32 %v347, 0.0
      %v380 = vmax.f32 %v348, 0.0
      %v381 = vmax.f32 %v349, 0.0
      %v382 = vmax.f32 %v350, 0.0
      %v383 = vmax.f32 %v351, 0.0
      %384 = vst [vmem:[#allocation2 + $0x18] sm:$0xff] %v352
      %385 = vst [vmem:[#allocation2 + $0x20] sm:$0xff] %v353
      %386 = vst [vmem:[#allocation2 + $0x28] sm:$0xff] %v354
      %387 = vst [vmem:[#allocation2 + $0x30] sm:$0xff] %v355
      %388 = vst [vmem:[#allocation2 + $0x38] sm:$0xff] %v356
      %389 = vst [vmem:[#allocation2 + $0x40] sm:$0xff] %v357
      %390 = vst [vmem:[#allocation2 + $0x48] sm:$0xff] %v358
      %391 = vst [vmem:[#allocation2 + $0x50] sm:$0xff] %v359
      %392 = vst [vmem:[#allocation2 + $0x58] sm:$0xff] %v360
      %393 = vst [vmem:[#allocation2 + $0x60] sm:$0xff] %v361
      %394 = vst [vmem:[#allocation2 + $0x68] sm:$0xff] %v362
      %395 = vst [vmem:[#allocation2 + $0x70] sm:$0xff] %v363
      %396 = vst [vmem:[#allocation2 + $0x78] sm:$0xff] %v364
      %397 = vst [vmem:[#allocation2 + $0x80] sm:$0xff] %v365
      %398 = vst [vmem:[#allocation2 + $0x88] sm:$0xff] %v366
      %399 = vst [vmem:[#allocation2 + $0x90] sm:$0xff] %v367
      %400 = vst [vmem:[#allocation2 + $0x98] sm:$0xff] %v368
      %401 = vst [vmem:[#allocation2 + $0xa0] sm:$0xff] %v369
      %402 = vst [vmem:[#allocation2 + $0xa8] sm:$0xff] %v370
      %403 = vst [vmem:[#allocation2 + $0xb0] sm:$0xff] %v371
      %404 = vst [vmem:[#allocation2 + $0xb8] sm:$0xff] %v372
      %405 = vst [vmem:[#allocation2 + $0xc0] sm:$0xff] %v373
      %406 = vst [vmem:[#allocation2 + $0xc8] sm:$0xff] %v374
      %407 = vst [vmem:[#allocation2 + $0xd0] sm:$0xff] %v375
      %408 = vst [vmem:[#allocation2 + $0xd8] sm:$0xff] %v376
      %409 = vst [vmem:[#allocation2 + $0xe0] sm:$0xff] %v377
      %410 = vst [vmem:[#allocation2 + $0xe8] sm:$0xff] %v378
      %411 = vst [vmem:[#allocation2 + $0xf0] sm:$0xff] %v379
      %412 = vst [vmem:[#allocation2 + $0xf8] sm:$0xff] %v380
      %413 = vst [vmem:[#allocation2 + $0x100] sm:$0xff] %v381
      %414 = vst [vmem:[#allocation2 + $0x108] sm:$0xff] %v382
      %415 = vst [vmem:[#allocation2 + $0x110] sm:$0xff] %v383
      %v416 = vlaneseq
      %v417 = vshrl.u32 %v416, 7
      %v418 = vadd.s32 %v417, 8
      %v419 = vadd.s32 %v417, 16
      %v420 = vadd.s32 %v417, 24
      %v421 = vadd.s32 %v417, 32
      %v422 = vadd.s32 %v417, 40
      %v423 = vadd.s32 %v417, 48
      %v424 = vadd.s32 %v417, 56
      %v425 = vadd.s32 %v417, 64
      %v426 = vadd.s32 %v417, 72
      %v427 = vadd.s32 %v417, 80
      %v428 = vadd.s32 %v417, 88
      %v429 = vadd.s32 %v417, 96
      %v430 = vadd.s32 %v417, 104
      %v431 = vadd.s32 %v417, 112
      %v432 = vadd.s32 %v417, 120
      %v433 = vadd.s32 %v417, 128
      %v434 = vadd.s32 %v417, 136
      %v435 = vadd.s32 %v417, 144
      %v436 = vadd.s32 %v417, 152
      %v437 = vadd.s32 %v417, 160
      %v438 = vadd.s32 %v417, 168
      %v439 = vadd.s32 %v417, 176
      %v440 = vadd.s32 %v417, 184
      %v441 = vadd.s32 %v417, 192
      %v442 = vadd.s32 %v417, 200
      %v443 = vadd.s32 %v417, 208
      %v444 = vadd.s32 %v417, 216
      %v445 = vadd.s32 %v417, 224
      %v446 = vadd.s32 %v417, 232
      %v447 = vadd.s32 %v417, 240
      %v448 = vadd.s32 %v417, 248
      %vm449 = vcmp.lt.s32.totalorder %v417, 0
      %v450 = vsub.s32 0, %v417
      %v451 = vsel %vm449, %v450, %v417
      %v452 = vshrl.u32 %v451, 4
      %v453 = vand.u32 %v451, 15
      %v454 = vsub.s32 0, %v453
      %v455 = vsel %vm449, %v454, %v453
      %vm456 = vcmp.lt.s32.totalorder %v418, 0
      %v457 = vsub.s32 0, %v418
      %v458 = vsel %vm456, %v457, %v418
      %v459 = vshrl.u32 %v458, 4
      %v460 = vand.u32 %v458, 15
      %v461 = vsub.s32 0, %v460
      %v462 = vsel %vm456, %v461, %v460
      %vm463 = vcmp.lt.s32.totalorder %v419, 0
      %v464 = vsub.s32 0, %v419
      %v465 = vsel %vm463, %v464, %v419
      %v466 = vshrl.u32 %v465, 4
      %v467 = vand.u32 %v465, 15
      %v468 = vsub.s32 0, %v467
      %v469 = vsel %vm463, %v468, %v467
      %vm470 = vcmp.lt.s32.totalorder %v420, 0
      %v471 = vsub.s32 0, %v420
      %v472 = vsel %vm470, %v471, %v420
      %v473 = vshrl.u32 %v472, 4
      %v474 = vand.u32 %v472, 15
      %v475 = vsub.s32 0, %v474
      %v476 = vsel %vm470, %v475, %v474
      %vm477 = vcmp.lt.s32.totalorder %v421, 0
      %v478 = vsub.s32 0, %v421
      %v479 = vsel %vm477, %v478, %v421
      %v480 = vshrl.u32 %v479, 4
      %v481 = vand.u32 %v479, 15
      %v482 = vsub.s32 0, %v481
      %v483 = vsel %vm477, %v482, %v481
      %vm484 = vcmp.lt.s32.totalorder %v422, 0
      %v485 = vsub.s32 0, %v422
      %v486 = vsel %vm484, %v485, %v422
      %v487 = vshrl.u32 %v486, 4
      %v488 = vand.u32 %v486, 15
      %v489 = vsub.s32 0, %v488
      %v490 = vsel %vm484, %v489, %v488
      %vm491 = vcmp.lt.s32.totalorder %v423, 0
      %v492 = vsub.s32 0, %v423
      %v493 = vsel %vm491, %v492, %v423
      %v494 = vshrl.u32 %v493, 4
      %v495 = vand.u32 %v493, 15
      %v496 = vsub.s32 0, %v495
      %v497 = vsel %vm491, %v496, %v495
      %vm498 = vcmp.lt.s32.totalorder %v424, 0
      %v499 = vsub.s32 0, %v424
      %v500 = vsel %vm498, %v499, %v424
      %v501 = vshrl.u32 %v500, 4
      %v502 = vand.u32 %v500, 15
      %v503 = vsub.s32 0, %v502
      %v504 = vsel %vm498, %v503, %v502
      %vm505 = vcmp.lt.s32.totalorder %v425, 0
      %v506 = vsub.s32 0, %v425
      %v507 = vsel %vm505, %v506, %v425
      %v508 = vshrl.u32 %v507, 4
      %v509 = vand.u32 %v507, 15
      %v510 = vsub.s32 0, %v509
      %v511 = vsel %vm505, %v510, %v509
      %vm512 = vcmp.lt.s32.totalorder %v426, 0
      %v513 = vsub.s32 0, %v426
      %v514 = vsel %vm512, %v513, %v426
      %v515 = vshrl.u32 %v514, 4
      %v516 = vand.u32 %v514, 15
      %v517 = vsub.s32 0, %v516
      %v518 = vsel %vm512, %v517, %v516
      %vm519 = vcmp.lt.s32.totalorder %v427, 0
      %v520 = vsub.s32 0, %v427
      %v521 = vsel %vm519, %v520, %v427
      %v522 = vshrl.u32 %v521, 4
      %v523 = vand.u32 %v521, 15
      %v524 = vsub.s32 0, %v523
      %v525 = vsel %vm519, %v524, %v523
      %vm526 = vcmp.lt.s32.totalorder %v428, 0
      %v527 = vsub.s32 0, %v428
      %v528 = vsel %vm526, %v527, %v428
      %v529 = vshrl.u32 %v528, 4
      %v530 = vand.u32 %v528, 15
      %v531 = vsub.s32 0, %v530
      %v532 = vsel %vm526, %v531, %v530
      %vm533 = vcmp.lt.s32.totalorder %v429, 0
      %v534 = vsub.s32 0, %v429
      %v535 = vsel %vm533, %v534, %v429
      %v536 = vshrl.u32 %v535, 4
      %v537 = vand.u32 %v535, 15
      %v538 = vsub.s32 0, %v537
      %v539 = vsel %vm533, %v538, %v537
      %vm540 = vcmp.lt.s32.totalorder %v430, 0
      %v541 = vsub.s32 0, %v430
      %v542 = vsel %vm540, %v541, %v430
      %v543 = vshrl.u32 %v542, 4
      %v544 = vand.u32 %v542, 15
      %v545 = vsub.s32 0, %v544
      %v546 = vsel %vm540, %v545, %v544
      %vm547 = vcmp.lt.s32.totalorder %v431, 0
      %v548 = vsub.s32 0, %v431
      %v549 = vsel %vm547, %v548, %v431
      %v550 = vshrl.u32 %v549, 4
      %v551 = vand.u32 %v549, 15
      %v552 = vsub.s32 0, %v551
      %v553 = vsel %vm547, %v552, %v551
      %vm554 = vcmp.lt.s32.totalorder %v432, 0
      %v555 = vsub.s32 0, %v432
      %v556 = vsel %vm554, %v555, %v432
      %v557 = vshrl.u32 %v556, 4
      %v558 = vand.u32 %v556, 15
      %v559 = vsub.s32 0, %v558
      %v560 = vsel %vm554, %v559, %v558
      %vm561 = vcmp.lt.s32.totalorder %v433, 0
      %v562 = vsub.s32 0, %v433
      %v563 = vsel %vm561, %v562, %v433
      %v564 = vshrl.u32 %v563, 4
      %v565 = vand.u32 %v563, 15
      %v566 = vsub.s32 0, %v565
      %v567 = vsel %vm561, %v566, %v565
      %vm568 = vcmp.lt.s32.totalorder %v434, 0
      %v569 = vsub.s32 0, %v434
      %v570 = vsel %vm568, %v569, %v434
      %v571 = vshrl.u32 %v570, 4
      %v572 = vand.u32 %v570, 15
      %v573 = vsub.s32 0, %v572
      %v574 = vsel %vm568, %v573, %v572
      %vm575 = vcmp.lt.s32.totalorder %v435, 0
      %v576 = vsub.s32 0, %v435
      %v577 = vsel %vm575, %v576, %v435
      %v578 = vshrl.u32 %v577, 4
      %v579 = vand.u32 %v577, 15
      %v580 = vsub.s32 0, %v579
      %v581 = vsel %vm575, %v580, %v579
      %vm582 = vcmp.lt.s32.totalorder %v436, 0
      %v583 = vsub.s32 0, %v436
      %v584 = vsel %vm582, %v583, %v436
      %v585 = vshrl.u32 %v584, 4
      %v586 = vand.u32 %v584, 15
      %v587 = vsub.s32 0, %v586
      %v588 = vsel %vm582, %v587, %v586
      %vm589 = vcmp.lt.s32.totalorder %v437, 0
      %v590 = vsub.s32 0, %v437
      %v591 = vsel %vm589, %v590, %v437
      %v592 = vshrl.u32 %v591, 4
      %v593 = vand.u32 %v591, 15
      %v594 = vsub.s32 0, %v593
      %v595 = vsel %vm589, %v594, %v593
      %vm596 = vcmp.lt.s32.totalorder %v438, 0
      %v597 = vsub.s32 0, %v438
      %v598 = vsel %vm596, %v597, %v438
      %v599 = vshrl.u32 %v598, 4
      %v600 = vand.u32 %v598, 15
      %v601 = vsub.s32 0, %v600
      %v602 = vsel %vm596, %v601, %v600
      %vm603 = vcmp.lt.s32.totalorder %v439, 0
      %v604 = vsub.s32 0, %v439
      %v605 = vsel %vm603, %v604, %v439
      %v606 = vshrl.u32 %v605, 4
      %v607 = vand.u32 %v605, 15
      %v608 = vsub.s32 0, %v607
      %v609 = vsel %vm603, %v608, %v607
      %vm610 = vcmp.lt.s32.totalorder %v440, 0
      %v611 = vsub.s32 0, %v440
      %v612 = vsel %vm610, %v611, %v440
      %v613 = vshrl.u32 %v612, 4
      %v614 = vand.u32 %v612, 15
      %v615 = vsub.s32 0, %v614
      %v616 = vsel %vm610, %v615, %v614
      %vm617 = vcmp.lt.s32.totalorder %v441, 0
      %v618 = vsub.s32 0, %v441
      %v619 = vsel %vm617, %v618, %v441
      %v620 = vshrl.u32 %v619, 4
      %v621 = vand.u32 %v619, 15
      %v622 = vsub.s32 0, %v621
      %v623 = vsel %vm617, %v622, %v621
      %vm624 = vcmp.lt.s32.totalorder %v442, 0
      %v625 = vsub.s32 0, %v442
      %v626 = vsel %vm624, %v625, %v442
      %v627 = vshrl.u32 %v626, 4
      %v628 = vand.u32 %v626, 15
      %v629 = vsub.s32 0, %v628
      %v630 = vsel %vm624, %v629, %v628
      %vm631 = vcmp.lt.s32.totalorder %v443, 0
      %v632 = vsub.s32 0, %v443
      %v633 = vsel %vm631, %v632, %v443
      %v634 = vshrl.u32 %v633, 4
      %v635 = vand.u32 %v633, 15
      %v636 = vsub.s32 0, %v635
      %v637 = vsel %vm631, %v636, %v635
      %vm638 = vcmp.lt.s32.totalorder %v444, 0
      %v639 = vsub.s32 0, %v444
      %v640 = vsel %vm638, %v639, %v444
      %v641 = vshrl.u32 %v640, 4
      %v642 = vand.u32 %v640, 15
      %v643 = vsub.s32 0, %v642
      %v644 = vsel %vm638, %v643, %v642
      %vm645 = vcmp.lt.s32.totalorder %v445, 0
      %v646 = vsub.s32 0, %v445
      %v647 = vsel %vm645, %v646, %v445
      %v648 = vshrl.u32 %v647, 4
      %v649 = vand.u32 %v647, 15
      %v650 = vsub.s32 0, %v649
      %v651 = vsel %vm645, %v650, %v649
      %vm652 = vcmp.lt.s32.totalorder %v446, 0
      %v653 = vsub.s32 0, %v446
      %v654 = vsel %vm652, %v653, %v446
      %v655 = vshrl.u32 %v654, 4
      %v656 = vand.u32 %v654, 15
      %v657 = vsub.s32 0, %v656
      %v658 = vsel %vm652, %v657, %v656
      %vm659 = vcmp.lt.s32.totalorder %v447, 0
      %v660 = vsub.s32 0, %v447
      %v661 = vsel %vm659, %v660, %v447
      %v662 = vshrl.u32 %v661, 4
      %v663 = vand.u32 %v661, 15
      %v664 = vsub.s32 0, %v663
      %v665 = vsel %vm659, %v664, %v663
      %vm666 = vcmp.lt.s32.totalorder %v448, 0
      %v667 = vsub.s32 0, %v448
      %v668 = vsel %vm666, %v667, %v448
      %v669 = vshrl.u32 %v668, 4
      %v670 = vand.u32 %v668, 15
      %v671 = vsub.s32 0, %v670
      %v672 = vsel %vm666, %v671, %v670
      %vm673 = vcmp.ne.s32.totalorder %v455, 0
      %vm674 = vcmp.ne.s32.totalorder %v462, 0
      %vm675 = vcmp.ne.s32.totalorder %v469, 0
      %vm676 = vcmp.ne.s32.totalorder %v476, 0
      %vm677 = vcmp.ne.s32.totalorder %v483, 0
      %vm678 = vcmp.ne.s32.totalorder %v490, 0
      %vm679 = vcmp.ne.s32.totalorder %v497, 0
      %vm680 = vcmp.ne.s32.totalorder %v504, 0
      %vm681 = vcmp.ne.s32.totalorder %v511, 0
      %vm682 = vcmp.ne.s32.totalorder %v518, 0
      %vm683 = vcmp.ne.s32.totalorder %v525, 0
      %vm684 = vcmp.ne.s32.totalorder %v532, 0
      %vm685 = vcmp.ne.s32.totalorder %v539, 0
      %vm686 = vcmp.ne.s32.totalorder %v546, 0
      %vm687 = vcmp.ne.s32.totalorder %v553, 0
      %vm688 = vcmp.ne.s32.totalorder %v560, 0
      %vm689 = vcmp.ne.s32.totalorder %v567, 0
      %vm690 = vcmp.ne.s32.totalorder %v574, 0
      %vm691 = vcmp.ne.s32.totalorder %v581, 0
      %vm692 = vcmp.ne.s32.totalorder %v588, 0
      %vm693 = vcmp.ne.s32.totalorder %v595, 0
      %vm694 = vcmp.ne.s32.totalorder %v602, 0
      %vm695 = vcmp.ne.s32.totalorder %v609, 0
      %vm696 = vcmp.ne.s32.totalorder %v616, 0
      %vm697 = vcmp.ne.s32.totalorder %v623, 0
      %vm698 = vcmp.ne.s32.totalorder %v630, 0
      %vm699 = vcmp.ne.s32.totalorder %v637, 0
      %vm700 = vcmp.ne.s32.totalorder %v644, 0
      %vm701 = vcmp.ne.s32.totalorder %v651, 0
      %vm702 = vcmp.ne.s32.totalorder %v658, 0
      %vm703 = vcmp.ne.s32.totalorder %v665, 0
      %vm704 = vcmp.ne.s32.totalorder %v672, 0
      %vm705 = vcmp.lt.s32.totalorder %v455, 0
      %vm706 = vcmp.lt.s32.totalorder %v462, 0
      %vm707 = vcmp.lt.s32.totalorder %v469, 0
      %vm708 = vcmp.lt.s32.totalorder %v476, 0
      %vm709 = vcmp.lt.s32.totalorder %v483, 0
      %vm710 = vcmp.lt.s32.totalorder %v490, 0
      %vm711 = vcmp.lt.s32.totalorder %v497, 0
      %vm712 = vcmp.lt.s32.totalorder %v504, 0
      %vm713 = vcmp.lt.s32.totalorder %v511, 0
      %vm714 = vcmp.lt.s32.totalorder %v518, 0
      %vm715 = vcmp.lt.s32.totalorder %v525, 0
      %vm716 = vcmp.lt.s32.totalorder %v532, 0
      %vm717 = vcmp.lt.s32.totalorder %v539, 0
      %vm718 = vcmp.lt.s32.totalorder %v546, 0
      %vm719 = vcmp.lt.s32.totalorder %v553, 0
      %vm720 = vcmp.lt.s32.totalorder %v560, 0
      %vm721 = vcmp.lt.s32.totalorder %v567, 0
      %vm722 = vcmp.lt.s32.totalorder %v574, 0
      %vm723 = vcmp.lt.s32.totalorder %v581, 0
      %vm724 = vcmp.lt.s32.totalorder %v588, 0
      %vm725 = vcmp.lt.s32.totalorder %v595, 0
      %vm726 = vcmp.lt.s32.totalorder %v602, 0
      %vm727 = vcmp.lt.s32.totalorder %v609, 0
      %vm728 = vcmp.lt.s32.totalorder %v616, 0
      %vm729 = vcmp.lt.s32.totalorder %v623, 0
      %vm730 = vcmp.lt.s32.totalorder %v630, 0
      %vm731 = vcmp.lt.s32.totalorder %v637, 0
      %vm732 = vcmp.lt.s32.totalorder %v644, 0
      %vm733 = vcmp.lt.s32.totalorder %v651, 0
      %vm734 = vcmp.lt.s32.totalorder %v658, 0
      %vm735 = vcmp.lt.s32.totalorder %v665, 0
      %vm736 = vcmp.lt.s32.totalorder %v672, 0
      %vm737 = vmand %vm705, %vm673
      %vm738 = vmand %vm706, %vm674
      %vm739 = vmand %vm707, %vm675
      %vm740 = vmand %vm708, %vm676
      %vm741 = vmand %vm709, %vm677
      %vm742 = vmand %vm710, %vm678
      %vm743 = vmand %vm711, %vm679
      %vm744 = vmand %vm712, %vm680
      %vm745 = vmand %vm713, %vm681
      %vm746 = vmand %vm714, %vm682
      %vm747 = vmand %vm715, %vm683
      %vm748 = vmand %vm716, %vm684
      %vm749 = vmand %vm717, %vm685
      %vm750 = vmand %vm718, %vm686
      %vm751 = vmand %vm719, %vm687
      %vm752 = vmand %vm720, %vm688
      %vm753 = vmand %vm721, %vm689
      %vm754 = vmand %vm722, %vm690
      %vm755 = vmand %vm723, %vm691
      %vm756 = vmand %vm724, %vm692
      %vm757 = vmand %vm725, %vm693
      %vm758 = vmand %vm726, %vm694
      %vm759 = vmand %vm727, %vm695
      %vm760 = vmand %vm728, %vm696
      %vm761 = vmand %vm729, %vm697
      %vm762 = vmand %vm730, %vm698
      %vm763 = vmand %vm731, %vm699
      %vm764 = vmand %vm732, %vm700
      %vm765 = vmand %vm733, %vm701
      %vm766 = vmand %vm734, %vm702
      %vm767 = vmand %vm735, %vm703
      %vm768 = vmand %vm736, %vm704
      %v769 = vadd.s32 %v455, 16
      %v770 = vadd.s32 %v462, 16
      %v771 = vadd.s32 %v469, 16
      %v772 = vadd.s32 %v476, 16
      %v773 = vadd.s32 %v483, 16
      %v774 = vadd.s32 %v490, 16
      %v775 = vadd.s32 %v497, 16
      %v776 = vadd.s32 %v504, 16
      %v777 = vadd.s32 %v511, 16
      %v778 = vadd.s32 %v518, 16
      %v779 = vadd.s32 %v525, 16
      %v780 = vadd.s32 %v532, 16
      %v781 = vadd.s32 %v539, 16
      %v782 = vadd.s32 %v546, 16
      %v783 = vadd.s32 %v553, 16
      %v784 = vadd.s32 %v560, 16
      %v785 = vadd.s32 %v567, 16
      %v786 = vadd.s32 %v574, 16
      %v787 = vadd.s32 %v581, 16
      %v788 = vadd.s32 %v588, 16
      %v789 = vadd.s32 %v595, 16
      %v790 = vadd.s32 %v602, 16
      %v791 = vadd.s32 %v609, 16
      %v792 = vadd.s32 %v616, 16
      %v793 = vadd.s32 %v623, 16
      %v794 = vadd.s32 %v630, 16
      %v795 = vadd.s32 %v637, 16
      %v796 = vadd.s32 %v644, 16
      %v797 = vadd.s32 %v651, 16
      %v798 = vadd.s32 %v658, 16
      %v799 = vadd.s32 %v665, 16
      %v800 = vadd.s32 %v672, 16
      %v801 = vsel %vm737, %v769, %v455
      %v802 = vsel %vm738, %v770, %v462
      %v803 = vsel %vm739, %v771, %v469
      %v804 = vsel %vm740, %v772, %v476
      %v805 = vsel %vm741, %v773, %v483
      %v806 = vsel %vm742, %v774, %v490
      %v807 = vsel %vm743, %v775, %v497
      %v808 = vsel %vm744, %v776, %v504
      %v809 = vsel %vm745, %v777, %v511
      %v810 = vsel %vm746, %v778, %v518
      %v811 = vsel %vm747, %v779, %v525
      %v812 = vsel %vm748, %v780, %v532
      %v813 = vsel %vm749, %v781, %v539
      %v814 = vsel %vm750, %v782, %v546
      %v815 = vsel %vm751, %v783, %v553
      %v816 = vsel %vm752, %v784, %v560
      %v817 = vsel %vm753, %v785, %v567
      %v818 = vsel %vm754, %v786, %v574
      %v819 = vsel %vm755, %v787, %v581
      %v820 = vsel %vm756, %v788, %v588
      %v821 = vsel %vm757, %v789, %v595
      %v822 = vsel %vm758, %v790, %v602
      %v823 = vsel %vm759, %v791, %v609
      %v824 = vsel %vm760, %v792, %v616
      %v825 = vsel %vm761, %v793, %v623
      %v826 = vsel %vm762, %v794, %v630
      %v827 = vsel %vm763, %v795, %v637
      %v828 = vsel %vm764, %v796, %v644
      %v829 = vsel %vm765, %v797, %v651
      %v830 = vsel %vm766, %v798, %v658
      %v831 = vsel %vm767, %v799, %v665
      %v832 = vsel %vm768, %v800, %v672
      %vm833 = vcmp.ne.s32.totalorder %v801, 0
      %vm834 = vcmp.ne.s32.totalorder %v802, 0
      %vm835 = vcmp.ne.s32.totalorder %v803, 0
      %vm836 = vcmp.ne.s32.totalorder %v804, 0
      %vm837 = vcmp.ne.s32.totalorder %v805, 0
      %vm838 = vcmp.ne.s32.totalorder %v806, 0
      %vm839 = vcmp.ne.s32.totalorder %v807, 0
      %vm840 = vcmp.ne.s32.totalorder %v808, 0
      %vm841 = vcmp.ne.s32.totalorder %v809, 0
      %vm842 = vcmp.ne.s32.totalorder %v810, 0
      %vm843 = vcmp.ne.s32.totalorder %v811, 0
      %vm844 = vcmp.ne.s32.totalorder %v812, 0
      %vm845 = vcmp.ne.s32.totalorder %v813, 0
      %vm846 = vcmp.ne.s32.totalorder %v814, 0
      %vm847 = vcmp.ne.s32.totalorder %v815, 0
      %vm848 = vcmp.ne.s32.totalorder %v816, 0
      %vm849 = vcmp.ne.s32.totalorder %v817, 0
      %vm850 = vcmp.ne.s32.totalorder %v818, 0
      %vm851 = vcmp.ne.s32.totalorder %v819, 0
      %vm852 = vcmp.ne.s32.totalorder %v820, 0
      %vm853 = vcmp.ne.s32.totalorder %v821, 0
      %vm854 = vcmp.ne.s32.totalorder %v822, 0
      %vm855 = vcmp.ne.s32.totalorder %v823, 0
      %vm856 = vcmp.ne.s32.totalorder %v824, 0
      %vm857 = vcmp.ne.s32.totalorder %v825, 0
      %vm858 = vcmp.ne.s32.totalorder %v826, 0
      %vm859 = vcmp.ne.s32.totalorder %v827, 0
      %vm860 = vcmp.ne.s32.totalorder %v828, 0
      %vm861 = vcmp.ne.s32.totalorder %v829, 0
      %vm862 = vcmp.ne.s32.totalorder %v830, 0
      %vm863 = vcmp.ne.s32.totalorder %v831, 0
      %vm864 = vcmp.ne.s32.totalorder %v832, 0
      %v865 = vsel %vm833, 1, 0
      %v866 = vsel %vm834, 1, 0
      %v867 = vsel %vm835, 1, 0
      %v868 = vsel %vm836, 1, 0
      %v869 = vsel %vm837, 1, 0
      %v870 = vsel %vm838, 1, 0
      %v871 = vsel %vm839, 1, 0
      %v872 = vsel %vm840, 1, 0
      %v873 = vsel %vm841, 1, 0
      %v874 = vsel %vm842, 1, 0
      %v875 = vsel %vm843, 1, 0
      %v876 = vsel %vm844, 1, 0
      %v877 = vsel %vm845, 1, 0
      %v878 = vsel %vm846, 1, 0
      %v879 = vsel %vm847, 1, 0
      %v880 = vsel %vm848, 1, 0
      %v881 = vsel %vm849, 1, 0
      %v882 = vsel %vm850, 1, 0
      %v883 = vsel %vm851, 1, 0
      %v884 = vsel %vm852, 1, 0
      %v885 = vsel %vm853, 1, 0
      %v886 = vsel %vm854, 1, 0
      %v887 = vsel %vm855, 1, 0
      %v888 = vsel %vm856, 1, 0
      %v889 = vsel %vm857, 1, 0
      %v890 = vsel %vm858, 1, 0
      %v891 = vsel %vm859, 1, 0
      %v892 = vsel %vm860, 1, 0
      %v893 = vsel %vm861, 1, 0
      %v894 = vsel %vm862, 1, 0
      %v895 = vsel %vm863, 1, 0
      %v896 = vsel %vm864, 1, 0
      %v897 = vcvt.s32.f32 %v865
      %v898 = vcvt.s32.f32 %v866
      %v899 = vcvt.s32.f32 %v867
      %v900 = vcvt.s32.f32 %v868
      %v901 = vcvt.s32.f32 %v869
      %v902 = vcvt.s32.f32 %v870
      %v903 = vcvt.s32.f32 %v871
      %v904 = vcvt.s32.f32 %v872
      %v905 = vcvt.s32.f32 %v873
      %v906 = vcvt.s32.f32 %v874
      %v907 = vcvt.s32.f32 %v875
      %v908 = vcvt.s32.f32 %v876
      %v909 = vcvt.s32.f32 %v877
      %v910 = vcvt.s32.f32 %v878
      %v911 = vcvt.s32.f32 %v879
      %v912 = vcvt.s32.f32 %v880
      %v913 = vcvt.s32.f32 %v881
      %v914 = vcvt.s32.f32 %v882
      %v915 = vcvt.s32.f32 %v883
      %v916 = vcvt.s32.f32 %v884
      %v917 = vcvt.s32.f32 %v885
      %v918 = vcvt.s32.f32 %v886
      %v919 = vcvt.s32.f32 %v887
      %v920 = vcvt.s32.f32 %v888
      %v921 = vcvt.s32.f32 %v889
      %v922 = vcvt.s32.f32 %v890
      %v923 = vcvt.s32.f32 %v891
      %v924 = vcvt.s32.f32 %v892
      %v925 = vcvt.s32.f32 %v893
      %v926 = vcvt.s32.f32 %v894
      %v927 = vcvt.s32.f32 %v895
      %v928 = vcvt.s32.f32 %v896
      %vm929 = vcmp.ne.s32.totalorder %v801, 15
      %vm930 = vcmp.ne.s32.totalorder %v802, 15
      %vm931 = vcmp.ne.s32.totalorder %v803, 15
      %vm932 = vcmp.ne.s32.totalorder %v804, 15
      %vm933 = vcmp.ne.s32.totalorder %v805, 15
      %vm934 = vcmp.ne.s32.totalorder %v806, 15
      %vm935 = vcmp.ne.s32.totalorder %v807, 15
      %vm936 = vcmp.ne.s32.totalorder %v808, 15
      %vm937 = vcmp.ne.s32.totalorder %v809, 15
      %vm938 = vcmp.ne.s32.totalorder %v810, 15
      %vm939 = vcmp.ne.s32.totalorder %v811, 15
      %vm940 = vcmp.ne.s32.totalorder %v812, 15
      %vm941 = vcmp.ne.s32.totalorder %v813, 15
      %vm942 = vcmp.ne.s32.totalorder %v814, 15
      %vm943 = vcmp.ne.s32.totalorder %v815, 15
      %vm944 = vcmp.ne.s32.totalorder %v816, 15
      %vm945 = vcmp.ne.s32.totalorder %v817, 15
      %vm946 = vcmp.ne.s32.totalorder %v818, 15
      %vm947 = vcmp.ne.s32.totalorder %v819, 15
      %vm948 = vcmp.ne.s32.totalorder %v820, 15
      %vm949 = vcmp.ne.s32.totalorder %v821, 15
      %vm950 = vcmp.ne.s32.totalorder %v822, 15
      %vm951 = vcmp.ne.s32.totalorder %v823, 15
      %vm952 = vcmp.ne.s32.totalorder %v824, 15
      %vm953 = vcmp.ne.s32.totalorder %v825, 15
      %vm954 = vcmp.ne.s32.totalorder %v826, 15
      %vm955 = vcmp.ne.s32.totalorder %v827, 15
      %vm956 = vcmp.ne.s32.totalorder %v828, 15
      %vm957 = vcmp.ne.s32.totalorder %v829, 15
      %vm958 = vcmp.ne.s32.totalorder %v830, 15
      %vm959 = vcmp.ne.s32.totalorder %v831, 15
      %vm960 = vcmp.ne.s32.totalorder %v832, 15
      %v961 = vsel %vm929, 1, 0
      %v962 = vsel %vm930, 1, 0
      %v963 = vsel %vm931, 1, 0
      %v964 = vsel %vm932, 1, 0
      %v965 = vsel %vm933, 1, 0
      %v966 = vsel %vm934, 1, 0
      %v967 = vsel %vm935, 1, 0
      %v968 = vsel %vm936, 1, 0
      %v969 = vsel %vm937, 1, 0
      %v970 = vsel %vm938, 1, 0
      %v971 = vsel %vm939, 1, 0
      %v972 = vsel %vm940, 1, 0
      %v973 = vsel %vm941, 1, 0
      %v974 = vsel %vm942, 1, 0
      %v975 = vsel %vm943, 1, 0
      %v976 = vsel %vm944, 1, 0
      %v977 = vsel %vm945, 1, 0
      %v978 = vsel %vm946, 1, 0
      %v979 = vsel %vm947, 1, 0
      %v980 = vsel %vm948, 1, 0
      %v981 = vsel %vm949, 1, 0
      %v982 = vsel %vm950, 1, 0
      %v983 = vsel %vm951, 1, 0
      %v984 = vsel %vm952, 1, 0
      %v985 = vsel %vm953, 1, 0
      %v986 = vsel %vm954, 1, 0
      %v987 = vsel %vm955, 1, 0
      %v988 = vsel %vm956, 1, 0
      %v989 = vsel %vm957, 1, 0
      %v990 = vsel %vm958, 1, 0
      %v991 = vsel %vm959, 1, 0
      %v992 = vsel %vm960, 1, 0
      %v993 = vcvt.s32.f32 %v961
      %v994 = vcvt.s32.f32 %v962
      %v995 = vcvt.s32.f32 %v963
      %v996 = vcvt.s32.f32 %v964
      %v997 = vcvt.s32.f32 %v965
      %v998 = vcvt.s32.f32 %v966
      %v999 = vcvt.s32.f32 %v967
      %v1000 = vcvt.s32.f32 %v968
      %v1001 = vcvt.s32.f32 %v969
      %v1002 = vcvt.s32.f32 %v970
      %v1003 = vcvt.s32.f32 %v971
      %v1004 = vcvt.s32.f32 %v972
      %v1005 = vcvt.s32.f32 %v973
      %v1006 = vcvt.s32.f32 %v974
      %v1007 = vcvt.s32.f32 %v975
      %v1008 = vcvt.s32.f32 %v976
      %v1009 = vcvt.s32.f32 %v977
      %v1010 = vcvt.s32.f32 %v978
      %v1011 = vcvt.s32.f32 %v979
      %v1012 = vcvt.s32.f32 %v980
      %v1013 = vcvt.s32.f32 %v981
      %v1014 = vcvt.s32.f32 %v982
      %v1015 = vcvt.s32.f32 %v983
      %v1016 = vcvt.s32.f32 %v984
      %v1017 = vcvt.s32.f32 %v985
      %v1018 = vcvt.s32.f32 %v986
      %v1019 = vcvt.s32.f32 %v987
      %v1020 = vcvt.s32.f32 %v988
      %v1021 = vcvt.s32.f32 %v989
      %v1022 = vcvt.s32.f32 %v990
      %v1023 = vcvt.s32.f32 %v991
      %v1024 = vcvt.s32.f32 %v992
      %s1025 = sadd.s32 0, 7
      %s1026 = scalar_lea.vmem [#allocation2], %s1025
      %v1027 = vld [vmem:[%s1026] sm:$0xff]
      %v1028 = vld [vmem:[%s1026 + $0x8] sm:$0xff]
      %v1029 = vld [vmem:[%s1026 + $0x10] sm:$0xff]
      %v1030 = vld [vmem:[%s1026 + $0x18] sm:$0xff]
      %v1031 = vld [vmem:[%s1026 + $0x20] sm:$0xff]
      %v1032 = vld [vmem:[%s1026 + $0x28] sm:$0xff]
      %v1033 = vld [vmem:[%s1026 + $0x30] sm:$0xff]
      %v1034 = vld [vmem:[%s1026 + $0x38] sm:$0xff]
      %v1035 = vld [vmem:[%s1026 + $0x40] sm:$0xff]
      %v1036 = vld [vmem:[%s1026 + $0x48] sm:$0xff]
      %v1037 = vld [vmem:[%s1026 + $0x50] sm:$0xff]
      %v1038 = vld [vmem:[%s1026 + $0x58] sm:$0xff]
      %v1039 = vld [vmem:[%s1026 + $0x60] sm:$0xff]
      %v1040 = vld [vmem:[%s1026 + $0x68] sm:$0xff]
      %v1041 = vld [vmem:[%s1026 + $0x70] sm:$0xff]
      %v1042 = vld [vmem:[%s1026 + $0x78] sm:$0xff]
      %v1043 = vld [vmem:[%s1026 + $0x80] sm:$0xff]
      %v1044 = vld [vmem:[%s1026 + $0x88] sm:$0xff]
      %v1045 = vld [vmem:[%s1026 + $0x90] sm:$0xff]
      %v1046 = vld [vmem:[%s1026 + $0x98] sm:$0xff]
      %v1047 = vld [vmem:[%s1026 + $0xa0] sm:$0xff]
      %v1048 = vld [vmem:[%s1026 + $0xa8] sm:$0xff]
      %v1049 = vld [vmem:[%s1026 + $0xb0] sm:$0xff]
      %v1050 = vld [vmem:[%s1026 + $0xb8] sm:$0xff]
      %v1051 = vld [vmem:[%s1026 + $0xc0] sm:$0xff]
      %v1052 = vld [vmem:[%s1026 + $0xc8] sm:$0xff]
      %v1053 = vld [vmem:[%s1026 + $0xd0] sm:$0xff]
      %v1054 = vld [vmem:[%s1026 + $0xd8] sm:$0xff]
      %v1055 = vld [vmem:[%s1026 + $0xe0] sm:$0xff]
      %v1056 = vld [vmem:[%s1026 + $0xe8] sm:$0xff]
      %v1057 = vld [vmem:[%s1026 + $0xf0] sm:$0xff]
      %v1058 = vld [vmem:[%s1026 + $0xf8] sm:$0xff]
      %v1059 = vmul.f32 %v1027, %v897
      %v1060 = vmul.f32 %v1028, %v898
      %v1061 = vmul.f32 %v1029, %v899
      %v1062 = vmul.f32 %v1030, %v900
      %v1063 = vmul.f32 %v1031, %v901
      %v1064 = vmul.f32 %v1032, %v902
      %v1065 = vmul.f32 %v1033, %v903
      %v1066 = vmul.f32 %v1034, %v904
      %v1067 = vmul.f32 %v1035, %v905
      %v1068 = vmul.f32 %v1036, %v906
      %v1069 = vmul.f32 %v1037, %v907
      %v1070 = vmul.f32 %v1038, %v908
      %v1071 = vmul.f32 %v1039, %v909
      %v1072 = vmul.f32 %v1040, %v910
      %v1073 = vmul.f32 %v1041, %v911
      %v1074 = vmul.f32 %v1042, %v912
      %v1075 = vmul.f32 %v1043, %v913
      %v1076 = vmul.f32 %v1044, %v914
      %v1077 = vmul.f32 %v1045, %v915
      %v1078 = vmul.f32 %v1046, %v916
      %v1079 = vmul.f32 %v1047, %v917
      %v1080 = vmul.f32 %v1048, %v918
      %v1081 = vmul.f32 %v1049, %v919
      %v1082 = vmul.f32 %v1050, %v920
      %v1083 = vmul.f32 %v1051, %v921
      %v1084 = vmul.f32 %v1052, %v922
      %v1085 = vmul.f32 %v1053, %v923
      %v1086 = vmul.f32 %v1054, %v924
      %v1087 = vmul.f32 %v1055, %v925
      %v1088 = vmul.f32 %v1056, %v926
      %v1089 = vmul.f32 %v1057, %v927
      %v1090 = vmul.f32 %v1058, %v928
      %v1091 = vld [vmem:[%s3] sm:$0xff]
      %v1092 = vld [vmem:[%s3 + $0x8] sm:$0xff]
      %v1093 = vld [vmem:[%s3 + $0x10] sm:$0xff]
      %v1094 = vld [vmem:[%s3 + $0x18] sm:$0xff]
      %v1095 = vld [vmem:[%s3 + $0x20] sm:$0xff]
      %v1096 = vld [vmem:[%s3 + $0x28] sm:$0xff]
      %v1097 = vld [vmem:[%s3 + $0x30] sm:$0xff]
      %v1098 = vld [vmem:[%s3 + $0x38] sm:$0xff]
      %v1099 = vld [vmem:[%s3 + $0x40] sm:$0xff]
      %v1100 = vld [vmem:[%s3 + $0x48] sm:$0xff]
      %v1101 = vld [vmem:[%s3 + $0x50] sm:$0xff]
      %v1102 = vld [vmem:[%s3 + $0x58] sm:$0xff]
      %v1103 = vld [vmem:[%s3 + $0x60] sm:$0xff]
      %v1104 = vld [vmem:[%s3 + $0x68] sm:$0xff]
      %v1105 = vld [vmem:[%s3 + $0x70] sm:$0xff]
      %v1106 = vld [vmem:[%s3 + $0x78] sm:$0xff]
      %s1107 = sadd.s32 0, 8
      %s1108 = scalar_lea.vmem [#allocation2], %s1107
      %v1109 = vld [vmem:[%s1108] sm:$0xff]
      %v1110 = vld [vmem:[%s1108 + $0x8] sm:$0xff]
      %v1111 = vld [vmem:[%s1108 + $0x10] sm:$0xff]
      %v1112 = vld [vmem:[%s1108 + $0x18] sm:$0xff]
      %v1113 = vld [vmem:[%s1108 + $0x20] sm:$0xff]
      %v1114 = vld [vmem:[%s1108 + $0x28] sm:$0xff]
      %v1115 = vld [vmem:[%s1108 + $0x30] sm:$0xff]
      %v1116 = vld [vmem:[%s1108 + $0x38] sm:$0xff]
      %v1117 = vld [vmem:[%s1108 + $0x40] sm:$0xff]
      %v1118 = vld [vmem:[%s1108 + $0x48] sm:$0xff]
      %v1119 = vld [vmem:[%s1108 + $0x50] sm:$0xff]
      %v1120 = vld [vmem:[%s1108 + $0x58] sm:$0xff]
      %v1121 = vld [vmem:[%s1108 + $0x60] sm:$0xff]
      %v1122 = vld [vmem:[%s1108 + $0x68] sm:$0xff]
      %v1123 = vld [vmem:[%s1108 + $0x70] sm:$0xff]
      %v1124 = vld [vmem:[%s1108 + $0x78] sm:$0xff]
      %v1125 = vld [vmem:[%s1108 + $0x80] sm:$0xff]
      %v1126 = vld [vmem:[%s1108 + $0x88] sm:$0xff]
      %v1127 = vld [vmem:[%s1108 + $0x90] sm:$0xff]
      %v1128 = vld [vmem:[%s1108 + $0x98] sm:$0xff]
      %v1129 = vld [vmem:[%s1108 + $0xa0] sm:$0xff]
      %v1130 = vld [vmem:[%s1108 + $0xa8] sm:$0xff]
      %v1131 = vld [vmem:[%s1108 + $0xb0] sm:$0xff]
      %v1132 = vld [vmem:[%s1108 + $0xb8] sm:$0xff]
      %v1133 = vld [vmem:[%s1108 + $0xc0] sm:$0xff]
      %v1134 = vld [vmem:[%s1108 + $0xc8] sm:$0xff]
      %v1135 = vld [vmem:[%s1108 + $0xd0] sm:$0xff]
      %v1136 = vld [vmem:[%s1108 + $0xd8] sm:$0xff]
      %v1137 = vld [vmem:[%s1108 + $0xe0] sm:$0xff]
      %v1138 = vld [vmem:[%s1108 + $0xe8] sm:$0xff]
      %v1139 = vld [vmem:[%s1108 + $0xf0] sm:$0xff]
      %v1140 = vld [vmem:[%s1108 + $0xf8] sm:$0xff]
      %s1141 = scalar_lea.vmem %s3, 128
      %v1142 = vld [vmem:[%s1141] sm:$0xff]
      %v1143 = vld [vmem:[%s1141 + $0x8] sm:$0xff]
      %v1144 = vld [vmem:[%s1141 + $0x10] sm:$0xff]
      %v1145 = vld [vmem:[%s1141 + $0x18] sm:$0xff]
      %v1146 = vld [vmem:[%s1141 + $0x20] sm:$0xff]
      %v1147 = vld [vmem:[%s1141 + $0x28] sm:$0xff]
      %v1148 = vld [vmem:[%s1141 + $0x30] sm:$0xff]
      %v1149 = vld [vmem:[%s1141 + $0x38] sm:$0xff]
      %v1150 = vld [vmem:[%s1141 + $0x40] sm:$0xff]
      %v1151 = vld [vmem:[%s1141 + $0x48] sm:$0xff]
      %v1152 = vld [vmem:[%s1141 + $0x50] sm:$0xff]
      %v1153 = vld [vmem:[%s1141 + $0x58] sm:$0xff]
      %v1154 = vld [vmem:[%s1141 + $0x60] sm:$0xff]
      %v1155 = vld [vmem:[%s1141 + $0x68] sm:$0xff]
      %v1156 = vld [vmem:[%s1141 + $0x70] sm:$0xff]
      %v1157 = vld [vmem:[%s1141 + $0x78] sm:$0xff]
      %1158 = vmatprep.subr.mxu0 0.0
      %1159 = vmatpush1.msra.mxu0 %v1142
      %1160 = vmatprep.subr.mxu0 0.0
      %1161 = vmatpush1.msra.mxu0 %v1143
      %1162 = vmatprep.subr.mxu0 0.0
      %1163 = vmatpush1.msra.mxu0 %v1144
      %1164 = vmatprep.subr.mxu0 0.0
      %1165 = vmatpush1.msra.mxu0 %v1145
      %1166 = vmatprep.subr.mxu0 0.0
      %1167 = vmatpush1.msra.mxu0 %v1146
      %1168 = vmatprep.subr.mxu0 0.0
      %1169 = vmatpush1.msra.mxu0 %v1147
      %1170 = vmatprep.subr.mxu0 0.0
      %1171 = vmatpush1.msra.mxu0 %v1148
      %1172 = vmatprep.subr.mxu0 0.0
      %1173 = vmatpush1.msra.mxu0 %v1149
      %1174 = vmatprep.subr.mxu0 0.0
      %1175 = vmatpush1.msra.mxu0 %v1150
      %1176 = vmatprep.subr.mxu0 0.0
      %1177 = vmatpush1.msra.mxu0 %v1151
      %1178 = vmatprep.subr.mxu0 0.0
      %1179 = vmatpush1.msra.mxu0 %v1152
      %1180 = vmatprep.subr.mxu0 0.0
      %1181 = vmatpush1.msra.mxu0 %v1153
      %1182 = vmatprep.subr.mxu0 0.0
      %1183 = vmatpush1.msra.mxu0 %v1154
      %1184 = vmatprep.subr.mxu0 0.0
      %1185 = vmatpush1.msra.mxu0 %v1155
      %1186 = vmatprep.subr.mxu0 0.0
      %1187 = vmatpush1.msra.mxu0 %v1156
      %1188 = vmatprep.subr.mxu0 0.0
      %1189 = vmatpush1.msra.mxu0 %v1157
      %1190 = vmatprep.subr.mxu0 0.0
      %1191 = vmatpush1.msra.mxu0 0.0
      %1192 = vmatprep.subr.mxu0 0.0
      %1193 = vmatpush1.msra.mxu0 0.0
      %1194 = vmatprep.subr.mxu0 0.0
      %1195 = vmatpush1.msra.mxu0 0.0
      %1196 = vmatprep.subr.mxu0 0.0
      %1197 = vmatpush1.msra.mxu0 0.0
      %1198 = vmatprep.subr.mxu0 0.0
      %1199 = vmatpush1.msra.mxu0 0.0
      %1200 = vmatprep.subr.mxu0 0.0
      %1201 = vmatpush1.msra.mxu0 0.0
      %1202 = vmatprep.subr.mxu0 0.0
      %1203 = vmatpush1.msra.mxu0 0.0
      %1204 = vmatprep.subr.mxu0 0.0
      %1205 = vmatpush1.msra.mxu0 0.0
      %1206 = vmatprep.subr.mxu0 0.0
      %1207 = vmatpush1.msra.mxu0 0.0
      %1208 = vmatprep.subr.mxu0 0.0
      %1209 = vmatpush1.msra.mxu0 0.0
      %1210 = vmatprep.subr.mxu0 0.0
      %1211 = vmatpush1.msra.mxu0 0.0
      %1212 = vmatprep.subr.mxu0 0.0
      %1213 = vmatpush1.msra.mxu0 0.0
      %1214 = vmatprep.subr.mxu0 0.0
      %1215 = vmatpush1.msra.mxu0 0.0
      %1216 = vmatprep.subr.mxu0 0.0
      %1217 = vmatpush1.msra.mxu0 0.0
      %1218 = vmatprep.subr.mxu0 0.0
      %1219 = vmatpush1.msra.mxu0 0.0
      %1220 = vmatprep.subr.mxu0 0.0
      %1221 = vmatpush1.msra.mxu0 0.0
      %1222 = vmatprep.mubr.f32.mxu0 0.0
      %1223 = vmatmul.mubr.f32.gmra.mrb[0].mxu0 %v1109
      %v1224 = vpop.f32.mrb[0].mxu0
      %v1225 = vadd.f32 0.0, %v1224
      %v1226 = vpop.f32.mrb[0].mxu0
      %1227 = vmatprep.mubr.f32.mxu0 0.0
      %1228 = vmatmul.mubr.f32.gmra.mrb[0].mxu0 %v1110
      %v1229 = vpop.f32.mrb[0].mxu0
      %v1230 = vadd.f32 0.0, %v1229
      %v1231 = vpop.f32.mrb[0].mxu0
      %1232 = vmatprep.mubr.f32.mxu0 0.0
      %1233 = vmatmul.mubr.f32.gmra.mrb[0].mxu0 %v1111
      %v1234 = vpop.f32.mrb[0].mxu0
      %v1235 = vadd.f32 0.0, %v1234
      %v1236 = vpop.f32.mrb[0].mxu0
      %1237 = vmatprep.mubr.f32.mxu0 0.0
      %1238 = vmatmul.mubr.f32.gmra.mrb[0].mxu0 %v1112
      %v1239 = vpop.f32.mrb[0].mxu0
      %v1240 = vadd.f32 0.0, %v1239
      %v1241 = vpop.f32.mrb[0].mxu0
      %1242 = vmatprep.mubr.f32.mxu0 0.0
      %1243 = vmatmul.mubr.f32.gmra.mrb[0].mxu0 %v1113
      %v1244 = vpop.f32.mrb[0].mxu0
      %v1245 = vadd.f32 0.0, %v1244
      %v1246 = vpop.f32.mrb[0].mxu0
      %1247 = vmatprep.mubr.f32.mxu0 0.0
      %1248 = vmatmul.mubr.f32.gmra.mrb[0].mxu0 %v1114
      %v1249 = vpop.f32.mrb[0].mxu0
      %v1250 = vadd.f32 0.0, %v1249
      %v1251 = vpop.f32.mrb[0].mxu0
      %1252 = vmatprep.mubr.f32.mxu0 0.0
      %1253 = vmatmul.mubr.f32.gmra.mrb[0].mxu0 %v1115
      %v1254 = vpop.f32.mrb[0].mxu0
      %v1255 = vadd.f32 0.0, %v1254
      %v1256 = vpop.f32.mrb[0].mxu0
      %1257 = vmatprep.mubr.f32.mxu0 0.0
      %1258 = vmatmul.mubr.f32.gmra.mrb[0].mxu0 %v1116
      %v1259 = vpop.f32.mrb[0].mxu0
      %v1260 = vadd.f32 0.0, %v1259
      %v1261 = vpop.f32.mrb[0].mxu0
      %1262 = vmatprep.mubr.f32.mxu0 0.0
      %1263 = vmatmul.mubr.f32.gmra.mrb[0].mxu0 %v1117
      %v1264 = vpop.f32.mrb[0].mxu0
      %v1265 = vadd.f32 0.0, %v1264
      %v1266 = vpop.f32.mrb[0].mxu0
      %1267 = vmatprep.mubr.f32.mxu0 0.0
      %1268 = vmatmul.mubr.f32.gmra.mrb[0].mxu0 %v1118
      %v1269 = vpop.f32.mrb[0].mxu0
      %v1270 = vadd.f32 0.0, %v1269
      %v1271 = vpop.f32.mrb[0].mxu0
      %1272 = vmatprep.mubr.f32.mxu0 0.0
      %1273 = vmatmul.mubr.f32.gmra.mrb[0].mxu0 %v1119
      %v1274 = vpop.f32.mrb[0].mxu0
      %v1275 = vadd.f32 0.0, %v1274
      %v1276 = vpop.f32.mrb[0].mxu0
      %1277 = vmatprep.mubr.f32.mxu0 0.0
      %1278 = vmatmul.mubr.f32.gmra.mrb[0].mxu0 %v1120
      %v1279 = vpop.f32.mrb[0].mxu0
      %v1280 = vadd.f32 0.0, %v1279
      %v1281 = vpop.f32.mrb[0].mxu0
      %1282 = vmatprep.mubr.f32.mxu0 0.0
      %1283 = vmatmul.mubr.f32.gmra.mrb[0].mxu0 %v1121
      %v1284 = vpop.f32.mrb[0].mxu0
      %v1285 = vadd.f32 0.0, %v1284
      %v1286 = vpop.f32.mrb[0].mxu0
      %1287 = vmatprep.mubr.f32.mxu0 0.0
      %1288 = vmatmul.mubr.f32.gmra.mrb[0].mxu0 %v1122
      %v1289 = vpop.f32.mrb[0].mxu0
      %v1290 = vadd.f32 0.0, %v1289
      %v1291 = vpop.f32.mrb[0].mxu0
      %1292 = vmatprep.mubr.f32.mxu0 0.0
      %1293 = vmatmul.mubr.f32.gmra.mrb[0].mxu0 %v1123
      %v1294 = vpop.f32.mrb[0].mxu0
      %v1295 = vadd.f32 0.0, %v1294
      %v1296 = vpop.f32.mrb[0].mxu0
      %1297 = vmatprep.mubr.f32.mxu0 0.0
      %1298 = vmatmul.mubr.f32.gmra.mrb[0].mxu0 %v1124
      %v1299 = vpop.f32.mrb[0].mxu0
      %v1300 = vadd.f32 0.0, %v1299
      %v1301 = vpop.f32.mrb[0].mxu0
      %1302 = vmatprep.mubr.f32.mxu0 0.0
      %1303 = vmatmul.mubr.f32.gmra.mrb[0].mxu0 %v1125
      %v1304 = vpop.f32.mrb[0].mxu0
      %v1305 = vadd.f32 0.0, %v1304
      %v1306 = vpop.f32.mrb[0].mxu0
      %1307 = vmatprep.mubr.f32.mxu0 0.0
      %1308 = vmatmul.mubr.f32.gmra.mrb[0].mxu0 %v1126
      %v1309 = vpop.f32.mrb[0].mxu0
      %v1310 = vadd.f32 0.0, %v1309
      %v1311 = vpop.f32.mrb[0].mxu0
      %1312 = vmatprep.mubr.f32.mxu0 0.0
      %1313 = vmatmul.mubr.f32.gmra.mrb[0].mxu0 %v1127
      %v1314 = vpop.f32.mrb[0].mxu0
      %v1315 = vadd.f32 0.0, %v1314
      %v1316 = vpop.f32.mrb[0].mxu0
      %1317 = vmatprep.mubr.f32.mxu0 0.0
      %1318 = vmatmul.mubr.f32.gmra.mrb[0].mxu0 %v1128
      %v1319 = vpop.f32.mrb[0].mxu0
      %v1320 = vadd.f32 0.0, %v1319
      %v1321 = vpop.f32.mrb[0].mxu0
      %1322 = vmatprep.mubr.f32.mxu0 0.0
      %1323 = vmatmul.mubr.f32.gmra.mrb[0].mxu0 %v1129
      %v1324 = vpop.f32.mrb[0].mxu0
      %v1325 = vadd.f32 0.0, %v1324
      %v1326 = vpop.f32.mrb[0].mxu0
      %1327 = vmatprep.mubr.f32.mxu0 0.0
      %1328 = vmatmul.mubr.f32.gmra.mrb[0].mxu0 %v1130
      %v1329 = vpop.f32.mrb[0].mxu0
      %v1330 = vadd.f32 0.0, %v1329
      %v1331 = vpop.f32.mrb[0].mxu0
      %1332 = vmatprep.mubr.f32.mxu0 0.0
      %1333 = vmatmul.mubr.f32.gmra.mrb[0].mxu0 %v1131
      %v1334 = vpop.f32.mrb[0].mxu0
      %v1335 = vadd.f32 0.0, %v1334
      %v1336 = vpop.f32.mrb[0].mxu0
      %1337 = vmatprep.mubr.f32.mxu0 0.0
      %1338 = vmatmul.mubr.f32.gmra.mrb[0].mxu0 %v1132
      %v1339 = vpop.f32.mrb[0].mxu0
      %v1340 = vadd.f32 0.0, %v1339
      %v1341 = vpop.f32.mrb[0].mxu0
      %1342 = vmatprep.mubr.f32.mxu0 0.0
      %1343 = vmatmul.mubr.f32.gmra.mrb[0].mxu0 %v1133
      %v1344 = vpop.f32.mrb[0].mxu0
      %v1345 = vadd.f32 0.0, %v1344
      %v1346 = vpop.f32.mrb[0].mxu0
      %1347 = vmatprep.mubr.f32.mxu0 0.0
      %1348 = vmatmul.mubr.f32.gmra.mrb[0].mxu0 %v1134
      %v1349 = vpop.f32.mrb[0].mxu0
      %v1350 = vadd.f32 0.0, %v1349
      %v1351 = vpop.f32.mrb[0].mxu0
      %1352 = vmatprep.mubr.f32.mxu0 0.0
      %1353 = vmatmul.mubr.f32.gmra.mrb[0].mxu0 %v1135
      %v1354 = vpop.f32.mrb[0].mxu0
      %v1355 = vadd.f32 0.0, %v1354
      %v1356 = vpop.f32.mrb[0].mxu0
      %1357 = vmatprep.mubr.f32.mxu0 0.0
      %1358 = vmatmul.mubr.f32.gmra.mrb[0].mxu0 %v1136
      %v1359 = vpop.f32.mrb[0].mxu0
      %v1360 = vadd.f32 0.0, %v1359
      %v1361 = vpop.f32.mrb[0].mxu0
      %1362 = vmatprep.mubr.f32.mxu0 0.0
      %1363 = vmatmul.mubr.f32.gmra.mrb[0].mxu0 %v1137
      %v1364 = vpop.f32.mrb[0].mxu0
      %v1365 = vadd.f32 0.0, %v1364
      %v1366 = vpop.f32.mrb[0].mxu0
      %1367 = vmatprep.mubr.f32.mxu0 0.0
      %1368 = vmatmul.mubr.f32.gmra.mrb[0].mxu0 %v1138
      %v1369 = vpop.f32.mrb[0].mxu0
      %v1370 = vadd.f32 0.0, %v1369
      %v1371 = vpop.f32.mrb[0].mxu0
      %1372 = vmatprep.mubr.f32.mxu0 0.0
      %1373 = vmatmul.mubr.f32.gmra.mrb[0].mxu0 %v1139
      %v1374 = vpop.f32.mrb[0].mxu0
      %v1375 = vadd.f32 0.0, %v1374
      %v1376 = vpop.f32.mrb[0].mxu0
      %1377 = vmatprep.mubr.f32.mxu0 0.0
      %1378 = vmatmul.mubr.f32.gmra.mrb[0].mxu0 %v1140
      %v1379 = vpop.f32.mrb[0].mxu0
      %v1380 = vadd.f32 0.0, %v1379
      %v1381 = vpop.f32.mrb[0].mxu0
      %1382 = vdwg.mxu0
      %1383 = vmatprep.subr.mxu0 0.0
      %1384 = vmatpush1.msra.mxu0 %v1091
      %1385 = vmatprep.subr.mxu0 0.0
      %1386 = vmatpush1.msra.mxu0 %v1092
      %1387 = vmatprep.subr.mxu0 0.0
      %1388 = vmatpush1.msra.mxu0 %v1093
      %1389 = vmatprep.subr.mxu0 0.0
      %1390 = vmatpush1.msra.mxu0 %v1094
      %1391 = vmatprep.subr.mxu0 0.0
      %1392 = vmatpush1.msra.mxu0 %v1095
      %1393 = vmatprep.subr.mxu0 0.0
      %1394 = vmatpush1.msra.mxu0 %v1096
      %1395 = vmatprep.subr.mxu0 0.0
      %1396 = vmatpush1.msra.mxu0 %v1097
      %1397 = vmatprep.subr.mxu0 0.0
      %1398 = vmatpush1.msra.mxu0 %v1098
      %1399 = vmatprep.subr.mxu0 0.0
      %1400 = vmatpush1.msra.mxu0 %v1099
      %1401 = vmatprep.subr.mxu0 0.0
      %1402 = vmatpush1.msra.mxu0 %v1100
      %1403 = vmatprep.subr.mxu0 0.0
      %1404 = vmatpush1.msra.mxu0 %v1101
      %1405 = vmatprep.subr.mxu0 0.0
      %1406 = vmatpush1.msra.mxu0 %v1102
      %1407 = vmatprep.subr.mxu0 0.0
      %1408 = vmatpush1.msra.mxu0 %v1103
      %1409 = vmatprep.subr.mxu0 0.0
      %1410 = vmatpush1.msra.mxu0 %v1104
      %1411 = vmatprep.subr.mxu0 0.0
      %1412 = vmatpush1.msra.mxu0 %v1105
      %1413 = vmatprep.subr.mxu0 0.0
      %1414 = vmatpush1.msra.mxu0 %v1106
      %1415 = vmatprep.subr.mxu0 0.0
      %1416 = vmatpush1.msra.mxu0 0.0
      %1417 = vmatprep.subr.mxu0 0.0
      %1418 = vmatpush1.msra.mxu0 0.0
      %1419 = vmatprep.subr.mxu0 0.0
      %1420 = vmatpush1.msra.mxu0 0.0
      %1421 = vmatprep.subr.mxu0 0.0
      %1422 = vmatpush1.msra.mxu0 0.0
      %1423 = vmatprep.subr.mxu0 0.0
      %1424 = vmatpush1.msra.mxu0 0.0
      %1425 = vmatprep.subr.mxu0 0.0
      %1426 = vmatpush1.msra.mxu0 0.0
      %1427 = vmatprep.subr.mxu0 0.0
      %1428 = vmatpush1.msra.mxu0 0.0
      %1429 = vmatprep.subr.mxu0 0.0
      %1430 = vmatpush1.msra.mxu0 0.0
      %1431 = vmatprep.subr.mxu0 0.0
      %1432 = vmatpush1.msra.mxu0 0.0
      %1433 = vmatprep.subr.mxu0 0.0
      %1434 = vmatpush1.msra.mxu0 0.0
      %1435 = vmatprep.subr.mxu0 0.0
      %1436 = vmatpush1.msra.mxu0 0.0
      %1437 = vmatprep.subr.mxu0 0.0
      %1438 = vmatpush1.msra.mxu0 0.0
      %1439 = vmatprep.subr.mxu0 0.0
      %1440 = vmatpush1.msra.mxu0 0.0
      %1441 = vmatprep.subr.mxu0 0.0
      %1442 = vmatpush1.msra.mxu0 0.0
      %1443 = vmatprep.subr.mxu0 0.0
      %1444 = vmatpush1.msra.mxu0 0.0
      %1445 = vmatprep.subr.mxu0 0.0
      %1446 = vmatpush1.msra.mxu0 0.0
      %1447 = vmatprep.mubr.f32.mxu0 0.0
      %1448 = vmatmul.mubr.f32.gmra.mrb[0].mxu0 %v1059
      %v1449 = vpop.f32.mrb[0].mxu0
      %v1450 = vadd.f32 %v1225, %v1449
      %v1451 = vpop.f32.mrb[0].mxu0
      %1452 = vmatprep.mubr.f32.mxu0 0.0
      %1453 = vmatmul.mubr.f32.gmra.mrb[0].mxu0 %v1060
      %v1454 = vpop.f32.mrb[0].mxu0
      %v1455 = vadd.f32 %v1230, %v1454
      %v1456 = vpop.f32.mrb[0].mxu0
      %1457 = vmatprep.mubr.f32.mxu0 0.0
      %1458 = vmatmul.mubr.f32.gmra.mrb[0].mxu0 %v1061
      %v1459 = vpop.f32.mrb[0].mxu0
      %v1460 = vadd.f32 %v1235, %v1459
      %v1461 = vpop.f32.mrb[0].mxu0
      %1462 = vmatprep.mubr.f32.mxu0 0.0
      %1463 = vmatmul.mubr.f32.gmra.mrb[0].mxu0 %v1062
      %v1464 = vpop.f32.mrb[0].mxu0
      %v1465 = vadd.f32 %v1240, %v1464
      %v1466 = vpop.f32.mrb[0].mxu0
      %1467 = vmatprep.mubr.f32.mxu0 0.0
      %1468 = vmatmul.mubr.f32.gmra.mrb[0].mxu0 %v1063
      %v1469 = vpop.f32.mrb[0].mxu0
      %v1470 = vadd.f32 %v1245, %v1469
      %v1471 = vpop.f32.mrb[0].mxu0
      %1472 = vmatprep.mubr.f32.mxu0 0.0
      %1473 = vmatmul.mubr.f32.gmra.mrb[0].mxu0 %v1064
      %v1474 = vpop.f32.mrb[0].mxu0
      %v1475 = vadd.f32 %v1250, %v1474
      %v1476 = vpop.f32.mrb[0].mxu0
      %1477 = vmatprep.mubr.f32.mxu0 0.0
      %1478 = vmatmul.mubr.f32.gmra.mrb[0].mxu0 %v1065
      %v1479 = vpop.f32.mrb[0].mxu0
      %v1480 = vadd.f32 %v1255, %v1479
      %v1481 = vpop.f32.mrb[0].mxu0
      %1482 = vmatprep.mubr.f32.mxu0 0.0
      %1483 = vmatmul.mubr.f32.gmra.mrb[0].mxu0 %v1066
      %v1484 = vpop.f32.mrb[0].mxu0
      %v1485 = vadd.f32 %v1260, %v1484
      %v1486 = vpop.f32.mrb[0].mxu0
      %1487 = vmatprep.mubr.f32.mxu0 0.0
      %1488 = vmatmul.mubr.f32.gmra.mrb[0].mxu0 %v1067
      %v1489 = vpop.f32.mrb[0].mxu0
      %v1490 = vadd.f32 %v1265, %v1489
      %v1491 = vpop.f32.mrb[0].mxu0
      %1492 = vmatprep.mubr.f32.mxu0 0.0
      %1493 = vmatmul.mubr.f32.gmra.mrb[0].mxu0 %v1068
      %v1494 = vpop.f32.mrb[0].mxu0
      %v1495 = vadd.f32 %v1270, %v1494
      %v1496 = vpop.f32.mrb[0].mxu0
      %1497 = vmatprep.mubr.f32.mxu0 0.0
      %1498 = vmatmul.mubr.f32.gmra.mrb[0].mxu0 %v1069
      %v1499 = vpop.f32.mrb[0].mxu0
      %v1500 = vadd.f32 %v1275, %v1499
      %v1501 = vpop.f32.mrb[0].mxu0
      %1502 = vmatprep.mubr.f32.mxu0 0.0
      %1503 = vmatmul.mubr.f32.gmra.mrb[0].mxu0 %v1070
      %v1504 = vpop.f32.mrb[0].mxu0
      %v1505 = vadd.f32 %v1280, %v1504
      %v1506 = vpop.f32.mrb[0].mxu0
      %1507 = vmatprep.mubr.f32.mxu0 0.0
      %1508 = vmatmul.mubr.f32.gmra.mrb[0].mxu0 %v1071
      %v1509 = vpop.f32.mrb[0].mxu0
      %v1510 = vadd.f32 %v1285, %v1509
      %v1511 = vpop.f32.mrb[0].mxu0
      %1512 = vmatprep.mubr.f32.mxu0 0.0
      %1513 = vmatmul.mubr.f32.gmra.mrb[0].mxu0 %v1072
      %v1514 = vpop.f32.mrb[0].mxu0
      %v1515 = vadd.f32 %v1290, %v1514
      %v1516 = vpop.f32.mrb[0].mxu0
      %1517 = vmatprep.mubr.f32.mxu0 0.0
      %1518 = vmatmul.mubr.f32.gmra.mrb[0].mxu0 %v1073
      %v1519 = vpop.f32.mrb[0].mxu0
      %v1520 = vadd.f32 %v1295, %v1519
      %v1521 = vpop.f32.mrb[0].mxu0
      %1522 = vmatprep.mubr.f32.mxu0 0.0
      %1523 = vmatmul.mubr.f32.gmra.mrb[0].mxu0 %v1074
      %v1524 = vpop.f32.mrb[0].mxu0
      %v1525 = vadd.f32 %v1300, %v1524
      %v1526 = vpop.f32.mrb[0].mxu0
      %1527 = vmatprep.mubr.f32.mxu0 0.0
      %1528 = vmatmul.mubr.f32.gmra.mrb[0].mxu0 %v1075
      %v1529 = vpop.f32.mrb[0].mxu0
      %v1530 = vadd.f32 %v1305, %v1529
      %v1531 = vpop.f32.mrb[0].mxu0
      %1532 = vmatprep.mubr.f32.mxu0 0.0
      %1533 = vmatmul.mubr.f32.gmra.mrb[0].mxu0 %v1076
      %v1534 = vpop.f32.mrb[0].mxu0
      %v1535 = vadd.f32 %v1310, %v1534
      %v1536 = vpop.f32.mrb[0].mxu0
      %1537 = vmatprep.mubr.f32.mxu0 0.0
      %1538 = vmatmul.mubr.f32.gmra.mrb[0].mxu0 %v1077
      %v1539 = vpop.f32.mrb[0].mxu0
      %v1540 = vadd.f32 %v1315, %v1539
      %v1541 = vpop.f32.mrb[0].mxu0
      %1542 = vmatprep.mubr.f32.mxu0 0.0
      %1543 = vmatmul.mubr.f32.gmra.mrb[0].mxu0 %v1078
      %v1544 = vpop.f32.mrb[0].mxu0
      %v1545 = vadd.f32 %v1320, %v1544
      %v1546 = vpop.f32.mrb[0].mxu0
      %1547 = vmatprep.mubr.f32.mxu0 0.0
      %1548 = vmatmul.mubr.f32.gmra.mrb[0].mxu0 %v1079
      %v1549 = vpop.f32.mrb[0].mxu0
      %v1550 = vadd.f32 %v1325, %v1549
      %v1551 = vpop.f32.mrb[0].mxu0
      %1552 = vmatprep.mubr.f32.mxu0 0.0
      %1553 = vmatmul.mubr.f32.gmra.mrb[0].mxu0 %v1080
      %v1554 = vpop.f32.mrb[0].mxu0
      %v1555 = vadd.f32 %v1330, %v1554
      %v1556 = vpop.f32.mrb[0].mxu0
      %1557 = vmatprep.mubr.f32.mxu0 0.0
      %1558 = vmatmul.mubr.f32.gmra.mrb[0].mxu0 %v1081
      %v1559 = vpop.f32.mrb[0].mxu0
      %v1560 = vadd.f32 %v1335, %v1559
      %v1561 = vpop.f32.mrb[0].mxu0
      %1562 = vmatprep.mubr.f32.mxu0 0.0
      %1563 = vmatmul.mubr.f32.gmra.mrb[0].mxu0 %v1082
      %v1564 = vpop.f32.mrb[0].mxu0
      %v1565 = vadd.f32 %v1340, %v1564
      %v1566 = vpop.f32.mrb[0].mxu0
      %1567 = vmatprep.mubr.f32.mxu0 0.0
      %1568 = vmatmul.mubr.f32.gmra.mrb[0].mxu0 %v1083
      %v1569 = vpop.f32.mrb[0].mxu0
      %v1570 = vadd.f32 %v1345, %v1569
      %v1571 = vpop.f32.mrb[0].mxu0
      %1572 = vmatprep.mubr.f32.mxu0 0.0
      %1573 = vmatmul.mubr.f32.gmra.mrb[0].mxu0 %v1084
      %v1574 = vpop.f32.mrb[0].mxu0
      %v1575 = vadd.f32 %v1350, %v1574
      %v1576 = vpop.f32.mrb[0].mxu0
      %1577 = vmatprep.mubr.f32.mxu0 0.0
      %1578 = vmatmul.mubr.f32.gmra.mrb[0].mxu0 %v1085
      %v1579 = vpop.f32.mrb[0].mxu0
      %v1580 = vadd.f32 %v1355, %v1579
      %v1581 = vpop.f32.mrb[0].mxu0
      %1582 = vmatprep.mubr.f32.mxu0 0.0
      %1583 = vmatmul.mubr.f32.gmra.mrb[0].mxu0 %v1086
      %v1584 = vpop.f32.mrb[0].mxu0
      %v1585 = vadd.f32 %v1360, %v1584
      %v1586 = vpop.f32.mrb[0].mxu0
      %1587 = vmatprep.mubr.f32.mxu0 0.0
      %1588 = vmatmul.mubr.f32.gmra.mrb[0].mxu0 %v1087
      %v1589 = vpop.f32.mrb[0].mxu0
      %v1590 = vadd.f32 %v1365, %v1589
      %v1591 = vpop.f32.mrb[0].mxu0
      %1592 = vmatprep.mubr.f32.mxu0 0.0
      %1593 = vmatmul.mubr.f32.gmra.mrb[0].mxu0 %v1088
      %v1594 = vpop.f32.mrb[0].mxu0
      %v1595 = vadd.f32 %v1370, %v1594
      %v1596 = vpop.f32.mrb[0].mxu0
      %1597 = vmatprep.mubr.f32.mxu0 0.0
      %1598 = vmatmul.mubr.f32.gmra.mrb[0].mxu0 %v1089
      %v1599 = vpop.f32.mrb[0].mxu0
      %v1600 = vadd.f32 %v1375, %v1599
      %v1601 = vpop.f32.mrb[0].mxu0
      %1602 = vmatprep.mubr.f32.mxu0 0.0
      %1603 = vmatmul.mubr.f32.gmra.mrb[0].mxu0 %v1090
      %v1604 = vpop.f32.mrb[0].mxu0
      %v1605 = vadd.f32 %v1380, %v1604
      %v1606 = vpop.f32.mrb[0].mxu0
      %1607 = vdwg.mxu0
      %s1608 = sadd.s32 0, 9
      %s1609 = scalar_lea.vmem [#allocation2], %s1608
      %v1610 = vld [vmem:[%s1609] sm:$0xff]
      %v1611 = vld [vmem:[%s1609 + $0x8] sm:$0xff]
      %v1612 = vld [vmem:[%s1609 + $0x10] sm:$0xff]
      %v1613 = vld [vmem:[%s1609 + $0x18] sm:$0xff]
      %v1614 = vld [vmem:[%s1609 + $0x20] sm:$0xff]
      %v1615 = vld [vmem:[%s1609 + $0x28] sm:$0xff]
      %v1616 = vld [vmem:[%s1609 + $0x30] sm:$0xff]
      %v1617 = vld [vmem:[%s1609 + $0x38] sm:$0xff]
      %v1618 = vld [vmem:[%s1609 + $0x40] sm:$0xff]
      %v1619 = vld [vmem:[%s1609 + $0x48] sm:$0xff]
      %v1620 = vld [vmem:[%s1609 + $0x50] sm:$0xff]
      %v1621 = vld [vmem:[%s1609 + $0x58] sm:$0xff]
      %v1622 = vld [vmem:[%s1609 + $0x60] sm:$0xff]
      %v1623 = vld [vmem:[%s1609 + $0x68] sm:$0xff]
      %v1624 = vld [vmem:[%s1609 + $0x70] sm:$0xff]
      %v1625 = vld [vmem:[%s1609 + $0x78] sm:$0xff]
      %v1626 = vld [vmem:[%s1609 + $0x80] sm:$0xff]
      %v1627 = vld [vmem:[%s1609 + $0x88] sm:$0xff]
      %v1628 = vld [vmem:[%s1609 + $0x90] sm:$0xff]
      %v1629 = vld [vmem:[%s1609 + $0x98] sm:$0xff]
      %v1630 = vld [vmem:[%s1609 + $0xa0] sm:$0xff]
      %v1631 = vld [vmem:[%s1609 + $0xa8] sm:$0xff]
      %v1632 = vld [vmem:[%s1609 + $0xb0] sm:$0xff]
      %v1633 = vld [vmem:[%s1609 + $0xb8] sm:$0xff]
      %v1634 = vld [vmem:[%s1609 + $0xc0] sm:$0xff]
      %v1635 = vld [vmem:[%s1609 + $0xc8] sm:$0xff]
      %v1636 = vld [vmem:[%s1609 + $0xd0] sm:$0xff]
      %v1637 = vld [vmem:[%s1609 + $0xd8] sm:$0xff]
      %v1638 = vld [vmem:[%s1609 + $0xe0] sm:$0xff]
      %v1639 = vld [vmem:[%s1609 + $0xe8] sm:$0xff]
      %v1640 = vld [vmem:[%s1609 + $0xf0] sm:$0xff]
      %v1641 = vld [vmem:[%s1609 + $0xf8] sm:$0xff]
      %v1642 = vmul.f32 %v1610, %v993
      %v1643 = vmul.f32 %v1611, %v994
      %v1644 = vmul.f32 %v1612, %v995
      %v1645 = vmul.f32 %v1613, %v996
      %v1646 = vmul.f32 %v1614, %v997
      %v1647 = vmul.f32 %v1615, %v998
      %v1648 = vmul.f32 %v1616, %v999
      %v1649 = vmul.f32 %v1617, %v1000
      %v1650 = vmul.f32 %v1618, %v1001
      %v1651 = vmul.f32 %v1619, %v1002
      %v1652 = vmul.f32 %v1620, %v1003
      %v1653 = vmul.f32 %v1621, %v1004
      %v1654 = vmul.f32 %v1622, %v1005
      %v1655 = vmul.f32 %v1623, %v1006
      %v1656 = vmul.f32 %v1624, %v1007
      %v1657 = vmul.f32 %v1625, %v1008
      %v1658 = vmul.f32 %v1626, %v1009
      %v1659 = vmul.f32 %v1627, %v1010
      %v1660 = vmul.f32 %v1628, %v1011
      %v1661 = vmul.f32 %v1629, %v1012
      %v1662 = vmul.f32 %v1630, %v1013
      %v1663 = vmul.f32 %v1631, %v1014
      %v1664 = vmul.f32 %v1632, %v1015
      %v1665 = vmul.f32 %v1633, %v1016
      %v1666 = vmul.f32 %v1634, %v1017
      %v1667 = vmul.f32 %v1635, %v1018
      %v1668 = vmul.f32 %v1636, %v1019
      %v1669 = vmul.f32 %v1637, %v1020
      %v1670 = vmul.f32 %v1638, %v1021
      %v1671 = vmul.f32 %v1639, %v1022
      %v1672 = vmul.f32 %v1640, %v1023
      %v1673 = vmul.f32 %v1641, %v1024
      %s1674 = scalar_lea.vmem %s3, 256
      %v1675 = vld [vmem:[%s1674] sm:$0xff]
      %v1676 = vld [vmem:[%s1674 + $0x8] sm:$0xff]
      %v1677 = vld [vmem:[%s1674 + $0x10] sm:$0xff]
      %v1678 = vld [vmem:[%s1674 + $0x18] sm:$0xff]
      %v1679 = vld [vmem:[%s1674 + $0x20] sm:$0xff]
      %v1680 = vld [vmem:[%s1674 + $0x28] sm:$0xff]
      %v1681 = vld [vmem:[%s1674 + $0x30] sm:$0xff]
      %v1682 = vld [vmem:[%s1674 + $0x38] sm:$0xff]
      %v1683 = vld [vmem:[%s1674 + $0x40] sm:$0xff]
      %v1684 = vld [vmem:[%s1674 + $0x48] sm:$0xff]
      %v1685 = vld [vmem:[%s1674 + $0x50] sm:$0xff]
      %v1686 = vld [vmem:[%s1674 + $0x58] sm:$0xff]
      %v1687 = vld [vmem:[%s1674 + $0x60] sm:$0xff]
      %v1688 = vld [vmem:[%s1674 + $0x68] sm:$0xff]
      %v1689 = vld [vmem:[%s1674 + $0x70] sm:$0xff]
      %v1690 = vld [vmem:[%s1674 + $0x78] sm:$0xff]
      %1691 = vmatprep.subr.mxu0 0.0
      %1692 = vmatpush1.msra.mxu0 %v1675
      %1693 = vmatprep.subr.mxu0 0.0
      %1694 = vmatpush1.msra.mxu0 %v1676
      %1695 = vmatprep.subr.mxu0 0.0
      %1696 = vmatpush1.msra.mxu0 %v1677
      %1697 = vmatprep.subr.mxu0 0.0
      %1698 = vmatpush1.msra.mxu0 %v1678
      %1699 = vmatprep.subr.mxu0 0.0
      %1700 = vmatpush1.msra.mxu0 %v1679
      %1701 = vmatprep.subr.mxu0 0.0
      %1702 = vmatpush1.msra.mxu0 %v1680
      %1703 = vmatprep.subr.mxu0 0.0
      %1704 = vmatpush1.msra.mxu0 %v1681
      %1705 = vmatprep.subr.mxu0 0.0
      %1706 = vmatpush1.msra.mxu0 %v1682
      %1707 = vmatprep.subr.mxu0 0.0
      %1708 = vmatpush1.msra.mxu0 %v1683
      %1709 = vmatprep.subr.mxu0 0.0
      %1710 = vmatpush1.msra.mxu0 %v1684
      %1711 = vmatprep.subr.mxu0 0.0
      %1712 = vmatpush1.msra.mxu0 %v1685
      %1713 = vmatprep.subr.mxu0 0.0
      %1714 = vmatpush1.msra.mxu0 %v1686
      %1715 = vmatprep.subr.mxu0 0.0
      %1716 = vmatpush1.msra.mxu0 %v1687
      %1717 = vmatprep.subr.mxu0 0.0
      %1718 = vmatpush1.msra.mxu0 %v1688
      %1719 = vmatprep.subr.mxu0 0.0
      %1720 = vmatpush1.msra.mxu0 %v1689
      %1721 = vmatprep.subr.mxu0 0.0
      %1722 = vmatpush1.msra.mxu0 %v1690
      %1723 = vmatprep.subr.mxu0 0.0
      %1724 = vmatpush1.msra.mxu0 0.0
      %1725 = vmatprep.subr.mxu0 0.0
      %1726 = vmatpush1.msra.mxu0 0.0
      %1727 = vmatprep.subr.mxu0 0.0
      %1728 = vmatpush1.msra.mxu0 0.0
      %1729 = vmatprep.subr.mxu0 0.0
      %1730 = vmatpush1.msra.mxu0 0.0
      %1731 = vmatprep.subr.mxu0 0.0
      %1732 = vmatpush1.msra.mxu0 0.0
      %1733 = vmatprep.subr.mxu0 0.0
      %1734 = vmatpush1.msra.mxu0 0.0
      %1735 = vmatprep.subr.mxu0 0.0
      %1736 = vmatpush1.msra.mxu0 0.0
      %1737 = vmatprep.subr.mxu0 0.0
      %1738 = vmatpush1.msra.mxu0 0.0
      %1739 = vmatprep.subr.mxu0 0.0
      %1740 = vmatpush1.msra.mxu0 0.0
      %1741 = vmatprep.subr.mxu0 0.0
      %1742 = vmatpush1.msra.mxu0 0.0
      %1743 = vmatprep.subr.mxu0 0.0
      %1744 = vmatpush1.msra.mxu0 0.0
      %1745 = vmatprep.subr.mxu0 0.0
      %1746 = vmatpush1.msra.mxu0 0.0
      %1747 = vmatprep.subr.mxu0 0.0
      %1748 = vmatpush1.msra.mxu0 0.0
      %1749 = vmatprep.subr.mxu0 0.0
      %1750 = vmatpush1.msra.mxu0 0.0
      %1751 = vmatprep.subr.mxu0 0.0
      %1752 = vmatpush1.msra.mxu0 0.0
      %1753 = vmatprep.subr.mxu0 0.0
      %1754 = vmatpush1.msra.mxu0 0.0
      %1755 = vmatprep.mubr.f32.mxu0 0.0
      %1756 = vmatmul.mubr.f32.gmra.mrb[0].mxu0 %v1642
      %v1757 = vpop.f32.mrb[0].mxu0
      %v1758 = vadd.f32 0.0, %v1757
      %v1759 = vpop.f32.mrb[0].mxu0
      %1760 = vmatprep.mubr.f32.mxu0 0.0
      %1761 = vmatmul.mubr.f32.gmra.mrb[0].mxu0 %v1643
      %v1762 = vpop.f32.mrb[0].mxu0
      %v1763 = vadd.f32 0.0, %v1762
      %v1764 = vpop.f32.mrb[0].mxu0
      %1765 = vmatprep.mubr.f32.mxu0 0.0
      %1766 = vmatmul.mubr.f32.gmra.mrb[0].mxu0 %v1644
      %v1767 = vpop.f32.mrb[0].mxu0
      %v1768 = vadd.f32 0.0, %v1767
      %v1769 = vpop.f32.mrb[0].mxu0
      %1770 = vmatprep.mubr.f32.mxu0 0.0
      %1771 = vmatmul.mubr.f32.gmra.mrb[0].mxu0 %v1645
      %v1772 = vpop.f32.mrb[0].mxu0
      %v1773 = vadd.f32 0.0, %v1772
      %v1774 = vpop.f32.mrb[0].mxu0
      %1775 = vmatprep.mubr.f32.mxu0 0.0
      %1776 = vmatmul.mubr.f32.gmra.mrb[0].mxu0 %v1646
      %v1777 = vpop.f32.mrb[0].mxu0
      %v1778 = vadd.f32 0.0, %v1777
      %v1779 = vpop.f32.mrb[0].mxu0
      %1780 = vmatprep.mubr.f32.mxu0 0.0
      %1781 = vmatmul.mubr.f32.gmra.mrb[0].mxu0 %v1647
      %v1782 = vpop.f32.mrb[0].mxu0
      %v1783 = vadd.f32 0.0, %v1782
      %v1784 = vpop.f32.mrb[0].mxu0
      %1785 = vmatprep.mubr.f32.mxu0 0.0
      %1786 = vmatmul.mubr.f32.gmra.mrb[0].mxu0 %v1648
      %v1787 = vpop.f32.mrb[0].mxu0
      %v1788 = vadd.f32 0.0, %v1787
      %v1789 = vpop.f32.mrb[0].mxu0
      %1790 = vmatprep.mubr.f32.mxu0 0.0
      %1791 = vmatmul.mubr.f32.gmra.mrb[0].mxu0 %v1649
      %v1792 = vpop.f32.mrb[0].mxu0
      %v1793 = vadd.f32 0.0, %v1792
      %v1794 = vpop.f32.mrb[0].mxu0
      %1795 = vmatprep.mubr.f32.mxu0 0.0
      %1796 = vmatmul.mubr.f32.gmra.mrb[0].mxu0 %v1650
      %v1797 = vpop.f32.mrb[0].mxu0
      %v1798 = vadd.f32 0.0, %v1797
      %v1799 = vpop.f32.mrb[0].mxu0
      %1800 = vmatprep.mubr.f32.mxu0 0.0
      %1801 = vmatmul.mubr.f32.gmra.mrb[0].mxu0 %v1651
      %v1802 = vpop.f32.mrb[0].mxu0
      %v1803 = vadd.f32 0.0, %v1802
      %v1804 = vpop.f32.mrb[0].mxu0
      %1805 = vmatprep.mubr.f32.mxu0 0.0
      %1806 = vmatmul.mubr.f32.gmra.mrb[0].mxu0 %v1652
      %v1807 = vpop.f32.mrb[0].mxu0
      %v1808 = vadd.f32 0.0, %v1807
      %v1809 = vpop.f32.mrb[0].mxu0
      %1810 = vmatprep.mubr.f32.mxu0 0.0
      %1811 = vmatmul.mubr.f32.gmra.mrb[0].mxu0 %v1653
      %v1812 = vpop.f32.mrb[0].mxu0
      %v1813 = vadd.f32 0.0, %v1812
      %v1814 = vpop.f32.mrb[0].mxu0
      %1815 = vmatprep.mubr.f32.mxu0 0.0
      %1816 = vmatmul.mubr.f32.gmra.mrb[0].mxu0 %v1654
      %v1817 = vpop.f32.mrb[0].mxu0
      %v1818 = vadd.f32 0.0, %v1817
      %v1819 = vpop.f32.mrb[0].mxu0
      %1820 = vmatprep.mubr.f32.mxu0 0.0
      %1821 = vmatmul.mubr.f32.gmra.mrb[0].mxu0 %v1655
      %v1822 = vpop.f32.mrb[0].mxu0
      %v1823 = vadd.f32 0.0, %v1822
      %v1824 = vpop.f32.mrb[0].mxu0
      %1825 = vmatprep.mubr.f32.mxu0 0.0
      %1826 = vmatmul.mubr.f32.gmra.mrb[0].mxu0 %v1656
      %v1827 = vpop.f32.mrb[0].mxu0
      %v1828 = vadd.f32 0.0, %v1827
      %v1829 = vpop.f32.mrb[0].mxu0
      %1830 = vmatprep.mubr.f32.mxu0 0.0
      %1831 = vmatmul.mubr.f32.gmra.mrb[0].mxu0 %v1657
      %v1832 = vpop.f32.mrb[0].mxu0
      %v1833 = vadd.f32 0.0, %v1832
      %v1834 = vpop.f32.mrb[0].mxu0
      %1835 = vmatprep.mubr.f32.mxu0 0.0
      %1836 = vmatmul.mubr.f32.gmra.mrb[0].mxu0 %v1658
      %v1837 = vpop.f32.mrb[0].mxu0
      %v1838 = vadd.f32 0.0, %v1837
      %v1839 = vpop.f32.mrb[0].mxu0
      %1840 = vmatprep.mubr.f32.mxu0 0.0
      %1841 = vmatmul.mubr.f32.gmra.mrb[0].mxu0 %v1659
      %v1842 = vpop.f32.mrb[0].mxu0
      %v1843 = vadd.f32 0.0, %v1842
      %v1844 = vpop.f32.mrb[0].mxu0
      %1845 = vmatprep.mubr.f32.mxu0 0.0
      %1846 = vmatmul.mubr.f32.gmra.mrb[0].mxu0 %v1660
      %v1847 = vpop.f32.mrb[0].mxu0
      %v1848 = vadd.f32 0.0, %v1847
      %v1849 = vpop.f32.mrb[0].mxu0
      %1850 = vmatprep.mubr.f32.mxu0 0.0
      %1851 = vmatmul.mubr.f32.gmra.mrb[0].mxu0 %v1661
      %v1852 = vpop.f32.mrb[0].mxu0
      %v1853 = vadd.f32 0.0, %v1852
      %v1854 = vpop.f32.mrb[0].mxu0
      %1855 = vmatprep.mubr.f32.mxu0 0.0
      %1856 = vmatmul.mubr.f32.gmra.mrb[0].mxu0 %v1662
      %v1857 = vpop.f32.mrb[0].mxu0
      %v1858 = vadd.f32 0.0, %v1857
      %v1859 = vpop.f32.mrb[0].mxu0
      %1860 = vmatprep.mubr.f32.mxu0 0.0
      %1861 = vmatmul.mubr.f32.gmra.mrb[0].mxu0 %v1663
      %v1862 = vpop.f32.mrb[0].mxu0
      %v1863 = vadd.f32 0.0, %v1862
      %v1864 = vpop.f32.mrb[0].mxu0
      %1865 = vmatprep.mubr.f32.mxu0 0.0
      %1866 = vmatmul.mubr.f32.gmra.mrb[0].mxu0 %v1664
      %v1867 = vpop.f32.mrb[0].mxu0
      %v1868 = vadd.f32 0.0, %v1867
      %v1869 = vpop.f32.mrb[0].mxu0
      %1870 = vmatprep.mubr.f32.mxu0 0.0
      %1871 = vmatmul.mubr.f32.gmra.mrb[0].mxu0 %v1665
      %v1872 = vpop.f32.mrb[0].mxu0
      %v1873 = vadd.f32 0.0, %v1872
      %v1874 = vpop.f32.mrb[0].mxu0
      %1875 = vmatprep.mubr.f32.mxu0 0.0
      %1876 = vmatmul.mubr.f32.gmra.mrb[0].mxu0 %v1666
      %v1877 = vpop.f32.mrb[0].mxu0
      %v1878 = vadd.f32 0.0, %v1877
      %v1879 = vpop.f32.mrb[0].mxu0
      %1880 = vmatprep.mubr.f32.mxu0 0.0
      %1881 = vmatmul.mubr.f32.gmra.mrb[0].mxu0 %v1667
      %v1882 = vpop.f32.mrb[0].mxu0
      %v1883 = vadd.f32 0.0, %v1882
      %v1884 = vpop.f32.mrb[0].mxu0
      %1885 = vmatprep.mubr.f32.mxu0 0.0
      %1886 = vmatmul.mubr.f32.gmra.mrb[0].mxu0 %v1668
      %v1887 = vpop.f32.mrb[0].mxu0
      %v1888 = vadd.f32 0.0, %v1887
      %v1889 = vpop.f32.mrb[0].mxu0
      %1890 = vmatprep.mubr.f32.mxu0 0.0
      %1891 = vmatmul.mubr.f32.gmra.mrb[0].mxu0 %v1669
      %v1892 = vpop.f32.mrb[0].mxu0
      %v1893 = vadd.f32 0.0, %v1892
      %v1894 = vpop.f32.mrb[0].mxu0
      %1895 = vmatprep.mubr.f32.mxu0 0.0
      %1896 = vmatmul.mubr.f32.gmra.mrb[0].mxu0 %v1670
      %v1897 = vpop.f32.mrb[0].mxu0
      %v1898 = vadd.f32 0.0, %v1897
      %v1899 = vpop.f32.mrb[0].mxu0
      %1900 = vmatprep.mubr.f32.mxu0 0.0
      %1901 = vmatmul.mubr.f32.gmra.mrb[0].mxu0 %v1671
      %v1902 = vpop.f32.mrb[0].mxu0
      %v1903 = vadd.f32 0.0, %v1902
      %v1904 = vpop.f32.mrb[0].mxu0
      %1905 = vmatprep.mubr.f32.mxu0 0.0
      %1906 = vmatmul.mubr.f32.gmra.mrb[0].mxu0 %v1672
      %v1907 = vpop.f32.mrb[0].mxu0
      %v1908 = vadd.f32 0.0, %v1907
      %v1909 = vpop.f32.mrb[0].mxu0
      %1910 = vmatprep.mubr.f32.mxu0 0.0
      %1911 = vmatmul.mubr.f32.gmra.mrb[0].mxu0 %v1673
      %v1912 = vpop.f32.mrb[0].mxu0
      %v1913 = vadd.f32 0.0, %v1912
      %v1914 = vpop.f32.mrb[0].mxu0
      %1915 = vdwg.mxu0
      %v1916 = vadd.f32 %v1450, %v1758
      %v1917 = vadd.f32 %v1455, %v1763
      %v1918 = vadd.f32 %v1460, %v1768
      %v1919 = vadd.f32 %v1465, %v1773
      %v1920 = vadd.f32 %v1470, %v1778
      %v1921 = vadd.f32 %v1475, %v1783
      %v1922 = vadd.f32 %v1480, %v1788
      %v1923 = vadd.f32 %v1485, %v1793
      %v1924 = vadd.f32 %v1490, %v1798
      %v1925 = vadd.f32 %v1495, %v1803
      %v1926 = vadd.f32 %v1500, %v1808
      %v1927 = vadd.f32 %v1505, %v1813
      %v1928 = vadd.f32 %v1510, %v1818
      %v1929 = vadd.f32 %v1515, %v1823
      %v1930 = vadd.f32 %v1520, %v1828
      %v1931 = vadd.f32 %v1525, %v1833
      %v1932 = vadd.f32 %v1530, %v1838
      %v1933 = vadd.f32 %v1535, %v1843
      %v1934 = vadd.f32 %v1540, %v1848
      %v1935 = vadd.f32 %v1545, %v1853
      %v1936 = vadd.f32 %v1550, %v1858
      %v1937 = vadd.f32 %v1555, %v1863
      %v1938 = vadd.f32 %v1560, %v1868
      %v1939 = vadd.f32 %v1565, %v1873
      %v1940 = vadd.f32 %v1570, %v1878
      %v1941 = vadd.f32 %v1575, %v1883
      %v1942 = vadd.f32 %v1580, %v1888
      %v1943 = vadd.f32 %v1585, %v1893
      %v1944 = vadd.f32 %v1590, %v1898
      %v1945 = vadd.f32 %v1595, %v1903
      %v1946 = vadd.f32 %v1600, %v1908
      %v1947 = vadd.f32 %v1605, %v1913
      %s1948 = sadd.s32 0, 23
      %s1949 = scalar_lea.vmem [#allocation2], %s1948
      %v1950 = vld [vmem:[%s1949] sm:$0xff]
      %v1951 = vld [vmem:[%s1949 + $0x8] sm:$0xff]
      %v1952 = vld [vmem:[%s1949 + $0x10] sm:$0xff]
      %v1953 = vld [vmem:[%s1949 + $0x18] sm:$0xff]
      %v1954 = vld [vmem:[%s1949 + $0x20] sm:$0xff]
      %v1955 = vld [vmem:[%s1949 + $0x28] sm:$0xff]
      %v1956 = vld [vmem:[%s1949 + $0x30] sm:$0xff]
      %v1957 = vld [vmem:[%s1949 + $0x38] sm:$0xff]
      %v1958 = vld [vmem:[%s1949 + $0x40] sm:$0xff]
      %v1959 = vld [vmem:[%s1949 + $0x48] sm:$0xff]
      %v1960 = vld [vmem:[%s1949 + $0x50] sm:$0xff]
      %v1961 = vld [vmem:[%s1949 + $0x58] sm:$0xff]
      %v1962 = vld [vmem:[%s1949 + $0x60] sm:$0xff]
      %v1963 = vld [vmem:[%s1949 + $0x68] sm:$0xff]
      %v1964 = vld [vmem:[%s1949 + $0x70] sm:$0xff]
      %v1965 = vld [vmem:[%s1949 + $0x78] sm:$0xff]
      %v1966 = vld [vmem:[%s1949 + $0x80] sm:$0xff]
      %v1967 = vld [vmem:[%s1949 + $0x88] sm:$0xff]
      %v1968 = vld [vmem:[%s1949 + $0x90] sm:$0xff]
      %v1969 = vld [vmem:[%s1949 + $0x98] sm:$0xff]
      %v1970 = vld [vmem:[%s1949 + $0xa0] sm:$0xff]
      %v1971 = vld [vmem:[%s1949 + $0xa8] sm:$0xff]
      %v1972 = vld [vmem:[%s1949 + $0xb0] sm:$0xff]
      %v1973 = vld [vmem:[%s1949 + $0xb8] sm:$0xff]
      %v1974 = vld [vmem:[%s1949 + $0xc0] sm:$0xff]
      %v1975 = vld [vmem:[%s1949 + $0xc8] sm:$0xff]
      %v1976 = vld [vmem:[%s1949 + $0xd0] sm:$0xff]
      %v1977 = vld [vmem:[%s1949 + $0xd8] sm:$0xff]
      %v1978 = vld [vmem:[%s1949 + $0xe0] sm:$0xff]
      %v1979 = vld [vmem:[%s1949 + $0xe8] sm:$0xff]
      %v1980 = vld [vmem:[%s1949 + $0xf0] sm:$0xff]
      %v1981 = vld [vmem:[%s1949 + $0xf8] sm:$0xff]
      %v1982 = vmul.f32 %v1950, %v897
      %v1983 = vmul.f32 %v1951, %v898
      %v1984 = vmul.f32 %v1952, %v899
      %v1985 = vmul.f32 %v1953, %v900
      %v1986 = vmul.f32 %v1954, %v901
      %v1987 = vmul.f32 %v1955, %v902
      %v1988 = vmul.f32 %v1956, %v903
      %v1989 = vmul.f32 %v1957, %v904
      %v1990 = vmul.f32 %v1958, %v905
      %v1991 = vmul.f32 %v1959, %v906
      %v1992 = vmul.f32 %v1960, %v907
      %v1993 = vmul.f32 %v1961, %v908
      %v1994 = vmul.f32 %v1962, %v909
      %v1995 = vmul.f32 %v1963, %v910
      %v1996 = vmul.f32 %v1964, %v911
      %v1997 = vmul.f32 %v1965, %v912
      %v1998 = vmul.f32 %v1966, %v913
      %v1999 = vmul.f32 %v1967, %v914
      %v2000 = vmul.f32 %v1968, %v915
      %v2001 = vmul.f32 %v1969, %v916
      %v2002 = vmul.f32 %v1970, %v917
      %v2003 = vmul.f32 %v1971, %v918
      %v2004 = vmul.f32 %v1972, %v919
      %v2005 = vmul.f32 %v1973, %v920
      %v2006 = vmul.f32 %v1974, %v921
      %v2007 = vmul.f32 %v1975, %v922
      %v2008 = vmul.f32 %v1976, %v923
      %v2009 = vmul.f32 %v1977, %v924
      %v2010 = vmul.f32 %v1978, %v925
      %v2011 = vmul.f32 %v1979, %v926
      %v2012 = vmul.f32 %v1980, %v927
      %v2013 = vmul.f32 %v1981, %v928
      %s2014 = scalar_lea.vmem %s3, 384
      %v2015 = vld [vmem:[%s2014] sm:$0xff]
      %v2016 = vld [vmem:[%s2014 + $0x8] sm:$0xff]
      %v2017 = vld [vmem:[%s2014 + $0x10] sm:$0xff]
      %v2018 = vld [vmem:[%s2014 + $0x18] sm:$0xff]
      %v2019 = vld [vmem:[%s2014 + $0x20] sm:$0xff]
      %v2020 = vld [vmem:[%s2014 + $0x28] sm:$0xff]
      %v2021 = vld [vmem:[%s2014 + $0x30] sm:$0xff]
      %v2022 = vld [vmem:[%s2014 + $0x38] sm:$0xff]
      %v2023 = vld [vmem:[%s2014 + $0x40] sm:$0xff]
      %v2024 = vld [vmem:[%s2014 + $0x48] sm:$0xff]
      %v2025 = vld [vmem:[%s2014 + $0x50] sm:$0xff]
      %v2026 = vld [vmem:[%s2014 + $0x58] sm:$0xff]
      %v2027 = vld [vmem:[%s2014 + $0x60] sm:$0xff]
      %v2028 = vld [vmem:[%s2014 + $0x68] sm:$0xff]
      %v2029 = vld [vmem:[%s2014 + $0x70] sm:$0xff]
      %v2030 = vld [vmem:[%s2014 + $0x78] sm:$0xff]
      %2031 = vmatprep.subr.mxu0 0.0
      %2032 = vmatpush1.msra.mxu0 %v2015
      %2033 = vmatprep.subr.mxu0 0.0
      %2034 = vmatpush1.msra.mxu0 %v2016
      %2035 = vmatprep.subr.mxu0 0.0
      %2036 = vmatpush1.msra.mxu0 %v2017
      %2037 = vmatprep.subr.mxu0 0.0
      %2038 = vmatpush1.msra.mxu0 %v2018
      %2039 = vmatprep.subr.mxu0 0.0
      %2040 = vmatpush1.msra.mxu0 %v2019
      %2041 = vmatprep.subr.mxu0 0.0
      %2042 = vmatpush1.msra.mxu0 %v2020
      %2043 = vmatprep.subr.mxu0 0.0
      %2044 = vmatpush1.msra.mxu0 %v2021
      %2045 = vmatprep.subr.mxu0 0.0
      %2046 = vmatpush1.msra.mxu0 %v2022
      %2047 = vmatprep.subr.mxu0 0.0
      %2048 = vmatpush1.msra.mxu0 %v2023
      %2049 = vmatprep.subr.mxu0 0.0
      %2050 = vmatpush1.msra.mxu0 %v2024
      %2051 = vmatprep.subr.mxu0 0.0
      %2052 = vmatpush1.msra.mxu0 %v2025
      %2053 = vmatprep.subr.mxu0 0.0
      %2054 = vmatpush1.msra.mxu0 %v2026
      %2055 = vmatprep.subr.mxu0 0.0
      %2056 = vmatpush1.msra.mxu0 %v2027
      %2057 = vmatprep.subr.mxu0 0.0
      %2058 = vmatpush1.msra.mxu0 %v2028
      %2059 = vmatprep.subr.mxu0 0.0
      %2060 = vmatpush1.msra.mxu0 %v2029
      %2061 = vmatprep.subr.mxu0 0.0
      %2062 = vmatpush1.msra.mxu0 %v2030
      %2063 = vmatprep.subr.mxu0 0.0
      %2064 = vmatpush1.msra.mxu0 0.0
      %2065 = vmatprep.subr.mxu0 0.0
      %2066 = vmatpush1.msra.mxu0 0.0
      %2067 = vmatprep.subr.mxu0 0.0
      %2068 = vmatpush1.msra.mxu0 0.0
      %2069 = vmatprep.subr.mxu0 0.0
      %2070 = vmatpush1.msra.mxu0 0.0
      %2071 = vmatprep.subr.mxu0 0.0
      %2072 = vmatpush1.msra.mxu0 0.0
      %2073 = vmatprep.subr.mxu0 0.0
      %2074 = vmatpush1.msra.mxu0 0.0
      %2075 = vmatprep.subr.mxu0 0.0
      %2076 = vmatpush1.msra.mxu0 0.0
      %2077 = vmatprep.subr.mxu0 0.0
      %2078 = vmatpush1.msra.mxu0 0.0
      %2079 = vmatprep.subr.mxu0 0.0
      %2080 = vmatpush1.msra.mxu0 0.0
      %2081 = vmatprep.subr.mxu0 0.0
      %2082 = vmatpush1.msra.mxu0 0.0
      %2083 = vmatprep.subr.mxu0 0.0
      %2084 = vmatpush1.msra.mxu0 0.0
      %2085 = vmatprep.subr.mxu0 0.0
      %2086 = vmatpush1.msra.mxu0 0.0
      %2087 = vmatprep.subr.mxu0 0.0
      %2088 = vmatpush1.msra.mxu0 0.0
      %2089 = vmatprep.subr.mxu0 0.0
      %2090 = vmatpush1.msra.mxu0 0.0
      %2091 = vmatprep.subr.mxu0 0.0
      %2092 = vmatpush1.msra.mxu0 0.0
      %2093 = vmatprep.subr.mxu0 0.0
      %2094 = vmatpush1.msra.mxu0 0.0
      %2095 = vmatprep.mubr.f32.mxu0 0.0
      %2096 = vmatmul.mubr.f32.gmra.mrb[0].mxu0 %v1982
      %v2097 = vpop.f32.mrb[0].mxu0
      %v2098 = vadd.f32 0.0, %v2097
      %v2099 = vpop.f32.mrb[0].mxu0
      %2100 = vmatprep.mubr.f32.mxu0 0.0
      %2101 = vmatmul.mubr.f32.gmra.mrb[0].mxu0 %v1983
      %v2102 = vpop.f32.mrb[0].mxu0
      %v2103 = vadd.f32 0.0, %v2102
      %v2104 = vpop.f32.mrb[0].mxu0
      %2105 = vmatprep.mubr.f32.mxu0 0.0
      %2106 = vmatmul.mubr.f32.gmra.mrb[0].mxu0 %v1984
      %v2107 = vpop.f32.mrb[0].mxu0
      %v2108 = vadd.f32 0.0, %v2107
      %v2109 = vpop.f32.mrb[0].mxu0
      %2110 = vmatprep.mubr.f32.mxu0 0.0
      %2111 = vmatmul.mubr.f32.gmra.mrb[0].mxu0 %v1985
      %v2112 = vpop.f32.mrb[0].mxu0
      %v2113 = vadd.f32 0.0, %v2112
      %v2114 = vpop.f32.mrb[0].mxu0
      %2115 = vmatprep.mubr.f32.mxu0 0.0
      %2116 = vmatmul.mubr.f32.gmra.mrb[0].mxu0 %v1986
      %v2117 = vpop.f32.mrb[0].mxu0
      %v2118 = vadd.f32 0.0, %v2117
      %v2119 = vpop.f32.mrb[0].mxu0
      %2120 = vmatprep.mubr.f32.mxu0 0.0
      %2121 = vmatmul.mubr.f32.gmra.mrb[0].mxu0 %v1987
      %v2122 = vpop.f32.mrb[0].mxu0
      %v2123 = vadd.f32 0.0, %v2122
      %v2124 = vpop.f32.mrb[0].mxu0
      %2125 = vmatprep.mubr.f32.mxu0 0.0
      %2126 = vmatmul.mubr.f32.gmra.mrb[0].mxu0 %v1988
      %v2127 = vpop.f32.mrb[0].mxu0
      %v2128 = vadd.f32 0.0, %v2127
      %v2129 = vpop.f32.mrb[0].mxu0
      %2130 = vmatprep.mubr.f32.mxu0 0.0
      %2131 = vmatmul.mubr.f32.gmra.mrb[0].mxu0 %v1989
      %v2132 = vpop.f32.mrb[0].mxu0
      %v2133 = vadd.f32 0.0, %v2132
      %v2134 = vpop.f32.mrb[0].mxu0
      %2135 = vmatprep.mubr.f32.mxu0 0.0
      %2136 = vmatmul.mubr.f32.gmra.mrb[0].mxu0 %v1990
      %v2137 = vpop.f32.mrb[0].mxu0
      %v2138 = vadd.f32 0.0, %v2137
      %v2139 = vpop.f32.mrb[0].mxu0
      %2140 = vmatprep.mubr.f32.mxu0 0.0
      %2141 = vmatmul.mubr.f32.gmra.mrb[0].mxu0 %v1991
      %v2142 = vpop.f32.mrb[0].mxu0
      %v2143 = vadd.f32 0.0, %v2142
      %v2144 = vpop.f32.mrb[0].mxu0
      %2145 = vmatprep.mubr.f32.mxu0 0.0
      %2146 = vmatmul.mubr.f32.gmra.mrb[0].mxu0 %v1992
      %v2147 = vpop.f32.mrb[0].mxu0
      %v2148 = vadd.f32 0.0, %v2147
      %v2149 = vpop.f32.mrb[0].mxu0
      %2150 = vmatprep.mubr.f32.mxu0 0.0
      %2151 = vmatmul.mubr.f32.gmra.mrb[0].mxu0 %v1993
      %v2152 = vpop.f32.mrb[0].mxu0
      %v2153 = vadd.f32 0.0, %v2152
      %v2154 = vpop.f32.mrb[0].mxu0
      %2155 = vmatprep.mubr.f32.mxu0 0.0
      %2156 = vmatmul.mubr.f32.gmra.mrb[0].mxu0 %v1994
      %v2157 = vpop.f32.mrb[0].mxu0
      %v2158 = vadd.f32 0.0, %v2157
      %v2159 = vpop.f32.mrb[0].mxu0
      %2160 = vmatprep.mubr.f32.mxu0 0.0
      %2161 = vmatmul.mubr.f32.gmra.mrb[0].mxu0 %v1995
      %v2162 = vpop.f32.mrb[0].mxu0
      %v2163 = vadd.f32 0.0, %v2162
      %v2164 = vpop.f32.mrb[0].mxu0
      %2165 = vmatprep.mubr.f32.mxu0 0.0
      %2166 = vmatmul.mubr.f32.gmra.mrb[0].mxu0 %v1996
      %v2167 = vpop.f32.mrb[0].mxu0
      %v2168 = vadd.f32 0.0, %v2167
      %v2169 = vpop.f32.mrb[0].mxu0
      %2170 = vmatprep.mubr.f32.mxu0 0.0
      %2171 = vmatmul.mubr.f32.gmra.mrb[0].mxu0 %v1997
      %v2172 = vpop.f32.mrb[0].mxu0
      %v2173 = vadd.f32 0.0, %v2172
      %v2174 = vpop.f32.mrb[0].mxu0
      %2175 = vmatprep.mubr.f32.mxu0 0.0
      %2176 = vmatmul.mubr.f32.gmra.mrb[0].mxu0 %v1998
      %v2177 = vpop.f32.mrb[0].mxu0
      %v2178 = vadd.f32 0.0, %v2177
      %v2179 = vpop.f32.mrb[0].mxu0
      %2180 = vmatprep.mubr.f32.mxu0 0.0
      %2181 = vmatmul.mubr.f32.gmra.mrb[0].mxu0 %v1999
      %v2182 = vpop.f32.mrb[0].mxu0
      %v2183 = vadd.f32 0.0, %v2182
      %v2184 = vpop.f32.mrb[0].mxu0
      %2185 = vmatprep.mubr.f32.mxu0 0.0
      %2186 = vmatmul.mubr.f32.gmra.mrb[0].mxu0 %v2000
      %v2187 = vpop.f32.mrb[0].mxu0
      %v2188 = vadd.f32 0.0, %v2187
      %v2189 = vpop.f32.mrb[0].mxu0
      %2190 = vmatprep.mubr.f32.mxu0 0.0
      %2191 = vmatmul.mubr.f32.gmra.mrb[0].mxu0 %v2001
      %v2192 = vpop.f32.mrb[0].mxu0
      %v2193 = vadd.f32 0.0, %v2192
      %v2194 = vpop.f32.mrb[0].mxu0
      %2195 = vmatprep.mubr.f32.mxu0 0.0
      %2196 = vmatmul.mubr.f32.gmra.mrb[0].mxu0 %v2002
      %v2197 = vpop.f32.mrb[0].mxu0
      %v2198 = vadd.f32 0.0, %v2197
      %v2199 = vpop.f32.mrb[0].mxu0
      %2200 = vmatprep.mubr.f32.mxu0 0.0
      %2201 = vmatmul.mubr.f32.gmra.mrb[0].mxu0 %v2003
      %v2202 = vpop.f32.mrb[0].mxu0
      %v2203 = vadd.f32 0.0, %v2202
      %v2204 = vpop.f32.mrb[0].mxu0
      %2205 = vmatprep.mubr.f32.mxu0 0.0
      %2206 = vmatmul.mubr.f32.gmra.mrb[0].mxu0 %v2004
      %v2207 = vpop.f32.mrb[0].mxu0
      %v2208 = vadd.f32 0.0, %v2207
      %v2209 = vpop.f32.mrb[0].mxu0
      %2210 = vmatprep.mubr.f32.mxu0 0.0
      %2211 = vmatmul.mubr.f32.gmra.mrb[0].mxu0 %v2005
      %v2212 = vpop.f32.mrb[0].mxu0
      %v2213 = vadd.f32 0.0, %v2212
      %v2214 = vpop.f32.mrb[0].mxu0
      %2215 = vmatprep.mubr.f32.mxu0 0.0
      %2216 = vmatmul.mubr.f32.gmra.mrb[0].mxu0 %v2006
      %v2217 = vpop.f32.mrb[0].mxu0
      %v2218 = vadd.f32 0.0, %v2217
      %v2219 = vpop.f32.mrb[0].mxu0
      %2220 = vmatprep.mubr.f32.mxu0 0.0
      %2221 = vmatmul.mubr.f32.gmra.mrb[0].mxu0 %v2007
      %v2222 = vpop.f32.mrb[0].mxu0
      %v2223 = vadd.f32 0.0, %v2222
      %v2224 = vpop.f32.mrb[0].mxu0
      %2225 = vmatprep.mubr.f32.mxu0 0.0
      %2226 = vmatmul.mubr.f32.gmra.mrb[0].mxu0 %v2008
      %v2227 = vpop.f32.mrb[0].mxu0
      %v2228 = vadd.f32 0.0, %v2227
      %v2229 = vpop.f32.mrb[0].mxu0
      %2230 = vmatprep.mubr.f32.mxu0 0.0
      %2231 = vmatmul.mubr.f32.gmra.mrb[0].mxu0 %v2009
      %v2232 = vpop.f32.mrb[0].mxu0
      %v2233 = vadd.f32 0.0, %v2232
      %v2234 = vpop.f32.mrb[0].mxu0
      %2235 = vmatprep.mubr.f32.mxu0 0.0
      %2236 = vmatmul.mubr.f32.gmra.mrb[0].mxu0 %v2010
      %v2237 = vpop.f32.mrb[0].mxu0
      %v2238 = vadd.f32 0.0, %v2237
      %v2239 = vpop.f32.mrb[0].mxu0
      %2240 = vmatprep.mubr.f32.mxu0 0.0
      %2241 = vmatmul.mubr.f32.gmra.mrb[0].mxu0 %v2011
      %v2242 = vpop.f32.mrb[0].mxu0
      %v2243 = vadd.f32 0.0, %v2242
      %v2244 = vpop.f32.mrb[0].mxu0
      %2245 = vmatprep.mubr.f32.mxu0 0.0
      %2246 = vmatmul.mubr.f32.gmra.mrb[0].mxu0 %v2012
      %v2247 = vpop.f32.mrb[0].mxu0
      %v2248 = vadd.f32 0.0, %v2247
      %v2249 = vpop.f32.mrb[0].mxu0
      %2250 = vmatprep.mubr.f32.mxu0 0.0
      %2251 = vmatmul.mubr.f32.gmra.mrb[0].mxu0 %v2013
      %v2252 = vpop.f32.mrb[0].mxu0
      %v2253 = vadd.f32 0.0, %v2252
      %v2254 = vpop.f32.mrb[0].mxu0
      %2255 = vdwg.mxu0
      %v2256 = vadd.f32 %v1916, %v2098
      %v2257 = vadd.f32 %v1917, %v2103
      %v2258 = vadd.f32 %v1918, %v2108
      %v2259 = vadd.f32 %v1919, %v2113
      %v2260 = vadd.f32 %v1920, %v2118
      %v2261 = vadd.f32 %v1921, %v2123
      %v2262 = vadd.f32 %v1922, %v2128
      %v2263 = vadd.f32 %v1923, %v2133
      %v2264 = vadd.f32 %v1924, %v2138
      %v2265 = vadd.f32 %v1925, %v2143
      %v2266 = vadd.f32 %v1926, %v2148
      %v2267 = vadd.f32 %v1927, %v2153
      %v2268 = vadd.f32 %v1928, %v2158
      %v2269 = vadd.f32 %v1929, %v2163
      %v2270 = vadd.f32 %v1930, %v2168
      %v2271 = vadd.f32 %v1931, %v2173
      %v2272 = vadd.f32 %v1932, %v2178
      %v2273 = vadd.f32 %v1933, %v2183
      %v2274 = vadd.f32 %v1934, %v2188
      %v2275 = vadd.f32 %v1935, %v2193
      %v2276 = vadd.f32 %v1936, %v2198
      %v2277 = vadd.f32 %v1937, %v2203
      %v2278 = vadd.f32 %v1938, %v2208
      %v2279 = vadd.f32 %v1939, %v2213
      %v2280 = vadd.f32 %v1940, %v2218
      %v2281 = vadd.f32 %v1941, %v2223
      %v2282 = vadd.f32 %v1942, %v2228
      %v2283 = vadd.f32 %v1943, %v2233
      %v2284 = vadd.f32 %v1944, %v2238
      %v2285 = vadd.f32 %v1945, %v2243
      %v2286 = vadd.f32 %v1946, %v2248
      %v2287 = vadd.f32 %v1947, %v2253
      %s2288 = sadd.s32 0, 24
      %s2289 = scalar_lea.vmem [#allocation2], %s2288
      %v2290 = vld [vmem:[%s2289] sm:$0xff]
      %v2291 = vld [vmem:[%s2289 + $0x8] sm:$0xff]
      %v2292 = vld [vmem:[%s2289 + $0x10] sm:$0xff]
      %v2293 = vld [vmem:[%s2289 + $0x18] sm:$0xff]
      %v2294 = vld [vmem:[%s2289 + $0x20] sm:$0xff]
      %v2295 = vld [vmem:[%s2289 + $0x28] sm:$0xff]
      %v2296 = vld [vmem:[%s2289 + $0x30] sm:$0xff]
      %v2297 = vld [vmem:[%s2289 + $0x38] sm:$0xff]
      %v2298 = vld [vmem:[%s2289 + $0x40] sm:$0xff]
      %v2299 = vld [vmem:[%s2289 + $0x48] sm:$0xff]
      %v2300 = vld [vmem:[%s2289 + $0x50] sm:$0xff]
      %v2301 = vld [vmem:[%s2289 + $0x58] sm:$0xff]
      %v2302 = vld [vmem:[%s2289 + $0x60] sm:$0xff]
      %v2303 = vld [vmem:[%s2289 + $0x68] sm:$0xff]
      %v2304 = vld [vmem:[%s2289 + $0x70] sm:$0xff]
      %v2305 = vld [vmem:[%s2289 + $0x78] sm:$0xff]
      %v2306 = vld [vmem:[%s2289 + $0x80] sm:$0xff]
      %v2307 = vld [vmem:[%s2289 + $0x88] sm:$0xff]
      %v2308 = vld [vmem:[%s2289 + $0x90] sm:$0xff]
      %v2309 = vld [vmem:[%s2289 + $0x98] sm:$0xff]
      %v2310 = vld [vmem:[%s2289 + $0xa0] sm:$0xff]
      %v2311 = vld [vmem:[%s2289 + $0xa8] sm:$0xff]
      %v2312 = vld [vmem:[%s2289 + $0xb0] sm:$0xff]
      %v2313 = vld [vmem:[%s2289 + $0xb8] sm:$0xff]
      %v2314 = vld [vmem:[%s2289 + $0xc0] sm:$0xff]
      %v2315 = vld [vmem:[%s2289 + $0xc8] sm:$0xff]
      %v2316 = vld [vmem:[%s2289 + $0xd0] sm:$0xff]
      %v2317 = vld [vmem:[%s2289 + $0xd8] sm:$0xff]
      %v2318 = vld [vmem:[%s2289 + $0xe0] sm:$0xff]
      %v2319 = vld [vmem:[%s2289 + $0xe8] sm:$0xff]
      %v2320 = vld [vmem:[%s2289 + $0xf0] sm:$0xff]
      %v2321 = vld [vmem:[%s2289 + $0xf8] sm:$0xff]
      %s2322 = scalar_lea.vmem %s3, 512
      %v2323 = vld [vmem:[%s2322] sm:$0xff]
      %v2324 = vld [vmem:[%s2322 + $0x8] sm:$0xff]
      %v2325 = vld [vmem:[%s2322 + $0x10] sm:$0xff]
      %v2326 = vld [vmem:[%s2322 + $0x18] sm:$0xff]
      %v2327 = vld [vmem:[%s2322 + $0x20] sm:$0xff]
      %v2328 = vld [vmem:[%s2322 + $0x28] sm:$0xff]
      %v2329 = vld [vmem:[%s2322 + $0x30] sm:$0xff]
      %v2330 = vld [vmem:[%s2322 + $0x38] sm:$0xff]
      %v2331 = vld [vmem:[%s2322 + $0x40] sm:$0xff]
      %v2332 = vld [vmem:[%s2322 + $0x48] sm:$0xff]
      %v2333 = vld [vmem:[%s2322 + $0x50] sm:$0xff]
      %v2334 = vld [vmem:[%s2322 + $0x58] sm:$0xff]
      %v2335 = vld [vmem:[%s2322 + $0x60] sm:$0xff]
      %v2336 = vld [vmem:[%s2322 + $0x68] sm:$0xff]
      %v2337 = vld [vmem:[%s2322 + $0x70] sm:$0xff]
      %v2338 = vld [vmem:[%s2322 + $0x78] sm:$0xff]
      %2339 = vmatprep.subr.mxu0 0.0
      %2340 = vmatpush1.msra.mxu0 %v2323
      %2341 = vmatprep.subr.mxu0 0.0
      %2342 = vmatpush1.msra.mxu0 %v2324
      %2343 = vmatprep.subr.mxu0 0.0
      %2344 = vmatpush1.msra.mxu0 %v2325
      %2345 = vmatprep.subr.mxu0 0.0
      %2346 = vmatpush1.msra.mxu0 %v2326
      %2347 = vmatprep.subr.mxu0 0.0
      %2348 = vmatpush1.msra.mxu0 %v2327
      %2349 = vmatprep.subr.mxu0 0.0
      %2350 = vmatpush1.msra.mxu0 %v2328
      %2351 = vmatprep.subr.mxu0 0.0
      %2352 = vmatpush1.msra.mxu0 %v2329
      %2353 = vmatprep.subr.mxu0 0.0
      %2354 = vmatpush1.msra.mxu0 %v2330
      %2355 = vmatprep.subr.mxu0 0.0
      %2356 = vmatpush1.msra.mxu0 %v2331
      %2357 = vmatprep.subr.mxu0 0.0
      %2358 = vmatpush1.msra.mxu0 %v2332
      %2359 = vmatprep.subr.mxu0 0.0
      %2360 = vmatpush1.msra.mxu0 %v2333
      %2361 = vmatprep.subr.mxu0 0.0
      %2362 = vmatpush1.msra.mxu0 %v2334
      %2363 = vmatprep.subr.mxu0 0.0
      %2364 = vmatpush1.msra.mxu0 %v2335
      %2365 = vmatprep.subr.mxu0 0.0
      %2366 = vmatpush1.msra.mxu0 %v2336
      %2367 = vmatprep.subr.mxu0 0.0
      %2368 = vmatpush1.msra.mxu0 %v2337
      %2369 = vmatprep.subr.mxu0 0.0
      %2370 = vmatpush1.msra.mxu0 %v2338
      %2371 = vmatprep.subr.mxu0 0.0
      %2372 = vmatpush1.msra.mxu0 0.0
      %2373 = vmatprep.subr.mxu0 0.0
      %2374 = vmatpush1.msra.mxu0 0.0
      %2375 = vmatprep.subr.mxu0 0.0
      %2376 = vmatpush1.msra.mxu0 0.0
      %2377 = vmatprep.subr.mxu0 0.0
      %2378 = vmatpush1.msra.mxu0 0.0
      %2379 = vmatprep.subr.mxu0 0.0
      %2380 = vmatpush1.msra.mxu0 0.0
      %2381 = vmatprep.subr.mxu0 0.0
      %2382 = vmatpush1.msra.mxu0 0.0
      %2383 = vmatprep.subr.mxu0 0.0
      %2384 = vmatpush1.msra.mxu0 0.0
      %2385 = vmatprep.subr.mxu0 0.0
      %2386 = vmatpush1.msra.mxu0 0.0
      %2387 = vmatprep.subr.mxu0 0.0
      %2388 = vmatpush1.msra.mxu0 0.0
      %2389 = vmatprep.subr.mxu0 0.0
      %2390 = vmatpush1.msra.mxu0 0.0
      %2391 = vmatprep.subr.mxu0 0.0
      %2392 = vmatpush1.msra.mxu0 0.0
      %2393 = vmatprep.subr.mxu0 0.0
      %2394 = vmatpush1.msra.mxu0 0.0
      %2395 = vmatprep.subr.mxu0 0.0
      %2396 = vmatpush1.msra.mxu0 0.0
      %2397 = vmatprep.subr.mxu0 0.0
      %2398 = vmatpush1.msra.mxu0 0.0
      %2399 = vmatprep.subr.mxu0 0.0
      %2400 = vmatpush1.msra.mxu0 0.0
      %2401 = vmatprep.subr.mxu0 0.0
      %2402 = vmatpush1.msra.mxu0 0.0
      %2403 = vmatprep.mubr.f32.mxu0 0.0
      %2404 = vmatmul.mubr.f32.gmra.mrb[0].mxu0 %v2290
      %v2405 = vpop.f32.mrb[0].mxu0
      %v2406 = vadd.f32 0.0, %v2405
      %v2407 = vpop.f32.mrb[0].mxu0
      %2408 = vmatprep.mubr.f32.mxu0 0.0
      %2409 = vmatmul.mubr.f32.gmra.mrb[0].mxu0 %v2291
      %v2410 = vpop.f32.mrb[0].mxu0
      %v2411 = vadd.f32 0.0, %v2410
      %v2412 = vpop.f32.mrb[0].mxu0
      %2413 = vmatprep.mubr.f32.mxu0 0.0
      %2414 = vmatmul.mubr.f32.gmra.mrb[0].mxu0 %v2292
      %v2415 = vpop.f32.mrb[0].mxu0
      %v2416 = vadd.f32 0.0, %v2415
      %v2417 = vpop.f32.mrb[0].mxu0
      %2418 = vmatprep.mubr.f32.mxu0 0.0
      %2419 = vmatmul.mubr.f32.gmra.mrb[0].mxu0 %v2293
      %v2420 = vpop.f32.mrb[0].mxu0
      %v2421 = vadd.f32 0.0, %v2420
      %v2422 = vpop.f32.mrb[0].mxu0
      %2423 = vmatprep.mubr.f32.mxu0 0.0
      %2424 = vmatmul.mubr.f32.gmra.mrb[0].mxu0 %v2294
      %v2425 = vpop.f32.mrb[0].mxu0
      %v2426 = vadd.f32 0.0, %v2425
      %v2427 = vpop.f32.mrb[0].mxu0
      %2428 = vmatprep.mubr.f32.mxu0 0.0
      %2429 = vmatmul.mubr.f32.gmra.mrb[0].mxu0 %v2295
      %v2430 = vpop.f32.mrb[0].mxu0
      %v2431 = vadd.f32 0.0, %v2430
      %v2432 = vpop.f32.mrb[0].mxu0
      %2433 = vmatprep.mubr.f32.mxu0 0.0
      %2434 = vmatmul.mubr.f32.gmra.mrb[0].mxu0 %v2296
      %v2435 = vpop.f32.mrb[0].mxu0
      %v2436 = vadd.f32 0.0, %v2435
      %v2437 = vpop.f32.mrb[0].mxu0
      %2438 = vmatprep.mubr.f32.mxu0 0.0
      %2439 = vmatmul.mubr.f32.gmra.mrb[0].mxu0 %v2297
      %v2440 = vpop.f32.mrb[0].mxu0
      %v2441 = vadd.f32 0.0, %v2440
      %v2442 = vpop.f32.mrb[0].mxu0
      %2443 = vmatprep.mubr.f32.mxu0 0.0
      %2444 = vmatmul.mubr.f32.gmra.mrb[0].mxu0 %v2298
      %v2445 = vpop.f32.mrb[0].mxu0
      %v2446 = vadd.f32 0.0, %v2445
      %v2447 = vpop.f32.mrb[0].mxu0
      %2448 = vmatprep.mubr.f32.mxu0 0.0
      %2449 = vmatmul.mubr.f32.gmra.mrb[0].mxu0 %v2299
      %v2450 = vpop.f32.mrb[0].mxu0
      %v2451 = vadd.f32 0.0, %v2450
      %v2452 = vpop.f32.mrb[0].mxu0
      %2453 = vmatprep.mubr.f32.mxu0 0.0
      %2454 = vmatmul.mubr.f32.gmra.mrb[0].mxu0 %v2300
      %v2455 = vpop.f32.mrb[0].mxu0
      %v2456 = vadd.f32 0.0, %v2455
      %v2457 = vpop.f32.mrb[0].mxu0
      %2458 = vmatprep.mubr.f32.mxu0 0.0
      %2459 = vmatmul.mubr.f32.gmra.mrb[0].mxu0 %v2301
      %v2460 = vpop.f32.mrb[0].mxu0
      %v2461 = vadd.f32 0.0, %v2460
      %v2462 = vpop.f32.mrb[0].mxu0
      %2463 = vmatprep.mubr.f32.mxu0 0.0
      %2464 = vmatmul.mubr.f32.gmra.mrb[0].mxu0 %v2302
      %v2465 = vpop.f32.mrb[0].mxu0
      %v2466 = vadd.f32 0.0, %v2465
      %v2467 = vpop.f32.mrb[0].mxu0
      %2468 = vmatprep.mubr.f32.mxu0 0.0
      %2469 = vmatmul.mubr.f32.gmra.mrb[0].mxu0 %v2303
      %v2470 = vpop.f32.mrb[0].mxu0
      %v2471 = vadd.f32 0.0, %v2470
      %v2472 = vpop.f32.mrb[0].mxu0
      %2473 = vmatprep.mubr.f32.mxu0 0.0
      %2474 = vmatmul.mubr.f32.gmra.mrb[0].mxu0 %v2304
      %v2475 = vpop.f32.mrb[0].mxu0
      %v2476 = vadd.f32 0.0, %v2475
      %v2477 = vpop.f32.mrb[0].mxu0
      %2478 = vmatprep.mubr.f32.mxu0 0.0
      %2479 = vmatmul.mubr.f32.gmra.mrb[0].mxu0 %v2305
      %v2480 = vpop.f32.mrb[0].mxu0
      %v2481 = vadd.f32 0.0, %v2480
      %v2482 = vpop.f32.mrb[0].mxu0
      %2483 = vmatprep.mubr.f32.mxu0 0.0
      %2484 = vmatmul.mubr.f32.gmra.mrb[0].mxu0 %v2306
      %v2485 = vpop.f32.mrb[0].mxu0
      %v2486 = vadd.f32 0.0, %v2485
      %v2487 = vpop.f32.mrb[0].mxu0
      %2488 = vmatprep.mubr.f32.mxu0 0.0
      %2489 = vmatmul.mubr.f32.gmra.mrb[0].mxu0 %v2307
      %v2490 = vpop.f32.mrb[0].mxu0
      %v2491 = vadd.f32 0.0, %v2490
      %v2492 = vpop.f32.mrb[0].mxu0
      %2493 = vmatprep.mubr.f32.mxu0 0.0
      %2494 = vmatmul.mubr.f32.gmra.mrb[0].mxu0 %v2308
      %v2495 = vpop.f32.mrb[0].mxu0
      %v2496 = vadd.f32 0.0, %v2495
      %v2497 = vpop.f32.mrb[0].mxu0
      %2498 = vmatprep.mubr.f32.mxu0 0.0
      %2499 = vmatmul.mubr.f32.gmra.mrb[0].mxu0 %v2309
      %v2500 = vpop.f32.mrb[0].mxu0
      %v2501 = vadd.f32 0.0, %v2500
      %v2502 = vpop.f32.mrb[0].mxu0
      %2503 = vmatprep.mubr.f32.mxu0 0.0
      %2504 = vmatmul.mubr.f32.gmra.mrb[0].mxu0 %v2310
      %v2505 = vpop.f32.mrb[0].mxu0
      %v2506 = vadd.f32 0.0, %v2505
      %v2507 = vpop.f32.mrb[0].mxu0
      %2508 = vmatprep.mubr.f32.mxu0 0.0
      %2509 = vmatmul.mubr.f32.gmra.mrb[0].mxu0 %v2311
      %v2510 = vpop.f32.mrb[0].mxu0
      %v2511 = vadd.f32 0.0, %v2510
      %v2512 = vpop.f32.mrb[0].mxu0
      %2513 = vmatprep.mubr.f32.mxu0 0.0
      %2514 = vmatmul.mubr.f32.gmra.mrb[0].mxu0 %v2312
      %v2515 = vpop.f32.mrb[0].mxu0
      %v2516 = vadd.f32 0.0, %v2515
      %v2517 = vpop.f32.mrb[0].mxu0
      %2518 = vmatprep.mubr.f32.mxu0 0.0
      %2519 = vmatmul.mubr.f32.gmra.mrb[0].mxu0 %v2313
      %v2520 = vpop.f32.mrb[0].mxu0
      %v2521 = vadd.f32 0.0, %v2520
      %v2522 = vpop.f32.mrb[0].mxu0
      %2523 = vmatprep.mubr.f32.mxu0 0.0
      %2524 = vmatmul.mubr.f32.gmra.mrb[0].mxu0 %v2314
      %v2525 = vpop.f32.mrb[0].mxu0
      %v2526 = vadd.f32 0.0, %v2525
      %v2527 = vpop.f32.mrb[0].mxu0
      %2528 = vmatprep.mubr.f32.mxu0 0.0
      %2529 = vmatmul.mubr.f32.gmra.mrb[0].mxu0 %v2315
      %v2530 = vpop.f32.mrb[0].mxu0
      %v2531 = vadd.f32 0.0, %v2530
      %v2532 = vpop.f32.mrb[0].mxu0
      %2533 = vmatprep.mubr.f32.mxu0 0.0
      %2534 = vmatmul.mubr.f32.gmra.mrb[0].mxu0 %v2316
      %v2535 = vpop.f32.mrb[0].mxu0
      %v2536 = vadd.f32 0.0, %v2535
      %v2537 = vpop.f32.mrb[0].mxu0
      %2538 = vmatprep.mubr.f32.mxu0 0.0
      %2539 = vmatmul.mubr.f32.gmra.mrb[0].mxu0 %v2317
      %v2540 = vpop.f32.mrb[0].mxu0
      %v2541 = vadd.f32 0.0, %v2540
      %v2542 = vpop.f32.mrb[0].mxu0
      %2543 = vmatprep.mubr.f32.mxu0 0.0
      %2544 = vmatmul.mubr.f32.gmra.mrb[0].mxu0 %v2318
      %v2545 = vpop.f32.mrb[0].mxu0
      %v2546 = vadd.f32 0.0, %v2545
      %v2547 = vpop.f32.mrb[0].mxu0
      %2548 = vmatprep.mubr.f32.mxu0 0.0
      %2549 = vmatmul.mubr.f32.gmra.mrb[0].mxu0 %v2319
      %v2550 = vpop.f32.mrb[0].mxu0
      %v2551 = vadd.f32 0.0, %v2550
      %v2552 = vpop.f32.mrb[0].mxu0
      %2553 = vmatprep.mubr.f32.mxu0 0.0
      %2554 = vmatmul.mubr.f32.gmra.mrb[0].mxu0 %v2320
      %v2555 = vpop.f32.mrb[0].mxu0
      %v2556 = vadd.f32 0.0, %v2555
      %v2557 = vpop.f32.mrb[0].mxu0
      %2558 = vmatprep.mubr.f32.mxu0 0.0
      %2559 = vmatmul.mubr.f32.gmra.mrb[0].mxu0 %v2321
      %v2560 = vpop.f32.mrb[0].mxu0
      %v2561 = vadd.f32 0.0, %v2560
      %v2562 = vpop.f32.mrb[0].mxu0
      %2563 = vdwg.mxu0
      %v2564 = vadd.f32 %v2256, %v2406
      %v2565 = vadd.f32 %v2257, %v2411
      %v2566 = vadd.f32 %v2258, %v2416
      %v2567 = vadd.f32 %v2259, %v2421
      %v2568 = vadd.f32 %v2260, %v2426
      %v2569 = vadd.f32 %v2261, %v2431
      %v2570 = vadd.f32 %v2262, %v2436
      %v2571 = vadd.f32 %v2263, %v2441
      %v2572 = vadd.f32 %v2264, %v2446
      %v2573 = vadd.f32 %v2265, %v2451
      %v2574 = vadd.f32 %v2266, %v2456
      %v2575 = vadd.f32 %v2267, %v2461
      %v2576 = vadd.f32 %v2268, %v2466
      %v2577 = vadd.f32 %v2269, %v2471
      %v2578 = vadd.f32 %v2270, %v2476
      %v2579 = vadd.f32 %v2271, %v2481
      %v2580 = vadd.f32 %v2272, %v2486
      %v2581 = vadd.f32 %v2273, %v2491
      %v2582 = vadd.f32 %v2274, %v2496
      %v2583 = vadd.f32 %v2275, %v2501
      %v2584 = vadd.f32 %v2276, %v2506
      %v2585 = vadd.f32 %v2277, %v2511
      %v2586 = vadd.f32 %v2278, %v2516
      %v2587 = vadd.f32 %v2279, %v2521
      %v2588 = vadd.f32 %v2280, %v2526
      %v2589 = vadd.f32 %v2281, %v2531
      %v2590 = vadd.f32 %v2282, %v2536
      %v2591 = vadd.f32 %v2283, %v2541
      %v2592 = vadd.f32 %v2284, %v2546
      %v2593 = vadd.f32 %v2285, %v2551
      %v2594 = vadd.f32 %v2286, %v2556
      %v2595 = vadd.f32 %v2287, %v2561
      %s2596 = sadd.s32 0, 25
      %s2597 = scalar_lea.vmem [#allocation2], %s2596
      %v2598 = vld [vmem:[%s2597] sm:$0xff]
      %v2599 = vld [vmem:[%s2597 + $0x8] sm:$0xff]
      %v2600 = vld [vmem:[%s2597 + $0x10] sm:$0xff]
      %v2601 = vld [vmem:[%s2597 + $0x18] sm:$0xff]
      %v2602 = vld [vmem:[%s2597 + $0x20] sm:$0xff]
      %v2603 = vld [vmem:[%s2597 + $0x28] sm:$0xff]
      %v2604 = vld [vmem:[%s2597 + $0x30] sm:$0xff]
      %v2605 = vld [vmem:[%s2597 + $0x38] sm:$0xff]
      %v2606 = vld [vmem:[%s2597 + $0x40] sm:$0xff]
      %v2607 = vld [vmem:[%s2597 + $0x48] sm:$0xff]
      %v2608 = vld [vmem:[%s2597 + $0x50] sm:$0xff]
      %v2609 = vld [vmem:[%s2597 + $0x58] sm:$0xff]
      %v2610 = vld [vmem:[%s2597 + $0x60] sm:$0xff]
      %v2611 = vld [vmem:[%s2597 + $0x68] sm:$0xff]
      %v2612 = vld [vmem:[%s2597 + $0x70] sm:$0xff]
      %v2613 = vld [vmem:[%s2597 + $0x78] sm:$0xff]
      %v2614 = vld [vmem:[%s2597 + $0x80] sm:$0xff]
      %v2615 = vld [vmem:[%s2597 + $0x88] sm:$0xff]
      %v2616 = vld [vmem:[%s2597 + $0x90] sm:$0xff]
      %v2617 = vld [vmem:[%s2597 + $0x98] sm:$0xff]
      %v2618 = vld [vmem:[%s2597 + $0xa0] sm:$0xff]
      %v2619 = vld [vmem:[%s2597 + $0xa8] sm:$0xff]
      %v2620 = vld [vmem:[%s2597 + $0xb0] sm:$0xff]
      %v2621 = vld [vmem:[%s2597 + $0xb8] sm:$0xff]
      %v2622 = vld [vmem:[%s2597 + $0xc0] sm:$0xff]
      %v2623 = vld [vmem:[%s2597 + $0xc8] sm:$0xff]
      %v2624 = vld [vmem:[%s2597 + $0xd0] sm:$0xff]
      %v2625 = vld [vmem:[%s2597 + $0xd8] sm:$0xff]
      %v2626 = vld [vmem:[%s2597 + $0xe0] sm:$0xff]
      %v2627 = vld [vmem:[%s2597 + $0xe8] sm:$0xff]
      %v2628 = vld [vmem:[%s2597 + $0xf0] sm:$0xff]
      %v2629 = vld [vmem:[%s2597 + $0xf8] sm:$0xff]
      %v2630 = vmul.f32 %v2598, %v993
      %v2631 = vmul.f32 %v2599, %v994
      %v2632 = vmul.f32 %v2600, %v995
      %v2633 = vmul.f32 %v2601, %v996
      %v2634 = vmul.f32 %v2602, %v997
      %v2635 = vmul.f32 %v2603, %v998
      %v2636 = vmul.f32 %v2604, %v999
      %v2637 = vmul.f32 %v2605, %v1000
      %v2638 = vmul.f32 %v2606, %v1001
      %v2639 = vmul.f32 %v2607, %v1002
      %v2640 = vmul.f32 %v2608, %v1003
      %v2641 = vmul.f32 %v2609, %v1004
      %v2642 = vmul.f32 %v2610, %v1005
      %v2643 = vmul.f32 %v2611, %v1006
      %v2644 = vmul.f32 %v2612, %v1007
      %v2645 = vmul.f32 %v2613, %v1008
      %v2646 = vmul.f32 %v2614, %v1009
      %v2647 = vmul.f32 %v2615, %v1010
      %v2648 = vmul.f32 %v2616, %v1011
      %v2649 = vmul.f32 %v2617, %v1012
      %v2650 = vmul.f32 %v2618, %v1013
      %v2651 = vmul.f32 %v2619, %v1014
      %v2652 = vmul.f32 %v2620, %v1015
      %v2653 = vmul.f32 %v2621, %v1016
      %v2654 = vmul.f32 %v2622, %v1017
      %v2655 = vmul.f32 %v2623, %v1018
      %v2656 = vmul.f32 %v2624, %v1019
      %v2657 = vmul.f32 %v2625, %v1020
      %v2658 = vmul.f32 %v2626, %v1021
      %v2659 = vmul.f32 %v2627, %v1022
      %v2660 = vmul.f32 %v2628, %v1023
      %v2661 = vmul.f32 %v2629, %v1024
      %s2662 = scalar_lea.vmem %s3, 640
      %v2663 = vld [vmem:[%s2662] sm:$0xff]
      %v2664 = vld [vmem:[%s2662 + $0x8] sm:$0xff]
      %v2665 = vld [vmem:[%s2662 + $0x10] sm:$0xff]
      %v2666 = vld [vmem:[%s2662 + $0x18] sm:$0xff]
      %v2667 = vld [vmem:[%s2662 + $0x20] sm:$0xff]
      %v2668 = vld [vmem:[%s2662 + $0x28] sm:$0xff]
      %v2669 = vld [vmem:[%s2662 + $0x30] sm:$0xff]
      %v2670 = vld [vmem:[%s2662 + $0x38] sm:$0xff]
      %v2671 = vld [vmem:[%s2662 + $0x40] sm:$0xff]
      %v2672 = vld [vmem:[%s2662 + $0x48] sm:$0xff]
      %v2673 = vld [vmem:[%s2662 + $0x50] sm:$0xff]
      %v2674 = vld [vmem:[%s2662 + $0x58] sm:$0xff]
      %v2675 = vld [vmem:[%s2662 + $0x60] sm:$0xff]
      %v2676 = vld [vmem:[%s2662 + $0x68] sm:$0xff]
      %v2677 = vld [vmem:[%s2662 + $0x70] sm:$0xff]
      %v2678 = vld [vmem:[%s2662 + $0x78] sm:$0xff]
      %2679 = vmatprep.subr.mxu0 0.0
      %2680 = vmatpush1.msra.mxu0 %v2663
      %2681 = vmatprep.subr.mxu0 0.0
      %2682 = vmatpush1.msra.mxu0 %v2664
      %2683 = vmatprep.subr.mxu0 0.0
      %2684 = vmatpush1.msra.mxu0 %v2665
      %2685 = vmatprep.subr.mxu0 0.0
      %2686 = vmatpush1.msra.mxu0 %v2666
      %2687 = vmatprep.subr.mxu0 0.0
      %2688 = vmatpush1.msra.mxu0 %v2667
      %2689 = vmatprep.subr.mxu0 0.0
      %2690 = vmatpush1.msra.mxu0 %v2668
      %2691 = vmatprep.subr.mxu0 0.0
      %2692 = vmatpush1.msra.mxu0 %v2669
      %2693 = vmatprep.subr.mxu0 0.0
      %2694 = vmatpush1.msra.mxu0 %v2670
      %2695 = vmatprep.subr.mxu0 0.0
      %2696 = vmatpush1.msra.mxu0 %v2671
      %2697 = vmatprep.subr.mxu0 0.0
      %2698 = vmatpush1.msra.mxu0 %v2672
      %2699 = vmatprep.subr.mxu0 0.0
      %2700 = vmatpush1.msra.mxu0 %v2673
      %2701 = vmatprep.subr.mxu0 0.0
      %2702 = vmatpush1.msra.mxu0 %v2674
      %2703 = vmatprep.subr.mxu0 0.0
      %2704 = vmatpush1.msra.mxu0 %v2675
      %2705 = vmatprep.subr.mxu0 0.0
      %2706 = vmatpush1.msra.mxu0 %v2676
      %2707 = vmatprep.subr.mxu0 0.0
      %2708 = vmatpush1.msra.mxu0 %v2677
      %2709 = vmatprep.subr.mxu0 0.0
      %2710 = vmatpush1.msra.mxu0 %v2678
      %2711 = vmatprep.subr.mxu0 0.0
      %2712 = vmatpush1.msra.mxu0 0.0
      %2713 = vmatprep.subr.mxu0 0.0
      %2714 = vmatpush1.msra.mxu0 0.0
      %2715 = vmatprep.subr.mxu0 0.0
      %2716 = vmatpush1.msra.mxu0 0.0
      %2717 = vmatprep.subr.mxu0 0.0
      %2718 = vmatpush1.msra.mxu0 0.0
      %2719 = vmatprep.subr.mxu0 0.0
      %2720 = vmatpush1.msra.mxu0 0.0
      %2721 = vmatprep.subr.mxu0 0.0
      %2722 = vmatpush1.msra.mxu0 0.0
      %2723 = vmatprep.subr.mxu0 0.0
      %2724 = vmatpush1.msra.mxu0 0.0
      %2725 = vmatprep.subr.mxu0 0.0
      %2726 = vmatpush1.msra.mxu0 0.0
      %2727 = vmatprep.subr.mxu0 0.0
      %2728 = vmatpush1.msra.mxu0 0.0
      %2729 = vmatprep.subr.mxu0 0.0
      %2730 = vmatpush1.msra.mxu0 0.0
      %2731 = vmatprep.subr.mxu0 0.0
      %2732 = vmatpush1.msra.mxu0 0.0
      %2733 = vmatprep.subr.mxu0 0.0
      %2734 = vmatpush1.msra.mxu0 0.0
      %2735 = vmatprep.subr.mxu0 0.0
      %2736 = vmatpush1.msra.mxu0 0.0
      %2737 = vmatprep.subr.mxu0 0.0
      %2738 = vmatpush1.msra.mxu0 0.0
      %2739 = vmatprep.subr.mxu0 0.0
      %2740 = vmatpush1.msra.mxu0 0.0
      %2741 = vmatprep.subr.mxu0 0.0
      %2742 = vmatpush1.msra.mxu0 0.0
      %2743 = vmatprep.mubr.f32.mxu0 0.0
      %2744 = vmatmul.mubr.f32.gmra.mrb[0].mxu0 %v2630
      %v2745 = vpop.f32.mrb[0].mxu0
      %v2746 = vadd.f32 0.0, %v2745
      %v2747 = vpop.f32.mrb[0].mxu0
      %2748 = vmatprep.mubr.f32.mxu0 0.0
      %2749 = vmatmul.mubr.f32.gmra.mrb[0].mxu0 %v2631
      %v2750 = vpop.f32.mrb[0].mxu0
      %v2751 = vadd.f32 0.0, %v2750
      %v2752 = vpop.f32.mrb[0].mxu0
      %2753 = vmatprep.mubr.f32.mxu0 0.0
      %2754 = vmatmul.mubr.f32.gmra.mrb[0].mxu0 %v2632
      %v2755 = vpop.f32.mrb[0].mxu0
      %v2756 = vadd.f32 0.0, %v2755
      %v2757 = vpop.f32.mrb[0].mxu0
      %2758 = vmatprep.mubr.f32.mxu0 0.0
      %2759 = vmatmul.mubr.f32.gmra.mrb[0].mxu0 %v2633
      %v2760 = vpop.f32.mrb[0].mxu0
      %v2761 = vadd.f32 0.0, %v2760
      %v2762 = vpop.f32.mrb[0].mxu0
      %2763 = vmatprep.mubr.f32.mxu0 0.0
      %2764 = vmatmul.mubr.f32.gmra.mrb[0].mxu0 %v2634
      %v2765 = vpop.f32.mrb[0].mxu0
      %v2766 = vadd.f32 0.0, %v2765
      %v2767 = vpop.f32.mrb[0].mxu0
      %2768 = vmatprep.mubr.f32.mxu0 0.0
      %2769 = vmatmul.mubr.f32.gmra.mrb[0].mxu0 %v2635
      %v2770 = vpop.f32.mrb[0].mxu0
      %v2771 = vadd.f32 0.0, %v2770
      %v2772 = vpop.f32.mrb[0].mxu0
      %2773 = vmatprep.mubr.f32.mxu0 0.0
      %2774 = vmatmul.mubr.f32.gmra.mrb[0].mxu0 %v2636
      %v2775 = vpop.f32.mrb[0].mxu0
      %v2776 = vadd.f32 0.0, %v2775
      %v2777 = vpop.f32.mrb[0].mxu0
      %2778 = vmatprep.mubr.f32.mxu0 0.0
      %2779 = vmatmul.mubr.f32.gmra.mrb[0].mxu0 %v2637
      %v2780 = vpop.f32.mrb[0].mxu0
      %v2781 = vadd.f32 0.0, %v2780
      %v2782 = vpop.f32.mrb[0].mxu0
      %2783 = vmatprep.mubr.f32.mxu0 0.0
      %2784 = vmatmul.mubr.f32.gmra.mrb[0].mxu0 %v2638
      %v2785 = vpop.f32.mrb[0].mxu0
      %v2786 = vadd.f32 0.0, %v2785
      %v2787 = vpop.f32.mrb[0].mxu0
      %2788 = vmatprep.mubr.f32.mxu0 0.0
      %2789 = vmatmul.mubr.f32.gmra.mrb[0].mxu0 %v2639
      %v2790 = vpop.f32.mrb[0].mxu0
      %v2791 = vadd.f32 0.0, %v2790
      %v2792 = vpop.f32.mrb[0].mxu0
      %2793 = vmatprep.mubr.f32.mxu0 0.0
      %2794 = vmatmul.mubr.f32.gmra.mrb[0].mxu0 %v2640
      %v2795 = vpop.f32.mrb[0].mxu0
      %v2796 = vadd.f32 0.0, %v2795
      %v2797 = vpop.f32.mrb[0].mxu0
      %2798 = vmatprep.mubr.f32.mxu0 0.0
      %2799 = vmatmul.mubr.f32.gmra.mrb[0].mxu0 %v2641
      %v2800 = vpop.f32.mrb[0].mxu0
      %v2801 = vadd.f32 0.0, %v2800
      %v2802 = vpop.f32.mrb[0].mxu0
      %2803 = vmatprep.mubr.f32.mxu0 0.0
      %2804 = vmatmul.mubr.f32.gmra.mrb[0].mxu0 %v2642
      %v2805 = vpop.f32.mrb[0].mxu0
      %v2806 = vadd.f32 0.0, %v2805
      %v2807 = vpop.f32.mrb[0].mxu0
      %2808 = vmatprep.mubr.f32.mxu0 0.0
      %2809 = vmatmul.mubr.f32.gmra.mrb[0].mxu0 %v2643
      %v2810 = vpop.f32.mrb[0].mxu0
      %v2811 = vadd.f32 0.0, %v2810
      %v2812 = vpop.f32.mrb[0].mxu0
      %2813 = vmatprep.mubr.f32.mxu0 0.0
      %2814 = vmatmul.mubr.f32.gmra.mrb[0].mxu0 %v2644
      %v2815 = vpop.f32.mrb[0].mxu0
      %v2816 = vadd.f32 0.0, %v2815
      %v2817 = vpop.f32.mrb[0].mxu0
      %2818 = vmatprep.mubr.f32.mxu0 0.0
      %2819 = vmatmul.mubr.f32.gmra.mrb[0].mxu0 %v2645
      %v2820 = vpop.f32.mrb[0].mxu0
      %v2821 = vadd.f32 0.0, %v2820
      %v2822 = vpop.f32.mrb[0].mxu0
      %2823 = vmatprep.mubr.f32.mxu0 0.0
      %2824 = vmatmul.mubr.f32.gmra.mrb[0].mxu0 %v2646
      %v2825 = vpop.f32.mrb[0].mxu0
      %v2826 = vadd.f32 0.0, %v2825
      %v2827 = vpop.f32.mrb[0].mxu0
      %2828 = vmatprep.mubr.f32.mxu0 0.0
      %2829 = vmatmul.mubr.f32.gmra.mrb[0].mxu0 %v2647
      %v2830 = vpop.f32.mrb[0].mxu0
      %v2831 = vadd.f32 0.0, %v2830
      %v2832 = vpop.f32.mrb[0].mxu0
      %2833 = vmatprep.mubr.f32.mxu0 0.0
      %2834 = vmatmul.mubr.f32.gmra.mrb[0].mxu0 %v2648
      %v2835 = vpop.f32.mrb[0].mxu0
      %v2836 = vadd.f32 0.0, %v2835
      %v2837 = vpop.f32.mrb[0].mxu0
      %2838 = vmatprep.mubr.f32.mxu0 0.0
      %2839 = vmatmul.mubr.f32.gmra.mrb[0].mxu0 %v2649
      %v2840 = vpop.f32.mrb[0].mxu0
      %v2841 = vadd.f32 0.0, %v2840
      %v2842 = vpop.f32.mrb[0].mxu0
      %2843 = vmatprep.mubr.f32.mxu0 0.0
      %2844 = vmatmul.mubr.f32.gmra.mrb[0].mxu0 %v2650
      %v2845 = vpop.f32.mrb[0].mxu0
      %v2846 = vadd.f32 0.0, %v2845
      %v2847 = vpop.f32.mrb[0].mxu0
      %2848 = vmatprep.mubr.f32.mxu0 0.0
      %2849 = vmatmul.mubr.f32.gmra.mrb[0].mxu0 %v2651
      %v2850 = vpop.f32.mrb[0].mxu0
      %v2851 = vadd.f32 0.0, %v2850
      %v2852 = vpop.f32.mrb[0].mxu0
      %2853 = vmatprep.mubr.f32.mxu0 0.0
      %2854 = vmatmul.mubr.f32.gmra.mrb[0].mxu0 %v2652
      %v2855 = vpop.f32.mrb[0].mxu0
      %v2856 = vadd.f32 0.0, %v2855
      %v2857 = vpop.f32.mrb[0].mxu0
      %2858 = vmatprep.mubr.f32.mxu0 0.0
      %2859 = vmatmul.mubr.f32.gmra.mrb[0].mxu0 %v2653
      %v2860 = vpop.f32.mrb[0].mxu0
      %v2861 = vadd.f32 0.0, %v2860
      %v2862 = vpop.f32.mrb[0].mxu0
      %2863 = vmatprep.mubr.f32.mxu0 0.0
      %2864 = vmatmul.mubr.f32.gmra.mrb[0].mxu0 %v2654
      %v2865 = vpop.f32.mrb[0].mxu0
      %v2866 = vadd.f32 0.0, %v2865
      %v2867 = vpop.f32.mrb[0].mxu0
      %2868 = vmatprep.mubr.f32.mxu0 0.0
      %2869 = vmatmul.mubr.f32.gmra.mrb[0].mxu0 %v2655
      %v2870 = vpop.f32.mrb[0].mxu0
      %v2871 = vadd.f32 0.0, %v2870
      %v2872 = vpop.f32.mrb[0].mxu0
      %2873 = vmatprep.mubr.f32.mxu0 0.0
      %2874 = vmatmul.mubr.f32.gmra.mrb[0].mxu0 %v2656
      %v2875 = vpop.f32.mrb[0].mxu0
      %v2876 = vadd.f32 0.0, %v2875
      %v2877 = vpop.f32.mrb[0].mxu0
      %2878 = vmatprep.mubr.f32.mxu0 0.0
      %2879 = vmatmul.mubr.f32.gmra.mrb[0].mxu0 %v2657
      %v2880 = vpop.f32.mrb[0].mxu0
      %v2881 = vadd.f32 0.0, %v2880
      %v2882 = vpop.f32.mrb[0].mxu0
      %2883 = vmatprep.mubr.f32.mxu0 0.0
      %2884 = vmatmul.mubr.f32.gmra.mrb[0].mxu0 %v2658
      %v2885 = vpop.f32.mrb[0].mxu0
      %v2886 = vadd.f32 0.0, %v2885
      %v2887 = vpop.f32.mrb[0].mxu0
      %2888 = vmatprep.mubr.f32.mxu0 0.0
      %2889 = vmatmul.mubr.f32.gmra.mrb[0].mxu0 %v2659
      %v2890 = vpop.f32.mrb[0].mxu0
      %v2891 = vadd.f32 0.0, %v2890
      %v2892 = vpop.f32.mrb[0].mxu0
      %2893 = vmatprep.mubr.f32.mxu0 0.0
      %2894 = vmatmul.mubr.f32.gmra.mrb[0].mxu0 %v2660
      %v2895 = vpop.f32.mrb[0].mxu0
      %v2896 = vadd.f32 0.0, %v2895
      %v2897 = vpop.f32.mrb[0].mxu0
      %2898 = vmatprep.mubr.f32.mxu0 0.0
      %2899 = vmatmul.mubr.f32.gmra.mrb[0].mxu0 %v2661
      %v2900 = vpop.f32.mrb[0].mxu0
      %v2901 = vadd.f32 0.0, %v2900
      %v2902 = vpop.f32.mrb[0].mxu0
      %2903 = vdwg.mxu0
      %v2904 = vadd.f32 %v2564, %v2746
      %v2905 = vadd.f32 %v2565, %v2751
      %v2906 = vadd.f32 %v2566, %v2756
      %v2907 = vadd.f32 %v2567, %v2761
      %v2908 = vadd.f32 %v2568, %v2766
      %v2909 = vadd.f32 %v2569, %v2771
      %v2910 = vadd.f32 %v2570, %v2776
      %v2911 = vadd.f32 %v2571, %v2781
      %v2912 = vadd.f32 %v2572, %v2786
      %v2913 = vadd.f32 %v2573, %v2791
      %v2914 = vadd.f32 %v2574, %v2796
      %v2915 = vadd.f32 %v2575, %v2801
      %v2916 = vadd.f32 %v2576, %v2806
      %v2917 = vadd.f32 %v2577, %v2811
      %v2918 = vadd.f32 %v2578, %v2816
      %v2919 = vadd.f32 %v2579, %v2821
      %v2920 = vadd.f32 %v2580, %v2826
      %v2921 = vadd.f32 %v2581, %v2831
      %v2922 = vadd.f32 %v2582, %v2836
      %v2923 = vadd.f32 %v2583, %v2841
      %v2924 = vadd.f32 %v2584, %v2846
      %v2925 = vadd.f32 %v2585, %v2851
      %v2926 = vadd.f32 %v2586, %v2856
      %v2927 = vadd.f32 %v2587, %v2861
      %v2928 = vadd.f32 %v2588, %v2866
      %v2929 = vadd.f32 %v2589, %v2871
      %v2930 = vadd.f32 %v2590, %v2876
      %v2931 = vadd.f32 %v2591, %v2881
      %v2932 = vadd.f32 %v2592, %v2886
      %v2933 = vadd.f32 %v2593, %v2891
      %v2934 = vadd.f32 %v2594, %v2896
      %v2935 = vadd.f32 %v2595, %v2901
      %s2936 = sadd.s32 0, 39
      %s2937 = scalar_lea.vmem [#allocation2], %s2936
      %v2938 = vld [vmem:[%s2937] sm:$0xff]
      %v2939 = vld [vmem:[%s2937 + $0x8] sm:$0xff]
      %v2940 = vld [vmem:[%s2937 + $0x10] sm:$0xff]
      %v2941 = vld [vmem:[%s2937 + $0x18] sm:$0xff]
      %v2942 = vld [vmem:[%s2937 + $0x20] sm:$0xff]
      %v2943 = vld [vmem:[%s2937 + $0x28] sm:$0xff]
      %v2944 = vld [vmem:[%s2937 + $0x30] sm:$0xff]
      %v2945 = vld [vmem:[%s2937 + $0x38] sm:$0xff]
      %v2946 = vld [vmem:[%s2937 + $0x40] sm:$0xff]
      %v2947 = vld [vmem:[%s2937 + $0x48] sm:$0xff]
      %v2948 = vld [vmem:[%s2937 + $0x50] sm:$0xff]
      %v2949 = vld [vmem:[%s2937 + $0x58] sm:$0xff]
      %v2950 = vld [vmem:[%s2937 + $0x60] sm:$0xff]
      %v2951 = vld [vmem:[%s2937 + $0x68] sm:$0xff]
      %v2952 = vld [vmem:[%s2937 + $0x70] sm:$0xff]
      %v2953 = vld [vmem:[%s2937 + $0x78] sm:$0xff]
      %v2954 = vld [vmem:[%s2937 + $0x80] sm:$0xff]
      %v2955 = vld [vmem:[%s2937 + $0x88] sm:$0xff]
      %v2956 = vld [vmem:[%s2937 + $0x90] sm:$0xff]
      %v2957 = vld [vmem:[%s2937 + $0x98] sm:$0xff]
      %v2958 = vld [vmem:[%s2937 + $0xa0] sm:$0xff]
      %v2959 = vld [vmem:[%s2937 + $0xa8] sm:$0xff]
      %v2960 = vld [vmem:[%s2937 + $0xb0] sm:$0xff]
      %v2961 = vld [vmem:[%s2937 + $0xb8] sm:$0xff]
      %v2962 = vld [vmem:[%s2937 + $0xc0] sm:$0xff]
      %v2963 = vld [vmem:[%s2937 + $0xc8] sm:$0xff]
      %v2964 = vld [vmem:[%s2937 + $0xd0] sm:$0xff]
      %v2965 = vld [vmem:[%s2937 + $0xd8] sm:$0xff]
      %v2966 = vld [vmem:[%s2937 + $0xe0] sm:$0xff]
      %v2967 = vld [vmem:[%s2937 + $0xe8] sm:$0xff]
      %v2968 = vld [vmem:[%s2937 + $0xf0] sm:$0xff]
      %v2969 = vld [vmem:[%s2937 + $0xf8] sm:$0xff]
      %v2970 = vmul.f32 %v2938, %v897
      %v2971 = vmul.f32 %v2939, %v898
      %v2972 = vmul.f32 %v2940, %v899
      %v2973 = vmul.f32 %v2941, %v900
      %v2974 = vmul.f32 %v2942, %v901
      %v2975 = vmul.f32 %v2943, %v902
      %v2976 = vmul.f32 %v2944, %v903
      %v2977 = vmul.f32 %v2945, %v904
      %v2978 = vmul.f32 %v2946, %v905
      %v2979 = vmul.f32 %v2947, %v906
      %v2980 = vmul.f32 %v2948, %v907
      %v2981 = vmul.f32 %v2949, %v908
      %v2982 = vmul.f32 %v2950, %v909
      %v2983 = vmul.f32 %v2951, %v910
      %v2984 = vmul.f32 %v2952, %v911
      %v2985 = vmul.f32 %v2953, %v912
      %v2986 = vmul.f32 %v2954, %v913
      %v2987 = vmul.f32 %v2955, %v914
      %v2988 = vmul.f32 %v2956, %v915
      %v2989 = vmul.f32 %v2957, %v916
      %v2990 = vmul.f32 %v2958, %v917
      %v2991 = vmul.f32 %v2959, %v918
      %v2992 = vmul.f32 %v2960, %v919
      %v2993 = vmul.f32 %v2961, %v920
      %v2994 = vmul.f32 %v2962, %v921
      %v2995 = vmul.f32 %v2963, %v922
      %v2996 = vmul.f32 %v2964, %v923
      %v2997 = vmul.f32 %v2965, %v924
      %v2998 = vmul.f32 %v2966, %v925
      %v2999 = vmul.f32 %v2967, %v926
      %v3000 = vmul.f32 %v2968, %v927
      %v3001 = vmul.f32 %v2969, %v928
      %s3002 = scalar_lea.vmem %s3, 768
      %v3003 = vld [vmem:[%s3002] sm:$0xff]
      %v3004 = vld [vmem:[%s3002 + $0x8] sm:$0xff]
      %v3005 = vld [vmem:[%s3002 + $0x10] sm:$0xff]
      %v3006 = vld [vmem:[%s3002 + $0x18] sm:$0xff]
      %v3007 = vld [vmem:[%s3002 + $0x20] sm:$0xff]
      %v3008 = vld [vmem:[%s3002 + $0x28] sm:$0xff]
      %v3009 = vld [vmem:[%s3002 + $0x30] sm:$0xff]
      %v3010 = vld [vmem:[%s3002 + $0x38] sm:$0xff]
      %v3011 = vld [vmem:[%s3002 + $0x40] sm:$0xff]
      %v3012 = vld [vmem:[%s3002 + $0x48] sm:$0xff]
      %v3013 = vld [vmem:[%s3002 + $0x50] sm:$0xff]
      %v3014 = vld [vmem:[%s3002 + $0x58] sm:$0xff]
      %v3015 = vld [vmem:[%s3002 + $0x60] sm:$0xff]
      %v3016 = vld [vmem:[%s3002 + $0x68] sm:$0xff]
      %v3017 = vld [vmem:[%s3002 + $0x70] sm:$0xff]
      %v3018 = vld [vmem:[%s3002 + $0x78] sm:$0xff]
      %3019 = vmatprep.subr.mxu0 0.0
      %3020 = vmatpush1.msra.mxu0 %v3003
      %3021 = vmatprep.subr.mxu0 0.0
      %3022 = vmatpush1.msra.mxu0 %v3004
      %3023 = vmatprep.subr.mxu0 0.0
      %3024 = vmatpush1.msra.mxu0 %v3005
      %3025 = vmatprep.subr.mxu0 0.0
      %3026 = vmatpush1.msra.mxu0 %v3006
      %3027 = vmatprep.subr.mxu0 0.0
      %3028 = vmatpush1.msra.mxu0 %v3007
      %3029 = vmatprep.subr.mxu0 0.0
      %3030 = vmatpush1.msra.mxu0 %v3008
      %3031 = vmatprep.subr.mxu0 0.0
      %3032 = vmatpush1.msra.mxu0 %v3009
      %3033 = vmatprep.subr.mxu0 0.0
      %3034 = vmatpush1.msra.mxu0 %v3010
      %3035 = vmatprep.subr.mxu0 0.0
      %3036 = vmatpush1.msra.mxu0 %v3011
      %3037 = vmatprep.subr.mxu0 0.0
      %3038 = vmatpush1.msra.mxu0 %v3012
      %3039 = vmatprep.subr.mxu0 0.0
      %3040 = vmatpush1.msra.mxu0 %v3013
      %3041 = vmatprep.subr.mxu0 0.0
      %3042 = vmatpush1.msra.mxu0 %v3014
      %3043 = vmatprep.subr.mxu0 0.0
      %3044 = vmatpush1.msra.mxu0 %v3015
      %3045 = vmatprep.subr.mxu0 0.0
      %3046 = vmatpush1.msra.mxu0 %v3016
      %3047 = vmatprep.subr.mxu0 0.0
      %3048 = vmatpush1.msra.mxu0 %v3017
      %3049 = vmatprep.subr.mxu0 0.0
      %3050 = vmatpush1.msra.mxu0 %v3018
      %3051 = vmatprep.subr.mxu0 0.0
      %3052 = vmatpush1.msra.mxu0 0.0
      %3053 = vmatprep.subr.mxu0 0.0
      %3054 = vmatpush1.msra.mxu0 0.0
      %3055 = vmatprep.subr.mxu0 0.0
      %3056 = vmatpush1.msra.mxu0 0.0
      %3057 = vmatprep.subr.mxu0 0.0
      %3058 = vmatpush1.msra.mxu0 0.0
      %3059 = vmatprep.subr.mxu0 0.0
      %3060 = vmatpush1.msra.mxu0 0.0
      %3061 = vmatprep.subr.mxu0 0.0
      %3062 = vmatpush1.msra.mxu0 0.0
      %3063 = vmatprep.subr.mxu0 0.0
      %3064 = vmatpush1.msra.mxu0 0.0
      %3065 = vmatprep.subr.mxu0 0.0
      %3066 = vmatpush1.msra.mxu0 0.0
      %3067 = vmatprep.subr.mxu0 0.0
      %3068 = vmatpush1.msra.mxu0 0.0
      %3069 = vmatprep.subr.mxu0 0.0
      %3070 = vmatpush1.msra.mxu0 0.0
      %3071 = vmatprep.subr.mxu0 0.0
      %3072 = vmatpush1.msra.mxu0 0.0
      %3073 = vmatprep.subr.mxu0 0.0
      %3074 = vmatpush1.msra.mxu0 0.0
      %3075 = vmatprep.subr.mxu0 0.0
      %3076 = vmatpush1.msra.mxu0 0.0
      %3077 = vmatprep.subr.mxu0 0.0
      %3078 = vmatpush1.msra.mxu0 0.0
      %3079 = vmatprep.subr.mxu0 0.0
      %3080 = vmatpush1.msra.mxu0 0.0
      %3081 = vmatprep.subr.mxu0 0.0
      %3082 = vmatpush1.msra.mxu0 0.0
      %3083 = vmatprep.mubr.f32.mxu0 0.0
      %3084 = vmatmul.mubr.f32.gmra.mrb[0].mxu0 %v2970
      %v3085 = vpop.f32.mrb[0].mxu0
      %v3086 = vadd.f32 0.0, %v3085
      %v3087 = vpop.f32.mrb[0].mxu0
      %3088 = vmatprep.mubr.f32.mxu0 0.0
      %3089 = vmatmul.mubr.f32.gmra.mrb[0].mxu0 %v2971
      %v3090 = vpop.f32.mrb[0].mxu0
      %v3091 = vadd.f32 0.0, %v3090
      %v3092 = vpop.f32.mrb[0].mxu0
      %3093 = vmatprep.mubr.f32.mxu0 0.0
      %3094 = vmatmul.mubr.f32.gmra.mrb[0].mxu0 %v2972
      %v3095 = vpop.f32.mrb[0].mxu0
      %v3096 = vadd.f32 0.0, %v3095
      %v3097 = vpop.f32.mrb[0].mxu0
      %3098 = vmatprep.mubr.f32.mxu0 0.0
      %3099 = vmatmul.mubr.f32.gmra.mrb[0].mxu0 %v2973
      %v3100 = vpop.f32.mrb[0].mxu0
      %v3101 = vadd.f32 0.0, %v3100
      %v3102 = vpop.f32.mrb[0].mxu0
      %3103 = vmatprep.mubr.f32.mxu0 0.0
      %3104 = vmatmul.mubr.f32.gmra.mrb[0].mxu0 %v2974
      %v3105 = vpop.f32.mrb[0].mxu0
      %v3106 = vadd.f32 0.0, %v3105
      %v3107 = vpop.f32.mrb[0].mxu0
      %3108 = vmatprep.mubr.f32.mxu0 0.0
      %3109 = vmatmul.mubr.f32.gmra.mrb[0].mxu0 %v2975
      %v3110 = vpop.f32.mrb[0].mxu0
      %v3111 = vadd.f32 0.0, %v3110
      %v3112 = vpop.f32.mrb[0].mxu0
      %3113 = vmatprep.mubr.f32.mxu0 0.0
      %3114 = vmatmul.mubr.f32.gmra.mrb[0].mxu0 %v2976
      %v3115 = vpop.f32.mrb[0].mxu0
      %v3116 = vadd.f32 0.0, %v3115
      %v3117 = vpop.f32.mrb[0].mxu0
      %3118 = vmatprep.mubr.f32.mxu0 0.0
      %3119 = vmatmul.mubr.f32.gmra.mrb[0].mxu0 %v2977
      %v3120 = vpop.f32.mrb[0].mxu0
      %v3121 = vadd.f32 0.0, %v3120
      %v3122 = vpop.f32.mrb[0].mxu0
      %3123 = vmatprep.mubr.f32.mxu0 0.0
      %3124 = vmatmul.mubr.f32.gmra.mrb[0].mxu0 %v2978
      %v3125 = vpop.f32.mrb[0].mxu0
      %v3126 = vadd.f32 0.0, %v3125
      %v3127 = vpop.f32.mrb[0].mxu0
      %3128 = vmatprep.mubr.f32.mxu0 0.0
      %3129 = vmatmul.mubr.f32.gmra.mrb[0].mxu0 %v2979
      %v3130 = vpop.f32.mrb[0].mxu0
      %v3131 = vadd.f32 0.0, %v3130
      %v3132 = vpop.f32.mrb[0].mxu0
      %3133 = vmatprep.mubr.f32.mxu0 0.0
      %3134 = vmatmul.mubr.f32.gmra.mrb[0].mxu0 %v2980
      %v3135 = vpop.f32.mrb[0].mxu0
      %v3136 = vadd.f32 0.0, %v3135
      %v3137 = vpop.f32.mrb[0].mxu0
      %3138 = vmatprep.mubr.f32.mxu0 0.0
      %3139 = vmatmul.mubr.f32.gmra.mrb[0].mxu0 %v2981
      %v3140 = vpop.f32.mrb[0].mxu0
      %v3141 = vadd.f32 0.0, %v3140
      %v3142 = vpop.f32.mrb[0].mxu0
      %3143 = vmatprep.mubr.f32.mxu0 0.0
      %3144 = vmatmul.mubr.f32.gmra.mrb[0].mxu0 %v2982
      %v3145 = vpop.f32.mrb[0].mxu0
      %v3146 = vadd.f32 0.0, %v3145
      %v3147 = vpop.f32.mrb[0].mxu0
      %3148 = vmatprep.mubr.f32.mxu0 0.0
      %3149 = vmatmul.mubr.f32.gmra.mrb[0].mxu0 %v2983
      %v3150 = vpop.f32.mrb[0].mxu0
      %v3151 = vadd.f32 0.0, %v3150
      %v3152 = vpop.f32.mrb[0].mxu0
      %3153 = vmatprep.mubr.f32.mxu0 0.0
      %3154 = vmatmul.mubr.f32.gmra.mrb[0].mxu0 %v2984
      %v3155 = vpop.f32.mrb[0].mxu0
      %v3156 = vadd.f32 0.0, %v3155
      %v3157 = vpop.f32.mrb[0].mxu0
      %3158 = vmatprep.mubr.f32.mxu0 0.0
      %3159 = vmatmul.mubr.f32.gmra.mrb[0].mxu0 %v2985
      %v3160 = vpop.f32.mrb[0].mxu0
      %v3161 = vadd.f32 0.0, %v3160
      %v3162 = vpop.f32.mrb[0].mxu0
      %3163 = vmatprep.mubr.f32.mxu0 0.0
      %3164 = vmatmul.mubr.f32.gmra.mrb[0].mxu0 %v2986
      %v3165 = vpop.f32.mrb[0].mxu0
      %v3166 = vadd.f32 0.0, %v3165
      %v3167 = vpop.f32.mrb[0].mxu0
      %3168 = vmatprep.mubr.f32.mxu0 0.0
      %3169 = vmatmul.mubr.f32.gmra.mrb[0].mxu0 %v2987
      %v3170 = vpop.f32.mrb[0].mxu0
      %v3171 = vadd.f32 0.0, %v3170
      %v3172 = vpop.f32.mrb[0].mxu0
      %3173 = vmatprep.mubr.f32.mxu0 0.0
      %3174 = vmatmul.mubr.f32.gmra.mrb[0].mxu0 %v2988
      %v3175 = vpop.f32.mrb[0].mxu0
      %v3176 = vadd.f32 0.0, %v3175
      %v3177 = vpop.f32.mrb[0].mxu0
      %3178 = vmatprep.mubr.f32.mxu0 0.0
      %3179 = vmatmul.mubr.f32.gmra.mrb[0].mxu0 %v2989
      %v3180 = vpop.f32.mrb[0].mxu0
      %v3181 = vadd.f32 0.0, %v3180
      %v3182 = vpop.f32.mrb[0].mxu0
      %3183 = vmatprep.mubr.f32.mxu0 0.0
      %3184 = vmatmul.mubr.f32.gmra.mrb[0].mxu0 %v2990
      %v3185 = vpop.f32.mrb[0].mxu0
      %v3186 = vadd.f32 0.0, %v3185
      %v3187 = vpop.f32.mrb[0].mxu0
      %3188 = vmatprep.mubr.f32.mxu0 0.0
      %3189 = vmatmul.mubr.f32.gmra.mrb[0].mxu0 %v2991
      %v3190 = vpop.f32.mrb[0].mxu0
      %v3191 = vadd.f32 0.0, %v3190
      %v3192 = vpop.f32.mrb[0].mxu0
      %3193 = vmatprep.mubr.f32.mxu0 0.0
      %3194 = vmatmul.mubr.f32.gmra.mrb[0].mxu0 %v2992
      %v3195 = vpop.f32.mrb[0].mxu0
      %v3196 = vadd.f32 0.0, %v3195
      %v3197 = vpop.f32.mrb[0].mxu0
      %3198 = vmatprep.mubr.f32.mxu0 0.0
      %3199 = vmatmul.mubr.f32.gmra.mrb[0].mxu0 %v2993
      %v3200 = vpop.f32.mrb[0].mxu0
      %v3201 = vadd.f32 0.0, %v3200
      %v3202 = vpop.f32.mrb[0].mxu0
      %3203 = vmatprep.mubr.f32.mxu0 0.0
      %3204 = vmatmul.mubr.f32.gmra.mrb[0].mxu0 %v2994
      %v3205 = vpop.f32.mrb[0].mxu0
      %v3206 = vadd.f32 0.0, %v3205
      %v3207 = vpop.f32.mrb[0].mxu0
      %3208 = vmatprep.mubr.f32.mxu0 0.0
      %3209 = vmatmul.mubr.f32.gmra.mrb[0].mxu0 %v2995
      %v3210 = vpop.f32.mrb[0].mxu0
      %v3211 = vadd.f32 0.0, %v3210
      %v3212 = vpop.f32.mrb[0].mxu0
      %3213 = vmatprep.mubr.f32.mxu0 0.0
      %3214 = vmatmul.mubr.f32.gmra.mrb[0].mxu0 %v2996
      %v3215 = vpop.f32.mrb[0].mxu0
      %v3216 = vadd.f32 0.0, %v3215
      %v3217 = vpop.f32.mrb[0].mxu0
      %3218 = vmatprep.mubr.f32.mxu0 0.0
      %3219 = vmatmul.mubr.f32.gmra.mrb[0].mxu0 %v2997
      %v3220 = vpop.f32.mrb[0].mxu0
      %v3221 = vadd.f32 0.0, %v3220
      %v3222 = vpop.f32.mrb[0].mxu0
      %3223 = vmatprep.mubr.f32.mxu0 0.0
      %3224 = vmatmul.mubr.f32.gmra.mrb[0].mxu0 %v2998
      %v3225 = vpop.f32.mrb[0].mxu0
      %v3226 = vadd.f32 0.0, %v3225
      %v3227 = vpop.f32.mrb[0].mxu0
      %3228 = vmatprep.mubr.f32.mxu0 0.0
      %3229 = vmatmul.mubr.f32.gmra.mrb[0].mxu0 %v2999
      %v3230 = vpop.f32.mrb[0].mxu0
      %v3231 = vadd.f32 0.0, %v3230
      %v3232 = vpop.f32.mrb[0].mxu0
      %3233 = vmatprep.mubr.f32.mxu0 0.0
      %3234 = vmatmul.mubr.f32.gmra.mrb[0].mxu0 %v3000
      %v3235 = vpop.f32.mrb[0].mxu0
      %v3236 = vadd.f32 0.0, %v3235
      %v3237 = vpop.f32.mrb[0].mxu0
      %3238 = vmatprep.mubr.f32.mxu0 0.0
      %3239 = vmatmul.mubr.f32.gmra.mrb[0].mxu0 %v3001
      %v3240 = vpop.f32.mrb[0].mxu0
      %v3241 = vadd.f32 0.0, %v3240
      %v3242 = vpop.f32.mrb[0].mxu0
      %3243 = vdwg.mxu0
      %v3244 = vadd.f32 %v2904, %v3086
      %v3245 = vadd.f32 %v2905, %v3091
      %v3246 = vadd.f32 %v2906, %v3096
      %v3247 = vadd.f32 %v2907, %v3101
      %v3248 = vadd.f32 %v2908, %v3106
      %v3249 = vadd.f32 %v2909, %v3111
      %v3250 = vadd.f32 %v2910, %v3116
      %v3251 = vadd.f32 %v2911, %v3121
      %v3252 = vadd.f32 %v2912, %v3126
      %v3253 = vadd.f32 %v2913, %v3131
      %v3254 = vadd.f32 %v2914, %v3136
      %v3255 = vadd.f32 %v2915, %v3141
      %v3256 = vadd.f32 %v2916, %v3146
      %v3257 = vadd.f32 %v2917, %v3151
      %v3258 = vadd.f32 %v2918, %v3156
      %v3259 = vadd.f32 %v2919, %v3161
      %v3260 = vadd.f32 %v2920, %v3166
      %v3261 = vadd.f32 %v2921, %v3171
      %v3262 = vadd.f32 %v2922, %v3176
      %v3263 = vadd.f32 %v2923, %v3181
      %v3264 = vadd.f32 %v2924, %v3186
      %v3265 = vadd.f32 %v2925, %v3191
      %v3266 = vadd.f32 %v2926, %v3196
      %v3267 = vadd.f32 %v2927, %v3201
      %v3268 = vadd.f32 %v2928, %v3206
      %v3269 = vadd.f32 %v2929, %v3211
      %v3270 = vadd.f32 %v2930, %v3216
      %v3271 = vadd.f32 %v2931, %v3221
      %v3272 = vadd.f32 %v2932, %v3226
      %v3273 = vadd.f32 %v2933, %v3231
      %v3274 = vadd.f32 %v2934, %v3236
      %v3275 = vadd.f32 %v2935, %v3241
      %s3276 = sadd.s32 0, 40
      %s3277 = scalar_lea.vmem [#allocation2], %s3276
      %v3278 = vld [vmem:[%s3277] sm:$0xff]
      %v3279 = vld [vmem:[%s3277 + $0x8] sm:$0xff]
      %v3280 = vld [vmem:[%s3277 + $0x10] sm:$0xff]
      %v3281 = vld [vmem:[%s3277 + $0x18] sm:$0xff]
      %v3282 = vld [vmem:[%s3277 + $0x20] sm:$0xff]
      %v3283 = vld [vmem:[%s3277 + $0x28] sm:$0xff]
      %v3284 = vld [vmem:[%s3277 + $0x30] sm:$0xff]
      %v3285 = vld [vmem:[%s3277 + $0x38] sm:$0xff]
      %v3286 = vld [vmem:[%s3277 + $0x40] sm:$0xff]
      %v3287 = vld [vmem:[%s3277 + $0x48] sm:$0xff]
      %v3288 = vld [vmem:[%s3277 + $0x50] sm:$0xff]
      %v3289 = vld [vmem:[%s3277 + $0x58] sm:$0xff]
      %v3290 = vld [vmem:[%s3277 + $0x60] sm:$0xff]
      %v3291 = vld [vmem:[%s3277 + $0x68] sm:$0xff]
      %v3292 = vld [vmem:[%s3277 + $0x70] sm:$0xff]
      %v3293 = vld [vmem:[%s3277 + $0x78] sm:$0xff]
      %v3294 = vld [vmem:[%s3277 + $0x80] sm:$0xff]
      %v3295 = vld [vmem:[%s3277 + $0x88] sm:$0xff]
      %v3296 = vld [vmem:[%s3277 + $0x90] sm:$0xff]
      %v3297 = vld [vmem:[%s3277 + $0x98] sm:$0xff]
      %v3298 = vld [vmem:[%s3277 + $0xa0] sm:$0xff]
      %v3299 = vld [vmem:[%s3277 + $0xa8] sm:$0xff]
      %v3300 = vld [vmem:[%s3277 + $0xb0] sm:$0xff]
      %v3301 = vld [vmem:[%s3277 + $0xb8] sm:$0xff]
      %v3302 = vld [vmem:[%s3277 + $0xc0] sm:$0xff]
      %v3303 = vld [vmem:[%s3277 + $0xc8] sm:$0xff]
      %v3304 = vld [vmem:[%s3277 + $0xd0] sm:$0xff]
      %v3305 = vld [vmem:[%s3277 + $0xd8] sm:$0xff]
      %v3306 = vld [vmem:[%s3277 + $0xe0] sm:$0xff]
      %v3307 = vld [vmem:[%s3277 + $0xe8] sm:$0xff]
      %v3308 = vld [vmem:[%s3277 + $0xf0] sm:$0xff]
      %v3309 = vld [vmem:[%s3277 + $0xf8] sm:$0xff]
      %s3310 = scalar_lea.vmem %s3, 896
      %v3311 = vld [vmem:[%s3310] sm:$0xff]
      %v3312 = vld [vmem:[%s3310 + $0x8] sm:$0xff]
      %v3313 = vld [vmem:[%s3310 + $0x10] sm:$0xff]
      %v3314 = vld [vmem:[%s3310 + $0x18] sm:$0xff]
      %v3315 = vld [vmem:[%s3310 + $0x20] sm:$0xff]
      %v3316 = vld [vmem:[%s3310 + $0x28] sm:$0xff]
      %v3317 = vld [vmem:[%s3310 + $0x30] sm:$0xff]
      %v3318 = vld [vmem:[%s3310 + $0x38] sm:$0xff]
      %v3319 = vld [vmem:[%s3310 + $0x40] sm:$0xff]
      %v3320 = vld [vmem:[%s3310 + $0x48] sm:$0xff]
      %v3321 = vld [vmem:[%s3310 + $0x50] sm:$0xff]
      %v3322 = vld [vmem:[%s3310 + $0x58] sm:$0xff]
      %v3323 = vld [vmem:[%s3310 + $0x60] sm:$0xff]
      %v3324 = vld [vmem:[%s3310 + $0x68] sm:$0xff]
      %v3325 = vld [vmem:[%s3310 + $0x70] sm:$0xff]
      %v3326 = vld [vmem:[%s3310 + $0x78] sm:$0xff]
      %3327 = vmatprep.subr.mxu0 0.0
      %3328 = vmatpush1.msra.mxu0 %v3311
      %3329 = vmatprep.subr.mxu0 0.0
      %3330 = vmatpush1.msra.mxu0 %v3312
      %3331 = vmatprep.subr.mxu0 0.0
      %3332 = vmatpush1.msra.mxu0 %v3313
      %3333 = vmatprep.subr.mxu0 0.0
      %3334 = vmatpush1.msra.mxu0 %v3314
      %3335 = vmatprep.subr.mxu0 0.0
      %3336 = vmatpush1.msra.mxu0 %v3315
      %3337 = vmatprep.subr.mxu0 0.0
      %3338 = vmatpush1.msra.mxu0 %v3316
      %3339 = vmatprep.subr.mxu0 0.0
      %3340 = vmatpush1.msra.mxu0 %v3317
      %3341 = vmatprep.subr.mxu0 0.0
      %3342 = vmatpush1.msra.mxu0 %v3318
      %3343 = vmatprep.subr.mxu0 0.0
      %3344 = vmatpush1.msra.mxu0 %v3319
      %3345 = vmatprep.subr.mxu0 0.0
      %3346 = vmatpush1.msra.mxu0 %v3320
      %3347 = vmatprep.subr.mxu0 0.0
      %3348 = vmatpush1.msra.mxu0 %v3321
      %3349 = vmatprep.subr.mxu0 0.0
      %3350 = vmatpush1.msra.mxu0 %v3322
      %3351 = vmatprep.subr.mxu0 0.0
      %3352 = vmatpush1.msra.mxu0 %v3323
      %3353 = vmatprep.subr.mxu0 0.0
      %3354 = vmatpush1.msra.mxu0 %v3324
      %3355 = vmatprep.subr.mxu0 0.0
      %3356 = vmatpush1.msra.mxu0 %v3325
      %3357 = vmatprep.subr.mxu0 0.0
      %3358 = vmatpush1.msra.mxu0 %v3326
      %3359 = vmatprep.subr.mxu0 0.0
      %3360 = vmatpush1.msra.mxu0 0.0
      %3361 = vmatprep.subr.mxu0 0.0
      %3362 = vmatpush1.msra.mxu0 0.0
      %3363 = vmatprep.subr.mxu0 0.0
      %3364 = vmatpush1.msra.mxu0 0.0
      %3365 = vmatprep.subr.mxu0 0.0
      %3366 = vmatpush1.msra.mxu0 0.0
      %3367 = vmatprep.subr.mxu0 0.0
      %3368 = vmatpush1.msra.mxu0 0.0
      %3369 = vmatprep.subr.mxu0 0.0
      %3370 = vmatpush1.msra.mxu0 0.0
      %3371 = vmatprep.subr.mxu0 0.0
      %3372 = vmatpush1.msra.mxu0 0.0
      %3373 = vmatprep.subr.mxu0 0.0
      %3374 = vmatpush1.msra.mxu0 0.0
      %3375 = vmatprep.subr.mxu0 0.0
      %3376 = vmatpush1.msra.mxu0 0.0
      %3377 = vmatprep.subr.mxu0 0.0
      %3378 = vmatpush1.msra.mxu0 0.0
      %3379 = vmatprep.subr.mxu0 0.0
      %3380 = vmatpush1.msra.mxu0 0.0
      %3381 = vmatprep.subr.mxu0 0.0
      %3382 = vmatpush1.msra.mxu0 0.0
      %3383 = vmatprep.subr.mxu0 0.0
      %3384 = vmatpush1.msra.mxu0 0.0
      %3385 = vmatprep.subr.mxu0 0.0
      %3386 = vmatpush1.msra.mxu0 0.0
      %3387 = vmatprep.subr.mxu0 0.0
      %3388 = vmatpush1.msra.mxu0 0.0
      %3389 = vmatprep.subr.mxu0 0.0
      %3390 = vmatpush1.msra.mxu0 0.0
      %3391 = vmatprep.mubr.f32.mxu0 0.0
      %3392 = vmatmul.mubr.f32.gmra.mrb[0].mxu0 %v3278
      %v3393 = vpop.f32.mrb[0].mxu0
      %v3394 = vadd.f32 0.0, %v3393
      %v3395 = vpop.f32.mrb[0].mxu0
      %3396 = vmatprep.mubr.f32.mxu0 0.0
      %3397 = vmatmul.mubr.f32.gmra.mrb[0].mxu0 %v3279
      %v3398 = vpop.f32.mrb[0].mxu0
      %v3399 = vadd.f32 0.0, %v3398
      %v3400 = vpop.f32.mrb[0].mxu0
      %3401 = vmatprep.mubr.f32.mxu0 0.0
      %3402 = vmatmul.mubr.f32.gmra.mrb[0].mxu0 %v3280
      %v3403 = vpop.f32.mrb[0].mxu0
      %v3404 = vadd.f32 0.0, %v3403
      %v3405 = vpop.f32.mrb[0].mxu0
      %3406 = vmatprep.mubr.f32.mxu0 0.0
      %3407 = vmatmul.mubr.f32.gmra.mrb[0].mxu0 %v3281
      %v3408 = vpop.f32.mrb[0].mxu0
      %v3409 = vadd.f32 0.0, %v3408
      %v3410 = vpop.f32.mrb[0].mxu0
      %3411 = vmatprep.mubr.f32.mxu0 0.0
      %3412 = vmatmul.mubr.f32.gmra.mrb[0].mxu0 %v3282
      %v3413 = vpop.f32.mrb[0].mxu0
      %v3414 = vadd.f32 0.0, %v3413
      %v3415 = vpop.f32.mrb[0].mxu0
      %3416 = vmatprep.mubr.f32.mxu0 0.0
      %3417 = vmatmul.mubr.f32.gmra.mrb[0].mxu0 %v3283
      %v3418 = vpop.f32.mrb[0].mxu0
      %v3419 = vadd.f32 0.0, %v3418
      %v3420 = vpop.f32.mrb[0].mxu0
      %3421 = vmatprep.mubr.f32.mxu0 0.0
      %3422 = vmatmul.mubr.f32.gmra.mrb[0].mxu0 %v3284
      %v3423 = vpop.f32.mrb[0].mxu0
      %v3424 = vadd.f32 0.0, %v3423
      %v3425 = vpop.f32.mrb[0].mxu0
      %3426 = vmatprep.mubr.f32.mxu0 0.0
      %3427 = vmatmul.mubr.f32.gmra.mrb[0].mxu0 %v3285
      %v3428 = vpop.f32.mrb[0].mxu0
      %v3429 = vadd.f32 0.0, %v3428
      %v3430 = vpop.f32.mrb[0].mxu0
      %3431 = vmatprep.mubr.f32.mxu0 0.0
      %3432 = vmatmul.mubr.f32.gmra.mrb[0].mxu0 %v3286
      %v3433 = vpop.f32.mrb[0].mxu0
      %v3434 = vadd.f32 0.0, %v3433
      %v3435 = vpop.f32.mrb[0].mxu0
      %3436 = vmatprep.mubr.f32.mxu0 0.0
      %3437 = vmatmul.mubr.f32.gmra.mrb[0].mxu0 %v3287
      %v3438 = vpop.f32.mrb[0].mxu0
      %v3439 = vadd.f32 0.0, %v3438
      %v3440 = vpop.f32.mrb[0].mxu0
      %3441 = vmatprep.mubr.f32.mxu0 0.0
      %3442 = vmatmul.mubr.f32.gmra.mrb[0].mxu0 %v3288
      %v3443 = vpop.f32.mrb[0].mxu0
      %v3444 = vadd.f32 0.0, %v3443
      %v3445 = vpop.f32.mrb[0].mxu0
      %3446 = vmatprep.mubr.f32.mxu0 0.0
      %3447 = vmatmul.mubr.f32.gmra.mrb[0].mxu0 %v3289
      %v3448 = vpop.f32.mrb[0].mxu0
      %v3449 = vadd.f32 0.0, %v3448
      %v3450 = vpop.f32.mrb[0].mxu0
      %3451 = vmatprep.mubr.f32.mxu0 0.0
      %3452 = vmatmul.mubr.f32.gmra.mrb[0].mxu0 %v3290
      %v3453 = vpop.f32.mrb[0].mxu0
      %v3454 = vadd.f32 0.0, %v3453
      %v3455 = vpop.f32.mrb[0].mxu0
      %3456 = vmatprep.mubr.f32.mxu0 0.0
      %3457 = vmatmul.mubr.f32.gmra.mrb[0].mxu0 %v3291
      %v3458 = vpop.f32.mrb[0].mxu0
      %v3459 = vadd.f32 0.0, %v3458
      %v3460 = vpop.f32.mrb[0].mxu0
      %3461 = vmatprep.mubr.f32.mxu0 0.0
      %3462 = vmatmul.mubr.f32.gmra.mrb[0].mxu0 %v3292
      %v3463 = vpop.f32.mrb[0].mxu0
      %v3464 = vadd.f32 0.0, %v3463
      %v3465 = vpop.f32.mrb[0].mxu0
      %3466 = vmatprep.mubr.f32.mxu0 0.0
      %3467 = vmatmul.mubr.f32.gmra.mrb[0].mxu0 %v3293
      %v3468 = vpop.f32.mrb[0].mxu0
      %v3469 = vadd.f32 0.0, %v3468
      %v3470 = vpop.f32.mrb[0].mxu0
      %3471 = vmatprep.mubr.f32.mxu0 0.0
      %3472 = vmatmul.mubr.f32.gmra.mrb[0].mxu0 %v3294
      %v3473 = vpop.f32.mrb[0].mxu0
      %v3474 = vadd.f32 0.0, %v3473
      %v3475 = vpop.f32.mrb[0].mxu0
      %3476 = vmatprep.mubr.f32.mxu0 0.0
      %3477 = vmatmul.mubr.f32.gmra.mrb[0].mxu0 %v3295
      %v3478 = vpop.f32.mrb[0].mxu0
      %v3479 = vadd.f32 0.0, %v3478
      %v3480 = vpop.f32.mrb[0].mxu0
      %3481 = vmatprep.mubr.f32.mxu0 0.0
      %3482 = vmatmul.mubr.f32.gmra.mrb[0].mxu0 %v3296
      %v3483 = vpop.f32.mrb[0].mxu0
      %v3484 = vadd.f32 0.0, %v3483
      %v3485 = vpop.f32.mrb[0].mxu0
      %3486 = vmatprep.mubr.f32.mxu0 0.0
      %3487 = vmatmul.mubr.f32.gmra.mrb[0].mxu0 %v3297
      %v3488 = vpop.f32.mrb[0].mxu0
      %v3489 = vadd.f32 0.0, %v3488
      %v3490 = vpop.f32.mrb[0].mxu0
      %3491 = vmatprep.mubr.f32.mxu0 0.0
      %3492 = vmatmul.mubr.f32.gmra.mrb[0].mxu0 %v3298
      %v3493 = vpop.f32.mrb[0].mxu0
      %v3494 = vadd.f32 0.0, %v3493
      %v3495 = vpop.f32.mrb[0].mxu0
      %3496 = vmatprep.mubr.f32.mxu0 0.0
      %3497 = vmatmul.mubr.f32.gmra.mrb[0].mxu0 %v3299
      %v3498 = vpop.f32.mrb[0].mxu0
      %v3499 = vadd.f32 0.0, %v3498
      %v3500 = vpop.f32.mrb[0].mxu0
      %3501 = vmatprep.mubr.f32.mxu0 0.0
      %3502 = vmatmul.mubr.f32.gmra.mrb[0].mxu0 %v3300
      %v3503 = vpop.f32.mrb[0].mxu0
      %v3504 = vadd.f32 0.0, %v3503
      %v3505 = vpop.f32.mrb[0].mxu0
      %3506 = vmatprep.mubr.f32.mxu0 0.0
      %3507 = vmatmul.mubr.f32.gmra.mrb[0].mxu0 %v3301
      %v3508 = vpop.f32.mrb[0].mxu0
      %v3509 = vadd.f32 0.0, %v3508
      %v3510 = vpop.f32.mrb[0].mxu0
      %3511 = vmatprep.mubr.f32.mxu0 0.0
      %3512 = vmatmul.mubr.f32.gmra.mrb[0].mxu0 %v3302
      %v3513 = vpop.f32.mrb[0].mxu0
      %v3514 = vadd.f32 0.0, %v3513
      %v3515 = vpop.f32.mrb[0].mxu0
      %3516 = vmatprep.mubr.f32.mxu0 0.0
      %3517 = vmatmul.mubr.f32.gmra.mrb[0].mxu0 %v3303
      %v3518 = vpop.f32.mrb[0].mxu0
      %v3519 = vadd.f32 0.0, %v3518
      %v3520 = vpop.f32.mrb[0].mxu0
      %3521 = vmatprep.mubr.f32.mxu0 0.0
      %3522 = vmatmul.mubr.f32.gmra.mrb[0].mxu0 %v3304
      %v3523 = vpop.f32.mrb[0].mxu0
      %v3524 = vadd.f32 0.0, %v3523
      %v3525 = vpop.f32.mrb[0].mxu0
      %3526 = vmatprep.mubr.f32.mxu0 0.0
      %3527 = vmatmul.mubr.f32.gmra.mrb[0].mxu0 %v3305
      %v3528 = vpop.f32.mrb[0].mxu0
      %v3529 = vadd.f32 0.0, %v3528
      %v3530 = vpop.f32.mrb[0].mxu0
      %3531 = vmatprep.mubr.f32.mxu0 0.0
      %3532 = vmatmul.mubr.f32.gmra.mrb[0].mxu0 %v3306
      %v3533 = vpop.f32.mrb[0].mxu0
      %v3534 = vadd.f32 0.0, %v3533
      %v3535 = vpop.f32.mrb[0].mxu0
      %3536 = vmatprep.mubr.f32.mxu0 0.0
      %3537 = vmatmul.mubr.f32.gmra.mrb[0].mxu0 %v3307
      %v3538 = vpop.f32.mrb[0].mxu0
      %v3539 = vadd.f32 0.0, %v3538
      %v3540 = vpop.f32.mrb[0].mxu0
      %3541 = vmatprep.mubr.f32.mxu0 0.0
      %3542 = vmatmul.mubr.f32.gmra.mrb[0].mxu0 %v3308
      %v3543 = vpop.f32.mrb[0].mxu0
      %v3544 = vadd.f32 0.0, %v3543
      %v3545 = vpop.f32.mrb[0].mxu0
      %3546 = vmatprep.mubr.f32.mxu0 0.0
      %3547 = vmatmul.mubr.f32.gmra.mrb[0].mxu0 %v3309
      %v3548 = vpop.f32.mrb[0].mxu0
      %v3549 = vadd.f32 0.0, %v3548
      %v3550 = vpop.f32.mrb[0].mxu0
      %3551 = vdwg.mxu0
      %v3552 = vadd.f32 %v3244, %v3394
      %v3553 = vadd.f32 %v3245, %v3399
      %v3554 = vadd.f32 %v3246, %v3404
      %v3555 = vadd.f32 %v3247, %v3409
      %v3556 = vadd.f32 %v3248, %v3414
      %v3557 = vadd.f32 %v3249, %v3419
      %v3558 = vadd.f32 %v3250, %v3424
      %v3559 = vadd.f32 %v3251, %v3429
      %v3560 = vadd.f32 %v3252, %v3434
      %v3561 = vadd.f32 %v3253, %v3439
      %v3562 = vadd.f32 %v3254, %v3444
      %v3563 = vadd.f32 %v3255, %v3449
      %v3564 = vadd.f32 %v3256, %v3454
      %v3565 = vadd.f32 %v3257, %v3459
      %v3566 = vadd.f32 %v3258, %v3464
      %v3567 = vadd.f32 %v3259, %v3469
      %v3568 = vadd.f32 %v3260, %v3474
      %v3569 = vadd.f32 %v3261, %v3479
      %v3570 = vadd.f32 %v3262, %v3484
      %v3571 = vadd.f32 %v3263, %v3489
      %v3572 = vadd.f32 %v3264, %v3494
      %v3573 = vadd.f32 %v3265, %v3499
      %v3574 = vadd.f32 %v3266, %v3504
      %v3575 = vadd.f32 %v3267, %v3509
      %v3576 = vadd.f32 %v3268, %v3514
      %v3577 = vadd.f32 %v3269, %v3519
      %v3578 = vadd.f32 %v3270, %v3524
      %v3579 = vadd.f32 %v3271, %v3529
      %v3580 = vadd.f32 %v3272, %v3534
      %v3581 = vadd.f32 %v3273, %v3539
      %v3582 = vadd.f32 %v3274, %v3544
      %v3583 = vadd.f32 %v3275, %v3549
      %s3584 = sadd.s32 0, 41
      %s3585 = scalar_lea.vmem [#allocation2], %s3584
      %v3586 = vld [vmem:[%s3585] sm:$0xff]
      %v3587 = vld [vmem:[%s3585 + $0x8] sm:$0xff]
      %v3588 = vld [vmem:[%s3585 + $0x10] sm:$0xff]
      %v3589 = vld [vmem:[%s3585 + $0x18] sm:$0xff]
      %v3590 = vld [vmem:[%s3585 + $0x20] sm:$0xff]
      %v3591 = vld [vmem:[%s3585 + $0x28] sm:$0xff]
      %v3592 = vld [vmem:[%s3585 + $0x30] sm:$0xff]
      %v3593 = vld [vmem:[%s3585 + $0x38] sm:$0xff]
      %v3594 = vld [vmem:[%s3585 + $0x40] sm:$0xff]
      %v3595 = vld [vmem:[%s3585 + $0x48] sm:$0xff]
      %v3596 = vld [vmem:[%s3585 + $0x50] sm:$0xff]
      %v3597 = vld [vmem:[%s3585 + $0x58] sm:$0xff]
      %v3598 = vld [vmem:[%s3585 + $0x60] sm:$0xff]
      %v3599 = vld [vmem:[%s3585 + $0x68] sm:$0xff]
      %v3600 = vld [vmem:[%s3585 + $0x70] sm:$0xff]
      %v3601 = vld [vmem:[%s3585 + $0x78] sm:$0xff]
      %v3602 = vld [vmem:[%s3585 + $0x80] sm:$0xff]
      %v3603 = vld [vmem:[%s3585 + $0x88] sm:$0xff]
      %v3604 = vld [vmem:[%s3585 + $0x90] sm:$0xff]
      %v3605 = vld [vmem:[%s3585 + $0x98] sm:$0xff]
      %v3606 = vld [vmem:[%s3585 + $0xa0] sm:$0xff]
      %v3607 = vld [vmem:[%s3585 + $0xa8] sm:$0xff]
      %v3608 = vld [vmem:[%s3585 + $0xb0] sm:$0xff]
      %v3609 = vld [vmem:[%s3585 + $0xb8] sm:$0xff]
      %v3610 = vld [vmem:[%s3585 + $0xc0] sm:$0xff]
      %v3611 = vld [vmem:[%s3585 + $0xc8] sm:$0xff]
      %v3612 = vld [vmem:[%s3585 + $0xd0] sm:$0xff]
      %v3613 = vld [vmem:[%s3585 + $0xd8] sm:$0xff]
      %v3614 = vld [vmem:[%s3585 + $0xe0] sm:$0xff]
      %v3615 = vld [vmem:[%s3585 + $0xe8] sm:$0xff]
      %v3616 = vld [vmem:[%s3585 + $0xf0] sm:$0xff]
      %v3617 = vld [vmem:[%s3585 + $0xf8] sm:$0xff]
      %v3618 = vmul.f32 %v3586, %v993
      %v3619 = vmul.f32 %v3587, %v994
      %v3620 = vmul.f32 %v3588, %v995
      %v3621 = vmul.f32 %v3589, %v996
      %v3622 = vmul.f32 %v3590, %v997
      %v3623 = vmul.f32 %v3591, %v998
      %v3624 = vmul.f32 %v3592, %v999
      %v3625 = vmul.f32 %v3593, %v1000
      %v3626 = vmul.f32 %v3594, %v1001
      %v3627 = vmul.f32 %v3595, %v1002
      %v3628 = vmul.f32 %v3596, %v1003
      %v3629 = vmul.f32 %v3597, %v1004
      %v3630 = vmul.f32 %v3598, %v1005
      %v3631 = vmul.f32 %v3599, %v1006
      %v3632 = vmul.f32 %v3600, %v1007
      %v3633 = vmul.f32 %v3601, %v1008
      %v3634 = vmul.f32 %v3602, %v1009
      %v3635 = vmul.f32 %v3603, %v1010
      %v3636 = vmul.f32 %v3604, %v1011
      %v3637 = vmul.f32 %v3605, %v1012
      %v3638 = vmul.f32 %v3606, %v1013
      %v3639 = vmul.f32 %v3607, %v1014
      %v3640 = vmul.f32 %v3608, %v1015
      %v3641 = vmul.f32 %v3609, %v1016
      %v3642 = vmul.f32 %v3610, %v1017
      %v3643 = vmul.f32 %v3611, %v1018
      %v3644 = vmul.f32 %v3612, %v1019
      %v3645 = vmul.f32 %v3613, %v1020
      %v3646 = vmul.f32 %v3614, %v1021
      %v3647 = vmul.f32 %v3615, %v1022
      %v3648 = vmul.f32 %v3616, %v1023
      %v3649 = vmul.f32 %v3617, %v1024
      %s3650 = scalar_lea.vmem %s3, 1024
      %v3651 = vld [vmem:[%s3650] sm:$0xff]
      %v3652 = vld [vmem:[%s3650 + $0x8] sm:$0xff]
      %v3653 = vld [vmem:[%s3650 + $0x10] sm:$0xff]
      %v3654 = vld [vmem:[%s3650 + $0x18] sm:$0xff]
      %v3655 = vld [vmem:[%s3650 + $0x20] sm:$0xff]
      %v3656 = vld [vmem:[%s3650 + $0x28] sm:$0xff]
      %v3657 = vld [vmem:[%s3650 + $0x30] sm:$0xff]
      %v3658 = vld [vmem:[%s3650 + $0x38] sm:$0xff]
      %v3659 = vld [vmem:[%s3650 + $0x40] sm:$0xff]
      %v3660 = vld [vmem:[%s3650 + $0x48] sm:$0xff]
      %v3661 = vld [vmem:[%s3650 + $0x50] sm:$0xff]
      %v3662 = vld [vmem:[%s3650 + $0x58] sm:$0xff]
      %v3663 = vld [vmem:[%s3650 + $0x60] sm:$0xff]
      %v3664 = vld [vmem:[%s3650 + $0x68] sm:$0xff]
      %v3665 = vld [vmem:[%s3650 + $0x70] sm:$0xff]
      %v3666 = vld [vmem:[%s3650 + $0x78] sm:$0xff]
      %3667 = vmatprep.subr.mxu0 0.0
      %3668 = vmatpush1.msra.mxu0 %v3651
      %3669 = vmatprep.subr.mxu0 0.0
      %3670 = vmatpush1.msra.mxu0 %v3652
      %3671 = vmatprep.subr.mxu0 0.0
      %3672 = vmatpush1.msra.mxu0 %v3653
      %3673 = vmatprep.subr.mxu0 0.0
      %3674 = vmatpush1.msra.mxu0 %v3654
      %3675 = vmatprep.subr.mxu0 0.0
      %3676 = vmatpush1.msra.mxu0 %v3655
      %3677 = vmatprep.subr.mxu0 0.0
      %3678 = vmatpush1.msra.mxu0 %v3656
      %3679 = vmatprep.subr.mxu0 0.0
      %3680 = vmatpush1.msra.mxu0 %v3657
      %3681 = vmatprep.subr.mxu0 0.0
      %3682 = vmatpush1.msra.mxu0 %v3658
      %3683 = vmatprep.subr.mxu0 0.0
      %3684 = vmatpush1.msra.mxu0 %v3659
      %3685 = vmatprep.subr.mxu0 0.0
      %3686 = vmatpush1.msra.mxu0 %v3660
      %3687 = vmatprep.subr.mxu0 0.0
      %3688 = vmatpush1.msra.mxu0 %v3661
      %3689 = vmatprep.subr.mxu0 0.0
      %3690 = vmatpush1.msra.mxu0 %v3662
      %3691 = vmatprep.subr.mxu0 0.0
      %3692 = vmatpush1.msra.mxu0 %v3663
      %3693 = vmatprep.subr.mxu0 0.0
      %3694 = vmatpush1.msra.mxu0 %v3664
      %3695 = vmatprep.subr.mxu0 0.0
      %3696 = vmatpush1.msra.mxu0 %v3665
      %3697 = vmatprep.subr.mxu0 0.0
      %3698 = vmatpush1.msra.mxu0 %v3666
      %3699 = vmatprep.subr.mxu0 0.0
      %3700 = vmatpush1.msra.mxu0 0.0
      %3701 = vmatprep.subr.mxu0 0.0
      %3702 = vmatpush1.msra.mxu0 0.0
      %3703 = vmatprep.subr.mxu0 0.0
      %3704 = vmatpush1.msra.mxu0 0.0
      %3705 = vmatprep.subr.mxu0 0.0
      %3706 = vmatpush1.msra.mxu0 0.0
      %3707 = vmatprep.subr.mxu0 0.0
      %3708 = vmatpush1.msra.mxu0 0.0
      %3709 = vmatprep.subr.mxu0 0.0
      %3710 = vmatpush1.msra.mxu0 0.0
      %3711 = vmatprep.subr.mxu0 0.0
      %3712 = vmatpush1.msra.mxu0 0.0
      %3713 = vmatprep.subr.mxu0 0.0
      %3714 = vmatpush1.msra.mxu0 0.0
      %3715 = vmatprep.subr.mxu0 0.0
      %3716 = vmatpush1.msra.mxu0 0.0
      %3717 = vmatprep.subr.mxu0 0.0
      %3718 = vmatpush1.msra.mxu0 0.0
      %3719 = vmatprep.subr.mxu0 0.0
      %3720 = vmatpush1.msra.mxu0 0.0
      %3721 = vmatprep.subr.mxu0 0.0
      %3722 = vmatpush1.msra.mxu0 0.0
      %3723 = vmatprep.subr.mxu0 0.0
      %3724 = vmatpush1.msra.mxu0 0.0
      %3725 = vmatprep.subr.mxu0 0.0
      %3726 = vmatpush1.msra.mxu0 0.0
      %3727 = vmatprep.subr.mxu0 0.0
      %3728 = vmatpush1.msra.mxu0 0.0
      %3729 = vmatprep.subr.mxu0 0.0
      %3730 = vmatpush1.msra.mxu0 0.0
      %3731 = vmatprep.mubr.f32.mxu0 0.0
      %3732 = vmatmul.mubr.f32.gmra.mrb[0].mxu0 %v3618
      %v3733 = vpop.f32.mrb[0].mxu0
      %v3734 = vadd.f32 0.0, %v3733
      %v3735 = vpop.f32.mrb[0].mxu0
      %3736 = vmatprep.mubr.f32.mxu0 0.0
      %3737 = vmatmul.mubr.f32.gmra.mrb[0].mxu0 %v3619
      %v3738 = vpop.f32.mrb[0].mxu0
      %v3739 = vadd.f32 0.0, %v3738
      %v3740 = vpop.f32.mrb[0].mxu0
      %3741 = vmatprep.mubr.f32.mxu0 0.0
      %3742 = vmatmul.mubr.f32.gmra.mrb[0].mxu0 %v3620
      %v3743 = vpop.f32.mrb[0].mxu0
      %v3744 = vadd.f32 0.0, %v3743
      %v3745 = vpop.f32.mrb[0].mxu0
      %3746 = vmatprep.mubr.f32.mxu0 0.0
      %3747 = vmatmul.mubr.f32.gmra.mrb[0].mxu0 %v3621
      %v3748 = vpop.f32.mrb[0].mxu0
      %v3749 = vadd.f32 0.0, %v3748
      %v3750 = vpop.f32.mrb[0].mxu0
      %3751 = vmatprep.mubr.f32.mxu0 0.0
      %3752 = vmatmul.mubr.f32.gmra.mrb[0].mxu0 %v3622
      %v3753 = vpop.f32.mrb[0].mxu0
      %v3754 = vadd.f32 0.0, %v3753
      %v3755 = vpop.f32.mrb[0].mxu0
      %3756 = vmatprep.mubr.f32.mxu0 0.0
      %3757 = vmatmul.mubr.f32.gmra.mrb[0].mxu0 %v3623
      %v3758 = vpop.f32.mrb[0].mxu0
      %v3759 = vadd.f32 0.0, %v3758
      %v3760 = vpop.f32.mrb[0].mxu0
      %3761 = vmatprep.mubr.f32.mxu0 0.0
      %3762 = vmatmul.mubr.f32.gmra.mrb[0].mxu0 %v3624
      %v3763 = vpop.f32.mrb[0].mxu0
      %v3764 = vadd.f32 0.0, %v3763
      %v3765 = vpop.f32.mrb[0].mxu0
      %3766 = vmatprep.mubr.f32.mxu0 0.0
      %3767 = vmatmul.mubr.f32.gmra.mrb[0].mxu0 %v3625
      %v3768 = vpop.f32.mrb[0].mxu0
      %v3769 = vadd.f32 0.0, %v3768
      %v3770 = vpop.f32.mrb[0].mxu0
      %3771 = vmatprep.mubr.f32.mxu0 0.0
      %3772 = vmatmul.mubr.f32.gmra.mrb[0].mxu0 %v3626
      %v3773 = vpop.f32.mrb[0].mxu0
      %v3774 = vadd.f32 0.0, %v3773
      %v3775 = vpop.f32.mrb[0].mxu0
      %3776 = vmatprep.mubr.f32.mxu0 0.0
      %3777 = vmatmul.mubr.f32.gmra.mrb[0].mxu0 %v3627
      %v3778 = vpop.f32.mrb[0].mxu0
      %v3779 = vadd.f32 0.0, %v3778
      %v3780 = vpop.f32.mrb[0].mxu0
      %3781 = vmatprep.mubr.f32.mxu0 0.0
      %3782 = vmatmul.mubr.f32.gmra.mrb[0].mxu0 %v3628
      %v3783 = vpop.f32.mrb[0].mxu0
      %v3784 = vadd.f32 0.0, %v3783
      %v3785 = vpop.f32.mrb[0].mxu0
      %3786 = vmatprep.mubr.f32.mxu0 0.0
      %3787 = vmatmul.mubr.f32.gmra.mrb[0].mxu0 %v3629
      %v3788 = vpop.f32.mrb[0].mxu0
      %v3789 = vadd.f32 0.0, %v3788
      %v3790 = vpop.f32.mrb[0].mxu0
      %3791 = vmatprep.mubr.f32.mxu0 0.0
      %3792 = vmatmul.mubr.f32.gmra.mrb[0].mxu0 %v3630
      %v3793 = vpop.f32.mrb[0].mxu0
      %v3794 = vadd.f32 0.0, %v3793
      %v3795 = vpop.f32.mrb[0].mxu0
      %3796 = vmatprep.mubr.f32.mxu0 0.0
      %3797 = vmatmul.mubr.f32.gmra.mrb[0].mxu0 %v3631
      %v3798 = vpop.f32.mrb[0].mxu0
      %v3799 = vadd.f32 0.0, %v3798
      %v3800 = vpop.f32.mrb[0].mxu0
      %3801 = vmatprep.mubr.f32.mxu0 0.0
      %3802 = vmatmul.mubr.f32.gmra.mrb[0].mxu0 %v3632
      %v3803 = vpop.f32.mrb[0].mxu0
      %v3804 = vadd.f32 0.0, %v3803
      %v3805 = vpop.f32.mrb[0].mxu0
      %3806 = vmatprep.mubr.f32.mxu0 0.0
      %3807 = vmatmul.mubr.f32.gmra.mrb[0].mxu0 %v3633
      %v3808 = vpop.f32.mrb[0].mxu0
      %v3809 = vadd.f32 0.0, %v3808
      %v3810 = vpop.f32.mrb[0].mxu0
      %3811 = vmatprep.mubr.f32.mxu0 0.0
      %3812 = vmatmul.mubr.f32.gmra.mrb[0].mxu0 %v3634
      %v3813 = vpop.f32.mrb[0].mxu0
      %v3814 = vadd.f32 0.0, %v3813
      %v3815 = vpop.f32.mrb[0].mxu0
      %3816 = vmatprep.mubr.f32.mxu0 0.0
      %3817 = vmatmul.mubr.f32.gmra.mrb[0].mxu0 %v3635
      %v3818 = vpop.f32.mrb[0].mxu0
      %v3819 = vadd.f32 0.0, %v3818
      %v3820 = vpop.f32.mrb[0].mxu0
      %3821 = vmatprep.mubr.f32.mxu0 0.0
      %3822 = vmatmul.mubr.f32.gmra.mrb[0].mxu0 %v3636
      %v3823 = vpop.f32.mrb[0].mxu0
      %v3824 = vadd.f32 0.0, %v3823
      %v3825 = vpop.f32.mrb[0].mxu0
      %3826 = vmatprep.mubr.f32.mxu0 0.0
      %3827 = vmatmul.mubr.f32.gmra.mrb[0].mxu0 %v3637
      %v3828 = vpop.f32.mrb[0].mxu0
      %v3829 = vadd.f32 0.0, %v3828
      %v3830 = vpop.f32.mrb[0].mxu0
      %3831 = vmatprep.mubr.f32.mxu0 0.0
      %3832 = vmatmul.mubr.f32.gmra.mrb[0].mxu0 %v3638
      %v3833 = vpop.f32.mrb[0].mxu0
      %v3834 = vadd.f32 0.0, %v3833
      %v3835 = vpop.f32.mrb[0].mxu0
      %3836 = vmatprep.mubr.f32.mxu0 0.0
      %3837 = vmatmul.mubr.f32.gmra.mrb[0].mxu0 %v3639
      %v3838 = vpop.f32.mrb[0].mxu0
      %v3839 = vadd.f32 0.0, %v3838
      %v3840 = vpop.f32.mrb[0].mxu0
      %3841 = vmatprep.mubr.f32.mxu0 0.0
      %3842 = vmatmul.mubr.f32.gmra.mrb[0].mxu0 %v3640
      %v3843 = vpop.f32.mrb[0].mxu0
      %v3844 = vadd.f32 0.0, %v3843
      %v3845 = vpop.f32.mrb[0].mxu0
      %3846 = vmatprep.mubr.f32.mxu0 0.0
      %3847 = vmatmul.mubr.f32.gmra.mrb[0].mxu0 %v3641
      %v3848 = vpop.f32.mrb[0].mxu0
      %v3849 = vadd.f32 0.0, %v3848
      %v3850 = vpop.f32.mrb[0].mxu0
      %3851 = vmatprep.mubr.f32.mxu0 0.0
      %3852 = vmatmul.mubr.f32.gmra.mrb[0].mxu0 %v3642
      %v3853 = vpop.f32.mrb[0].mxu0
      %v3854 = vadd.f32 0.0, %v3853
      %v3855 = vpop.f32.mrb[0].mxu0
      %3856 = vmatprep.mubr.f32.mxu0 0.0
      %3857 = vmatmul.mubr.f32.gmra.mrb[0].mxu0 %v3643
      %v3858 = vpop.f32.mrb[0].mxu0
      %v3859 = vadd.f32 0.0, %v3858
      %v3860 = vpop.f32.mrb[0].mxu0
      %3861 = vmatprep.mubr.f32.mxu0 0.0
      %3862 = vmatmul.mubr.f32.gmra.mrb[0].mxu0 %v3644
      %v3863 = vpop.f32.mrb[0].mxu0
      %v3864 = vadd.f32 0.0, %v3863
      %v3865 = vpop.f32.mrb[0].mxu0
      %3866 = vmatprep.mubr.f32.mxu0 0.0
      %3867 = vmatmul.mubr.f32.gmra.mrb[0].mxu0 %v3645
      %v3868 = vpop.f32.mrb[0].mxu0
      %v3869 = vadd.f32 0.0, %v3868
      %v3870 = vpop.f32.mrb[0].mxu0
      %3871 = vmatprep.mubr.f32.mxu0 0.0
      %3872 = vmatmul.mubr.f32.gmra.mrb[0].mxu0 %v3646
      %v3873 = vpop.f32.mrb[0].mxu0
      %v3874 = vadd.f32 0.0, %v3873
      %v3875 = vpop.f32.mrb[0].mxu0
      %3876 = vmatprep.mubr.f32.mxu0 0.0
      %3877 = vmatmul.mubr.f32.gmra.mrb[0].mxu0 %v3647
      %v3878 = vpop.f32.mrb[0].mxu0
      %v3879 = vadd.f32 0.0, %v3878
      %v3880 = vpop.f32.mrb[0].mxu0
      %3881 = vmatprep.mubr.f32.mxu0 0.0
      %3882 = vmatmul.mubr.f32.gmra.mrb[0].mxu0 %v3648
      %v3883 = vpop.f32.mrb[0].mxu0
      %v3884 = vadd.f32 0.0, %v3883
      %v3885 = vpop.f32.mrb[0].mxu0
      %3886 = vmatprep.mubr.f32.mxu0 0.0
      %3887 = vmatmul.mubr.f32.gmra.mrb[0].mxu0 %v3649
      %v3888 = vpop.f32.mrb[0].mxu0
      %v3889 = vadd.f32 0.0, %v3888
      %v3890 = vpop.f32.mrb[0].mxu0
      %3891 = vdwg.mxu0
      %v3892 = vadd.f32 %v3552, %v3734
      %v3893 = vadd.f32 %v3553, %v3739
      %v3894 = vadd.f32 %v3554, %v3744
      %v3895 = vadd.f32 %v3555, %v3749
      %v3896 = vadd.f32 %v3556, %v3754
      %v3897 = vadd.f32 %v3557, %v3759
      %v3898 = vadd.f32 %v3558, %v3764
      %v3899 = vadd.f32 %v3559, %v3769
      %v3900 = vadd.f32 %v3560, %v3774
      %v3901 = vadd.f32 %v3561, %v3779
      %v3902 = vadd.f32 %v3562, %v3784
      %v3903 = vadd.f32 %v3563, %v3789
      %v3904 = vadd.f32 %v3564, %v3794
      %v3905 = vadd.f32 %v3565, %v3799
      %v3906 = vadd.f32 %v3566, %v3804
      %v3907 = vadd.f32 %v3567, %v3809
      %v3908 = vadd.f32 %v3568, %v3814
      %v3909 = vadd.f32 %v3569, %v3819
      %v3910 = vadd.f32 %v3570, %v3824
      %v3911 = vadd.f32 %v3571, %v3829
      %v3912 = vadd.f32 %v3572, %v3834
      %v3913 = vadd.f32 %v3573, %v3839
      %v3914 = vadd.f32 %v3574, %v3844
      %v3915 = vadd.f32 %v3575, %v3849
      %v3916 = vadd.f32 %v3576, %v3854
      %v3917 = vadd.f32 %v3577, %v3859
      %v3918 = vadd.f32 %v3578, %v3864
      %v3919 = vadd.f32 %v3579, %v3869
      %v3920 = vadd.f32 %v3580, %v3874
      %v3921 = vadd.f32 %v3581, %v3879
      %v3922 = vadd.f32 %v3582, %v3884
      %v3923 = vadd.f32 %v3583, %v3889
      %3924 = vst [vmem:[%s231] sm:$0xff] %v3892
      %3925 = vst [vmem:[%s231 + $0x8] sm:$0xff] %v3893
      %3926 = vst [vmem:[%s231 + $0x10] sm:$0xff] %v3894
      %3927 = vst [vmem:[%s231 + $0x18] sm:$0xff] %v3895
      %3928 = vst [vmem:[%s231 + $0x20] sm:$0xff] %v3896
      %3929 = vst [vmem:[%s231 + $0x28] sm:$0xff] %v3897
      %3930 = vst [vmem:[%s231 + $0x30] sm:$0xff] %v3898
      %3931 = vst [vmem:[%s231 + $0x38] sm:$0xff] %v3899
      %3932 = vst [vmem:[%s231 + $0x40] sm:$0xff] %v3900
      %3933 = vst [vmem:[%s231 + $0x48] sm:$0xff] %v3901
      %3934 = vst [vmem:[%s231 + $0x50] sm:$0xff] %v3902
      %3935 = vst [vmem:[%s231 + $0x58] sm:$0xff] %v3903
      %3936 = vst [vmem:[%s231 + $0x60] sm:$0xff] %v3904
      %3937 = vst [vmem:[%s231 + $0x68] sm:$0xff] %v3905
      %3938 = vst [vmem:[%s231 + $0x70] sm:$0xff] %v3906
      %3939 = vst [vmem:[%s231 + $0x78] sm:$0xff] %v3907
      %3940 = vst [vmem:[%s231 + $0x80] sm:$0xff] %v3908
      %3941 = vst [vmem:[%s231 + $0x88] sm:$0xff] %v3909
      %3942 = vst [vmem:[%s231 + $0x90] sm:$0xff] %v3910
      %3943 = vst [vmem:[%s231 + $0x98] sm:$0xff] %v3911
      %3944 = vst [vmem:[%s231 + $0xa0] sm:$0xff] %v3912
      %3945 = vst [vmem:[%s231 + $0xa8] sm:$0xff] %v3913
      %3946 = vst [vmem:[%s231 + $0xb0] sm:$0xff] %v3914
      %3947 = vst [vmem:[%s231 + $0xb8] sm:$0xff] %v3915
      %3948 = vst [vmem:[%s231 + $0xc0] sm:$0xff] %v3916
      %3949 = vst [vmem:[%s231 + $0xc8] sm:$0xff] %v3917
      %3950 = vst [vmem:[%s231 + $0xd0] sm:$0xff] %v3918
      %3951 = vst [vmem:[%s231 + $0xd8] sm:$0xff] %v3919
      %3952 = vst [vmem:[%s231 + $0xe0] sm:$0xff] %v3920
      %3953 = vst [vmem:[%s231 + $0xe8] sm:$0xff] %v3921
      %3954 = vst [vmem:[%s231 + $0xf0] sm:$0xff] %v3922
      %3955 = vst [vmem:[%s231 + $0xf8] sm:$0xff] %v3923
      %v3956 = vadd.f32 %v3892, %v3893
      %v3957 = vadd.f32 %v3956, %v3894
      %v3958 = vadd.f32 %v3957, %v3895
      %v3959 = vadd.f32 %v3958, %v3896
      %v3960 = vadd.f32 %v3959, %v3897
      %v3961 = vadd.f32 %v3960, %v3898
      %v3962 = vadd.f32 %v3961, %v3899
      %v3963 = vadd.f32 %v3962, %v3900
      %v3964 = vadd.f32 %v3963, %v3901
      %v3965 = vadd.f32 %v3964, %v3902
      %v3966 = vadd.f32 %v3965, %v3903
      %v3967 = vadd.f32 %v3966, %v3904
      %v3968 = vadd.f32 %v3967, %v3905
      %v3969 = vadd.f32 %v3968, %v3906
      %v3970 = vadd.f32 %v3969, %v3907
      %v3971 = vadd.f32 %v3970, %v3908
      %v3972 = vadd.f32 %v3971, %v3909
      %v3973 = vadd.f32 %v3972, %v3910
      %v3974 = vadd.f32 %v3973, %v3911
      %v3975 = vadd.f32 %v3974, %v3912
      %v3976 = vadd.f32 %v3975, %v3913
      %v3977 = vadd.f32 %v3976, %v3914
      %v3978 = vadd.f32 %v3977, %v3915
      %v3979 = vadd.f32 %v3978, %v3916
      %v3980 = vadd.f32 %v3979, %v3917
      %v3981 = vadd.f32 %v3980, %v3918
      %v3982 = vadd.f32 %v3981, %v3919
      %v3983 = vadd.f32 %v3982, %v3920
      %v3984 = vadd.f32 %v3983, %v3921
      %v3985 = vadd.f32 %v3984, %v3922
      %v3986 = vadd.f32 %v3985, %v3923
      %v3987 = vrot.slane %v3986, 4
      %v3988 = vadd.f32 %v3986, %v3987
      %v3989 = vrot.slane %v3988, 2
      %v3990 = vadd.f32 %v3988, %v3989
      %v3991 = vrot.slane %v3990, 1
      %v3992 = vadd.f32 %v3990, %v3991
      %v3993 = vadd.f32 %v3992, 0.0
      %v3994 = vmul.f32 %v3892, %v3892
      %v3995 = vmul.f32 %v3893, %v3893
      %v3996 = vmul.f32 %v3894, %v3894
      %v3997 = vmul.f32 %v3895, %v3895
      %v3998 = vmul.f32 %v3896, %v3896
      %v3999 = vmul.f32 %v3897, %v3897
      %v4000 = vmul.f32 %v3898, %v3898
      %v4001 = vmul.f32 %v3899, %v3899
      %v4002 = vmul.f32 %v3900, %v3900
      %v4003 = vmul.f32 %v3901, %v3901
      %v4004 = vmul.f32 %v3902, %v3902
      %v4005 = vmul.f32 %v3903, %v3903
      %v4006 = vmul.f32 %v3904, %v3904
      %v4007 = vmul.f32 %v3905, %v3905
      %v4008 = vmul.f32 %v3906, %v3906
      %v4009 = vmul.f32 %v3907, %v3907
      %v4010 = vmul.f32 %v3908, %v3908
      %v4011 = vmul.f32 %v3909, %v3909
      %v4012 = vmul.f32 %v3910, %v3910
      %v4013 = vmul.f32 %v3911, %v3911
      %v4014 = vmul.f32 %v3912, %v3912
      %v4015 = vmul.f32 %v3913, %v3913
      %v4016 = vmul.f32 %v3914, %v3914
      %v4017 = vmul.f32 %v3915, %v3915
      %v4018 = vmul.f32 %v3916, %v3916
      %v4019 = vmul.f32 %v3917, %v3917
      %v4020 = vmul.f32 %v3918, %v3918
      %v4021 = vmul.f32 %v3919, %v3919
      %v4022 = vmul.f32 %v3920, %v3920
      %v4023 = vmul.f32 %v3921, %v3921
      %v4024 = vmul.f32 %v3922, %v3922
      %v4025 = vmul.f32 %v3923, %v3923
      %v4026 = vadd.f32 %v3994, %v3995
      %v4027 = vadd.f32 %v4026, %v3996
      %v4028 = vadd.f32 %v4027, %v3997
      %v4029 = vadd.f32 %v4028, %v3998
      %v4030 = vadd.f32 %v4029, %v3999
      %v4031 = vadd.f32 %v4030, %v4000
      %v4032 = vadd.f32 %v4031, %v4001
      %v4033 = vadd.f32 %v4032, %v4002
      %v4034 = vadd.f32 %v4033, %v4003
      %v4035 = vadd.f32 %v4034, %v4004
      %v4036 = vadd.f32 %v4035, %v4005
      %v4037 = vadd.f32 %v4036, %v4006
      %v4038 = vadd.f32 %v4037, %v4007
      %v4039 = vadd.f32 %v4038, %v4008
      %v4040 = vadd.f32 %v4039, %v4009
      %v4041 = vadd.f32 %v4040, %v4010
      %v4042 = vadd.f32 %v4041, %v4011
      %v4043 = vadd.f32 %v4042, %v4012
      %v4044 = vadd.f32 %v4043, %v4013
      %v4045 = vadd.f32 %v4044, %v4014
      %v4046 = vadd.f32 %v4045, %v4015
      %v4047 = vadd.f32 %v4046, %v4016
      %v4048 = vadd.f32 %v4047, %v4017
      %v4049 = vadd.f32 %v4048, %v4018
      %v4050 = vadd.f32 %v4049, %v4019
      %v4051 = vadd.f32 %v4050, %v4020
      %v4052 = vadd.f32 %v4051, %v4021
      %v4053 = vadd.f32 %v4052, %v4022
      %v4054 = vadd.f32 %v4053, %v4023
      %v4055 = vadd.f32 %v4054, %v4024
      %v4056 = vadd.f32 %v4055, %v4025
      %v4057 = vrot.slane %v4056, 4
      %v4058 = vadd.f32 %v4056, %v4057
      %v4059 = vrot.slane %v4058, 2
      %v4060 = vadd.f32 %v4058, %v4059
      %v4061 = vrot.slane %v4060, 1
      %v4062 = vadd.f32 %v4060, %v4061
      %v4063 = vadd.f32 %v4062, 0.0
      %4064 = vst [vmem:[%s235] sm:$0x1] %v3993
      %4065 = vst [vmem:[%s235 + $0x1] sm:$0x1] %v4063
      %p4066 = scmp.lt.s32.totalorder %s17, 1
      %s4067 = scalar_select %p4066, %s17, 1
      %s4068 = smul.addr %s4067, 32
      %s4069 = smul.addr %s4068, 8
      %s4070 = scalar_lea.vmem %s4, %s4069
      %p4071 = scmp.lt.s32.totalorder %s17, 1
      %s4072 = scalar_select %p4071, %s17, 1
      %s4073 = smul.addr %s4072, 2
      %s4074 = scalar_lea.vmem %s5, %s4073
      // Predicated region
      $region37: #{bottleneck_forward.5} parent=35 // pred_check
        %p4075 = pneg %p124
      $region38: #{bottleneck_forward.5} parent=35 // pred_check_branch
        %4077 = sbr.rel (%p4075) target = $region40
      $region39: #{bottleneck_forward.5} parent=35 // pred_region
        _
      $region40: #{bottleneck_forward.5} parent=35 // pred_fallthru
        _
      // Predicated region
      $region41: #{bottleneck_forward.5} parent=35 // pred_check
        %p4078 = pneg %p150
      $region42: #{bottleneck_forward.5} parent=35 // pred_check_branch
        %4080 = sbr.rel (%p4078) target = $region44
      $region43: #{bottleneck_forward.5} parent=35 // pred_region
        _
      $region44: #{bottleneck_forward.5} parent=35 // pred_fallthru
        _
    $region36: #{bottleneck_forward.5} parent=5 // pred_fallthru
      _
    %p4081 = scmp.le.s32.totalorder 2, %s12
    // Predicated region
    $region45: #{bottleneck_forward.5} parent=5 // pred_check
      %p4082 = pneg %p4081
    $region46: #{bottleneck_forward.5} parent=5 // pred_check_branch
      %4084 = sbr.rel (%p4082) target = $region48
    $region47: #{bottleneck_forward.5} parent=5 // pred_region
      %s4085 = ssub.s32 %s12, 2
      // Predicated region
      $region49: #{bottleneck_forward.5} parent=47 // pred_check
        %p4086 = pneg %p130
      $region50: #{bottleneck_forward.5} parent=47 // pred_check_branch
        %4088 = sbr.rel (%p4086) target = $region52
      $region51: #{bottleneck_forward.5} parent=47 // pred_region
        %p4089 = scmp.lt.s32.totalorder %s18, 1
        %s4090 = scalar_select %p4089, %s18, 1
        %s4091 = smul.addr %s4090, 32
        %s4092 = smul.addr %s4091, 8
        %s4093 = scalar_lea.vmem %s4, %s4092
      $region52: #{bottleneck_forward.5} parent=47 // pred_fallthru
        _
      // Predicated region
      $region53: #{bottleneck_forward.5} parent=47 // pred_check
        %p4094 = pneg %p156
      $region54: #{bottleneck_forward.5} parent=47 // pred_check_branch
        %4096 = sbr.rel (%p4094) target = $region56
      $region55: #{bottleneck_forward.5} parent=47 // pred_region
        %p4097 = scmp.lt.s32.totalorder %s18, 1
        %s4098 = scalar_select %p4097, %s18, 1
        %s4099 = smul.addr %s4098, 2
        %s4100 = scalar_lea.vmem %s5, %s4099
      $region56: #{bottleneck_forward.5} parent=47 // pred_fallthru
        _
    $region48: #{bottleneck_forward.5} parent=5 // pred_fallthru
      _
  $region6: #{bottleneck_forward.5} parent=0 // loop_footer
    %s16 = sadd.s32 1, %s12
  $region7: #{bottleneck_forward.5} parent=0 // loop_footer_branch
    %11 = sbr.rel target = $region3
  $region8: #{bottleneck_forward.5} parent=0 // loop_exit
    _

</llo_original>
